<compile_context>
chip_gen: v7x
topology: tpu7x:2x2x1
jax: 0.10.0
libtpu: 0.0.40
codegen_flags: <defaults>
</compile_context>

<pallas_src>
import jax
import jax.numpy as jnp
from jax import lax
from jax.experimental import pallas as pl
from jax.experimental.pallas import tpu as pltpu

HIDDEN = 32      # hidden_size
VOCAB = 64       # output_size
VPAD = 128       # lane-dense padded vocab for the log-softmax output
MAXLEN = 256     # max_length (small multiple-of-128 stand-in for 2000)
GPAD = 128       # packed GRU gate dim 3H=96 padded to one full vreg of lanes
EHF = MAXLEN + GPAD   # fused lane width for the embedded-/hidden-side weights
NEG_BIG = -1e30

assert MAXLEN % 128 == 0 and 3 * HIDDEN <= GPAD and VOCAB <= VPAD


def _attn_decoder_seq_kernel(tok_ref, emb_ref, h0_ref, enc_ref,
                             w_e_ref, b_e_ref, w_h_ref, b_h_ref,
                             w_comb_a_ref, w_ih_ref, b_ih_ref,
                             w_out_ref, b_out_ref,
                             logp_ref, hT_ref, attnw_ref,
                             h_scr, e_scr, ea_scr):
    H, L = HIDDEN, MAXLEN
    B = h0_ref.shape[0]
    TB = logp_ref.shape[0]
    T = TB // B

    # ---------- pre-loop: hoist all embedding-side work off the recurrence ----------
    # Gather E = emb[tokens]  (T*B, H) rows into VMEM scratch.
    def gather(i, c):
        tok = tok_ref[i]
        e_scr[pl.ds(i, 1), :] = emb_ref[pl.ds(tok, 1), :]
        return c
    lax.fori_loop(0, TB, gather, 0, unroll=min(TB, 8))
    # TODO(synk): nn.Dropout(p=0.1) on `embedded` is identity at inference;
    # training-mode random masking is not implemented here.

    # One big matmul: EA[:, :L]      = embedded @ w_attn_e + b_attn
    #                 EA[:, L:L+H]   = embedded @ w_comb_e + b_comb
    ea_scr[...] = (jnp.dot(e_scr[...], w_e_ref[...],
                           preferred_element_type=jnp.float32) + b_e_ref[...])

    h_scr[...] = h0_ref[...]          # hidden state resident in VMEM scratch

    def step(t, carry):
        hidden = h_scr[...]                                     # (B, H)
        ea_t = ea_scr[pl.ds(t * B, B), :]                       # (B, L+GPAD)

        # Fused hidden-side matmul: attn(hidden part) and GRU w_hh in ONE push.
        hv = (jnp.dot(hidden, w_h_ref[...],
                      preferred_element_type=jnp.float32) + b_h_ref[...])  # (B, L+GPAD)

        # attn_weights = softmax(attn(cat(embedded, hidden)), dim=1)
        attn_logits = ea_t[:, :L] + hv[:, :L]                   # (B, L)
        m = jnp.max(attn_logits, axis=1, keepdims=True)
        e = jnp.exp(attn_logits - m)
        s = jnp.sum(e, axis=1, keepdims=True)
        # Deferred normalization: unnormalized context first (MXU), reciprocal
        # on the EUP overlaps with it; one NR step restores full f32 precision.
        ap_un = jnp.dot(e, enc_ref[...],
                        preferred_element_type=jnp.float32)     # (B, H)
        inv = pl.reciprocal(s, approx=True)
        inv = inv * (2.0 - s * inv)                             # Newton-Raphson refine
        attn_applied = ap_un * inv                              # (B, H)

        # output = relu(attn_combine(cat(embedded, attn_applied)))
        x = jnp.maximum(
            ea_t[:, L:L + H]
            + jnp.dot(attn_applied, w_comb_a_ref[...],
                      preferred_element_type=jnp.float32), 0.0)  # (B, H)

        # Single-step GRU (PyTorch gate equations), gates packed (r,z,n) along lanes.
        gi = (jnp.dot(x, w_ih_ref[...],
                      preferred_element_type=jnp.float32) + b_ih_ref[...])  # (B, GPAD)
        gh = hv[:, L:]                                          # (B, GPAD) incl. b_hh
        r = jax.nn.sigmoid(gi[:, 0:H] + gh[:, 0:H])
        z = jax.nn.sigmoid(gi[:, H:2 * H] + gh[:, H:2 * H])
        n = jnp.tanh(gi[:, 2 * H:3 * H] + r * gh[:, 2 * H:3 * H])
        h_new = (1.0 - z) * n + z * hidden                      # (B, H)
        h_scr[...] = h_new

        # Off the recurrence path: normalized attention weights + log-softmax head.
        attnw_ref[pl.ds(t * B, B), :] = e * inv
        out_logits = (jnp.dot(h_new, w_out_ref[...],
                              preferred_element_type=jnp.float32) + b_out_ref[...])  # (B, VPAD)
        mo = jnp.max(out_logits, axis=1, keepdims=True)
        so = jnp.sum(jnp.exp(out_logits - mo), axis=1, keepdims=True)
        logp_ref[pl.ds(t * B, B), :] = out_logits - mo - jnp.log(so)
        return carry

    # Full unroll only for tiny T; moderate unroll keeps LLO visibility without
    # exploding code size / vreg live ranges at realistic sequence lengths.
    lax.fori_loop(0, T, step, 0, unroll=(T if T <= 8 else 4))
    hT_ref[...] = h_scr[...]


def prepare_kernel_params(params):
    """Split / fuse / pad the PyTorch-layout parameters for the kernel (done once)."""
    h = HIDDEN
    w_attn_e, w_attn_h = params["w_attn"][:h], params["w_attn"][h:]
    w_comb_e, w_comb_a = params["w_comb"][:h], params["w_comb"][h:]
    # Pack the 3 GRU gate matmuls per side into one (H, 3H) matmul, pad 96 -> 128.
    w_ih_f = jnp.concatenate([params["w_ih"][i] for i in range(3)], axis=1)
    b_ih_f = jnp.concatenate([params["b_ih"][i] for i in range(3)], axis=1)
    w_hh_f = jnp.concatenate([params["w_hh"][i] for i in range(3)], axis=1)
    b_hh_f = jnp.concatenate([params["b_hh"][i] for i in range(3)], axis=1)

    # Embedded-side fused weight/bias: [ attn (MAXLEN) | comb_e (H) | 0 pad ].
    w_e_fused = jnp.zeros((h, EHF), jnp.float32)
    w_e_fused = w_e_fused.at[:, :MAXLEN].set(w_attn_e)
    w_e_fused = w_e_fused.at[:, MAXLEN:MAXLEN + h].set(w_comb_e)
    b_e_fused = jnp.zeros((1, EHF), jnp.float32)
    b_e_fused = b_e_fused.at[:, :MAXLEN].set(params["b_attn"])
    b_e_fused = b_e_fused.at[:, MAXLEN:MAXLEN + h].set(params["b_comb"])

    # Hidden-side fused weight/bias: [ attn (MAXLEN) | GRU w_hh packed (3H) | 0 pad ].
    w_h_fused = jnp.zeros((h, EHF), jnp.float32)
    w_h_fused = w_h_fused.at[:, :MAXLEN].set(w_attn_h)
    w_h_fused = w_h_fused.at[:, MAXLEN:MAXLEN + 3 * h].set(w_hh_f)
    b_h_fused = jnp.zeros((1, EHF), jnp.float32)
    b_h_fused = b_h_fused.at[:, MAXLEN:MAXLEN + 3 * h].set(b_hh_f)

    return {
        "emb": params["emb"],
        "w_e_fused": w_e_fused, "b_e_fused": b_e_fused,
        "w_h_fused": w_h_fused, "b_h_fused": b_h_fused,
        "w_comb_a": w_comb_a,
        "w_ih_p": jnp.pad(w_ih_f, ((0, 0), (0, GPAD - 3 * h))),
        "b_ih_p": jnp.pad(b_ih_f, ((0, 0), (0, GPAD - 3 * h))),
        # Lane-dense output head: pad vocab 64 -> 128, padded logits pinned to -1e30.
        "w_out_p": jnp.pad(params["w_out"], ((0, 0), (0, VPAD - VOCAB))),
        "b_out_p": jnp.concatenate(
            [params["b_out"], jnp.full((1, VPAD - VOCAB), NEG_BIG, jnp.float32)], axis=1),
    }


def attn_decoder_forward_seq(tokens, hidden, encoder_outputs, kparams):
    """Run T decode steps (teacher forcing) for B independent streams in one pallas_call.

    tokens: (T, B) int32; hidden: (B, H) f32; encoder_outputs: (MAXLEN, H) f32
    (shared across streams, like beam search).  Returns
    (logp (T, B, VOCAB), final hidden (B, H), attn_weights (T, B, MAXLEN)).
    """
    T, B = tokens.shape
    # Clamp token ids: VMEM has no runtime bounds check, so OOB ids would read garbage.
    tokens_flat = jnp.clip(tokens.astype(jnp.int32), 0, VOCAB - 1).reshape(T * B)
    hidden = hidden.astype(jnp.float32)

    vmem = pl.BlockSpec(memory_space=pltpu.MemorySpace.VMEM)
    smem = pl.BlockSpec(memory_space=pltpu.MemorySpace.SMEM)
    out_shapes = (
        jax.ShapeDtypeStruct((T * B, VPAD), jnp.float32),    # padded log-probs (lane-dense)
        jax.ShapeDtypeStruct((B, HIDDEN), jnp.float32),      # final hidden
        jax.ShapeDtypeStruct((T * B, MAXLEN), jnp.float32),  # attention weights per step
    )
    logp_pad, h_T, attn_w = pl.pallas_call(
        _attn_decoder_seq_kernel,
        out_shape=out_shapes,
        in_specs=[smem] + [vmem] * 12,
        out_specs=(vmem, vmem, vmem),
        scratch_shapes=[
            pltpu.VMEM((B, HIDDEN), jnp.float32),       # carried hidden state
            pltpu.VMEM((T * B, HIDDEN), jnp.float32),   # gathered embeddings
            pltpu.VMEM((T * B, EHF), jnp.float32),      # precomputed embedded-side matmul
        ],
    )(tokens_flat, kparams["emb"], hidden, encoder_outputs,
      kparams["w_e_fused"], kparams["b_e_fused"],
      kparams["w_h_fused"], kparams["b_h_fused"],
      kparams["w_comb_a"],
      kparams["w_ih_p"], kparams["b_ih_p"],
      kparams["w_out_p"], kparams["b_out_p"])
    logp = logp_pad.reshape(T, B, VPAD)[..., :VOCAB]
    attn_w = attn_w.reshape(T, B, MAXLEN)
    return logp, h_T, attn_w


def attn_decoder_forward(token, hidden, encoder_outputs, kparams):
    """Single-step forward matching the PyTorch module (token: (1,) int32, hidden: (1,H))."""
    logp, h_new, attn_w = attn_decoder_forward_seq(
        token.reshape(1, 1), hidden.reshape(1, HIDDEN), encoder_outputs, kparams)
    return logp[:, 0, :], h_new.reshape(1, 1, HIDDEN), attn_w[:, 0, :]


def reference_forward(token, hidden, encoder_outputs, params):
    """Pure-JAX single-step reference (PyTorch-equivalent math, original layout)."""
    embedded = params["emb"][token[0]][None, :]
    h = hidden
    cat1 = jnp.concatenate([embedded, h], axis=1)
    attn_w = jax.nn.softmax(cat1 @ params["w_attn"] + params["b_attn"], axis=1)
    attn_applied = attn_w @ encoder_outputs
    cat2 = jnp.concatenate([embedded, attn_applied], axis=1)
    x = jnp.maximum(cat2 @ params["w_comb"] + params["b_comb"], 0.0)
    gi = [x @ params["w_ih"][i] + params["b_ih"][i] for i in range(3)]
    gh = [h @ params["w_hh"][i] + params["b_hh"][i] for i in range(3)]
    r = jax.nn.sigmoid(gi[0] + gh[0])
    z = jax.nn.sigmoid(gi[1] + gh[1])
    n = jnp.tanh(gi[2] + r * gh[2])
    h_new = (1.0 - z) * n + z * h
    logp = jax.nn.log_softmax(h_new @ params["w_out"] + params["b_out"], axis=1)
    return logp, h_new.reshape(1, 1, HIDDEN), attn_w


def reference_sequence(tokens_tb, h0_bh, enc, params):
    """Apply the single-step reference T times to each of B independent streams."""
    T, B = tokens_tb.shape
    hs = [h0_bh[b:b + 1] for b in range(B)]
    logps, attns = [], []
    for t in range(T):
        lp_t, aw_t = [], []
        for b in range(B):
            lp, hn, aw = reference_forward(tokens_tb[t, b:b + 1], hs[b], enc, params)
            hs[b] = hn.reshape(1, HIDDEN)
            lp_t.append(lp)
            aw_t.append(aw)
        logps.append(jnp.concatenate(lp_t, axis=0))
        attns.append(jnp.concatenate(aw_t, axis=0))
    return jnp.stack(logps, 0), jnp.concatenate(hs, 0), jnp.stack(attns, 0)


def init_params(key):
    ks = jax.random.split(key, 10)

    def u(k, shape, fan_in):
        bound = 1.0 / jnp.sqrt(jnp.float32(fan_in))
        return jax.random.uniform(k, shape, jnp.float32, -bound, bound)

    return {
        "emb":    jax.random.normal(ks[0], (VOCAB, HIDDEN), jnp.float32),
        "w_attn": u(ks[1], (2 * HIDDEN, MAXLEN), 2 * HIDDEN),
        "b_attn": u(ks[2], (1, MAXLEN), 2 * HIDDEN),
        "w_comb": u(ks[3], (2 * HIDDEN, HIDDEN), 2 * HIDDEN),
        "b_comb": u(ks[4], (1, HIDDEN), 2 * HIDDEN),
        "w_ih":   u(ks[5], (3, HIDDEN, HIDDEN), HIDDEN),
        "b_ih":   u(ks[6], (3, 1, HIDDEN), HIDDEN),
        "w_hh":   u(ks[7], (3, HIDDEN, HIDDEN), HIDDEN),
        "b_hh":   u(ks[8], (3, 1, HIDDEN), HIDDEN),
        "w_out":  u(ks[9], (HIDDEN, VOCAB), HIDDEN),
        "b_out":  jnp.zeros((1, VOCAB), jnp.float32),
    }


if __name__ == "__main__":
    key = jax.random.PRNGKey(0)
    kp, kh, ke, kt, ktb, khb = jax.random.split(key, 6)
    params = init_params(kp)
    kparams = prepare_kernel_params(params)     # one-time layout prep

    encoder_outputs = jax.random.normal(ke, (MAXLEN, HIDDEN), jnp.float32) * 0.1

    # --- (1) module-faithful single stream (B=1), T teacher-forced steps ---
    T, B = 8, 1
    tokens = jax.random.randint(kt, (T, B), 0, VOCAB, dtype=jnp.int32)
    hidden0 = jax.random.normal(kh, (B, HIDDEN), jnp.float32) * 0.1

    logp, h_final, attn_w = attn_decoder_forward_seq(tokens, hidden0, encoder_outputs, kparams)
    jax.block_until_ready((logp, h_final, attn_w))

    ref_logp, ref_h, ref_attn = reference_sequence(tokens, hidden0, encoder_outputs, params)
    assert jnp.allclose(logp, ref_logp, atol=5e-4, rtol=1e-3)
    assert jnp.allclose(h_final, ref_h, atol=5e-4, rtol=1e-3)
    assert jnp.allclose(attn_w, ref_attn, atol=1e-5, rtol=1e-4)

    # --- (2) batched independent decode streams (B=4) share one kernel call ---
    Tb, Bb = 8, 4
    tokens_b = jax.random.randint(ktb, (Tb, Bb), 0, VOCAB, dtype=jnp.int32)
    hidden0_b = jax.random.normal(khb, (Bb, HIDDEN), jnp.float32) * 0.1
    logp_b, h_b, attn_b = attn_decoder_forward_seq(tokens_b, hidden0_b, encoder_outputs, kparams)
    jax.block_until_ready((logp_b, h_b, attn_b))

    ref_logp_b, ref_h_b, ref_attn_b = reference_sequence(tokens_b, hidden0_b, encoder_outputs, params)
    assert jnp.allclose(logp_b, ref_logp_b, atol=5e-4, rtol=1e-3)
    assert jnp.allclose(h_b, ref_h_b, atol=5e-4, rtol=1e-3)
    assert jnp.allclose(attn_b, ref_attn_b, atol=1e-5, rtol=1e-4)

    # --- (3) single-step path matching the original module's forward signature ---
    lp1, h1, aw1 = attn_decoder_forward(tokens[0, :1], hidden0, encoder_outputs, kparams)
    rl1, rh1, ra1 = reference_forward(tokens[0, :1], hidden0, encoder_outputs, params)
    jax.block_until_ready((lp1, h1, aw1))
    assert jnp.allclose(lp1, rl1, atol=5e-4, rtol=1e-3)
    assert jnp.allclose(h1, rh1, atol=5e-4, rtol=1e-3)
    assert jnp.allclose(aw1, ra1, atol=1e-5, rtol=1e-4)

    print("KERNEL_OK")
</pallas_src>

<mosaic_0001>
module attributes {stable_mosaic.version = 11 : i64} {
  func.func @_attn_decoder_seq_kernel(%arg0: memref<8xi32, #tpu.memory_space<smem>>, %arg1: memref<64x32xf32, #tpu.memory_space<vmem>>, %arg2: memref<1x32xf32, #tpu.memory_space<vmem>>, %arg3: memref<256x32xf32, #tpu.memory_space<vmem>>, %arg4: memref<32x384xf32, #tpu.memory_space<vmem>>, %arg5: memref<1x384xf32, #tpu.memory_space<vmem>>, %arg6: memref<32x384xf32, #tpu.memory_space<vmem>>, %arg7: memref<1x384xf32, #tpu.memory_space<vmem>>, %arg8: memref<32x32xf32, #tpu.memory_space<vmem>>, %arg9: memref<32x128xf32, #tpu.memory_space<vmem>>, %arg10: memref<1x128xf32, #tpu.memory_space<vmem>>, %arg11: memref<32x128xf32, #tpu.memory_space<vmem>>, %arg12: memref<1x128xf32, #tpu.memory_space<vmem>>, %arg13: memref<8x128xf32, #tpu.memory_space<vmem>>, %arg14: memref<1x32xf32, #tpu.memory_space<vmem>>, %arg15: memref<8x256xf32, #tpu.memory_space<vmem>>, %arg16: memref<1x32xf32, #tpu.memory_space<vmem>>, %arg17: memref<8x32xf32, #tpu.memory_space<vmem>>, %arg18: memref<8x384xf32, #tpu.memory_space<vmem>>) attributes {dimension_semantics = [], scalar_prefetch = 0 : i64, scratch_operands = 3 : i64, tpu.core_type = #tpu.core_type<tc>} {
    %c0_i32 = arith.constant 0 : i32
    %0 = arith.index_cast %c0_i32 : i32 to index
    %1 = memref.load %arg0[%0] : memref<8xi32, #tpu.memory_space<smem>>
    %2 = arith.index_cast %1 : i32 to index
    %c0 = arith.constant 0 : index
    %3 = vector.load %arg1[%2, %c0] : memref<64x32xf32, #tpu.memory_space<vmem>>, vector<1x32xf32>
    %4 = arith.index_cast %c0_i32 : i32 to index
    %c0_0 = arith.constant 0 : index
    %5 = vector.load %arg17[%4, %c0_0] : memref<8x32xf32, #tpu.memory_space<vmem>>, vector<1x32xf32>
    tpu.vector_store %arg17[%4, %c0_0], %3 {strides = array<i32>} : memref<8x32xf32, #tpu.memory_space<vmem>>, vector<1x32xf32>,
    %c1_i32 = arith.constant 1 : i32
    %6 = arith.index_cast %c1_i32 : i32 to index
    %7 = memref.load %arg0[%6] : memref<8xi32, #tpu.memory_space<smem>>
    %8 = arith.index_cast %7 : i32 to index
    %c0_1 = arith.constant 0 : index
    %9 = vector.load %arg1[%8, %c0_1] : memref<64x32xf32, #tpu.memory_space<vmem>>, vector<1x32xf32>
    %10 = arith.index_cast %c1_i32 : i32 to index
    %c0_2 = arith.constant 0 : index
    %11 = vector.load %arg17[%10, %c0_2] : memref<8x32xf32, #tpu.memory_space<vmem>>, vector<1x32xf32>
    tpu.vector_store %arg17[%10, %c0_2], %9 {strides = array<i32>} : memref<8x32xf32, #tpu.memory_space<vmem>>, vector<1x32xf32>,
    %c2_i32 = arith.constant 2 : i32
    %12 = arith.index_cast %c2_i32 : i32 to index
    %13 = memref.load %arg0[%12] : memref<8xi32, #tpu.memory_space<smem>>
    %14 = arith.index_cast %13 : i32 to index
    %c0_3 = arith.constant 0 : index
    %15 = vector.load %arg1[%14, %c0_3] : memref<64x32xf32, #tpu.memory_space<vmem>>, vector<1x32xf32>
    %16 = arith.index_cast %c2_i32 : i32 to index
    %c0_4 = arith.constant 0 : index
    %17 = vector.load %arg17[%16, %c0_4] : memref<8x32xf32, #tpu.memory_space<vmem>>, vector<1x32xf32>
    tpu.vector_store %arg17[%16, %c0_4], %15 {strides = array<i32>} : memref<8x32xf32, #tpu.memory_space<vmem>>, vector<1x32xf32>,
    %c3_i32 = arith.constant 3 : i32
    %18 = arith.index_cast %c3_i32 : i32 to index
    %19 = memref.load %arg0[%18] : memref<8xi32, #tpu.memory_space<smem>>
    %20 = arith.index_cast %19 : i32 to index
    %c0_5 = arith.constant 0 : index
    %21 = vector.load %arg1[%20, %c0_5] : memref<64x32xf32, #tpu.memory_space<vmem>>, vector<1x32xf32>
    %22 = arith.index_cast %c3_i32 : i32 to index
    %c0_6 = arith.constant 0 : index
    %23 = vector.load %arg17[%22, %c0_6] : memref<8x32xf32, #tpu.memory_space<vmem>>, vector<1x32xf32>
    tpu.vector_store %arg17[%22, %c0_6], %21 {strides = array<i32>} : memref<8x32xf32, #tpu.memory_space<vmem>>, vector<1x32xf32>,
    %c4_i32 = arith.constant 4 : i32
    %24 = arith.index_cast %c4_i32 : i32 to index
    %25 = memref.load %arg0[%24] : memref<8xi32, #tpu.memory_space<smem>>
    %26 = arith.index_cast %25 : i32 to index
    %c0_7 = arith.constant 0 : index
    %27 = vector.load %arg1[%26, %c0_7] : memref<64x32xf32, #tpu.memory_space<vmem>>, vector<1x32xf32>
    %28 = arith.index_cast %c4_i32 : i32 to index
    %c0_8 = arith.constant 0 : index
    %29 = vector.load %arg17[%28, %c0_8] : memref<8x32xf32, #tpu.memory_space<vmem>>, vector<1x32xf32>
    tpu.vector_store %arg17[%28, %c0_8], %27 {strides = array<i32>} : memref<8x32xf32, #tpu.memory_space<vmem>>, vector<1x32xf32>,
    %c5_i32 = arith.constant 5 : i32
    %30 = arith.index_cast %c5_i32 : i32 to index
    %31 = memref.load %arg0[%30] : memref<8xi32, #tpu.memory_space<smem>>
    %32 = arith.index_cast %31 : i32 to index
    %c0_9 = arith.constant 0 : index
    %33 = vector.load %arg1[%32, %c0_9] : memref<64x32xf32, #tpu.memory_space<vmem>>, vector<1x32xf32>
    %34 = arith.index_cast %c5_i32 : i32 to index
    %c0_10 = arith.constant 0 : index
    %35 = vector.load %arg17[%34, %c0_10] : memref<8x32xf32, #tpu.memory_space<vmem>>, vector<1x32xf32>
    tpu.vector_store %arg17[%34, %c0_10], %33 {strides = array<i32>} : memref<8x32xf32, #tpu.memory_space<vmem>>, vector<1x32xf32>,
    %c6_i32 = arith.constant 6 : i32
    %36 = arith.index_cast %c6_i32 : i32 to index
    %37 = memref.load %arg0[%36] : memref<8xi32, #tpu.memory_space<smem>>
    %38 = arith.index_cast %37 : i32 to index
    %c0_11 = arith.constant 0 : index
    %39 = vector.load %arg1[%38, %c0_11] : memref<64x32xf32, #tpu.memory_space<vmem>>, vector<1x32xf32>
    %40 = arith.index_cast %c6_i32 : i32 to index
    %c0_12 = arith.constant 0 : index
    %41 = vector.load %arg17[%40, %c0_12] : memref<8x32xf32, #tpu.memory_space<vmem>>, vector<1x32xf32>
    tpu.vector_store %arg17[%40, %c0_12], %39 {strides = array<i32>} : memref<8x32xf32, #tpu.memory_space<vmem>>, vector<1x32xf32>,
    %c7_i32 = arith.constant 7 : i32
    %42 = arith.index_cast %c7_i32 : i32 to index
    %43 = memref.load %arg0[%42] : memref<8xi32, #tpu.memory_space<smem>>
    %44 = arith.index_cast %43 : i32 to index
    %c0_13 = arith.constant 0 : index
    %45 = vector.load %arg1[%44, %c0_13] : memref<64x32xf32, #tpu.memory_space<vmem>>, vector<1x32xf32>
    %46 = arith.index_cast %c7_i32 : i32 to index
    %c0_14 = arith.constant 0 : index
    %47 = vector.load %arg17[%46, %c0_14] : memref<8x32xf32, #tpu.memory_space<vmem>>, vector<1x32xf32>
    tpu.vector_store %arg17[%46, %c0_14], %45 {strides = array<i32>} : memref<8x32xf32, #tpu.memory_space<vmem>>, vector<1x32xf32>,
    %c8_i32 = arith.constant 8 : i32
    %c0_15 = arith.constant 0 : index
    %c0_16 = arith.constant 0 : index
    %48 = vector.load %arg17[%c0_15, %c0_16] : memref<8x32xf32, #tpu.memory_space<vmem>>, vector<8x32xf32>
    %c0_17 = arith.constant 0 : index
    %c0_18 = arith.constant 0 : index
    %49 = vector.load %arg4[%c0_17, %c0_18] : memref<32x384xf32, #tpu.memory_space<vmem>>, vector<32x384xf32>
    %cst = arith.constant dense<0.000000e+00> : vector<8x384xf32>
    %50 = tpu.matmul %48, %49, %cst {dimension_numbers = #tpu.dot_dimension_numbers<[1], [0], [0], [1], [0, 0, 1, 1], [], []>} : vector<8x32xf32>, vector<32x384xf32>, vector<8x384xf32> -> vector<8x384xf32>
    %c0_19 = arith.constant 0 : index
    %c0_20 = arith.constant 0 : index
    %51 = vector.load %arg5[%c0_19, %c0_20] : memref<1x384xf32, #tpu.memory_space<vmem>>, vector<1x384xf32>
    %52 = vector.broadcast %51 : vector<1x384xf32> to vector<8x384xf32>
    %53 = arith.addf %50, %52 : vector<8x384xf32>
    %c0_21 = arith.constant 0 : index
    %c0_22 = arith.constant 0 : index
    %54 = vector.load %arg18[%c0_21, %c0_22] : memref<8x384xf32, #tpu.memory_space<vmem>>, vector<8x384xf32>
    tpu.vector_store %arg18[%c0_21, %c0_22], %53 {strides = array<i32>} : memref<8x384xf32, #tpu.memory_space<vmem>>, vector<8x384xf32>,
    %c0_23 = arith.constant 0 : index
    %c0_24 = arith.constant 0 : index
    %55 = vector.load %arg2[%c0_23, %c0_24] : memref<1x32xf32, #tpu.memory_space<vmem>>, vector<1x32xf32>
    %c0_25 = arith.constant 0 : index
    %c0_26 = arith.constant 0 : index
    %56 = vector.load %arg16[%c0_25, %c0_26] : memref<1x32xf32, #tpu.memory_space<vmem>>, vector<1x32xf32>
    tpu.vector_store %arg16[%c0_25, %c0_26], %55 {strides = array<i32>} : memref<1x32xf32, #tpu.memory_space<vmem>>, vector<1x32xf32>,
    %c0_i32_27 = arith.constant 0 : i32
    %c0_28 = arith.constant 0 : index
    %c0_29 = arith.constant 0 : index
    %57 = vector.load %arg16[%c0_28, %c0_29] : memref<1x32xf32, #tpu.memory_space<vmem>>, vector<1x32xf32>
    %c1_i32_30 = arith.constant 1 : i32
    %58 = arith.muli %c0_i32_27, %c1_i32_30 : i32
    %59 = arith.index_cast %58 : i32 to index
    %c0_31 = arith.constant 0 : index
    %60 = vector.load %arg18[%59, %c0_31] : memref<8x384xf32, #tpu.memory_space<vmem>>, vector<1x384xf32>
    %c0_32 = arith.constant 0 : index
    %c0_33 = arith.constant 0 : index
    %61 = vector.load %arg6[%c0_32, %c0_33] : memref<32x384xf32, #tpu.memory_space<vmem>>, vector<32x384xf32>
    %cst_34 = arith.constant dense<0.000000e+00> : vector<1x384xf32>
    %62 = tpu.matmul %57, %61, %cst_34 {dimension_numbers = #tpu.dot_dimension_numbers<[1], [0], [0], [1], [0, 0, 1, 1], [], []>} : vector<1x32xf32>, vector<32x384xf32>, vector<1x384xf32> -> vector<1x384xf32>
    %c0_35 = arith.constant 0 : index
    %c0_36 = arith.constant 0 : index
    %63 = vector.load %arg7[%c0_35, %c0_36] : memref<1x384xf32, #tpu.memory_space<vmem>>, vector<1x384xf32>
    %64 = arith.addf %62, %63 : vector<1x384xf32>
    %65 = vector.extract_strided_slice %60 {offsets = [0, 0], sizes = [1, 256], strides = [1, 1]} : vector<1x384xf32> to vector<1x256xf32>
    %66 = vector.extract_strided_slice %64 {offsets = [0, 0], sizes = [1, 256], strides = [1, 1]} : vector<1x384xf32> to vector<1x256xf32>
    %67 = arith.addf %65, %66 : vector<1x256xf32>
    %cst_37 = arith.constant dense<0xFF800000> : vector<1xf32>
    %68 = vector.multi_reduction <maximumf>, %67, %cst_37 [1] : vector<1x256xf32> to vector<1xf32>
    %69 = vector.shape_cast %68 : vector<1xf32> to vector<1x1xf32>
    %70 = vector.broadcast %69 : vector<1x1xf32> to vector<1x256xf32>
    %71 = arith.subf %67, %70 : vector<1x256xf32>
    %72 = math.exp %71 : vector<1x256xf32>
    %cst_38 = arith.constant dense<0.000000e+00> : vector<1xf32>
    %73 = vector.multi_reduction <add>, %72, %cst_38 [1] : vector<1x256xf32> to vector<1xf32>
    %74 = vector.shape_cast %73 : vector<1xf32> to vector<1x1xf32>
    %c0_39 = arith.constant 0 : index
    %c0_40 = arith.constant 0 : index
    %75 = vector.load %arg3[%c0_39, %c0_40] : memref<256x32xf32, #tpu.memory_space<vmem>>, vector<256x32xf32>
    %cst_41 = arith.constant dense<0.000000e+00> : vector<1x32xf32>
    %76 = tpu.matmul %72, %75, %cst_41 {dimension_numbers = #tpu.dot_dimension_numbers<[1], [0], [0], [1], [0, 0, 1, 1], [], []>} : vector<1x256xf32>, vector<256x32xf32>, vector<1x32xf32> -> vector<1x32xf32>
    %77 = tpu.reciprocal %74 {approx = true} : vector<1x1xf32> -> vector<1x1xf32>
    %78 = arith.mulf %74, %77 : vector<1x1xf32>
    %cst_42 = arith.constant 2.000000e+00 : f32
    %79 = vector.broadcast %cst_42 : f32 to vector<1x1xf32>
    %80 = arith.subf %79, %78 : vector<1x1xf32>
    %81 = arith.mulf %77, %80 : vector<1x1xf32>
    %82 = vector.broadcast %81 : vector<1x1xf32> to vector<1x32xf32>
    %83 = arith.mulf %76, %82 : vector<1x32xf32>
    %84 = vector.extract_strided_slice %60 {offsets = [0, 256], sizes = [1, 32], strides = [1, 1]} : vector<1x384xf32> to vector<1x32xf32>
    %c0_43 = arith.constant 0 : index
    %c0_44 = arith.constant 0 : index
    %85 = vector.load %arg8[%c0_43, %c0_44] : memref<32x32xf32, #tpu.memory_space<vmem>>, vector<32x32xf32>
    %cst_45 = arith.constant dense<0.000000e+00> : vector<1x32xf32>
    %86 = tpu.matmul %83, %85, %cst_45 {dimension_numbers = #tpu.dot_dimension_numbers<[1], [0], [0], [1], [0, 0, 1, 1], [], []>} : vector<1x32xf32>, vector<32x32xf32>, vector<1x32xf32> -> vector<1x32xf32>
    %87 = arith.addf %84, %86 : vector<1x32xf32>
    %cst_46 = arith.constant 0.000000e+00 : f32
    %88 = vector.broadcast %cst_46 : f32 to vector<1x32xf32>
    %89 = arith.maximumf %87, %88 : vector<1x32xf32>
    %c0_47 = arith.constant 0 : index
    %c0_48 = arith.constant 0 : index
    %90 = vector.load %arg9[%c0_47, %c0_48] : memref<32x128xf32, #tpu.memory_space<vmem>>, vector<32x128xf32>
    %cst_49 = arith.constant dense<0.000000e+00> : vector<1x128xf32>
    %91 = tpu.matmul %89, %90, %cst_49 {dimension_numbers = #tpu.dot_dimension_numbers<[1], [0], [0], [1], [0, 0, 1, 1], [], []>} : vector<1x32xf32>, vector<32x128xf32>, vector<1x128xf32> -> vector<1x128xf32>
    %c0_50 = arith.constant 0 : index
    %c0_51 = arith.constant 0 : index
    %92 = vector.load %arg10[%c0_50, %c0_51] : memref<1x128xf32, #tpu.memory_space<vmem>>, vector<1x128xf32>
    %93 = arith.addf %91, %92 : vector<1x128xf32>
    %94 = vector.extract_strided_slice %64 {offsets = [0, 256], sizes = [1, 128], strides = [1, 1]} : vector<1x384xf32> to vector<1x128xf32>
    %95 = vector.extract_strided_slice %93 {offsets = [0, 0], sizes = [1, 32], strides = [1, 1]} : vector<1x128xf32> to vector<1x32xf32>
    %96 = vector.extract_strided_slice %94 {offsets = [0, 0], sizes = [1, 32], strides = [1, 1]} : vector<1x128xf32> to vector<1x32xf32>
    %97 = arith.addf %95, %96 : vector<1x32xf32>
    %98 = arith.negf %97 : vector<1x32xf32>
    %99 = math.exp %98 : vector<1x32xf32>
    %cst_52 = arith.constant 1.000000e+00 : f32
    %100 = vector.broadcast %cst_52 : f32 to vector<1x32xf32>
    %101 = arith.addf %100, %99 : vector<1x32xf32>
    %102 = arith.divf %100, %101 : vector<1x32xf32>
    %103 = vector.extract_strided_slice %93 {offsets = [0, 32], sizes = [1, 32], strides = [1, 1]} : vector<1x128xf32> to vector<1x32xf32>
    %104 = vector.extract_strided_slice %94 {offsets = [0, 32], sizes = [1, 32], strides = [1, 1]} : vector<1x128xf32> to vector<1x32xf32>
    %105 = arith.addf %103, %104 : vector<1x32xf32>
    %106 = arith.negf %105 : vector<1x32xf32>
    %107 = math.exp %106 : vector<1x32xf32>
    %cst_53 = arith.constant 1.000000e+00 : f32
    %108 = vector.broadcast %cst_53 : f32 to vector<1x32xf32>
    %109 = arith.addf %108, %107 : vector<1x32xf32>
    %110 = arith.divf %108, %109 : vector<1x32xf32>
    %111 = vector.extract_strided_slice %93 {offsets = [0, 64], sizes = [1, 32], strides = [1, 1]} : vector<1x128xf32> to vector<1x32xf32>
    %112 = vector.extract_strided_slice %94 {offsets = [0, 64], sizes = [1, 32], strides = [1, 1]} : vector<1x128xf32> to vector<1x32xf32>
    %113 = arith.mulf %102, %112 : vector<1x32xf32>
    %114 = arith.addf %111, %113 : vector<1x32xf32>
    %115 = math.tanh %114 : vector<1x32xf32>
    %cst_54 = arith.constant 1.000000e+00 : f32
    %116 = vector.broadcast %cst_54 : f32 to vector<1x32xf32>
    %117 = arith.subf %116, %110 : vector<1x32xf32>
    %118 = arith.mulf %117, %115 : vector<1x32xf32>
    %119 = arith.mulf %110, %57 : vector<1x32xf32>
    %120 = arith.addf %118, %119 : vector<1x32xf32>
    %c0_55 = arith.constant 0 : index
    %c0_56 = arith.constant 0 : index
    %121 = vector.load %arg16[%c0_55, %c0_56] : memref<1x32xf32, #tpu.memory_space<vmem>>, vector<1x32xf32>
    tpu.vector_store %arg16[%c0_55, %c0_56], %120 {strides = array<i32>} : memref<1x32xf32, #tpu.memory_space<vmem>>, vector<1x32xf32>,
    %122 = vector.broadcast %81 : vector<1x1xf32> to vector<1x256xf32>
    %123 = arith.mulf %72, %122 : vector<1x256xf32>
    %c1_i32_57 = arith.constant 1 : i32
    %124 = arith.muli %c0_i32_27, %c1_i32_57 : i32
    %125 = arith.index_cast %124 : i32 to index
    %c0_58 = arith.constant 0 : index
    %126 = vector.load %arg15[%125, %c0_58] : memref<8x256xf32, #tpu.memory_space<vmem>>, vector<1x256xf32>
    tpu.vector_store %arg15[%125, %c0_58], %123 {strides = array<i32>} : memref<8x256xf32, #tpu.memory_space<vmem>>, vector<1x256xf32>,
    %c0_59 = arith.constant 0 : index
    %c0_60 = arith.constant 0 : index
    %127 = vector.load %arg11[%c0_59, %c0_60] : memref<32x128xf32, #tpu.memory_space<vmem>>, vector<32x128xf32>
    %cst_61 = arith.constant dense<0.000000e+00> : vector<1x128xf32>
    %128 = tpu.matmul %120, %127, %cst_61 {dimension_numbers = #tpu.dot_dimension_numbers<[1], [0], [0], [1], [0, 0, 1, 1], [], []>} : vector<1x32xf32>, vector<32x128xf32>, vector<1x128xf32> -> vector<1x128xf32>
    %c0_62 = arith.constant 0 : index
    %c0_63 = arith.constant 0 : index
    %129 = vector.load %arg12[%c0_62, %c0_63] : memref<1x128xf32, #tpu.memory_space<vmem>>, vector<1x128xf32>
    %130 = arith.addf %128, %129 : vector<1x128xf32>
    %cst_64 = arith.constant dense<0xFF800000> : vector<1xf32>
    %131 = vector.multi_reduction <maximumf>, %130, %cst_64 [1] : vector<1x128xf32> to vector<1xf32>
    %132 = vector.shape_cast %131 : vector<1xf32> to vector<1x1xf32>
    %133 = vector.broadcast %132 : vector<1x1xf32> to vector<1x128xf32>
    %134 = arith.subf %130, %133 : vector<1x128xf32>
    %135 = math.exp %134 : vector<1x128xf32>
    %cst_65 = arith.constant dense<0.000000e+00> : vector<1xf32>
    %136 = vector.multi_reduction <add>, %135, %cst_65 [1] : vector<1x128xf32> to vector<1xf32>
    %137 = vector.shape_cast %136 : vector<1xf32> to vector<1x1xf32>
    %138 = vector.broadcast %132 : vector<1x1xf32> to vector<1x128xf32>
    %139 = arith.subf %130, %138 : vector<1x128xf32>
    %140 = math.log %137 : vector<1x1xf32>
    %141 = vector.broadcast %140 : vector<1x1xf32> to vector<1x128xf32>
    %142 = arith.subf %139, %141 : vector<1x128xf32>
    %c1_i32_66 = arith.constant 1 : i32
    %143 = arith.muli %c0_i32_27, %c1_i32_66 : i32
    %144 = arith.index_cast %143 : i32 to index
    %c0_67 = arith.constant 0 : index
    %145 = vector.load %arg13[%144, %c0_67] : memref<8x128xf32, #tpu.memory_space<vmem>>, vector<1x128xf32>
    tpu.vector_store %arg13[%144, %c0_67], %142 {strides = array<i32>} : memref<8x128xf32, #tpu.memory_space<vmem>>, vector<1x128xf32>,
    %c1_i32_68 = arith.constant 1 : i32
    %c0_69 = arith.constant 0 : index
    %c0_70 = arith.constant 0 : index
    %146 = vector.load %arg16[%c0_69, %c0_70] : memref<1x32xf32, #tpu.memory_space<vmem>>, vector<1x32xf32>
    %c1_i32_71 = arith.constant 1 : i32
    %147 = arith.muli %c1_i32_68, %c1_i32_71 : i32
    %148 = arith.index_cast %147 : i32 to index
    %c0_72 = arith.constant 0 : index
    %149 = vector.load %arg18[%148, %c0_72] : memref<8x384xf32, #tpu.memory_space<vmem>>, vector<1x384xf32>
    %c0_73 = arith.constant 0 : index
    %c0_74 = arith.constant 0 : index
    %150 = vector.load %arg6[%c0_73, %c0_74] : memref<32x384xf32, #tpu.memory_space<vmem>>, vector<32x384xf32>
    %cst_75 = arith.constant dense<0.000000e+00> : vector<1x384xf32>
    %151 = tpu.matmul %146, %150, %cst_75 {dimension_numbers = #tpu.dot_dimension_numbers<[1], [0], [0], [1], [0, 0, 1, 1], [], []>} : vector<1x32xf32>, vector<32x384xf32>, vector<1x384xf32> -> vector<1x384xf32>
    %c0_76 = arith.constant 0 : index
    %c0_77 = arith.constant 0 : index
    %152 = vector.load %arg7[%c0_76, %c0_77] : memref<1x384xf32, #tpu.memory_space<vmem>>, vector<1x384xf32>
    %153 = arith.addf %151, %152 : vector<1x384xf32>
    %154 = vector.extract_strided_slice %149 {offsets = [0, 0], sizes = [1, 256], strides = [1, 1]} : vector<1x384xf32> to vector<1x256xf32>
    %155 = vector.extract_strided_slice %153 {offsets = [0, 0], sizes = [1, 256], strides = [1, 1]} : vector<1x384xf32> to vector<1x256xf32>
    %156 = arith.addf %154, %155 : vector<1x256xf32>
    %cst_78 = arith.constant dense<0xFF800000> : vector<1xf32>
    %157 = vector.multi_reduction <maximumf>, %156, %cst_78 [1] : vector<1x256xf32> to vector<1xf32>
    %158 = vector.shape_cast %157 : vector<1xf32> to vector<1x1xf32>
    %159 = vector.broadcast %158 : vector<1x1xf32> to vector<1x256xf32>
    %160 = arith.subf %156, %159 : vector<1x256xf32>
    %161 = math.exp %160 : vector<1x256xf32>
    %cst_79 = arith.constant dense<0.000000e+00> : vector<1xf32>
    %162 = vector.multi_reduction <add>, %161, %cst_79 [1] : vector<1x256xf32> to vector<1xf32>
    %163 = vector.shape_cast %162 : vector<1xf32> to vector<1x1xf32>
    %c0_80 = arith.constant 0 : index
    %c0_81 = arith.constant 0 : index
    %164 = vector.load %arg3[%c0_80, %c0_81] : memref<256x32xf32, #tpu.memory_space<vmem>>, vector<256x32xf32>
    %cst_82 = arith.constant dense<0.000000e+00> : vector<1x32xf32>
    %165 = tpu.matmul %161, %164, %cst_82 {dimension_numbers = #tpu.dot_dimension_numbers<[1], [0], [0], [1], [0, 0, 1, 1], [], []>} : vector<1x256xf32>, vector<256x32xf32>, vector<1x32xf32> -> vector<1x32xf32>
    %166 = tpu.reciprocal %163 {approx = true} : vector<1x1xf32> -> vector<1x1xf32>
    %167 = arith.mulf %163, %166 : vector<1x1xf32>
    %cst_83 = arith.constant 2.000000e+00 : f32
    %168 = vector.broadcast %cst_83 : f32 to vector<1x1xf32>
    %169 = arith.subf %168, %167 : vector<1x1xf32>
    %170 = arith.mulf %166, %169 : vector<1x1xf32>
    %171 = vector.broadcast %170 : vector<1x1xf32> to vector<1x32xf32>
    %172 = arith.mulf %165, %171 : vector<1x32xf32>
    %173 = vector.extract_strided_slice %149 {offsets = [0, 256], sizes = [1, 32], strides = [1, 1]} : vector<1x384xf32> to vector<1x32xf32>
    %c0_84 = arith.constant 0 : index
    %c0_85 = arith.constant 0 : index
    %174 = vector.load %arg8[%c0_84, %c0_85] : memref<32x32xf32, #tpu.memory_space<vmem>>, vector<32x32xf32>
    %cst_86 = arith.constant dense<0.000000e+00> : vector<1x32xf32>
    %175 = tpu.matmul %172, %174, %cst_86 {dimension_numbers = #tpu.dot_dimension_numbers<[1], [0], [0], [1], [0, 0, 1, 1], [], []>} : vector<1x32xf32>, vector<32x32xf32>, vector<1x32xf32> -> vector<1x32xf32>
    %176 = arith.addf %173, %175 : vector<1x32xf32>
    %cst_87 = arith.constant 0.000000e+00 : f32
    %177 = vector.broadcast %cst_87 : f32 to vector<1x32xf32>
    %178 = arith.maximumf %176, %177 : vector<1x32xf32>
    %c0_88 = arith.constant 0 : index
    %c0_89 = arith.constant 0 : index
    %179 = vector.load %arg9[%c0_88, %c0_89] : memref<32x128xf32, #tpu.memory_space<vmem>>, vector<32x128xf32>
    %cst_90 = arith.constant dense<0.000000e+00> : vector<1x128xf32>
    %180 = tpu.matmul %178, %179, %cst_90 {dimension_numbers = #tpu.dot_dimension_numbers<[1], [0], [0], [1], [0, 0, 1, 1], [], []>} : vector<1x32xf32>, vector<32x128xf32>, vector<1x128xf32> -> vector<1x128xf32>
    %c0_91 = arith.constant 0 : index
    %c0_92 = arith.constant 0 : index
    %181 = vector.load %arg10[%c0_91, %c0_92] : memref<1x128xf32, #tpu.memory_space<vmem>>, vector<1x128xf32>
    %182 = arith.addf %180, %181 : vector<1x128xf32>
    %183 = vector.extract_strided_slice %153 {offsets = [0, 256], sizes = [1, 128], strides = [1, 1]} : vector<1x384xf32> to vector<1x128xf32>
    %184 = vector.extract_strided_slice %182 {offsets = [0, 0], sizes = [1, 32], strides = [1, 1]} : vector<1x128xf32> to vector<1x32xf32>
    %185 = vector.extract_strided_slice %183 {offsets = [0, 0], sizes = [1, 32], strides = [1, 1]} : vector<1x128xf32> to vector<1x32xf32>
    %186 = arith.addf %184, %185 : vector<1x32xf32>
    %187 = arith.negf %186 : vector<1x32xf32>
    %188 = math.exp %187 : vector<1x32xf32>
    %cst_93 = arith.constant 1.000000e+00 : f32
    %189 = vector.broadcast %cst_93 : f32 to vector<1x32xf32>
    %190 = arith.addf %189, %188 : vector<1x32xf32>
    %191 = arith.divf %189, %190 : vector<1x32xf32>
    %192 = vector.extract_strided_slice %182 {offsets = [0, 32], sizes = [1, 32], strides = [1, 1]} : vector<1x128xf32> to vector<1x32xf32>
    %193 = vector.extract_strided_slice %183 {offsets = [0, 32], sizes = [1, 32], strides = [1, 1]} : vector<1x128xf32> to vector<1x32xf32>
    %194 = arith.addf %192, %193 : vector<1x32xf32>
    %195 = arith.negf %194 : vector<1x32xf32>
    %196 = math.exp %195 : vector<1x32xf32>
    %cst_94 = arith.constant 1.000000e+00 : f32
    %197 = vector.broadcast %cst_94 : f32 to vector<1x32xf32>
    %198 = arith.addf %197, %196 : vector<1x32xf32>
    %199 = arith.divf %197, %198 : vector<1x32xf32>
    %200 = vector.extract_strided_slice %182 {offsets = [0, 64], sizes = [1, 32], strides = [1, 1]} : vector<1x128xf32> to vector<1x32xf32>
    %201 = vector.extract_strided_slice %183 {offsets = [0, 64], sizes = [1, 32], strides = [1, 1]} : vector<1x128xf32> to vector<1x32xf32>
    %202 = arith.mulf %191, %201 : vector<1x32xf32>
    %203 = arith.addf %200, %202 : vector<1x32xf32>
    %204 = math.tanh %203 : vector<1x32xf32>
    %cst_95 = arith.constant 1.000000e+00 : f32
    %205 = vector.broadcast %cst_95 : f32 to vector<1x32xf32>
    %206 = arith.subf %205, %199 : vector<1x32xf32>
    %207 = arith.mulf %206, %204 : vector<1x32xf32>
    %208 = arith.mulf %199, %146 : vector<1x32xf32>
    %209 = arith.addf %207, %208 : vector<1x32xf32>
    %c0_96 = arith.constant 0 : index
    %c0_97 = arith.constant 0 : index
    %210 = vector.load %arg16[%c0_96, %c0_97] : memref<1x32xf32, #tpu.memory_space<vmem>>, vector<1x32xf32>
    tpu.vector_store %arg16[%c0_96, %c0_97], %209 {strides = array<i32>} : memref<1x32xf32, #tpu.memory_space<vmem>>, vector<1x32xf32>,
    %211 = vector.broadcast %170 : vector<1x1xf32> to vector<1x256xf32>
    %212 = arith.mulf %161, %211 : vector<1x256xf32>
    %c1_i32_98 = arith.constant 1 : i32
    %213 = arith.muli %c1_i32_68, %c1_i32_98 : i32
    %214 = arith.index_cast %213 : i32 to index
    %c0_99 = arith.constant 0 : index
    %215 = vector.load %arg15[%214, %c0_99] : memref<8x256xf32, #tpu.memory_space<vmem>>, vector<1x256xf32>
    tpu.vector_store %arg15[%214, %c0_99], %212 {strides = array<i32>} : memref<8x256xf32, #tpu.memory_space<vmem>>, vector<1x256xf32>,
    %c0_100 = arith.constant 0 : index
    %c0_101 = arith.constant 0 : index
    %216 = vector.load %arg11[%c0_100, %c0_101] : memref<32x128xf32, #tpu.memory_space<vmem>>, vector<32x128xf32>
    %cst_102 = arith.constant dense<0.000000e+00> : vector<1x128xf32>
    %217 = tpu.matmul %209, %216, %cst_102 {dimension_numbers = #tpu.dot_dimension_numbers<[1], [0], [0], [1], [0, 0, 1, 1], [], []>} : vector<1x32xf32>, vector<32x128xf32>, vector<1x128xf32> -> vector<1x128xf32>
    %c0_103 = arith.constant 0 : index
    %c0_104 = arith.constant 0 : index
    %218 = vector.load %arg12[%c0_103, %c0_104] : memref<1x128xf32, #tpu.memory_space<vmem>>, vector<1x128xf32>
    %219 = arith.addf %217, %218 : vector<1x128xf32>
    %cst_105 = arith.constant dense<0xFF800000> : vector<1xf32>
    %220 = vector.multi_reduction <maximumf>, %219, %cst_105 [1] : vector<1x128xf32> to vector<1xf32>
    %221 = vector.shape_cast %220 : vector<1xf32> to vector<1x1xf32>
    %222 = vector.broadcast %221 : vector<1x1xf32> to vector<1x128xf32>
    %223 = arith.subf %219, %222 : vector<1x128xf32>
    %224 = math.exp %223 : vector<1x128xf32>
    %cst_106 = arith.constant dense<0.000000e+00> : vector<1xf32>
    %225 = vector.multi_reduction <add>, %224, %cst_106 [1] : vector<1x128xf32> to vector<1xf32>
    %226 = vector.shape_cast %225 : vector<1xf32> to vector<1x1xf32>
    %227 = vector.broadcast %221 : vector<1x1xf32> to vector<1x128xf32>
    %228 = arith.subf %219, %227 : vector<1x128xf32>
    %229 = math.log %226 : vector<1x1xf32>
    %230 = vector.broadcast %229 : vector<1x1xf32> to vector<1x128xf32>
    %231 = arith.subf %228, %230 : vector<1x128xf32>
    %c1_i32_107 = arith.constant 1 : i32
    %232 = arith.muli %c1_i32_68, %c1_i32_107 : i32
    %233 = arith.index_cast %232 : i32 to index
    %c0_108 = arith.constant 0 : index
    %234 = vector.load %arg13[%233, %c0_108] : memref<8x128xf32, #tpu.memory_space<vmem>>, vector<1x128xf32>
    tpu.vector_store %arg13[%233, %c0_108], %231 {strides = array<i32>} : memref<8x128xf32, #tpu.memory_space<vmem>>, vector<1x128xf32>,
    %c2_i32_109 = arith.constant 2 : i32
    %c0_110 = arith.constant 0 : index
    %c0_111 = arith.constant 0 : index
    %235 = vector.load %arg16[%c0_110, %c0_111] : memref<1x32xf32, #tpu.memory_space<vmem>>, vector<1x32xf32>
    %c1_i32_112 = arith.constant 1 : i32
    %236 = arith.muli %c2_i32_109, %c1_i32_112 : i32
    %237 = arith.index_cast %236 : i32 to index
    %c0_113 = arith.constant 0 : index
    %238 = vector.load %arg18[%237, %c0_113] : memref<8x384xf32, #tpu.memory_space<vmem>>, vector<1x384xf32>
    %c0_114 = arith.constant 0 : index
    %c0_115 = arith.constant 0 : index
    %239 = vector.load %arg6[%c0_114, %c0_115] : memref<32x384xf32, #tpu.memory_space<vmem>>, vector<32x384xf32>
    %cst_116 = arith.constant dense<0.000000e+00> : vector<1x384xf32>
    %240 = tpu.matmul %235, %239, %cst_116 {dimension_numbers = #tpu.dot_dimension_numbers<[1], [0], [0], [1], [0, 0, 1, 1], [], []>} : vector<1x32xf32>, vector<32x384xf32>, vector<1x384xf32> -> vector<1x384xf32>
    %c0_117 = arith.constant 0 : index
    %c0_118 = arith.constant 0 : index
    %241 = vector.load %arg7[%c0_117, %c0_118] : memref<1x384xf32, #tpu.memory_space<vmem>>, vector<1x384xf32>
    %242 = arith.addf %240, %241 : vector<1x384xf32>
    %243 = vector.extract_strided_slice %238 {offsets = [0, 0], sizes = [1, 256], strides = [1, 1]} : vector<1x384xf32> to vector<1x256xf32>
    %244 = vector.extract_strided_slice %242 {offsets = [0, 0], sizes = [1, 256], strides = [1, 1]} : vector<1x384xf32> to vector<1x256xf32>
    %245 = arith.addf %243, %244 : vector<1x256xf32>
    %cst_119 = arith.constant dense<0xFF800000> : vector<1xf32>
    %246 = vector.multi_reduction <maximumf>, %245, %cst_119 [1] : vector<1x256xf32> to vector<1xf32>
    %247 = vector.shape_cast %246 : vector<1xf32> to vector<1x1xf32>
    %248 = vector.broadcast %247 : vector<1x1xf32> to vector<1x256xf32>
    %249 = arith.subf %245, %248 : vector<1x256xf32>
    %250 = math.exp %249 : vector<1x256xf32>
    %cst_120 = arith.constant dense<0.000000e+00> : vector<1xf32>
    %251 = vector.multi_reduction <add>, %250, %cst_120 [1] : vector<1x256xf32> to vector<1xf32>
    %252 = vector.shape_cast %251 : vector<1xf32> to vector<1x1xf32>
    %c0_121 = arith.constant 0 : index
    %c0_122 = arith.constant 0 : index
    %253 = vector.load %arg3[%c0_121, %c0_122] : memref<256x32xf32, #tpu.memory_space<vmem>>, vector<256x32xf32>
    %cst_123 = arith.constant dense<0.000000e+00> : vector<1x32xf32>
    %254 = tpu.matmul %250, %253, %cst_123 {dimension_numbers = #tpu.dot_dimension_numbers<[1], [0], [0], [1], [0, 0, 1, 1], [], []>} : vector<1x256xf32>, vector<256x32xf32>, vector<1x32xf32> -> vector<1x32xf32>
    %255 = tpu.reciprocal %252 {approx = true} : vector<1x1xf32> -> vector<1x1xf32>
    %256 = arith.mulf %252, %255 : vector<1x1xf32>
    %cst_124 = arith.constant 2.000000e+00 : f32
    %257 = vector.broadcast %cst_124 : f32 to vector<1x1xf32>
    %258 = arith.subf %257, %256 : vector<1x1xf32>
    %259 = arith.mulf %255, %258 : vector<1x1xf32>
    %260 = vector.broadcast %259 : vector<1x1xf32> to vector<1x32xf32>
    %261 = arith.mulf %254, %260 : vector<1x32xf32>
    %262 = vector.extract_strided_slice %238 {offsets = [0, 256], sizes = [1, 32], strides = [1, 1]} : vector<1x384xf32> to vector<1x32xf32>
    %c0_125 = arith.constant 0 : index
    %c0_126 = arith.constant 0 : index
    %263 = vector.load %arg8[%c0_125, %c0_126] : memref<32x32xf32, #tpu.memory_space<vmem>>, vector<32x32xf32>
    %cst_127 = arith.constant dense<0.000000e+00> : vector<1x32xf32>
    %264 = tpu.matmul %261, %263, %cst_127 {dimension_numbers = #tpu.dot_dimension_numbers<[1], [0], [0], [1], [0, 0, 1, 1], [], []>} : vector<1x32xf32>, vector<32x32xf32>, vector<1x32xf32> -> vector<1x32xf32>
    %265 = arith.addf %262, %264 : vector<1x32xf32>
    %cst_128 = arith.constant 0.000000e+00 : f32
    %266 = vector.broadcast %cst_128 : f32 to vector<1x32xf32>
    %267 = arith.maximumf %265, %266 : vector<1x32xf32>
    %c0_129 = arith.constant 0 : index
    %c0_130 = arith.constant 0 : index
    %268 = vector.load %arg9[%c0_129, %c0_130] : memref<32x128xf32, #tpu.memory_space<vmem>>, vector<32x128xf32>
    %cst_131 = arith.constant dense<0.000000e+00> : vector<1x128xf32>
    %269 = tpu.matmul %267, %268, %cst_131 {dimension_numbers = #tpu.dot_dimension_numbers<[1], [0], [0], [1], [0, 0, 1, 1], [], []>} : vector<1x32xf32>, vector<32x128xf32>, vector<1x128xf32> -> vector<1x128xf32>
    %c0_132 = arith.constant 0 : index
    %c0_133 = arith.constant 0 : index
    %270 = vector.load %arg10[%c0_132, %c0_133] : memref<1x128xf32, #tpu.memory_space<vmem>>, vector<1x128xf32>
    %271 = arith.addf %269, %270 : vector<1x128xf32>
    %272 = vector.extract_strided_slice %242 {offsets = [0, 256], sizes = [1, 128], strides = [1, 1]} : vector<1x384xf32> to vector<1x128xf32>
    %273 = vector.extract_strided_slice %271 {offsets = [0, 0], sizes = [1, 32], strides = [1, 1]} : vector<1x128xf32> to vector<1x32xf32>
    %274 = vector.extract_strided_slice %272 {offsets = [0, 0], sizes = [1, 32], strides = [1, 1]} : vector<1x128xf32> to vector<1x32xf32>
    %275 = arith.addf %273, %274 : vector<1x32xf32>
    %276 = arith.negf %275 : vector<1x32xf32>
    %277 = math.exp %276 : vector<1x32xf32>
    %cst_134 = arith.constant 1.000000e+00 : f32
    %278 = vector.broadcast %cst_134 : f32 to vector<1x32xf32>
    %279 = arith.addf %278, %277 : vector<1x32xf32>
    %280 = arith.divf %278, %279 : vector<1x32xf32>
    %281 = vector.extract_strided_slice %271 {offsets = [0, 32], sizes = [1, 32], strides = [1, 1]} : vector<1x128xf32> to vector<1x32xf32>
    %282 = vector.extract_strided_slice %272 {offsets = [0, 32], sizes = [1, 32], strides = [1, 1]} : vector<1x128xf32> to vector<1x32xf32>
    %283 = arith.addf %281, %282 : vector<1x32xf32>
    %284 = arith.negf %283 : vector<1x32xf32>
    %285 = math.exp %284 : vector<1x32xf32>
    %cst_135 = arith.constant 1.000000e+00 : f32
    %286 = vector.broadcast %cst_135 : f32 to vector<1x32xf32>
    %287 = arith.addf %286, %285 : vector<1x32xf32>
    %288 = arith.divf %286, %287 : vector<1x32xf32>
    %289 = vector.extract_strided_slice %271 {offsets = [0, 64], sizes = [1, 32], strides = [1, 1]} : vector<1x128xf32> to vector<1x32xf32>
    %290 = vector.extract_strided_slice %272 {offsets = [0, 64], sizes = [1, 32], strides = [1, 1]} : vector<1x128xf32> to vector<1x32xf32>
    %291 = arith.mulf %280, %290 : vector<1x32xf32>
    %292 = arith.addf %289, %291 : vector<1x32xf32>
    %293 = math.tanh %292 : vector<1x32xf32>
    %cst_136 = arith.constant 1.000000e+00 : f32
    %294 = vector.broadcast %cst_136 : f32 to vector<1x32xf32>
    %295 = arith.subf %294, %288 : vector<1x32xf32>
    %296 = arith.mulf %295, %293 : vector<1x32xf32>
    %297 = arith.mulf %288, %235 : vector<1x32xf32>
    %298 = arith.addf %296, %297 : vector<1x32xf32>
    %c0_137 = arith.constant 0 : index
    %c0_138 = arith.constant 0 : index
    %299 = vector.load %arg16[%c0_137, %c0_138] : memref<1x32xf32, #tpu.memory_space<vmem>>, vector<1x32xf32>
    tpu.vector_store %arg16[%c0_137, %c0_138], %298 {strides = array<i32>} : memref<1x32xf32, #tpu.memory_space<vmem>>, vector<1x32xf32>,
    %300 = vector.broadcast %259 : vector<1x1xf32> to vector<1x256xf32>
    %301 = arith.mulf %250, %300 : vector<1x256xf32>
    %c1_i32_139 = arith.constant 1 : i32
    %302 = arith.muli %c2_i32_109, %c1_i32_139 : i32
    %303 = arith.index_cast %302 : i32 to index
    %c0_140 = arith.constant 0 : index
    %304 = vector.load %arg15[%303, %c0_140] : memref<8x256xf32, #tpu.memory_space<vmem>>, vector<1x256xf32>
    tpu.vector_store %arg15[%303, %c0_140], %301 {strides = array<i32>} : memref<8x256xf32, #tpu.memory_space<vmem>>, vector<1x256xf32>,
    %c0_141 = arith.constant 0 : index
    %c0_142 = arith.constant 0 : index
    %305 = vector.load %arg11[%c0_141, %c0_142] : memref<32x128xf32, #tpu.memory_space<vmem>>, vector<32x128xf32>
    %cst_143 = arith.constant dense<0.000000e+00> : vector<1x128xf32>
    %306 = tpu.matmul %298, %305, %cst_143 {dimension_numbers = #tpu.dot_dimension_numbers<[1], [0], [0], [1], [0, 0, 1, 1], [], []>} : vector<1x32xf32>, vector<32x128xf32>, vector<1x128xf32> -> vector<1x128xf32>
    %c0_144 = arith.constant 0 : index
    %c0_145 = arith.constant 0 : index
    %307 = vector.load %arg12[%c0_144, %c0_145] : memref<1x128xf32, #tpu.memory_space<vmem>>, vector<1x128xf32>
    %308 = arith.addf %306, %307 : vector<1x128xf32>
    %cst_146 = arith.constant dense<0xFF800000> : vector<1xf32>
    %309 = vector.multi_reduction <maximumf>, %308, %cst_146 [1] : vector<1x128xf32> to vector<1xf32>
    %310 = vector.shape_cast %309 : vector<1xf32> to vector<1x1xf32>
    %311 = vector.broadcast %310 : vector<1x1xf32> to vector<1x128xf32>
    %312 = arith.subf %308, %311 : vector<1x128xf32>
    %313 = math.exp %312 : vector<1x128xf32>
    %cst_147 = arith.constant dense<0.000000e+00> : vector<1xf32>
    %314 = vector.multi_reduction <add>, %313, %cst_147 [1] : vector<1x128xf32> to vector<1xf32>
    %315 = vector.shape_cast %314 : vector<1xf32> to vector<1x1xf32>
    %316 = vector.broadcast %310 : vector<1x1xf32> to vector<1x128xf32>
    %317 = arith.subf %308, %316 : vector<1x128xf32>
    %318 = math.log %315 : vector<1x1xf32>
    %319 = vector.broadcast %318 : vector<1x1xf32> to vector<1x128xf32>
    %320 = arith.subf %317, %319 : vector<1x128xf32>
    %c1_i32_148 = arith.constant 1 : i32
    %321 = arith.muli %c2_i32_109, %c1_i32_148 : i32
    %322 = arith.index_cast %321 : i32 to index
    %c0_149 = arith.constant 0 : index
    %323 = vector.load %arg13[%322, %c0_149] : memref<8x128xf32, #tpu.memory_space<vmem>>, vector<1x128xf32>
    tpu.vector_store %arg13[%322, %c0_149], %320 {strides = array<i32>} : memref<8x128xf32, #tpu.memory_space<vmem>>, vector<1x128xf32>,
    %c3_i32_150 = arith.constant 3 : i32
    %c0_151 = arith.constant 0 : index
    %c0_152 = arith.constant 0 : index
    %324 = vector.load %arg16[%c0_151, %c0_152] : memref<1x32xf32, #tpu.memory_space<vmem>>, vector<1x32xf32>
    %c1_i32_153 = arith.constant 1 : i32
    %325 = arith.muli %c3_i32_150, %c1_i32_153 : i32
    %326 = arith.index_cast %325 : i32 to index
    %c0_154 = arith.constant 0 : index
    %327 = vector.load %arg18[%326, %c0_154] : memref<8x384xf32, #tpu.memory_space<vmem>>, vector<1x384xf32>
    %c0_155 = arith.constant 0 : index
    %c0_156 = arith.constant 0 : index
    %328 = vector.load %arg6[%c0_155, %c0_156] : memref<32x384xf32, #tpu.memory_space<vmem>>, vector<32x384xf32>
    %cst_157 = arith.constant dense<0.000000e+00> : vector<1x384xf32>
    %329 = tpu.matmul %324, %328, %cst_157 {dimension_numbers = #tpu.dot_dimension_numbers<[1], [0], [0], [1], [0, 0, 1, 1], [], []>} : vector<1x32xf32>, vector<32x384xf32>, vector<1x384xf32> -> vector<1x384xf32>
    %c0_158 = arith.constant 0 : index
    %c0_159 = arith.constant 0 : index
    %330 = vector.load %arg7[%c0_158, %c0_159] : memref<1x384xf32, #tpu.memory_space<vmem>>, vector<1x384xf32>
    %331 = arith.addf %329, %330 : vector<1x384xf32>
    %332 = vector.extract_strided_slice %327 {offsets = [0, 0], sizes = [1, 256], strides = [1, 1]} : vector<1x384xf32> to vector<1x256xf32>
    %333 = vector.extract_strided_slice %331 {offsets = [0, 0], sizes = [1, 256], strides = [1, 1]} : vector<1x384xf32> to vector<1x256xf32>
    %334 = arith.addf %332, %333 : vector<1x256xf32>
    %cst_160 = arith.constant dense<0xFF800000> : vector<1xf32>
    %335 = vector.multi_reduction <maximumf>, %334, %cst_160 [1] : vector<1x256xf32> to vector<1xf32>
    %336 = vector.shape_cast %335 : vector<1xf32> to vector<1x1xf32>
    %337 = vector.broadcast %336 : vector<1x1xf32> to vector<1x256xf32>
    %338 = arith.subf %334, %337 : vector<1x256xf32>
    %339 = math.exp %338 : vector<1x256xf32>
    %cst_161 = arith.constant dense<0.000000e+00> : vector<1xf32>
    %340 = vector.multi_reduction <add>, %339, %cst_161 [1] : vector<1x256xf32> to vector<1xf32>
    %341 = vector.shape_cast %340 : vector<1xf32> to vector<1x1xf32>
    %c0_162 = arith.constant 0 : index
    %c0_163 = arith.constant 0 : index
    %342 = vector.load %arg3[%c0_162, %c0_163] : memref<256x32xf32, #tpu.memory_space<vmem>>, vector<256x32xf32>
    %cst_164 = arith.constant dense<0.000000e+00> : vector<1x32xf32>
    %343 = tpu.matmul %339, %342, %cst_164 {dimension_numbers = #tpu.dot_dimension_numbers<[1], [0], [0], [1], [0, 0, 1, 1], [], []>} : vector<1x256xf32>, vector<256x32xf32>, vector<1x32xf32> -> vector<1x32xf32>
    %344 = tpu.reciprocal %341 {approx = true} : vector<1x1xf32> -> vector<1x1xf32>
    %345 = arith.mulf %341, %344 : vector<1x1xf32>
    %cst_165 = arith.constant 2.000000e+00 : f32
    %346 = vector.broadcast %cst_165 : f32 to vector<1x1xf32>
    %347 = arith.subf %346, %345 : vector<1x1xf32>
    %348 = arith.mulf %344, %347 : vector<1x1xf32>
    %349 = vector.broadcast %348 : vector<1x1xf32> to vector<1x32xf32>
    %350 = arith.mulf %343, %349 : vector<1x32xf32>
    %351 = vector.extract_strided_slice %327 {offsets = [0, 256], sizes = [1, 32], strides = [1, 1]} : vector<1x384xf32> to vector<1x32xf32>
    %c0_166 = arith.constant 0 : index
    %c0_167 = arith.constant 0 : index
    %352 = vector.load %arg8[%c0_166, %c0_167] : memref<32x32xf32, #tpu.memory_space<vmem>>, vector<32x32xf32>
    %cst_168 = arith.constant dense<0.000000e+00> : vector<1x32xf32>
    %353 = tpu.matmul %350, %352, %cst_168 {dimension_numbers = #tpu.dot_dimension_numbers<[1], [0], [0], [1], [0, 0, 1, 1], [], []>} : vector<1x32xf32>, vector<32x32xf32>, vector<1x32xf32> -> vector<1x32xf32>
    %354 = arith.addf %351, %353 : vector<1x32xf32>
    %cst_169 = arith.constant 0.000000e+00 : f32
    %355 = vector.broadcast %cst_169 : f32 to vector<1x32xf32>
    %356 = arith.maximumf %354, %355 : vector<1x32xf32>
    %c0_170 = arith.constant 0 : index
    %c0_171 = arith.constant 0 : index
    %357 = vector.load %arg9[%c0_170, %c0_171] : memref<32x128xf32, #tpu.memory_space<vmem>>, vector<32x128xf32>
    %cst_172 = arith.constant dense<0.000000e+00> : vector<1x128xf32>
    %358 = tpu.matmul %356, %357, %cst_172 {dimension_numbers = #tpu.dot_dimension_numbers<[1], [0], [0], [1], [0, 0, 1, 1], [], []>} : vector<1x32xf32>, vector<32x128xf32>, vector<1x128xf32> -> vector<1x128xf32>
    %c0_173 = arith.constant 0 : index
    %c0_174 = arith.constant 0 : index
    %359 = vector.load %arg10[%c0_173, %c0_174] : memref<1x128xf32, #tpu.memory_space<vmem>>, vector<1x128xf32>
    %360 = arith.addf %358, %359 : vector<1x128xf32>
    %361 = vector.extract_strided_slice %331 {offsets = [0, 256], sizes = [1, 128], strides = [1, 1]} : vector<1x384xf32> to vector<1x128xf32>
    %362 = vector.extract_strided_slice %360 {offsets = [0, 0], sizes = [1, 32], strides = [1, 1]} : vector<1x128xf32> to vector<1x32xf32>
    %363 = vector.extract_strided_slice %361 {offsets = [0, 0], sizes = [1, 32], strides = [1, 1]} : vector<1x128xf32> to vector<1x32xf32>
    %364 = arith.addf %362, %363 : vector<1x32xf32>
    %365 = arith.negf %364 : vector<1x32xf32>
    %366 = math.exp %365 : vector<1x32xf32>
    %cst_175 = arith.constant 1.000000e+00 : f32
    %367 = vector.broadcast %cst_175 : f32 to vector<1x32xf32>
    %368 = arith.addf %367, %366 : vector<1x32xf32>
    %369 = arith.divf %367, %368 : vector<1x32xf32>
    %370 = vector.extract_strided_slice %360 {offsets = [0, 32], sizes = [1, 32], strides = [1, 1]} : vector<1x128xf32> to vector<1x32xf32>
    %371 = vector.extract_strided_slice %361 {offsets = [0, 32], sizes = [1, 32], strides = [1, 1]} : vector<1x128xf32> to vector<1x32xf32>
    %372 = arith.addf %370, %371 : vector<1x32xf32>
    %373 = arith.negf %372 : vector<1x32xf32>
    %374 = math.exp %373 : vector<1x32xf32>
    %cst_176 = arith.constant 1.000000e+00 : f32
    %375 = vector.broadcast %cst_176 : f32 to vector<1x32xf32>
    %376 = arith.addf %375, %374 : vector<1x32xf32>
    %377 = arith.divf %375, %376 : vector<1x32xf32>
    %378 = vector.extract_strided_slice %360 {offsets = [0, 64], sizes = [1, 32], strides = [1, 1]} : vector<1x128xf32> to vector<1x32xf32>
    %379 = vector.extract_strided_slice %361 {offsets = [0, 64], sizes = [1, 32], strides = [1, 1]} : vector<1x128xf32> to vector<1x32xf32>
    %380 = arith.mulf %369, %379 : vector<1x32xf32>
    %381 = arith.addf %378, %380 : vector<1x32xf32>
    %382 = math.tanh %381 : vector<1x32xf32>
    %cst_177 = arith.constant 1.000000e+00 : f32
    %383 = vector.broadcast %cst_177 : f32 to vector<1x32xf32>
    %384 = arith.subf %383, %377 : vector<1x32xf32>
    %385 = arith.mulf %384, %382 : vector<1x32xf32>
    %386 = arith.mulf %377, %324 : vector<1x32xf32>
    %387 = arith.addf %385, %386 : vector<1x32xf32>
    %c0_178 = arith.constant 0 : index
    %c0_179 = arith.constant 0 : index
    %388 = vector.load %arg16[%c0_178, %c0_179] : memref<1x32xf32, #tpu.memory_space<vmem>>, vector<1x32xf32>
    tpu.vector_store %arg16[%c0_178, %c0_179], %387 {strides = array<i32>} : memref<1x32xf32, #tpu.memory_space<vmem>>, vector<1x32xf32>,
    %389 = vector.broadcast %348 : vector<1x1xf32> to vector<1x256xf32>
    %390 = arith.mulf %339, %389 : vector<1x256xf32>
    %c1_i32_180 = arith.constant 1 : i32
    %391 = arith.muli %c3_i32_150, %c1_i32_180 : i32
    %392 = arith.index_cast %391 : i32 to index
    %c0_181 = arith.constant 0 : index
    %393 = vector.load %arg15[%392, %c0_181] : memref<8x256xf32, #tpu.memory_space<vmem>>, vector<1x256xf32>
    tpu.vector_store %arg15[%392, %c0_181], %390 {strides = array<i32>} : memref<8x256xf32, #tpu.memory_space<vmem>>, vector<1x256xf32>,
    %c0_182 = arith.constant 0 : index
    %c0_183 = arith.constant 0 : index
    %394 = vector.load %arg11[%c0_182, %c0_183] : memref<32x128xf32, #tpu.memory_space<vmem>>, vector<32x128xf32>
    %cst_184 = arith.constant dense<0.000000e+00> : vector<1x128xf32>
    %395 = tpu.matmul %387, %394, %cst_184 {dimension_numbers = #tpu.dot_dimension_numbers<[1], [0], [0], [1], [0, 0, 1, 1], [], []>} : vector<1x32xf32>, vector<32x128xf32>, vector<1x128xf32> -> vector<1x128xf32>
    %c0_185 = arith.constant 0 : index
    %c0_186 = arith.constant 0 : index
    %396 = vector.load %arg12[%c0_185, %c0_186] : memref<1x128xf32, #tpu.memory_space<vmem>>, vector<1x128xf32>
    %397 = arith.addf %395, %396 : vector<1x128xf32>
    %cst_187 = arith.constant dense<0xFF800000> : vector<1xf32>
    %398 = vector.multi_reduction <maximumf>, %397, %cst_187 [1] : vector<1x128xf32> to vector<1xf32>
    %399 = vector.shape_cast %398 : vector<1xf32> to vector<1x1xf32>
    %400 = vector.broadcast %399 : vector<1x1xf32> to vector<1x128xf32>
    %401 = arith.subf %397, %400 : vector<1x128xf32>
    %402 = math.exp %401 : vector<1x128xf32>
    %cst_188 = arith.constant dense<0.000000e+00> : vector<1xf32>
    %403 = vector.multi_reduction <add>, %402, %cst_188 [1] : vector<1x128xf32> to vector<1xf32>
    %404 = vector.shape_cast %403 : vector<1xf32> to vector<1x1xf32>
    %405 = vector.broadcast %399 : vector<1x1xf32> to vector<1x128xf32>
    %406 = arith.subf %397, %405 : vector<1x128xf32>
    %407 = math.log %404 : vector<1x1xf32>
    %408 = vector.broadcast %407 : vector<1x1xf32> to vector<1x128xf32>
    %409 = arith.subf %406, %408 : vector<1x128xf32>
    %c1_i32_189 = arith.constant 1 : i32
    %410 = arith.muli %c3_i32_150, %c1_i32_189 : i32
    %411 = arith.index_cast %410 : i32 to index
    %c0_190 = arith.constant 0 : index
    %412 = vector.load %arg13[%411, %c0_190] : memref<8x128xf32, #tpu.memory_space<vmem>>, vector<1x128xf32>
    tpu.vector_store %arg13[%411, %c0_190], %409 {strides = array<i32>} : memref<8x128xf32, #tpu.memory_space<vmem>>, vector<1x128xf32>,
    %c4_i32_191 = arith.constant 4 : i32
    %c0_192 = arith.constant 0 : index
    %c0_193 = arith.constant 0 : index
    %413 = vector.load %arg16[%c0_192, %c0_193] : memref<1x32xf32, #tpu.memory_space<vmem>>, vector<1x32xf32>
    %c1_i32_194 = arith.constant 1 : i32
    %414 = arith.muli %c4_i32_191, %c1_i32_194 : i32
    %415 = arith.index_cast %414 : i32 to index
    %c0_195 = arith.constant 0 : index
    %416 = vector.load %arg18[%415, %c0_195] : memref<8x384xf32, #tpu.memory_space<vmem>>, vector<1x384xf32>
    %c0_196 = arith.constant 0 : index
    %c0_197 = arith.constant 0 : index
    %417 = vector.load %arg6[%c0_196, %c0_197] : memref<32x384xf32, #tpu.memory_space<vmem>>, vector<32x384xf32>
    %cst_198 = arith.constant dense<0.000000e+00> : vector<1x384xf32>
    %418 = tpu.matmul %413, %417, %cst_198 {dimension_numbers = #tpu.dot_dimension_numbers<[1], [0], [0], [1], [0, 0, 1, 1], [], []>} : vector<1x32xf32>, vector<32x384xf32>, vector<1x384xf32> -> vector<1x384xf32>
    %c0_199 = arith.constant 0 : index
    %c0_200 = arith.constant 0 : index
    %419 = vector.load %arg7[%c0_199, %c0_200] : memref<1x384xf32, #tpu.memory_space<vmem>>, vector<1x384xf32>
    %420 = arith.addf %418, %419 : vector<1x384xf32>
    %421 = vector.extract_strided_slice %416 {offsets = [0, 0], sizes = [1, 256], strides = [1, 1]} : vector<1x384xf32> to vector<1x256xf32>
    %422 = vector.extract_strided_slice %420 {offsets = [0, 0], sizes = [1, 256], strides = [1, 1]} : vector<1x384xf32> to vector<1x256xf32>
    %423 = arith.addf %421, %422 : vector<1x256xf32>
    %cst_201 = arith.constant dense<0xFF800000> : vector<1xf32>
    %424 = vector.multi_reduction <maximumf>, %423, %cst_201 [1] : vector<1x256xf32> to vector<1xf32>
    %425 = vector.shape_cast %424 : vector<1xf32> to vector<1x1xf32>
    %426 = vector.broadcast %425 : vector<1x1xf32> to vector<1x256xf32>
    %427 = arith.subf %423, %426 : vector<1x256xf32>
    %428 = math.exp %427 : vector<1x256xf32>
    %cst_202 = arith.constant dense<0.000000e+00> : vector<1xf32>
    %429 = vector.multi_reduction <add>, %428, %cst_202 [1] : vector<1x256xf32> to vector<1xf32>
    %430 = vector.shape_cast %429 : vector<1xf32> to vector<1x1xf32>
    %c0_203 = arith.constant 0 : index
    %c0_204 = arith.constant 0 : index
    %431 = vector.load %arg3[%c0_203, %c0_204] : memref<256x32xf32, #tpu.memory_space<vmem>>, vector<256x32xf32>
    %cst_205 = arith.constant dense<0.000000e+00> : vector<1x32xf32>
    %432 = tpu.matmul %428, %431, %cst_205 {dimension_numbers = #tpu.dot_dimension_numbers<[1], [0], [0], [1], [0, 0, 1, 1], [], []>} : vector<1x256xf32>, vector<256x32xf32>, vector<1x32xf32> -> vector<1x32xf32>
    %433 = tpu.reciprocal %430 {approx = true} : vector<1x1xf32> -> vector<1x1xf32>
    %434 = arith.mulf %430, %433 : vector<1x1xf32>
    %cst_206 = arith.constant 2.000000e+00 : f32
    %435 = vector.broadcast %cst_206 : f32 to vector<1x1xf32>
    %436 = arith.subf %435, %434 : vector<1x1xf32>
    %437 = arith.mulf %433, %436 : vector<1x1xf32>
    %438 = vector.broadcast %437 : vector<1x1xf32> to vector<1x32xf32>
    %439 = arith.mulf %432, %438 : vector<1x32xf32>
    %440 = vector.extract_strided_slice %416 {offsets = [0, 256], sizes = [1, 32], strides = [1, 1]} : vector<1x384xf32> to vector<1x32xf32>
    %c0_207 = arith.constant 0 : index
    %c0_208 = arith.constant 0 : index
    %441 = vector.load %arg8[%c0_207, %c0_208] : memref<32x32xf32, #tpu.memory_space<vmem>>, vector<32x32xf32>
    %cst_209 = arith.constant dense<0.000000e+00> : vector<1x32xf32>
    %442 = tpu.matmul %439, %441, %cst_209 {dimension_numbers = #tpu.dot_dimension_numbers<[1], [0], [0], [1], [0, 0, 1, 1], [], []>} : vector<1x32xf32>, vector<32x32xf32>, vector<1x32xf32> -> vector<1x32xf32>
    %443 = arith.addf %440, %442 : vector<1x32xf32>
    %cst_210 = arith.constant 0.000000e+00 : f32
    %444 = vector.broadcast %cst_210 : f32 to vector<1x32xf32>
    %445 = arith.maximumf %443, %444 : vector<1x32xf32>
    %c0_211 = arith.constant 0 : index
    %c0_212 = arith.constant 0 : index
    %446 = vector.load %arg9[%c0_211, %c0_212] : memref<32x128xf32, #tpu.memory_space<vmem>>, vector<32x128xf32>
    %cst_213 = arith.constant dense<0.000000e+00> : vector<1x128xf32>
    %447 = tpu.matmul %445, %446, %cst_213 {dimension_numbers = #tpu.dot_dimension_numbers<[1], [0], [0], [1], [0, 0, 1, 1], [], []>} : vector<1x32xf32>, vector<32x128xf32>, vector<1x128xf32> -> vector<1x128xf32>
    %c0_214 = arith.constant 0 : index
    %c0_215 = arith.constant 0 : index
    %448 = vector.load %arg10[%c0_214, %c0_215] : memref<1x128xf32, #tpu.memory_space<vmem>>, vector<1x128xf32>
    %449 = arith.addf %447, %448 : vector<1x128xf32>
    %450 = vector.extract_strided_slice %420 {offsets = [0, 256], sizes = [1, 128], strides = [1, 1]} : vector<1x384xf32> to vector<1x128xf32>
    %451 = vector.extract_strided_slice %449 {offsets = [0, 0], sizes = [1, 32], strides = [1, 1]} : vector<1x128xf32> to vector<1x32xf32>
    %452 = vector.extract_strided_slice %450 {offsets = [0, 0], sizes = [1, 32], strides = [1, 1]} : vector<1x128xf32> to vector<1x32xf32>
    %453 = arith.addf %451, %452 : vector<1x32xf32>
    %454 = arith.negf %453 : vector<1x32xf32>
    %455 = math.exp %454 : vector<1x32xf32>
    %cst_216 = arith.constant 1.000000e+00 : f32
    %456 = vector.broadcast %cst_216 : f32 to vector<1x32xf32>
    %457 = arith.addf %456, %455 : vector<1x32xf32>
    %458 = arith.divf %456, %457 : vector<1x32xf32>
    %459 = vector.extract_strided_slice %449 {offsets = [0, 32], sizes = [1, 32], strides = [1, 1]} : vector<1x128xf32> to vector<1x32xf32>
    %460 = vector.extract_strided_slice %450 {offsets = [0, 32], sizes = [1, 32], strides = [1, 1]} : vector<1x128xf32> to vector<1x32xf32>
    %461 = arith.addf %459, %460 : vector<1x32xf32>
    %462 = arith.negf %461 : vector<1x32xf32>
    %463 = math.exp %462 : vector<1x32xf32>
    %cst_217 = arith.constant 1.000000e+00 : f32
    %464 = vector.broadcast %cst_217 : f32 to vector<1x32xf32>
    %465 = arith.addf %464, %463 : vector<1x32xf32>
    %466 = arith.divf %464, %465 : vector<1x32xf32>
    %467 = vector.extract_strided_slice %449 {offsets = [0, 64], sizes = [1, 32], strides = [1, 1]} : vector<1x128xf32> to vector<1x32xf32>
    %468 = vector.extract_strided_slice %450 {offsets = [0, 64], sizes = [1, 32], strides = [1, 1]} : vector<1x128xf32> to vector<1x32xf32>
    %469 = arith.mulf %458, %468 : vector<1x32xf32>
    %470 = arith.addf %467, %469 : vector<1x32xf32>
    %471 = math.tanh %470 : vector<1x32xf32>
    %cst_218 = arith.constant 1.000000e+00 : f32
    %472 = vector.broadcast %cst_218 : f32 to vector<1x32xf32>
    %473 = arith.subf %472, %466 : vector<1x32xf32>
    %474 = arith.mulf %473, %471 : vector<1x32xf32>
    %475 = arith.mulf %466, %413 : vector<1x32xf32>
    %476 = arith.addf %474, %475 : vector<1x32xf32>
    %c0_219 = arith.constant 0 : index
    %c0_220 = arith.constant 0 : index
    %477 = vector.load %arg16[%c0_219, %c0_220] : memref<1x32xf32, #tpu.memory_space<vmem>>, vector<1x32xf32>
    tpu.vector_store %arg16[%c0_219, %c0_220], %476 {strides = array<i32>} : memref<1x32xf32, #tpu.memory_space<vmem>>, vector<1x32xf32>,
    %478 = vector.broadcast %437 : vector<1x1xf32> to vector<1x256xf32>
    %479 = arith.mulf %428, %478 : vector<1x256xf32>
    %c1_i32_221 = arith.constant 1 : i32
    %480 = arith.muli %c4_i32_191, %c1_i32_221 : i32
    %481 = arith.index_cast %480 : i32 to index
    %c0_222 = arith.constant 0 : index
    %482 = vector.load %arg15[%481, %c0_222] : memref<8x256xf32, #tpu.memory_space<vmem>>, vector<1x256xf32>
    tpu.vector_store %arg15[%481, %c0_222], %479 {strides = array<i32>} : memref<8x256xf32, #tpu.memory_space<vmem>>, vector<1x256xf32>,
    %c0_223 = arith.constant 0 : index
    %c0_224 = arith.constant 0 : index
    %483 = vector.load %arg11[%c0_223, %c0_224] : memref<32x128xf32, #tpu.memory_space<vmem>>, vector<32x128xf32>
    %cst_225 = arith.constant dense<0.000000e+00> : vector<1x128xf32>
    %484 = tpu.matmul %476, %483, %cst_225 {dimension_numbers = #tpu.dot_dimension_numbers<[1], [0], [0], [1], [0, 0, 1, 1], [], []>} : vector<1x32xf32>, vector<32x128xf32>, vector<1x128xf32> -> vector<1x128xf32>
    %c0_226 = arith.constant 0 : index
    %c0_227 = arith.constant 0 : index
    %485 = vector.load %arg12[%c0_226, %c0_227] : memref<1x128xf32, #tpu.memory_space<vmem>>, vector<1x128xf32>
    %486 = arith.addf %484, %485 : vector<1x128xf32>
    %cst_228 = arith.constant dense<0xFF800000> : vector<1xf32>
    %487 = vector.multi_reduction <maximumf>, %486, %cst_228 [1] : vector<1x128xf32> to vector<1xf32>
    %488 = vector.shape_cast %487 : vector<1xf32> to vector<1x1xf32>
    %489 = vector.broadcast %488 : vector<1x1xf32> to vector<1x128xf32>
    %490 = arith.subf %486, %489 : vector<1x128xf32>
    %491 = math.exp %490 : vector<1x128xf32>
    %cst_229 = arith.constant dense<0.000000e+00> : vector<1xf32>
    %492 = vector.multi_reduction <add>, %491, %cst_229 [1] : vector<1x128xf32> to vector<1xf32>
    %493 = vector.shape_cast %492 : vector<1xf32> to vector<1x1xf32>
    %494 = vector.broadcast %488 : vector<1x1xf32> to vector<1x128xf32>
    %495 = arith.subf %486, %494 : vector<1x128xf32>
    %496 = math.log %493 : vector<1x1xf32>
    %497 = vector.broadcast %496 : vector<1x1xf32> to vector<1x128xf32>
    %498 = arith.subf %495, %497 : vector<1x128xf32>
    %c1_i32_230 = arith.constant 1 : i32
    %499 = arith.muli %c4_i32_191, %c1_i32_230 : i32
    %500 = arith.index_cast %499 : i32 to index
    %c0_231 = arith.constant 0 : index
    %501 = vector.load %arg13[%500, %c0_231] : memref<8x128xf32, #tpu.memory_space<vmem>>, vector<1x128xf32>
    tpu.vector_store %arg13[%500, %c0_231], %498 {strides = array<i32>} : memref<8x128xf32, #tpu.memory_space<vmem>>, vector<1x128xf32>,
    %c5_i32_232 = arith.constant 5 : i32
    %c0_233 = arith.constant 0 : index
    %c0_234 = arith.constant 0 : index
    %502 = vector.load %arg16[%c0_233, %c0_234] : memref<1x32xf32, #tpu.memory_space<vmem>>, vector<1x32xf32>
    %c1_i32_235 = arith.constant 1 : i32
    %503 = arith.muli %c5_i32_232, %c1_i32_235 : i32
    %504 = arith.index_cast %503 : i32 to index
    %c0_236 = arith.constant 0 : index
    %505 = vector.load %arg18[%504, %c0_236] : memref<8x384xf32, #tpu.memory_space<vmem>>, vector<1x384xf32>
    %c0_237 = arith.constant 0 : index
    %c0_238 = arith.constant 0 : index
    %506 = vector.load %arg6[%c0_237, %c0_238] : memref<32x384xf32, #tpu.memory_space<vmem>>, vector<32x384xf32>
    %cst_239 = arith.constant dense<0.000000e+00> : vector<1x384xf32>
    %507 = tpu.matmul %502, %506, %cst_239 {dimension_numbers = #tpu.dot_dimension_numbers<[1], [0], [0], [1], [0, 0, 1, 1], [], []>} : vector<1x32xf32>, vector<32x384xf32>, vector<1x384xf32> -> vector<1x384xf32>
    %c0_240 = arith.constant 0 : index
    %c0_241 = arith.constant 0 : index
    %508 = vector.load %arg7[%c0_240, %c0_241] : memref<1x384xf32, #tpu.memory_space<vmem>>, vector<1x384xf32>
    %509 = arith.addf %507, %508 : vector<1x384xf32>
    %510 = vector.extract_strided_slice %505 {offsets = [0, 0], sizes = [1, 256], strides = [1, 1]} : vector<1x384xf32> to vector<1x256xf32>
    %511 = vector.extract_strided_slice %509 {offsets = [0, 0], sizes = [1, 256], strides = [1, 1]} : vector<1x384xf32> to vector<1x256xf32>
    %512 = arith.addf %510, %511 : vector<1x256xf32>
    %cst_242 = arith.constant dense<0xFF800000> : vector<1xf32>
    %513 = vector.multi_reduction <maximumf>, %512, %cst_242 [1] : vector<1x256xf32> to vector<1xf32>
    %514 = vector.shape_cast %513 : vector<1xf32> to vector<1x1xf32>
    %515 = vector.broadcast %514 : vector<1x1xf32> to vector<1x256xf32>
    %516 = arith.subf %512, %515 : vector<1x256xf32>
    %517 = math.exp %516 : vector<1x256xf32>
    %cst_243 = arith.constant dense<0.000000e+00> : vector<1xf32>
    %518 = vector.multi_reduction <add>, %517, %cst_243 [1] : vector<1x256xf32> to vector<1xf32>
    %519 = vector.shape_cast %518 : vector<1xf32> to vector<1x1xf32>
    %c0_244 = arith.constant 0 : index
    %c0_245 = arith.constant 0 : index
    %520 = vector.load %arg3[%c0_244, %c0_245] : memref<256x32xf32, #tpu.memory_space<vmem>>, vector<256x32xf32>
    %cst_246 = arith.constant dense<0.000000e+00> : vector<1x32xf32>
    %521 = tpu.matmul %517, %520, %cst_246 {dimension_numbers = #tpu.dot_dimension_numbers<[1], [0], [0], [1], [0, 0, 1, 1], [], []>} : vector<1x256xf32>, vector<256x32xf32>, vector<1x32xf32> -> vector<1x32xf32>
    %522 = tpu.reciprocal %519 {approx = true} : vector<1x1xf32> -> vector<1x1xf32>
    %523 = arith.mulf %519, %522 : vector<1x1xf32>
    %cst_247 = arith.constant 2.000000e+00 : f32
    %524 = vector.broadcast %cst_247 : f32 to vector<1x1xf32>
    %525 = arith.subf %524, %523 : vector<1x1xf32>
    %526 = arith.mulf %522, %525 : vector<1x1xf32>
    %527 = vector.broadcast %526 : vector<1x1xf32> to vector<1x32xf32>
    %528 = arith.mulf %521, %527 : vector<1x32xf32>
    %529 = vector.extract_strided_slice %505 {offsets = [0, 256], sizes = [1, 32], strides = [1, 1]} : vector<1x384xf32> to vector<1x32xf32>
    %c0_248 = arith.constant 0 : index
    %c0_249 = arith.constant 0 : index
    %530 = vector.load %arg8[%c0_248, %c0_249] : memref<32x32xf32, #tpu.memory_space<vmem>>, vector<32x32xf32>
    %cst_250 = arith.constant dense<0.000000e+00> : vector<1x32xf32>
    %531 = tpu.matmul %528, %530, %cst_250 {dimension_numbers = #tpu.dot_dimension_numbers<[1], [0], [0], [1], [0, 0, 1, 1], [], []>} : vector<1x32xf32>, vector<32x32xf32>, vector<1x32xf32> -> vector<1x32xf32>
    %532 = arith.addf %529, %531 : vector<1x32xf32>
    %cst_251 = arith.constant 0.000000e+00 : f32
    %533 = vector.broadcast %cst_251 : f32 to vector<1x32xf32>
    %534 = arith.maximumf %532, %533 : vector<1x32xf32>
    %c0_252 = arith.constant 0 : index
    %c0_253 = arith.constant 0 : index
    %535 = vector.load %arg9[%c0_252, %c0_253] : memref<32x128xf32, #tpu.memory_space<vmem>>, vector<32x128xf32>
    %cst_254 = arith.constant dense<0.000000e+00> : vector<1x128xf32>
    %536 = tpu.matmul %534, %535, %cst_254 {dimension_numbers = #tpu.dot_dimension_numbers<[1], [0], [0], [1], [0, 0, 1, 1], [], []>} : vector<1x32xf32>, vector<32x128xf32>, vector<1x128xf32> -> vector<1x128xf32>
    %c0_255 = arith.constant 0 : index
    %c0_256 = arith.constant 0 : index
    %537 = vector.load %arg10[%c0_255, %c0_256] : memref<1x128xf32, #tpu.memory_space<vmem>>, vector<1x128xf32>
    %538 = arith.addf %536, %537 : vector<1x128xf32>
    %539 = vector.extract_strided_slice %509 {offsets = [0, 256], sizes = [1, 128], strides = [1, 1]} : vector<1x384xf32> to vector<1x128xf32>
    %540 = vector.extract_strided_slice %538 {offsets = [0, 0], sizes = [1, 32], strides = [1, 1]} : vector<1x128xf32> to vector<1x32xf32>
    %541 = vector.extract_strided_slice %539 {offsets = [0, 0], sizes = [1, 32], strides = [1, 1]} : vector<1x128xf32> to vector<1x32xf32>
    %542 = arith.addf %540, %541 : vector<1x32xf32>
    %543 = arith.negf %542 : vector<1x32xf32>
    %544 = math.exp %543 : vector<1x32xf32>
    %cst_257 = arith.constant 1.000000e+00 : f32
    %545 = vector.broadcast %cst_257 : f32 to vector<1x32xf32>
    %546 = arith.addf %545, %544 : vector<1x32xf32>
    %547 = arith.divf %545, %546 : vector<1x32xf32>
    %548 = vector.extract_strided_slice %538 {offsets = [0, 32], sizes = [1, 32], strides = [1, 1]} : vector<1x128xf32> to vector<1x32xf32>
    %549 = vector.extract_strided_slice %539 {offsets = [0, 32], sizes = [1, 32], strides = [1, 1]} : vector<1x128xf32> to vector<1x32xf32>
    %550 = arith.addf %548, %549 : vector<1x32xf32>
    %551 = arith.negf %550 : vector<1x32xf32>
    %552 = math.exp %551 : vector<1x32xf32>
    %cst_258 = arith.constant 1.000000e+00 : f32
    %553 = vector.broadcast %cst_258 : f32 to vector<1x32xf32>
    %554 = arith.addf %553, %552 : vector<1x32xf32>
    %555 = arith.divf %553, %554 : vector<1x32xf32>
    %556 = vector.extract_strided_slice %538 {offsets = [0, 64], sizes = [1, 32], strides = [1, 1]} : vector<1x128xf32> to vector<1x32xf32>
    %557 = vector.extract_strided_slice %539 {offsets = [0, 64], sizes = [1, 32], strides = [1, 1]} : vector<1x128xf32> to vector<1x32xf32>
    %558 = arith.mulf %547, %557 : vector<1x32xf32>
    %559 = arith.addf %556, %558 : vector<1x32xf32>
    %560 = math.tanh %559 : vector<1x32xf32>
    %cst_259 = arith.constant 1.000000e+00 : f32
    %561 = vector.broadcast %cst_259 : f32 to vector<1x32xf32>
    %562 = arith.subf %561, %555 : vector<1x32xf32>
    %563 = arith.mulf %562, %560 : vector<1x32xf32>
    %564 = arith.mulf %555, %502 : vector<1x32xf32>
    %565 = arith.addf %563, %564 : vector<1x32xf32>
    %c0_260 = arith.constant 0 : index
    %c0_261 = arith.constant 0 : index
    %566 = vector.load %arg16[%c0_260, %c0_261] : memref<1x32xf32, #tpu.memory_space<vmem>>, vector<1x32xf32>
    tpu.vector_store %arg16[%c0_260, %c0_261], %565 {strides = array<i32>} : memref<1x32xf32, #tpu.memory_space<vmem>>, vector<1x32xf32>,
    %567 = vector.broadcast %526 : vector<1x1xf32> to vector<1x256xf32>
    %568 = arith.mulf %517, %567 : vector<1x256xf32>
    %c1_i32_262 = arith.constant 1 : i32
    %569 = arith.muli %c5_i32_232, %c1_i32_262 : i32
    %570 = arith.index_cast %569 : i32 to index
    %c0_263 = arith.constant 0 : index
    %571 = vector.load %arg15[%570, %c0_263] : memref<8x256xf32, #tpu.memory_space<vmem>>, vector<1x256xf32>
    tpu.vector_store %arg15[%570, %c0_263], %568 {strides = array<i32>} : memref<8x256xf32, #tpu.memory_space<vmem>>, vector<1x256xf32>,
    %c0_264 = arith.constant 0 : index
    %c0_265 = arith.constant 0 : index
    %572 = vector.load %arg11[%c0_264, %c0_265] : memref<32x128xf32, #tpu.memory_space<vmem>>, vector<32x128xf32>
    %cst_266 = arith.constant dense<0.000000e+00> : vector<1x128xf32>
    %573 = tpu.matmul %565, %572, %cst_266 {dimension_numbers = #tpu.dot_dimension_numbers<[1], [0], [0], [1], [0, 0, 1, 1], [], []>} : vector<1x32xf32>, vector<32x128xf32>, vector<1x128xf32> -> vector<1x128xf32>
    %c0_267 = arith.constant 0 : index
    %c0_268 = arith.constant 0 : index
    %574 = vector.load %arg12[%c0_267, %c0_268] : memref<1x128xf32, #tpu.memory_space<vmem>>, vector<1x128xf32>
    %575 = arith.addf %573, %574 : vector<1x128xf32>
    %cst_269 = arith.constant dense<0xFF800000> : vector<1xf32>
    %576 = vector.multi_reduction <maximumf>, %575, %cst_269 [1] : vector<1x128xf32> to vector<1xf32>
    %577 = vector.shape_cast %576 : vector<1xf32> to vector<1x1xf32>
    %578 = vector.broadcast %577 : vector<1x1xf32> to vector<1x128xf32>
    %579 = arith.subf %575, %578 : vector<1x128xf32>
    %580 = math.exp %579 : vector<1x128xf32>
    %cst_270 = arith.constant dense<0.000000e+00> : vector<1xf32>
    %581 = vector.multi_reduction <add>, %580, %cst_270 [1] : vector<1x128xf32> to vector<1xf32>
    %582 = vector.shape_cast %581 : vector<1xf32> to vector<1x1xf32>
    %583 = vector.broadcast %577 : vector<1x1xf32> to vector<1x128xf32>
    %584 = arith.subf %575, %583 : vector<1x128xf32>
    %585 = math.log %582 : vector<1x1xf32>
    %586 = vector.broadcast %585 : vector<1x1xf32> to vector<1x128xf32>
    %587 = arith.subf %584, %586 : vector<1x128xf32>
    %c1_i32_271 = arith.constant 1 : i32
    %588 = arith.muli %c5_i32_232, %c1_i32_271 : i32
    %589 = arith.index_cast %588 : i32 to index
    %c0_272 = arith.constant 0 : index
    %590 = vector.load %arg13[%589, %c0_272] : memref<8x128xf32, #tpu.memory_space<vmem>>, vector<1x128xf32>
    tpu.vector_store %arg13[%589, %c0_272], %587 {strides = array<i32>} : memref<8x128xf32, #tpu.memory_space<vmem>>, vector<1x128xf32>,
    %c6_i32_273 = arith.constant 6 : i32
    %c0_274 = arith.constant 0 : index
    %c0_275 = arith.constant 0 : index
    %591 = vector.load %arg16[%c0_274, %c0_275] : memref<1x32xf32, #tpu.memory_space<vmem>>, vector<1x32xf32>
    %c1_i32_276 = arith.constant 1 : i32
    %592 = arith.muli %c6_i32_273, %c1_i32_276 : i32
    %593 = arith.index_cast %592 : i32 to index
    %c0_277 = arith.constant 0 : index
    %594 = vector.load %arg18[%593, %c0_277] : memref<8x384xf32, #tpu.memory_space<vmem>>, vector<1x384xf32>
    %c0_278 = arith.constant 0 : index
    %c0_279 = arith.constant 0 : index
    %595 = vector.load %arg6[%c0_278, %c0_279] : memref<32x384xf32, #tpu.memory_space<vmem>>, vector<32x384xf32>
    %cst_280 = arith.constant dense<0.000000e+00> : vector<1x384xf32>
    %596 = tpu.matmul %591, %595, %cst_280 {dimension_numbers = #tpu.dot_dimension_numbers<[1], [0], [0], [1], [0, 0, 1, 1], [], []>} : vector<1x32xf32>, vector<32x384xf32>, vector<1x384xf32> -> vector<1x384xf32>
    %c0_281 = arith.constant 0 : index
    %c0_282 = arith.constant 0 : index
    %597 = vector.load %arg7[%c0_281, %c0_282] : memref<1x384xf32, #tpu.memory_space<vmem>>, vector<1x384xf32>
    %598 = arith.addf %596, %597 : vector<1x384xf32>
    %599 = vector.extract_strided_slice %594 {offsets = [0, 0], sizes = [1, 256], strides = [1, 1]} : vector<1x384xf32> to vector<1x256xf32>
    %600 = vector.extract_strided_slice %598 {offsets = [0, 0], sizes = [1, 256], strides = [1, 1]} : vector<1x384xf32> to vector<1x256xf32>
    %601 = arith.addf %599, %600 : vector<1x256xf32>
    %cst_283 = arith.constant dense<0xFF800000> : vector<1xf32>
    %602 = vector.multi_reduction <maximumf>, %601, %cst_283 [1] : vector<1x256xf32> to vector<1xf32>
    %603 = vector.shape_cast %602 : vector<1xf32> to vector<1x1xf32>
    %604 = vector.broadcast %603 : vector<1x1xf32> to vector<1x256xf32>
    %605 = arith.subf %601, %604 : vector<1x256xf32>
    %606 = math.exp %605 : vector<1x256xf32>
    %cst_284 = arith.constant dense<0.000000e+00> : vector<1xf32>
    %607 = vector.multi_reduction <add>, %606, %cst_284 [1] : vector<1x256xf32> to vector<1xf32>
    %608 = vector.shape_cast %607 : vector<1xf32> to vector<1x1xf32>
    %c0_285 = arith.constant 0 : index
    %c0_286 = arith.constant 0 : index
    %609 = vector.load %arg3[%c0_285, %c0_286] : memref<256x32xf32, #tpu.memory_space<vmem>>, vector<256x32xf32>
    %cst_287 = arith.constant dense<0.000000e+00> : vector<1x32xf32>
    %610 = tpu.matmul %606, %609, %cst_287 {dimension_numbers = #tpu.dot_dimension_numbers<[1], [0], [0], [1], [0, 0, 1, 1], [], []>} : vector<1x256xf32>, vector<256x32xf32>, vector<1x32xf32> -> vector<1x32xf32>
    %611 = tpu.reciprocal %608 {approx = true} : vector<1x1xf32> -> vector<1x1xf32>
    %612 = arith.mulf %608, %611 : vector<1x1xf32>
    %cst_288 = arith.constant 2.000000e+00 : f32
    %613 = vector.broadcast %cst_288 : f32 to vector<1x1xf32>
    %614 = arith.subf %613, %612 : vector<1x1xf32>
    %615 = arith.mulf %611, %614 : vector<1x1xf32>
    %616 = vector.broadcast %615 : vector<1x1xf32> to vector<1x32xf32>
    %617 = arith.mulf %610, %616 : vector<1x32xf32>
    %618 = vector.extract_strided_slice %594 {offsets = [0, 256], sizes = [1, 32], strides = [1, 1]} : vector<1x384xf32> to vector<1x32xf32>
    %c0_289 = arith.constant 0 : index
    %c0_290 = arith.constant 0 : index
    %619 = vector.load %arg8[%c0_289, %c0_290] : memref<32x32xf32, #tpu.memory_space<vmem>>, vector<32x32xf32>
    %cst_291 = arith.constant dense<0.000000e+00> : vector<1x32xf32>
    %620 = tpu.matmul %617, %619, %cst_291 {dimension_numbers = #tpu.dot_dimension_numbers<[1], [0], [0], [1], [0, 0, 1, 1], [], []>} : vector<1x32xf32>, vector<32x32xf32>, vector<1x32xf32> -> vector<1x32xf32>
    %621 = arith.addf %618, %620 : vector<1x32xf32>
    %cst_292 = arith.constant 0.000000e+00 : f32
    %622 = vector.broadcast %cst_292 : f32 to vector<1x32xf32>
    %623 = arith.maximumf %621, %622 : vector<1x32xf32>
    %c0_293 = arith.constant 0 : index
    %c0_294 = arith.constant 0 : index
    %624 = vector.load %arg9[%c0_293, %c0_294] : memref<32x128xf32, #tpu.memory_space<vmem>>, vector<32x128xf32>
    %cst_295 = arith.constant dense<0.000000e+00> : vector<1x128xf32>
    %625 = tpu.matmul %623, %624, %cst_295 {dimension_numbers = #tpu.dot_dimension_numbers<[1], [0], [0], [1], [0, 0, 1, 1], [], []>} : vector<1x32xf32>, vector<32x128xf32>, vector<1x128xf32> -> vector<1x128xf32>
    %c0_296 = arith.constant 0 : index
    %c0_297 = arith.constant 0 : index
    %626 = vector.load %arg10[%c0_296, %c0_297] : memref<1x128xf32, #tpu.memory_space<vmem>>, vector<1x128xf32>
    %627 = arith.addf %625, %626 : vector<1x128xf32>
    %628 = vector.extract_strided_slice %598 {offsets = [0, 256], sizes = [1, 128], strides = [1, 1]} : vector<1x384xf32> to vector<1x128xf32>
    %629 = vector.extract_strided_slice %627 {offsets = [0, 0], sizes = [1, 32], strides = [1, 1]} : vector<1x128xf32> to vector<1x32xf32>
    %630 = vector.extract_strided_slice %628 {offsets = [0, 0], sizes = [1, 32], strides = [1, 1]} : vector<1x128xf32> to vector<1x32xf32>
    %631 = arith.addf %629, %630 : vector<1x32xf32>
    %632 = arith.negf %631 : vector<1x32xf32>
    %633 = math.exp %632 : vector<1x32xf32>
    %cst_298 = arith.constant 1.000000e+00 : f32
    %634 = vector.broadcast %cst_298 : f32 to vector<1x32xf32>
    %635 = arith.addf %634, %633 : vector<1x32xf32>
    %636 = arith.divf %634, %635 : vector<1x32xf32>
    %637 = vector.extract_strided_slice %627 {offsets = [0, 32], sizes = [1, 32], strides = [1, 1]} : vector<1x128xf32> to vector<1x32xf32>
    %638 = vector.extract_strided_slice %628 {offsets = [0, 32], sizes = [1, 32], strides = [1, 1]} : vector<1x128xf32> to vector<1x32xf32>
    %639 = arith.addf %637, %638 : vector<1x32xf32>
    %640 = arith.negf %639 : vector<1x32xf32>
    %641 = math.exp %640 : vector<1x32xf32>
    %cst_299 = arith.constant 1.000000e+00 : f32
    %642 = vector.broadcast %cst_299 : f32 to vector<1x32xf32>
    %643 = arith.addf %642, %641 : vector<1x32xf32>
    %644 = arith.divf %642, %643 : vector<1x32xf32>
    %645 = vector.extract_strided_slice %627 {offsets = [0, 64], sizes = [1, 32], strides = [1, 1]} : vector<1x128xf32> to vector<1x32xf32>
    %646 = vector.extract_strided_slice %628 {offsets = [0, 64], sizes = [1, 32], strides = [1, 1]} : vector<1x128xf32> to vector<1x32xf32>
    %647 = arith.mulf %636, %646 : vector<1x32xf32>
    %648 = arith.addf %645, %647 : vector<1x32xf32>
    %649 = math.tanh %648 : vector<1x32xf32>
    %cst_300 = arith.constant 1.000000e+00 : f32
    %650 = vector.broadcast %cst_300 : f32 to vector<1x32xf32>
    %651 = arith.subf %650, %644 : vector<1x32xf32>
    %652 = arith.mulf %651, %649 : vector<1x32xf32>
    %653 = arith.mulf %644, %591 : vector<1x32xf32>
    %654 = arith.addf %652, %653 : vector<1x32xf32>
    %c0_301 = arith.constant 0 : index
    %c0_302 = arith.constant 0 : index
    %655 = vector.load %arg16[%c0_301, %c0_302] : memref<1x32xf32, #tpu.memory_space<vmem>>, vector<1x32xf32>
    tpu.vector_store %arg16[%c0_301, %c0_302], %654 {strides = array<i32>} : memref<1x32xf32, #tpu.memory_space<vmem>>, vector<1x32xf32>,
    %656 = vector.broadcast %615 : vector<1x1xf32> to vector<1x256xf32>
    %657 = arith.mulf %606, %656 : vector<1x256xf32>
    %c1_i32_303 = arith.constant 1 : i32
    %658 = arith.muli %c6_i32_273, %c1_i32_303 : i32
    %659 = arith.index_cast %658 : i32 to index
    %c0_304 = arith.constant 0 : index
    %660 = vector.load %arg15[%659, %c0_304] : memref<8x256xf32, #tpu.memory_space<vmem>>, vector<1x256xf32>
    tpu.vector_store %arg15[%659, %c0_304], %657 {strides = array<i32>} : memref<8x256xf32, #tpu.memory_space<vmem>>, vector<1x256xf32>,
    %c0_305 = arith.constant 0 : index
    %c0_306 = arith.constant 0 : index
    %661 = vector.load %arg11[%c0_305, %c0_306] : memref<32x128xf32, #tpu.memory_space<vmem>>, vector<32x128xf32>
    %cst_307 = arith.constant dense<0.000000e+00> : vector<1x128xf32>
    %662 = tpu.matmul %654, %661, %cst_307 {dimension_numbers = #tpu.dot_dimension_numbers<[1], [0], [0], [1], [0, 0, 1, 1], [], []>} : vector<1x32xf32>, vector<32x128xf32>, vector<1x128xf32> -> vector<1x128xf32>
    %c0_308 = arith.constant 0 : index
    %c0_309 = arith.constant 0 : index
    %663 = vector.load %arg12[%c0_308, %c0_309] : memref<1x128xf32, #tpu.memory_space<vmem>>, vector<1x128xf32>
    %664 = arith.addf %662, %663 : vector<1x128xf32>
    %cst_310 = arith.constant dense<0xFF800000> : vector<1xf32>
    %665 = vector.multi_reduction <maximumf>, %664, %cst_310 [1] : vector<1x128xf32> to vector<1xf32>
    %666 = vector.shape_cast %665 : vector<1xf32> to vector<1x1xf32>
    %667 = vector.broadcast %666 : vector<1x1xf32> to vector<1x128xf32>
    %668 = arith.subf %664, %667 : vector<1x128xf32>
    %669 = math.exp %668 : vector<1x128xf32>
    %cst_311 = arith.constant dense<0.000000e+00> : vector<1xf32>
    %670 = vector.multi_reduction <add>, %669, %cst_311 [1] : vector<1x128xf32> to vector<1xf32>
    %671 = vector.shape_cast %670 : vector<1xf32> to vector<1x1xf32>
    %672 = vector.broadcast %666 : vector<1x1xf32> to vector<1x128xf32>
    %673 = arith.subf %664, %672 : vector<1x128xf32>
    %674 = math.log %671 : vector<1x1xf32>
    %675 = vector.broadcast %674 : vector<1x1xf32> to vector<1x128xf32>
    %676 = arith.subf %673, %675 : vector<1x128xf32>
    %c1_i32_312 = arith.constant 1 : i32
    %677 = arith.muli %c6_i32_273, %c1_i32_312 : i32
    %678 = arith.index_cast %677 : i32 to index
    %c0_313 = arith.constant 0 : index
    %679 = vector.load %arg13[%678, %c0_313] : memref<8x128xf32, #tpu.memory_space<vmem>>, vector<1x128xf32>
    tpu.vector_store %arg13[%678, %c0_313], %676 {strides = array<i32>} : memref<8x128xf32, #tpu.memory_space<vmem>>, vector<1x128xf32>,
    %c7_i32_314 = arith.constant 7 : i32
    %c0_315 = arith.constant 0 : index
    %c0_316 = arith.constant 0 : index
    %680 = vector.load %arg16[%c0_315, %c0_316] : memref<1x32xf32, #tpu.memory_space<vmem>>, vector<1x32xf32>
    %c1_i32_317 = arith.constant 1 : i32
    %681 = arith.muli %c7_i32_314, %c1_i32_317 : i32
    %682 = arith.index_cast %681 : i32 to index
    %c0_318 = arith.constant 0 : index
    %683 = vector.load %arg18[%682, %c0_318] : memref<8x384xf32, #tpu.memory_space<vmem>>, vector<1x384xf32>
    %c0_319 = arith.constant 0 : index
    %c0_320 = arith.constant 0 : index
    %684 = vector.load %arg6[%c0_319, %c0_320] : memref<32x384xf32, #tpu.memory_space<vmem>>, vector<32x384xf32>
    %cst_321 = arith.constant dense<0.000000e+00> : vector<1x384xf32>
    %685 = tpu.matmul %680, %684, %cst_321 {dimension_numbers = #tpu.dot_dimension_numbers<[1], [0], [0], [1], [0, 0, 1, 1], [], []>} : vector<1x32xf32>, vector<32x384xf32>, vector<1x384xf32> -> vector<1x384xf32>
    %c0_322 = arith.constant 0 : index
    %c0_323 = arith.constant 0 : index
    %686 = vector.load %arg7[%c0_322, %c0_323] : memref<1x384xf32, #tpu.memory_space<vmem>>, vector<1x384xf32>
    %687 = arith.addf %685, %686 : vector<1x384xf32>
    %688 = vector.extract_strided_slice %683 {offsets = [0, 0], sizes = [1, 256], strides = [1, 1]} : vector<1x384xf32> to vector<1x256xf32>
    %689 = vector.extract_strided_slice %687 {offsets = [0, 0], sizes = [1, 256], strides = [1, 1]} : vector<1x384xf32> to vector<1x256xf32>
    %690 = arith.addf %688, %689 : vector<1x256xf32>
    %cst_324 = arith.constant dense<0xFF800000> : vector<1xf32>
    %691 = vector.multi_reduction <maximumf>, %690, %cst_324 [1] : vector<1x256xf32> to vector<1xf32>
    %692 = vector.shape_cast %691 : vector<1xf32> to vector<1x1xf32>
    %693 = vector.broadcast %692 : vector<1x1xf32> to vector<1x256xf32>
    %694 = arith.subf %690, %693 : vector<1x256xf32>
    %695 = math.exp %694 : vector<1x256xf32>
    %cst_325 = arith.constant dense<0.000000e+00> : vector<1xf32>
    %696 = vector.multi_reduction <add>, %695, %cst_325 [1] : vector<1x256xf32> to vector<1xf32>
    %697 = vector.shape_cast %696 : vector<1xf32> to vector<1x1xf32>
    %c0_326 = arith.constant 0 : index
    %c0_327 = arith.constant 0 : index
    %698 = vector.load %arg3[%c0_326, %c0_327] : memref<256x32xf32, #tpu.memory_space<vmem>>, vector<256x32xf32>
    %cst_328 = arith.constant dense<0.000000e+00> : vector<1x32xf32>
    %699 = tpu.matmul %695, %698, %cst_328 {dimension_numbers = #tpu.dot_dimension_numbers<[1], [0], [0], [1], [0, 0, 1, 1], [], []>} : vector<1x256xf32>, vector<256x32xf32>, vector<1x32xf32> -> vector<1x32xf32>
    %700 = tpu.reciprocal %697 {approx = true} : vector<1x1xf32> -> vector<1x1xf32>
    %701 = arith.mulf %697, %700 : vector<1x1xf32>
    %cst_329 = arith.constant 2.000000e+00 : f32
    %702 = vector.broadcast %cst_329 : f32 to vector<1x1xf32>
    %703 = arith.subf %702, %701 : vector<1x1xf32>
    %704 = arith.mulf %700, %703 : vector<1x1xf32>
    %705 = vector.broadcast %704 : vector<1x1xf32> to vector<1x32xf32>
    %706 = arith.mulf %699, %705 : vector<1x32xf32>
    %707 = vector.extract_strided_slice %683 {offsets = [0, 256], sizes = [1, 32], strides = [1, 1]} : vector<1x384xf32> to vector<1x32xf32>
    %c0_330 = arith.constant 0 : index
    %c0_331 = arith.constant 0 : index
    %708 = vector.load %arg8[%c0_330, %c0_331] : memref<32x32xf32, #tpu.memory_space<vmem>>, vector<32x32xf32>
    %cst_332 = arith.constant dense<0.000000e+00> : vector<1x32xf32>
    %709 = tpu.matmul %706, %708, %cst_332 {dimension_numbers = #tpu.dot_dimension_numbers<[1], [0], [0], [1], [0, 0, 1, 1], [], []>} : vector<1x32xf32>, vector<32x32xf32>, vector<1x32xf32> -> vector<1x32xf32>
    %710 = arith.addf %707, %709 : vector<1x32xf32>
    %cst_333 = arith.constant 0.000000e+00 : f32
    %711 = vector.broadcast %cst_333 : f32 to vector<1x32xf32>
    %712 = arith.maximumf %710, %711 : vector<1x32xf32>
    %c0_334 = arith.constant 0 : index
    %c0_335 = arith.constant 0 : index
    %713 = vector.load %arg9[%c0_334, %c0_335] : memref<32x128xf32, #tpu.memory_space<vmem>>, vector<32x128xf32>
    %cst_336 = arith.constant dense<0.000000e+00> : vector<1x128xf32>
    %714 = tpu.matmul %712, %713, %cst_336 {dimension_numbers = #tpu.dot_dimension_numbers<[1], [0], [0], [1], [0, 0, 1, 1], [], []>} : vector<1x32xf32>, vector<32x128xf32>, vector<1x128xf32> -> vector<1x128xf32>
    %c0_337 = arith.constant 0 : index
    %c0_338 = arith.constant 0 : index
    %715 = vector.load %arg10[%c0_337, %c0_338] : memref<1x128xf32, #tpu.memory_space<vmem>>, vector<1x128xf32>
    %716 = arith.addf %714, %715 : vector<1x128xf32>
    %717 = vector.extract_strided_slice %687 {offsets = [0, 256], sizes = [1, 128], strides = [1, 1]} : vector<1x384xf32> to vector<1x128xf32>
    %718 = vector.extract_strided_slice %716 {offsets = [0, 0], sizes = [1, 32], strides = [1, 1]} : vector<1x128xf32> to vector<1x32xf32>
    %719 = vector.extract_strided_slice %717 {offsets = [0, 0], sizes = [1, 32], strides = [1, 1]} : vector<1x128xf32> to vector<1x32xf32>
    %720 = arith.addf %718, %719 : vector<1x32xf32>
    %721 = arith.negf %720 : vector<1x32xf32>
    %722 = math.exp %721 : vector<1x32xf32>
    %cst_339 = arith.constant 1.000000e+00 : f32
    %723 = vector.broadcast %cst_339 : f32 to vector<1x32xf32>
    %724 = arith.addf %723, %722 : vector<1x32xf32>
    %725 = arith.divf %723, %724 : vector<1x32xf32>
    %726 = vector.extract_strided_slice %716 {offsets = [0, 32], sizes = [1, 32], strides = [1, 1]} : vector<1x128xf32> to vector<1x32xf32>
    %727 = vector.extract_strided_slice %717 {offsets = [0, 32], sizes = [1, 32], strides = [1, 1]} : vector<1x128xf32> to vector<1x32xf32>
    %728 = arith.addf %726, %727 : vector<1x32xf32>
    %729 = arith.negf %728 : vector<1x32xf32>
    %730 = math.exp %729 : vector<1x32xf32>
    %cst_340 = arith.constant 1.000000e+00 : f32
    %731 = vector.broadcast %cst_340 : f32 to vector<1x32xf32>
    %732 = arith.addf %731, %730 : vector<1x32xf32>
    %733 = arith.divf %731, %732 : vector<1x32xf32>
    %734 = vector.extract_strided_slice %716 {offsets = [0, 64], sizes = [1, 32], strides = [1, 1]} : vector<1x128xf32> to vector<1x32xf32>
    %735 = vector.extract_strided_slice %717 {offsets = [0, 64], sizes = [1, 32], strides = [1, 1]} : vector<1x128xf32> to vector<1x32xf32>
    %736 = arith.mulf %725, %735 : vector<1x32xf32>
    %737 = arith.addf %734, %736 : vector<1x32xf32>
    %738 = math.tanh %737 : vector<1x32xf32>
    %cst_341 = arith.constant 1.000000e+00 : f32
    %739 = vector.broadcast %cst_341 : f32 to vector<1x32xf32>
    %740 = arith.subf %739, %733 : vector<1x32xf32>
    %741 = arith.mulf %740, %738 : vector<1x32xf32>
    %742 = arith.mulf %733, %680 : vector<1x32xf32>
    %743 = arith.addf %741, %742 : vector<1x32xf32>
    %c0_342 = arith.constant 0 : index
    %c0_343 = arith.constant 0 : index
    %744 = vector.load %arg16[%c0_342, %c0_343] : memref<1x32xf32, #tpu.memory_space<vmem>>, vector<1x32xf32>
    tpu.vector_store %arg16[%c0_342, %c0_343], %743 {strides = array<i32>} : memref<1x32xf32, #tpu.memory_space<vmem>>, vector<1x32xf32>,
    %745 = vector.broadcast %704 : vector<1x1xf32> to vector<1x256xf32>
    %746 = arith.mulf %695, %745 : vector<1x256xf32>
    %c1_i32_344 = arith.constant 1 : i32
    %747 = arith.muli %c7_i32_314, %c1_i32_344 : i32
    %748 = arith.index_cast %747 : i32 to index
    %c0_345 = arith.constant 0 : index
    %749 = vector.load %arg15[%748, %c0_345] : memref<8x256xf32, #tpu.memory_space<vmem>>, vector<1x256xf32>
    tpu.vector_store %arg15[%748, %c0_345], %746 {strides = array<i32>} : memref<8x256xf32, #tpu.memory_space<vmem>>, vector<1x256xf32>,
    %c0_346 = arith.constant 0 : index
    %c0_347 = arith.constant 0 : index
    %750 = vector.load %arg11[%c0_346, %c0_347] : memref<32x128xf32, #tpu.memory_space<vmem>>, vector<32x128xf32>
    %cst_348 = arith.constant dense<0.000000e+00> : vector<1x128xf32>
    %751 = tpu.matmul %743, %750, %cst_348 {dimension_numbers = #tpu.dot_dimension_numbers<[1], [0], [0], [1], [0, 0, 1, 1], [], []>} : vector<1x32xf32>, vector<32x128xf32>, vector<1x128xf32> -> vector<1x128xf32>
    %c0_349 = arith.constant 0 : index
    %c0_350 = arith.constant 0 : index
    %752 = vector.load %arg12[%c0_349, %c0_350] : memref<1x128xf32, #tpu.memory_space<vmem>>, vector<1x128xf32>
    %753 = arith.addf %751, %752 : vector<1x128xf32>
    %cst_351 = arith.constant dense<0xFF800000> : vector<1xf32>
    %754 = vector.multi_reduction <maximumf>, %753, %cst_351 [1] : vector<1x128xf32> to vector<1xf32>
    %755 = vector.shape_cast %754 : vector<1xf32> to vector<1x1xf32>
    %756 = vector.broadcast %755 : vector<1x1xf32> to vector<1x128xf32>
    %757 = arith.subf %753, %756 : vector<1x128xf32>
    %758 = math.exp %757 : vector<1x128xf32>
    %cst_352 = arith.constant dense<0.000000e+00> : vector<1xf32>
    %759 = vector.multi_reduction <add>, %758, %cst_352 [1] : vector<1x128xf32> to vector<1xf32>
    %760 = vector.shape_cast %759 : vector<1xf32> to vector<1x1xf32>
    %761 = vector.broadcast %755 : vector<1x1xf32> to vector<1x128xf32>
    %762 = arith.subf %753, %761 : vector<1x128xf32>
    %763 = math.log %760 : vector<1x1xf32>
    %764 = vector.broadcast %763 : vector<1x1xf32> to vector<1x128xf32>
    %765 = arith.subf %762, %764 : vector<1x128xf32>
    %c1_i32_353 = arith.constant 1 : i32
    %766 = arith.muli %c7_i32_314, %c1_i32_353 : i32
    %767 = arith.index_cast %766 : i32 to index
    %c0_354 = arith.constant 0 : index
    %768 = vector.load %arg13[%767, %c0_354] : memref<8x128xf32, #tpu.memory_space<vmem>>, vector<1x128xf32>
    tpu.vector_store %arg13[%767, %c0_354], %765 {strides = array<i32>} : memref<8x128xf32, #tpu.memory_space<vmem>>, vector<1x128xf32>,
    %c8_i32_355 = arith.constant 8 : i32
    %c0_356 = arith.constant 0 : index
    %c0_357 = arith.constant 0 : index
    %769 = vector.load %arg16[%c0_356, %c0_357] : memref<1x32xf32, #tpu.memory_space<vmem>>, vector<1x32xf32>
    %c0_358 = arith.constant 0 : index
    %c0_359 = arith.constant 0 : index
    %770 = vector.load %arg14[%c0_358, %c0_359] : memref<1x32xf32, #tpu.memory_space<vmem>>, vector<1x32xf32>
    tpu.vector_store %arg14[%c0_358, %c0_359], %769 {strides = array<i32>} : memref<1x32xf32, #tpu.memory_space<vmem>>, vector<1x32xf32>,
    return
  }
}

</mosaic_0001>

<llo_original>
// kernel: tpu_custom_call.1
$region0: #{tpu_custom_call.1}
  #allocation0 [shape = 'u32[]', space=smem, size = 0x4, offset = 0x4, fixed_abs, tag = 'smem constant byte address 0x4 - core index']
  #allocation1 [shape = 'u32[144,128]{1,0:T(1,128)}', space=vmem, size = 0x12000, scoped, tag = 'internal scratch']
  #allocation2 [shape = 'f32[1,32]{1,0:T(1,128)}', space=vmem, size = 0x200, scoped, tag = 'scratch operand']
  #allocation3 [shape = 'f32[8,32]{1,0:T(8,128)}', space=vmem, size = 0x1000, scoped, tag = 'scratch operand']
  #allocation4 [shape = 'f32[8,384]{1,0:T(8,128)}', space=vmem, size = 0x3000, scoped, tag = 'scratch operand']
  %s0 = inlined_call_operand.vmem [shape: s32[8], index: 0, kind: input, shape index: {}]
  %s1 = inlined_call_operand.vmem [shape: f32[64,32], index: 1, kind: input, shape index: {}]
  %s2 = inlined_call_operand.vmem [shape: f32[1,32], index: 2, kind: input, shape index: {}]
  %s3 = inlined_call_operand.vmem [shape: f32[256,32], index: 3, kind: input, shape index: {}]
  %s4 = inlined_call_operand.vmem [shape: f32[32,384], index: 4, kind: input, shape index: {}]
  %s5 = inlined_call_operand.vmem [shape: f32[1,384], index: 5, kind: input, shape index: {}]
  %s6 = inlined_call_operand.vmem [shape: f32[32,384], index: 6, kind: input, shape index: {}]
  %s7 = inlined_call_operand.vmem [shape: f32[1,384], index: 7, kind: input, shape index: {}]
  %s8 = inlined_call_operand.vmem [shape: f32[32,32], index: 8, kind: input, shape index: {}]
  %s9 = inlined_call_operand.vmem [shape: f32[32,128], index: 9, kind: input, shape index: {}]
  %s10 = inlined_call_operand.vmem [shape: f32[1,128], index: 10, kind: input, shape index: {}]
  %s11 = inlined_call_operand.vmem [shape: f32[32,128], index: 11, kind: input, shape index: {}]
  %s12 = inlined_call_operand.vmem [shape: f32[1,128], index: 12, kind: input, shape index: {}]
  %s13 = inlined_call_operand.hbm [shape: f32[8,128], index: 13, kind: output, shape index: {0}]
  %s14 = inlined_call_operand.hbm [shape: f32[1,32], index: 14, kind: output, shape index: {1}]
  %s15 = inlined_call_operand.hbm [shape: f32[8,256], index: 15, kind: output, shape index: {2}]
  %16 = xla_tuple %s13, %s14, %s15
  %s17 = sld [smem:[#allocation0]]
  $region82: #{tpu_custom_call.1} parent=0
    _
  %s19 = ssub.s32 1, %s17
  %s20 = scalar_select 0, %s19, %s17
  $region1: #{tpu_custom_call.1} parent=0
    #allocation5 [shape = 'u8[512]{0}', space=smem, size = 0x200, scoped, tag = 'input window, operand 0, single buffered']
    #allocation6 [shape = 's32[1]{0}', space=sflag, size = 0x4, scoped, tag = 'scoped memory for tpu_custom_call.1']
    #allocation7 [shape = 's32[1]{0}', space=sflag, size = 0x4, scoped, tag = 'scoped memory for tpu_custom_call.1']
    #allocation8 [shape = 'u8[4096]{0}', space=vmem, size = 0x1000, scoped, tag = 'output window, operand 0, single buffered']
    #allocation9 [shape = 'u8[512]{0}', space=vmem, size = 0x400, scoped, tag = 'output window, operand 1, single buffered']
    #allocation10 [shape = 's32[1]{0}', space=sflag, size = 0x4, scoped, tag = 'scoped memory for tpu_custom_call.1']
    #allocation11 [shape = 'u8[8192]{0}', space=vmem, size = 0x2000, scoped, tag = 'output window, operand 2, single buffered']
    %21 = vsyncpa [#allocation7], 0
    %22 = vsyncpa [#allocation6], 0
    %23 = vsyncpa [#allocation10], 0
    // Predicated region
    $region2: #{tpu_custom_call.1} parent=1 // pred_check
      _
    $region3: #{tpu_custom_call.1} parent=1 // pred_check_branch
      %25 = sbr.rel (0) target = $region5
    $region4: #{tpu_custom_call.1} parent=1 // pred_region
      %s27 = ssub.s32 16, 16
      %28 = vsyncadd [#allocation7], %s27
      %s30 = sshll.u32 %s0, 4
      %s31 = int_to_ptr.vmem [resolvable:$true] %s30
      %33 = dma.vmem_to_smem %s31, 16, [#allocation5], [#allocation7]
    $region5: #{tpu_custom_call.1} parent=1 // pred_fallthru
      _
    // Predicated region
    $region6: #{tpu_custom_call.1} parent=1 // pred_check
      _
    $region7: #{tpu_custom_call.1} parent=1 // pred_check_branch
      %35 = sbr.rel (0) target = $region9
    $region8: #{tpu_custom_call.1} parent=1 // pred_region
      _
    $region9: #{tpu_custom_call.1} parent=1 // pred_fallthru
      _
    // Predicated region
    $region10: #{tpu_custom_call.1} parent=1 // pred_check
      _
    $region11: #{tpu_custom_call.1} parent=1 // pred_check_branch
      %37 = sbr.rel (0) target = $region13
    $region12: #{tpu_custom_call.1} parent=1 // pred_region
      _
    $region13: #{tpu_custom_call.1} parent=1 // pred_fallthru
      _
    // Predicated region
    $region14: #{tpu_custom_call.1} parent=1 // pred_check
      _
    $region15: #{tpu_custom_call.1} parent=1 // pred_check_branch
      %39 = sbr.rel (0) target = $region17
    $region16: #{tpu_custom_call.1} parent=1 // pred_region
      _
    $region17: #{tpu_custom_call.1} parent=1 // pred_fallthru
      _
    // Predicated region
    $region18: #{tpu_custom_call.1} parent=1 // pred_check
      _
    $region19: #{tpu_custom_call.1} parent=1 // pred_check_branch
      %41 = sbr.rel (0) target = $region21
    $region20: #{tpu_custom_call.1} parent=1 // pred_region
      _
    $region21: #{tpu_custom_call.1} parent=1 // pred_fallthru
      _
    // Predicated region
    $region22: #{tpu_custom_call.1} parent=1 // pred_check
      _
    $region23: #{tpu_custom_call.1} parent=1 // pred_check_branch
      %43 = sbr.rel (0) target = $region25
    $region24: #{tpu_custom_call.1} parent=1 // pred_region
      _
    $region25: #{tpu_custom_call.1} parent=1 // pred_fallthru
      _
    // Predicated region
    $region26: #{tpu_custom_call.1} parent=1 // pred_check
      _
    $region27: #{tpu_custom_call.1} parent=1 // pred_check_branch
      %45 = sbr.rel (0) target = $region29
    $region28: #{tpu_custom_call.1} parent=1 // pred_region
      _
    $region29: #{tpu_custom_call.1} parent=1 // pred_fallthru
      _
    // Predicated region
    $region30: #{tpu_custom_call.1} parent=1 // pred_check
      _
    $region31: #{tpu_custom_call.1} parent=1 // pred_check_branch
      %47 = sbr.rel (0) target = $region33
    $region32: #{tpu_custom_call.1} parent=1 // pred_region
      _
    $region33: #{tpu_custom_call.1} parent=1 // pred_fallthru
      _
    // Predicated region
    $region34: #{tpu_custom_call.1} parent=1 // pred_check
      _
    $region35: #{tpu_custom_call.1} parent=1 // pred_check_branch
      %49 = sbr.rel (0) target = $region37
    $region36: #{tpu_custom_call.1} parent=1 // pred_region
      _
    $region37: #{tpu_custom_call.1} parent=1 // pred_fallthru
      _
    // Predicated region
    $region38: #{tpu_custom_call.1} parent=1 // pred_check
      _
    $region39: #{tpu_custom_call.1} parent=1 // pred_check_branch
      %51 = sbr.rel (0) target = $region41
    $region40: #{tpu_custom_call.1} parent=1 // pred_region
      _
    $region41: #{tpu_custom_call.1} parent=1 // pred_fallthru
      _
    // Predicated region
    $region42: #{tpu_custom_call.1} parent=1 // pred_check
      _
    $region43: #{tpu_custom_call.1} parent=1 // pred_check_branch
      %53 = sbr.rel (0) target = $region45
    $region44: #{tpu_custom_call.1} parent=1 // pred_region
      _
    $region45: #{tpu_custom_call.1} parent=1 // pred_fallthru
      _
    // Predicated region
    $region46: #{tpu_custom_call.1} parent=1 // pred_check
      _
    $region47: #{tpu_custom_call.1} parent=1 // pred_check_branch
      %55 = sbr.rel (0) target = $region49
    $region48: #{tpu_custom_call.1} parent=1 // pred_region
      _
    $region49: #{tpu_custom_call.1} parent=1 // pred_fallthru
      _
    // Predicated region
    $region50: #{tpu_custom_call.1} parent=1 // pred_check
      _
    $region51: #{tpu_custom_call.1} parent=1 // pred_check_branch
      %57 = sbr.rel (0) target = $region53
    $region52: #{tpu_custom_call.1} parent=1 // pred_region
      _
    $region53: #{tpu_custom_call.1} parent=1 // pred_fallthru
      _
    // Predicated region
    $region54: #{tpu_custom_call.1} parent=1 // pred_check
      _
    $region55: #{tpu_custom_call.1} parent=1 // pred_check_branch
      %59 = sbr.rel (0) target = $region57
    $region56: #{tpu_custom_call.1} parent=1 // pred_region
      %60 = dma.done [#allocation7], 16
    $region57: #{tpu_custom_call.1} parent=1 // pred_fallthru
      _
    %61 = sfence
    %s62 = sld [smem:[#allocation5]]
    %s63 = scalar_lea.vmem %s1, %s62
    %v64 = vld [vmem:[%s63] sm:$0x1]
    %vm65 = vcmask 253952
    %66 = vst.msk [vmem:[#allocation3] sm:$0x1] %vm65, %v64
    %s67 = sld [smem:[#allocation5 + $0x1]]
    %s68 = scalar_lea.vmem %s1, %s67
    %v69 = vld [vmem:[%s68] sm:$0x1]
    %70 = vst.msk [vmem:[#allocation3 + $0x1] sm:$0x1] %vm65, %v69
    %s71 = sld [smem:[#allocation5 + $0x2]]
    %s72 = scalar_lea.vmem %s1, %s71
    %v73 = vld [vmem:[%s72] sm:$0x1]
    %74 = vst.msk [vmem:[#allocation3 + $0x2] sm:$0x1] %vm65, %v73
    %s75 = sld [smem:[#allocation5 + $0x3]]
    %s76 = scalar_lea.vmem %s1, %s75
    %v77 = vld [vmem:[%s76] sm:$0x1]
    %78 = vst.msk [vmem:[#allocation3 + $0x3] sm:$0x1] %vm65, %v77
    %s79 = sld [smem:[#allocation5 + $0x4]]
    %s80 = scalar_lea.vmem %s1, %s79
    %v81 = vld [vmem:[%s80] sm:$0x1]
    %82 = vst.msk [vmem:[#allocation3 + $0x4] sm:$0x1] %vm65, %v81
    %s83 = sld [smem:[#allocation5 + $0x5]]
    %s84 = scalar_lea.vmem %s1, %s83
    %v85 = vld [vmem:[%s84] sm:$0x1]
    %86 = vst.msk [vmem:[#allocation3 + $0x5] sm:$0x1] %vm65, %v85
    %s87 = sld [smem:[#allocation5 + $0x6]]
    %s88 = scalar_lea.vmem %s1, %s87
    %v89 = vld [vmem:[%s88] sm:$0x1]
    %90 = vst.msk [vmem:[#allocation3 + $0x6] sm:$0x1] %vm65, %v89
    %s91 = sld [smem:[#allocation5 + $0x7]]
    %s92 = scalar_lea.vmem %s1, %s91
    %v93 = vld [vmem:[%s92] sm:$0x1]
    %94 = vst.msk [vmem:[#allocation3 + $0x7] sm:$0x1] %vm65, %v93
    %v95 = vld [vmem:[#allocation3] sm:$0xff]
    %v96 = vld [vmem:[%s4] sm:$0xff]
    %v97 = vld [vmem:[%s4 + $0x8] sm:$0xff]
    %v98 = vld [vmem:[%s4 + $0x10] sm:$0xff]
    %v99 = vld [vmem:[%s4 + $0x18] sm:$0xff]
    %v100 = vld [vmem:[%s4 + $0x20] sm:$0xff]
    %v101 = vld [vmem:[%s4 + $0x28] sm:$0xff]
    %v102 = vld [vmem:[%s4 + $0x30] sm:$0xff]
    %v103 = vld [vmem:[%s4 + $0x38] sm:$0xff]
    %v104 = vld [vmem:[%s4 + $0x40] sm:$0xff]
    %v105 = vld [vmem:[%s4 + $0x48] sm:$0xff]
    %v106 = vld [vmem:[%s4 + $0x50] sm:$0xff]
    %v107 = vld [vmem:[%s4 + $0x58] sm:$0xff]
    %v108 = vld [vmem:[%s5] sm:$0x7]
    %v110 = vlaneseq
    %v111 = vshrl.u32 %v110, 7
    %v112 = vsub.s32 0, %v111
    %v113 = vrot.slane %v108, %v112
    %v114 = vlaneseq
    %v115 = vshrl.u32 %v114, 7
    %v116 = vsub.s32 1, %v115
    %v117 = vrot.slane %v108, %v116
    %v118 = vlaneseq
    %v119 = vshrl.u32 %v118, 7
    %v120 = vsub.s32 2, %v119
    %v121 = vrot.slane %v108, %v120
    %vm125 = vcmask 261120
    %v127 = vsel %vm125, %v95, 0
    %129 = vmatprep.subr.mxu0 %v97
    %130 = vmatpush1.msra.mxu0 %v96
    %131 = vmatprep.subr.mxu0 %v100
    %132 = vmatpush1.msra.mxu0 %v99
    %133 = vmatprep.subr.mxu0 %v103
    %134 = vmatpush1.msra.mxu0 %v102
    %135 = vmatprep.subr.mxu0 %v106
    %136 = vmatpush1.msra.mxu0 %v105
    %137 = vmatprep.subr.mxu0 0.0
    %138 = vmatpush1.msra.mxu0 0.0
    %139 = vmatprep.subr.mxu0 0.0
    %140 = vmatpush1.msra.mxu0 0.0
    %141 = vmatprep.subr.mxu0 0.0
    %142 = vmatpush1.msra.mxu0 0.0
    %143 = vmatprep.subr.mxu0 0.0
    %144 = vmatpush1.msra.mxu0 0.0
    %145 = vmatprep.subr.mxu0 0.0
    %146 = vmatpush1.msra.mxu0 0.0
    %147 = vmatprep.subr.mxu0 0.0
    %148 = vmatpush1.msra.mxu0 0.0
    %149 = vmatprep.subr.mxu0 0.0
    %150 = vmatpush1.msra.mxu0 0.0
    %151 = vmatprep.subr.mxu0 0.0
    %152 = vmatpush1.msra.mxu0 0.0
    %153 = vmatprep.subr.mxu0 0.0
    %154 = vmatpush1.msra.mxu0 0.0
    %155 = vmatprep.subr.mxu0 0.0
    %156 = vmatpush1.msra.mxu0 0.0
    %157 = vmatprep.subr.mxu0 0.0
    %158 = vmatpush1.msra.mxu0 0.0
    %159 = vmatprep.subr.mxu0 0.0
    %160 = vmatpush1.msra.mxu0 0.0
    %161 = vmatprep.subr.mxu0 0.0
    %162 = vmatpush1.msra.mxu0 0.0
    %163 = vmatprep.subr.mxu0 0.0
    %164 = vmatpush1.msra.mxu0 0.0
    %165 = vmatprep.subr.mxu0 0.0
    %166 = vmatpush1.msra.mxu0 0.0
    %167 = vmatprep.subr.mxu0 0.0
    %168 = vmatpush1.msra.mxu0 0.0
    %169 = vmatprep.subr.mxu0 0.0
    %170 = vmatpush1.msra.mxu0 0.0
    %171 = vmatprep.subr.mxu0 0.0
    %172 = vmatpush1.msra.mxu0 0.0
    %173 = vmatprep.subr.mxu0 0.0
    %174 = vmatpush1.msra.mxu0 0.0
    %175 = vmatprep.subr.mxu0 0.0
    %176 = vmatpush1.msra.mxu0 0.0
    %177 = vmatprep.subr.mxu0 0.0
    %178 = vmatpush1.msra.mxu0 0.0
    %179 = vmatprep.subr.mxu0 0.0
    %180 = vmatpush1.msra.mxu0 0.0
    %181 = vmatprep.subr.mxu0 0.0
    %182 = vmatpush1.msra.mxu0 0.0
    %183 = vmatprep.subr.mxu0 0.0
    %184 = vmatpush1.msra.mxu0 0.0
    %185 = vmatprep.subr.mxu0 0.0
    %186 = vmatpush1.msra.mxu0 0.0
    %187 = vmatprep.subr.mxu0 0.0
    %188 = vmatpush1.msra.mxu0 0.0
    %189 = vmatprep.subr.mxu0 0.0
    %190 = vmatpush1.msra.mxu0 0.0
    %191 = vmatprep.subr.mxu0 0.0
    %192 = vmatpush1.msra.mxu0 0.0
    %193 = vmatprep.mubr.f32.mxu0 0.0
    %194 = vmatmul.mubr.f32.gmra.mrb[0].mxu0 %v127
    %v195 = vpop.f32.mrb[0].mxu0
    %v196 = vadd.f32 %v113, %v195
    %v197 = vpop.f32.mrb[0].mxu0
    %v198 = vadd.f32 %v117, %v197
    %199 = vdwg.mxu0
    %200 = vmatprep.subr.mxu0 0.0
    %201 = vmatpush1.msra.mxu0 %v98
    %202 = vmatprep.subr.mxu0 0.0
    %203 = vmatpush1.msra.mxu0 %v101
    %204 = vmatprep.subr.mxu0 0.0
    %205 = vmatpush1.msra.mxu0 %v104
    %206 = vmatprep.subr.mxu0 0.0
    %207 = vmatpush1.msra.mxu0 %v107
    %208 = vmatprep.subr.mxu0 0.0
    %209 = vmatpush1.msra.mxu0 0.0
    %210 = vmatprep.subr.mxu0 0.0
    %211 = vmatpush1.msra.mxu0 0.0
    %212 = vmatprep.subr.mxu0 0.0
    %213 = vmatpush1.msra.mxu0 0.0
    %214 = vmatprep.subr.mxu0 0.0
    %215 = vmatpush1.msra.mxu0 0.0
    %216 = vmatprep.subr.mxu0 0.0
    %217 = vmatpush1.msra.mxu0 0.0
    %218 = vmatprep.subr.mxu0 0.0
    %219 = vmatpush1.msra.mxu0 0.0
    %220 = vmatprep.subr.mxu0 0.0
    %221 = vmatpush1.msra.mxu0 0.0
    %222 = vmatprep.subr.mxu0 0.0
    %223 = vmatpush1.msra.mxu0 0.0
    %224 = vmatprep.subr.mxu0 0.0
    %225 = vmatpush1.msra.mxu0 0.0
    %226 = vmatprep.subr.mxu0 0.0
    %227 = vmatpush1.msra.mxu0 0.0
    %228 = vmatprep.subr.mxu0 0.0
    %229 = vmatpush1.msra.mxu0 0.0
    %230 = vmatprep.subr.mxu0 0.0
    %231 = vmatpush1.msra.mxu0 0.0
    %232 = vmatprep.subr.mxu0 0.0
    %233 = vmatpush1.msra.mxu0 0.0
    %234 = vmatprep.subr.mxu0 0.0
    %235 = vmatpush1.msra.mxu0 0.0
    %236 = vmatprep.subr.mxu0 0.0
    %237 = vmatpush1.msra.mxu0 0.0
    %238 = vmatprep.subr.mxu0 0.0
    %239 = vmatpush1.msra.mxu0 0.0
    %240 = vmatprep.subr.mxu0 0.0
    %241 = vmatpush1.msra.mxu0 0.0
    %242 = vmatprep.subr.mxu0 0.0
    %243 = vmatpush1.msra.mxu0 0.0
    %244 = vmatprep.subr.mxu0 0.0
    %245 = vmatpush1.msra.mxu0 0.0
    %246 = vmatprep.subr.mxu0 0.0
    %247 = vmatpush1.msra.mxu0 0.0
    %248 = vmatprep.subr.mxu0 0.0
    %249 = vmatpush1.msra.mxu0 0.0
    %250 = vmatprep.subr.mxu0 0.0
    %251 = vmatpush1.msra.mxu0 0.0
    %252 = vmatprep.subr.mxu0 0.0
    %253 = vmatpush1.msra.mxu0 0.0
    %254 = vmatprep.subr.mxu0 0.0
    %255 = vmatpush1.msra.mxu0 0.0
    %256 = vmatprep.subr.mxu0 0.0
    %257 = vmatpush1.msra.mxu0 0.0
    %258 = vmatprep.subr.mxu0 0.0
    %259 = vmatpush1.msra.mxu0 0.0
    %260 = vmatprep.subr.mxu0 0.0
    %261 = vmatpush1.msra.mxu0 0.0
    %262 = vmatprep.subr.mxu0 0.0
    %263 = vmatpush1.msra.mxu0 0.0
    %264 = vmatprep.mubr.f32.mxu0 0.0
    %265 = vmatmul.mubr.f32.gmra.mrb[0].mxu0 %v127
    %v266 = vpop.f32.mrb[0].mxu0
    %v267 = vadd.f32 %v121, %v266
    %v268 = vpop.f32.mrb[0].mxu0
    %269 = vdwg.mxu0
    %270 = vst [vmem:[#allocation4] sm:$0xff] %v196
    %271 = vst [vmem:[#allocation4 + $0x8] sm:$0xff] %v198
    %272 = vst [vmem:[#allocation4 + $0x10] sm:$0xff] %v267
    %v273 = vld [vmem:[%s2] sm:$0x1]
    %274 = vst.msk [vmem:[#allocation2] sm:$0x1] %vm65, %v273
    %v275 = vld [vmem:[#allocation2] sm:$0x1]
    %v276 = vld [vmem:[#allocation4] ss:$8 sm:$0x7]
    %v277 = vld [vmem:[%s6] sm:$0xff]
    %v278 = vld [vmem:[%s6 + $0x8] sm:$0xff]
    %v279 = vld [vmem:[%s6 + $0x10] sm:$0xff]
    %v280 = vld [vmem:[%s6 + $0x18] sm:$0xff]
    %v281 = vld [vmem:[%s6 + $0x20] sm:$0xff]
    %v282 = vld [vmem:[%s6 + $0x28] sm:$0xff]
    %v283 = vld [vmem:[%s6 + $0x30] sm:$0xff]
    %v284 = vld [vmem:[%s6 + $0x38] sm:$0xff]
    %v285 = vld [vmem:[%s6 + $0x40] sm:$0xff]
    %v286 = vld [vmem:[%s6 + $0x48] sm:$0xff]
    %v287 = vld [vmem:[%s6 + $0x50] sm:$0xff]
    %v288 = vld [vmem:[%s6 + $0x58] sm:$0xff]
    %v289 = vld [vmem:[%s7] sm:$0x7]
    %v291 = vlaneseq
    %v292 = vshrl.u32 %v291, 7
    %v293 = vsub.s32 0, %v292
    %v294 = vrot.slane %v289, %v293
    %v295 = vlaneseq
    %v296 = vshrl.u32 %v295, 7
    %v297 = vsub.s32 1, %v296
    %v298 = vrot.slane %v289, %v297
    %v299 = vlaneseq
    %v300 = vshrl.u32 %v299, 7
    %v301 = vsub.s32 2, %v300
    %v302 = vrot.slane %v289, %v301
    %v307 = vsel %vm125, %v275, 0
    %309 = vmatprep.subr.mxu0 %v278
    %310 = vmatpush1.msra.mxu0 %v277
    %311 = vmatprep.subr.mxu0 %v281
    %312 = vmatpush1.msra.mxu0 %v280
    %313 = vmatprep.subr.mxu0 %v284
    %314 = vmatpush1.msra.mxu0 %v283
    %315 = vmatprep.subr.mxu0 %v287
    %316 = vmatpush1.msra.mxu0 %v286
    %317 = vmatprep.subr.mxu0 0.0
    %318 = vmatpush1.msra.mxu0 0.0
    %319 = vmatprep.subr.mxu0 0.0
    %320 = vmatpush1.msra.mxu0 0.0
    %321 = vmatprep.subr.mxu0 0.0
    %322 = vmatpush1.msra.mxu0 0.0
    %323 = vmatprep.subr.mxu0 0.0
    %324 = vmatpush1.msra.mxu0 0.0
    %325 = vmatprep.subr.mxu0 0.0
    %326 = vmatpush1.msra.mxu0 0.0
    %327 = vmatprep.subr.mxu0 0.0
    %328 = vmatpush1.msra.mxu0 0.0
    %329 = vmatprep.subr.mxu0 0.0
    %330 = vmatpush1.msra.mxu0 0.0
    %331 = vmatprep.subr.mxu0 0.0
    %332 = vmatpush1.msra.mxu0 0.0
    %333 = vmatprep.subr.mxu0 0.0
    %334 = vmatpush1.msra.mxu0 0.0
    %335 = vmatprep.subr.mxu0 0.0
    %336 = vmatpush1.msra.mxu0 0.0
    %337 = vmatprep.subr.mxu0 0.0
    %338 = vmatpush1.msra.mxu0 0.0
    %339 = vmatprep.subr.mxu0 0.0
    %340 = vmatpush1.msra.mxu0 0.0
    %341 = vmatprep.subr.mxu0 0.0
    %342 = vmatpush1.msra.mxu0 0.0
    %343 = vmatprep.subr.mxu0 0.0
    %344 = vmatpush1.msra.mxu0 0.0
    %345 = vmatprep.subr.mxu0 0.0
    %346 = vmatpush1.msra.mxu0 0.0
    %347 = vmatprep.subr.mxu0 0.0
    %348 = vmatpush1.msra.mxu0 0.0
    %349 = vmatprep.subr.mxu0 0.0
    %350 = vmatpush1.msra.mxu0 0.0
    %351 = vmatprep.subr.mxu0 0.0
    %352 = vmatpush1.msra.mxu0 0.0
    %353 = vmatprep.subr.mxu0 0.0
    %354 = vmatpush1.msra.mxu0 0.0
    %355 = vmatprep.subr.mxu0 0.0
    %356 = vmatpush1.msra.mxu0 0.0
    %357 = vmatprep.subr.mxu0 0.0
    %358 = vmatpush1.msra.mxu0 0.0
    %359 = vmatprep.subr.mxu0 0.0
    %360 = vmatpush1.msra.mxu0 0.0
    %361 = vmatprep.subr.mxu0 0.0
    %362 = vmatpush1.msra.mxu0 0.0
    %363 = vmatprep.subr.mxu0 0.0
    %364 = vmatpush1.msra.mxu0 0.0
    %365 = vmatprep.subr.mxu0 0.0
    %366 = vmatpush1.msra.mxu0 0.0
    %367 = vmatprep.subr.mxu0 0.0
    %368 = vmatpush1.msra.mxu0 0.0
    %369 = vmatprep.subr.mxu0 0.0
    %370 = vmatpush1.msra.mxu0 0.0
    %371 = vmatprep.subr.mxu0 0.0
    %372 = vmatpush1.msra.mxu0 0.0
    %373 = vmatprep.mubr.f32.mxu0 0.0
    %374 = vmatmul.mubr.f32.gmra.mrb[0].mxu0 %v307
    %v375 = vpop.f32.mrb[0].mxu0
    %v376 = vadd.f32 %v294, %v375
    %v377 = vpop.f32.mrb[0].mxu0
    %v378 = vadd.f32 %v298, %v377
    %379 = vdwg.mxu0
    %380 = vmatprep.subr.mxu0 0.0
    %381 = vmatpush1.msra.mxu0 %v279
    %382 = vmatprep.subr.mxu0 0.0
    %383 = vmatpush1.msra.mxu0 %v282
    %384 = vmatprep.subr.mxu0 0.0
    %385 = vmatpush1.msra.mxu0 %v285
    %386 = vmatprep.subr.mxu0 0.0
    %387 = vmatpush1.msra.mxu0 %v288
    %388 = vmatprep.subr.mxu0 0.0
    %389 = vmatpush1.msra.mxu0 0.0
    %390 = vmatprep.subr.mxu0 0.0
    %391 = vmatpush1.msra.mxu0 0.0
    %392 = vmatprep.subr.mxu0 0.0
    %393 = vmatpush1.msra.mxu0 0.0
    %394 = vmatprep.subr.mxu0 0.0
    %395 = vmatpush1.msra.mxu0 0.0
    %396 = vmatprep.subr.mxu0 0.0
    %397 = vmatpush1.msra.mxu0 0.0
    %398 = vmatprep.subr.mxu0 0.0
    %399 = vmatpush1.msra.mxu0 0.0
    %400 = vmatprep.subr.mxu0 0.0
    %401 = vmatpush1.msra.mxu0 0.0
    %402 = vmatprep.subr.mxu0 0.0
    %403 = vmatpush1.msra.mxu0 0.0
    %404 = vmatprep.subr.mxu0 0.0
    %405 = vmatpush1.msra.mxu0 0.0
    %406 = vmatprep.subr.mxu0 0.0
    %407 = vmatpush1.msra.mxu0 0.0
    %408 = vmatprep.subr.mxu0 0.0
    %409 = vmatpush1.msra.mxu0 0.0
    %410 = vmatprep.subr.mxu0 0.0
    %411 = vmatpush1.msra.mxu0 0.0
    %412 = vmatprep.subr.mxu0 0.0
    %413 = vmatpush1.msra.mxu0 0.0
    %414 = vmatprep.subr.mxu0 0.0
    %415 = vmatpush1.msra.mxu0 0.0
    %416 = vmatprep.subr.mxu0 0.0
    %417 = vmatpush1.msra.mxu0 0.0
    %418 = vmatprep.subr.mxu0 0.0
    %419 = vmatpush1.msra.mxu0 0.0
    %420 = vmatprep.subr.mxu0 0.0
    %421 = vmatpush1.msra.mxu0 0.0
    %422 = vmatprep.subr.mxu0 0.0
    %423 = vmatpush1.msra.mxu0 0.0
    %424 = vmatprep.subr.mxu0 0.0
    %425 = vmatpush1.msra.mxu0 0.0
    %426 = vmatprep.subr.mxu0 0.0
    %427 = vmatpush1.msra.mxu0 0.0
    %428 = vmatprep.subr.mxu0 0.0
    %429 = vmatpush1.msra.mxu0 0.0
    %430 = vmatprep.subr.mxu0 0.0
    %431 = vmatpush1.msra.mxu0 0.0
    %432 = vmatprep.subr.mxu0 0.0
    %433 = vmatpush1.msra.mxu0 0.0
    %434 = vmatprep.subr.mxu0 0.0
    %435 = vmatpush1.msra.mxu0 0.0
    %436 = vmatprep.subr.mxu0 0.0
    %437 = vmatpush1.msra.mxu0 0.0
    %438 = vmatprep.subr.mxu0 0.0
    %439 = vmatpush1.msra.mxu0 0.0
    %440 = vmatprep.subr.mxu0 0.0
    %441 = vmatpush1.msra.mxu0 0.0
    %442 = vmatprep.subr.mxu0 0.0
    %443 = vmatpush1.msra.mxu0 0.0
    %444 = vmatprep.mubr.f32.mxu0 0.0
    %445 = vmatmul.mubr.f32.gmra.mrb[0].mxu0 %v307
    %v446 = vpop.f32.mrb[0].mxu0
    %v447 = vadd.f32 %v302, %v446
    %v448 = vpop.f32.mrb[0].mxu0
    %449 = vdwg.mxu0
    %v452 = vcombine.low %v376, %v378
    %v454 = vunpack.c.l.s4 1966171168
    %v455 = vunpack.c.0.s8 %v454
    %v456 = vlaneseq
    %v457 = vshrl.u32 %v456, 7
    %v458 = vsub.s32 %v455, %v457
    %v459 = vrot.slane %v452, %v458
    %v461 = vunpack.c.l.s4 1966171168
    %v462 = vunpack.c.0.s8 %v461
    %v463 = vlaneseq
    %v464 = vshrl.u32 %v463, 7
    %v465 = vsub.s32 %v462, %v464
    %v466 = vrot.slane %v459, %v465
    %v468 = vadd.f32 %v276, %v466
    %v470 = vlaneseq
    %v471 = vshrl.u32 %v470, 7
    %v472 = vsub.s32 0, %v471
    %v473 = vrot.slane %v468, %v472
    %v474 = vlaneseq
    %v475 = vshrl.u32 %v474, 7
    %v476 = vsub.s32 1, %v475
    %v477 = vrot.slane %v468, %v476
    %vm480 = vcmask 1040384
    %v481 = vsel %vm480, %v473, -inf
    %v482 = vsel %vm480, %v477, -inf
    %v483 = vmax.f32 %v481, %v482
    %484 = vmax.xlane.f32.xlu0 %v483
    %v485 = vpop.xlane.xlu0 %484
    %v487 = vlaneseq
    %v488 = vshrl.u32 %v487, 7
    %v489 = vsub.s32 0, %v488
    %v490 = vrot.slane %v485, %v489
    %v492 = vsub.f32 %v468, %v490
    %v493 = vmul.f32 %v492, 1.442695
    %v494 = vpow.pop %v493
    %v496 = vlaneseq
    %v497 = vshrl.u32 %v496, 7
    %v498 = vsub.s32 0, %v497
    %v499 = vrot.slane %v494, %v498
    %v500 = vlaneseq
    %v501 = vshrl.u32 %v500, 7
    %v502 = vsub.s32 1, %v501
    %v503 = vrot.slane %v494, %v502
    %v506 = vsel %vm480, %v499, 0.0
    %v507 = vsel %vm480, %v503, 0.0
    %v508 = vadd.f32 %v506, %v507
    %509 = vadd.xlane.f32.xlu0 %v508
    %v510 = vpop.xlane.xlu0 %509
    %v511 = vld [vmem:[%s3] sm:$0xff]
    %v512 = vld [vmem:[%s3 + $0x8] sm:$0xff]
    %v513 = vld [vmem:[%s3 + $0x10] sm:$0xff]
    %v514 = vld [vmem:[%s3 + $0x18] sm:$0xff]
    %v515 = vld [vmem:[%s3 + $0x20] sm:$0xff]
    %v516 = vld [vmem:[%s3 + $0x28] sm:$0xff]
    %v517 = vld [vmem:[%s3 + $0x30] sm:$0xff]
    %v518 = vld [vmem:[%s3 + $0x38] sm:$0xff]
    %v519 = vld [vmem:[%s3 + $0x40] sm:$0xff]
    %v520 = vld [vmem:[%s3 + $0x48] sm:$0xff]
    %v521 = vld [vmem:[%s3 + $0x50] sm:$0xff]
    %v522 = vld [vmem:[%s3 + $0x58] sm:$0xff]
    %v523 = vld [vmem:[%s3 + $0x60] sm:$0xff]
    %v524 = vld [vmem:[%s3 + $0x68] sm:$0xff]
    %v525 = vld [vmem:[%s3 + $0x70] sm:$0xff]
    %v526 = vld [vmem:[%s3 + $0x78] sm:$0xff]
    %v527 = vld [vmem:[%s3 + $0x80] sm:$0xff]
    %v528 = vld [vmem:[%s3 + $0x88] sm:$0xff]
    %v529 = vld [vmem:[%s3 + $0x90] sm:$0xff]
    %v530 = vld [vmem:[%s3 + $0x98] sm:$0xff]
    %v531 = vld [vmem:[%s3 + $0xa0] sm:$0xff]
    %v532 = vld [vmem:[%s3 + $0xa8] sm:$0xff]
    %v533 = vld [vmem:[%s3 + $0xb0] sm:$0xff]
    %v534 = vld [vmem:[%s3 + $0xb8] sm:$0xff]
    %v535 = vld [vmem:[%s3 + $0xc0] sm:$0xff]
    %v536 = vld [vmem:[%s3 + $0xc8] sm:$0xff]
    %v537 = vld [vmem:[%s3 + $0xd0] sm:$0xff]
    %v538 = vld [vmem:[%s3 + $0xd8] sm:$0xff]
    %v539 = vld [vmem:[%s3 + $0xe0] sm:$0xff]
    %v540 = vld [vmem:[%s3 + $0xe8] sm:$0xff]
    %v541 = vld [vmem:[%s3 + $0xf0] sm:$0xff]
    %v542 = vld [vmem:[%s3 + $0xf8] sm:$0xff]
    %543 = vmatprep.subr.mxu0 0.0
    %544 = vmatpush1.msra.mxu0 %v511
    %545 = vmatprep.subr.mxu0 0.0
    %546 = vmatpush1.msra.mxu0 %v512
    %547 = vmatprep.subr.mxu0 0.0
    %548 = vmatpush1.msra.mxu0 %v513
    %549 = vmatprep.subr.mxu0 0.0
    %550 = vmatpush1.msra.mxu0 %v514
    %551 = vmatprep.subr.mxu0 0.0
    %552 = vmatpush1.msra.mxu0 %v515
    %553 = vmatprep.subr.mxu0 0.0
    %554 = vmatpush1.msra.mxu0 %v516
    %555 = vmatprep.subr.mxu0 0.0
    %556 = vmatpush1.msra.mxu0 %v517
    %557 = vmatprep.subr.mxu0 0.0
    %558 = vmatpush1.msra.mxu0 %v518
    %559 = vmatprep.subr.mxu0 0.0
    %560 = vmatpush1.msra.mxu0 %v519
    %561 = vmatprep.subr.mxu0 0.0
    %562 = vmatpush1.msra.mxu0 %v520
    %563 = vmatprep.subr.mxu0 0.0
    %564 = vmatpush1.msra.mxu0 %v521
    %565 = vmatprep.subr.mxu0 0.0
    %566 = vmatpush1.msra.mxu0 %v522
    %567 = vmatprep.subr.mxu0 0.0
    %568 = vmatpush1.msra.mxu0 %v523
    %569 = vmatprep.subr.mxu0 0.0
    %570 = vmatpush1.msra.mxu0 %v524
    %571 = vmatprep.subr.mxu0 0.0
    %572 = vmatpush1.msra.mxu0 %v525
    %573 = vmatprep.subr.mxu0 0.0
    %574 = vmatpush1.msra.mxu0 %v526
    %575 = vmatprep.subr.mxu0 0.0
    %576 = vmatpush1.msra.mxu0 %v527
    %577 = vmatprep.subr.mxu0 0.0
    %578 = vmatpush1.msra.mxu0 %v528
    %579 = vmatprep.subr.mxu0 0.0
    %580 = vmatpush1.msra.mxu0 %v529
    %581 = vmatprep.subr.mxu0 0.0
    %582 = vmatpush1.msra.mxu0 %v530
    %583 = vmatprep.subr.mxu0 0.0
    %584 = vmatpush1.msra.mxu0 %v531
    %585 = vmatprep.subr.mxu0 0.0
    %586 = vmatpush1.msra.mxu0 %v532
    %587 = vmatprep.subr.mxu0 0.0
    %588 = vmatpush1.msra.mxu0 %v533
    %589 = vmatprep.subr.mxu0 0.0
    %590 = vmatpush1.msra.mxu0 %v534
    %591 = vmatprep.subr.mxu0 0.0
    %592 = vmatpush1.msra.mxu0 %v535
    %593 = vmatprep.subr.mxu0 0.0
    %594 = vmatpush1.msra.mxu0 %v536
    %595 = vmatprep.subr.mxu0 0.0
    %596 = vmatpush1.msra.mxu0 %v537
    %597 = vmatprep.subr.mxu0 0.0
    %598 = vmatpush1.msra.mxu0 %v538
    %599 = vmatprep.subr.mxu0 0.0
    %600 = vmatpush1.msra.mxu0 %v539
    %601 = vmatprep.subr.mxu0 0.0
    %602 = vmatpush1.msra.mxu0 %v540
    %603 = vmatprep.subr.mxu0 0.0
    %604 = vmatpush1.msra.mxu0 %v541
    %605 = vmatprep.subr.mxu0 0.0
    %606 = vmatpush1.msra.mxu0 %v542
    %607 = vmatprep.mubr.f32.mxu0 %v503
    %608 = vmatmul.mubr.f32.gmra.mrb[0].mxu0 %v499
    %v609 = vpop.f32.mrb[0].mxu0
    %v610 = vadd.f32 0.0, %v609
    %v611 = vpop.f32.mrb[0].mxu0
    %612 = vdwg.mxu0
    %v613 = vrcp.pop %v510
    %v614 = vmul.f32 %v510, %v613
    %v615 = vsub.f32 2.0, %v614
    %v616 = vmul.f32 %v613, %v615
    %v617 = vmul.f32 %v610, %v616
    %v618 = vld [vmem:[%s8] sm:$0xff]
    %v619 = vld [vmem:[%s8 + $0x8] sm:$0xff]
    %v620 = vld [vmem:[%s8 + $0x10] sm:$0xff]
    %v621 = vld [vmem:[%s8 + $0x18] sm:$0xff]
    %v623 = vsel %vm125, %v617, 0
    %625 = vmatprep.subr.mxu0 0.0
    %626 = vmatpush1.msra.mxu0 %v618
    %627 = vmatprep.subr.mxu0 0.0
    %628 = vmatpush1.msra.mxu0 %v619
    %629 = vmatprep.subr.mxu0 0.0
    %630 = vmatpush1.msra.mxu0 %v620
    %631 = vmatprep.subr.mxu0 0.0
    %632 = vmatpush1.msra.mxu0 %v621
    %633 = vmatprep.subr.mxu0 0.0
    %634 = vmatpush1.msra.mxu0 0.0
    %635 = vmatprep.subr.mxu0 0.0
    %636 = vmatpush1.msra.mxu0 0.0
    %637 = vmatprep.subr.mxu0 0.0
    %638 = vmatpush1.msra.mxu0 0.0
    %639 = vmatprep.subr.mxu0 0.0
    %640 = vmatpush1.msra.mxu0 0.0
    %641 = vmatprep.subr.mxu0 0.0
    %642 = vmatpush1.msra.mxu0 0.0
    %643 = vmatprep.subr.mxu0 0.0
    %644 = vmatpush1.msra.mxu0 0.0
    %645 = vmatprep.subr.mxu0 0.0
    %646 = vmatpush1.msra.mxu0 0.0
    %647 = vmatprep.subr.mxu0 0.0
    %648 = vmatpush1.msra.mxu0 0.0
    %649 = vmatprep.subr.mxu0 0.0
    %650 = vmatpush1.msra.mxu0 0.0
    %651 = vmatprep.subr.mxu0 0.0
    %652 = vmatpush1.msra.mxu0 0.0
    %653 = vmatprep.subr.mxu0 0.0
    %654 = vmatpush1.msra.mxu0 0.0
    %655 = vmatprep.subr.mxu0 0.0
    %656 = vmatpush1.msra.mxu0 0.0
    %657 = vmatprep.subr.mxu0 0.0
    %658 = vmatpush1.msra.mxu0 0.0
    %659 = vmatprep.subr.mxu0 0.0
    %660 = vmatpush1.msra.mxu0 0.0
    %661 = vmatprep.subr.mxu0 0.0
    %662 = vmatpush1.msra.mxu0 0.0
    %663 = vmatprep.subr.mxu0 0.0
    %664 = vmatpush1.msra.mxu0 0.0
    %665 = vmatprep.subr.mxu0 0.0
    %666 = vmatpush1.msra.mxu0 0.0
    %667 = vmatprep.subr.mxu0 0.0
    %668 = vmatpush1.msra.mxu0 0.0
    %669 = vmatprep.subr.mxu0 0.0
    %670 = vmatpush1.msra.mxu0 0.0
    %671 = vmatprep.subr.mxu0 0.0
    %672 = vmatpush1.msra.mxu0 0.0
    %673 = vmatprep.subr.mxu0 0.0
    %674 = vmatpush1.msra.mxu0 0.0
    %675 = vmatprep.subr.mxu0 0.0
    %676 = vmatpush1.msra.mxu0 0.0
    %677 = vmatprep.subr.mxu0 0.0
    %678 = vmatpush1.msra.mxu0 0.0
    %679 = vmatprep.subr.mxu0 0.0
    %680 = vmatpush1.msra.mxu0 0.0
    %681 = vmatprep.subr.mxu0 0.0
    %682 = vmatpush1.msra.mxu0 0.0
    %683 = vmatprep.subr.mxu0 0.0
    %684 = vmatpush1.msra.mxu0 0.0
    %685 = vmatprep.subr.mxu0 0.0
    %686 = vmatpush1.msra.mxu0 0.0
    %687 = vmatprep.subr.mxu0 0.0
    %688 = vmatpush1.msra.mxu0 0.0
    %689 = vmatprep.mubr.f32.mxu0 0.0
    %690 = vmatmul.mubr.f32.gmra.mrb[0].mxu0 %v623
    %v691 = vpop.f32.mrb[0].mxu0
    %v692 = vadd.f32 0.0, %v691
    %v693 = vpop.f32.mrb[0].mxu0
    %694 = vdwg.mxu0
    %v696 = vrot.slane %v276, 2
    %v698 = vadd.f32 %v696, %v692
    %v699 = vmax.f32 %v698, 0.0
    %v700 = vld [vmem:[%s9] sm:$0xff]
    %v701 = vld [vmem:[%s9 + $0x8] sm:$0xff]
    %v702 = vld [vmem:[%s9 + $0x10] sm:$0xff]
    %v703 = vld [vmem:[%s9 + $0x18] sm:$0xff]
    %v704 = vld [vmem:[%s10] sm:$0x1]
    %v706 = vsel %vm125, %v699, 0
    %708 = vmatprep.subr.mxu0 0.0
    %709 = vmatpush1.msra.mxu0 %v700
    %710 = vmatprep.subr.mxu0 0.0
    %711 = vmatpush1.msra.mxu0 %v701
    %712 = vmatprep.subr.mxu0 0.0
    %713 = vmatpush1.msra.mxu0 %v702
    %714 = vmatprep.subr.mxu0 0.0
    %715 = vmatpush1.msra.mxu0 %v703
    %716 = vmatprep.subr.mxu0 0.0
    %717 = vmatpush1.msra.mxu0 0.0
    %718 = vmatprep.subr.mxu0 0.0
    %719 = vmatpush1.msra.mxu0 0.0
    %720 = vmatprep.subr.mxu0 0.0
    %721 = vmatpush1.msra.mxu0 0.0
    %722 = vmatprep.subr.mxu0 0.0
    %723 = vmatpush1.msra.mxu0 0.0
    %724 = vmatprep.subr.mxu0 0.0
    %725 = vmatpush1.msra.mxu0 0.0
    %726 = vmatprep.subr.mxu0 0.0
    %727 = vmatpush1.msra.mxu0 0.0
    %728 = vmatprep.subr.mxu0 0.0
    %729 = vmatpush1.msra.mxu0 0.0
    %730 = vmatprep.subr.mxu0 0.0
    %731 = vmatpush1.msra.mxu0 0.0
    %732 = vmatprep.subr.mxu0 0.0
    %733 = vmatpush1.msra.mxu0 0.0
    %734 = vmatprep.subr.mxu0 0.0
    %735 = vmatpush1.msra.mxu0 0.0
    %736 = vmatprep.subr.mxu0 0.0
    %737 = vmatpush1.msra.mxu0 0.0
    %738 = vmatprep.subr.mxu0 0.0
    %739 = vmatpush1.msra.mxu0 0.0
    %740 = vmatprep.subr.mxu0 0.0
    %741 = vmatpush1.msra.mxu0 0.0
    %742 = vmatprep.subr.mxu0 0.0
    %743 = vmatpush1.msra.mxu0 0.0
    %744 = vmatprep.subr.mxu0 0.0
    %745 = vmatpush1.msra.mxu0 0.0
    %746 = vmatprep.subr.mxu0 0.0
    %747 = vmatpush1.msra.mxu0 0.0
    %748 = vmatprep.subr.mxu0 0.0
    %749 = vmatpush1.msra.mxu0 0.0
    %750 = vmatprep.subr.mxu0 0.0
    %751 = vmatpush1.msra.mxu0 0.0
    %752 = vmatprep.subr.mxu0 0.0
    %753 = vmatpush1.msra.mxu0 0.0
    %754 = vmatprep.subr.mxu0 0.0
    %755 = vmatpush1.msra.mxu0 0.0
    %756 = vmatprep.subr.mxu0 0.0
    %757 = vmatpush1.msra.mxu0 0.0
    %758 = vmatprep.subr.mxu0 0.0
    %759 = vmatpush1.msra.mxu0 0.0
    %760 = vmatprep.subr.mxu0 0.0
    %761 = vmatpush1.msra.mxu0 0.0
    %762 = vmatprep.subr.mxu0 0.0
    %763 = vmatpush1.msra.mxu0 0.0
    %764 = vmatprep.subr.mxu0 0.0
    %765 = vmatpush1.msra.mxu0 0.0
    %766 = vmatprep.subr.mxu0 0.0
    %767 = vmatpush1.msra.mxu0 0.0
    %768 = vmatprep.subr.mxu0 0.0
    %769 = vmatpush1.msra.mxu0 0.0
    %770 = vmatprep.subr.mxu0 0.0
    %771 = vmatpush1.msra.mxu0 0.0
    %772 = vmatprep.mubr.f32.mxu0 0.0
    %773 = vmatmul.mubr.f32.gmra.mrb[0].mxu0 %v706
    %v774 = vpop.f32.mrb[0].mxu0
    %v775 = vadd.f32 %v704, %v774
    %v776 = vpop.f32.mrb[0].mxu0
    %777 = vdwg.mxu0
    %v778 = vadd.f32 %v775, %v447
    %v779 = vxor.u32 %v778, 2147483648
    %v780 = vmul.f32 %v779, 1.442695
    %v781 = vpow.pop %v780
    %v782 = vadd.f32 %v781, 1.0
    %v783 = vrcp.pop %v782
    %v784 = vmul.f32 1.0, %v783
    %786 = vrot.lane.b32.xlu0 %v447, 64
    %v787 = vpop.permute.xlu0 %786
    %v789 = vmul.f32 %v784, %v787
    %791 = vrot.lane.b32.xlu0 %v789, 64
    %v792 = vpop.permute.xlu0 %791
    %v794 = vadd.f32 %v775, %v792
    %v795 = vtanh.pop %v794
    %v796 = vsub.f32 1.0, %v784
    %798 = vrot.lane.b32.xlu0 %v795, 96
    %v799 = vpop.permute.xlu0 %798
    %v801 = vmul.f32 %v796, %v799
    %v802 = vlaneseq
    %v803 = vshrl.u32 %v802, 7
    %v804 = vsub.s32 0, %v803
    %v805 = vrot.slane %v275, %v804
    %806 = vrot.lane.b32.xlu0 %v805, 32
    %v807 = vpop.permute.xlu0 %806
    %v809 = vmul.f32 %v784, %v807
    %v810 = vadd.f32 %v801, %v809
    %812 = vrot.lane.b32.xlu0 %v810, 96
    %v813 = vpop.permute.xlu0 %812
    %815 = vst.msk [vmem:[#allocation2] sm:$0x1] %vm65, %v813
    %v817 = vlaneseq
    %v818 = vshrl.u32 %v817, 7
    %v819 = vsub.s32 0, %v818
    %v820 = vrot.slane %v616, %v819
    %v822 = vmul.f32 %v494, %v820
    %v823 = vlaneseq
    %vm824 = vcmp.ge.s32.totalorder %v823, 0
    %vm825 = vcmp.lt.s32.totalorder %v823, 256
    %vm826 = vmand %vm824, %vm825
    %827 = vst.msk [vmem:[#allocation11] ss:$8 sm:$0x3] %vm826, %v822
    %828 = vst.msk [vmem:[#allocation11] ss:$8 sm:$0x0] %vm826, %v822
    %v829 = vld [vmem:[%s11] sm:$0xff]
    %v830 = vld [vmem:[%s11 + $0x8] sm:$0xff]
    %v831 = vld [vmem:[%s11 + $0x10] sm:$0xff]
    %v832 = vld [vmem:[%s11 + $0x18] sm:$0xff]
    %v833 = vld [vmem:[%s12] sm:$0x1]
    %v834 = vsel %vm125, %v813, 0
    %836 = vmatprep.subr.mxu0 0.0
    %837 = vmatpush1.msra.mxu0 %v829
    %838 = vmatprep.subr.mxu0 0.0
    %839 = vmatpush1.msra.mxu0 %v830
    %840 = vmatprep.subr.mxu0 0.0
    %841 = vmatpush1.msra.mxu0 %v831
    %842 = vmatprep.subr.mxu0 0.0
    %843 = vmatpush1.msra.mxu0 %v832
    %844 = vmatprep.subr.mxu0 0.0
    %845 = vmatpush1.msra.mxu0 0.0
    %846 = vmatprep.subr.mxu0 0.0
    %847 = vmatpush1.msra.mxu0 0.0
    %848 = vmatprep.subr.mxu0 0.0
    %849 = vmatpush1.msra.mxu0 0.0
    %850 = vmatprep.subr.mxu0 0.0
    %851 = vmatpush1.msra.mxu0 0.0
    %852 = vmatprep.subr.mxu0 0.0
    %853 = vmatpush1.msra.mxu0 0.0
    %854 = vmatprep.subr.mxu0 0.0
    %855 = vmatpush1.msra.mxu0 0.0
    %856 = vmatprep.subr.mxu0 0.0
    %857 = vmatpush1.msra.mxu0 0.0
    %858 = vmatprep.subr.mxu0 0.0
    %859 = vmatpush1.msra.mxu0 0.0
    %860 = vmatprep.subr.mxu0 0.0
    %861 = vmatpush1.msra.mxu0 0.0
    %862 = vmatprep.subr.mxu0 0.0
    %863 = vmatpush1.msra.mxu0 0.0
    %864 = vmatprep.subr.mxu0 0.0
    %865 = vmatpush1.msra.mxu0 0.0
    %866 = vmatprep.subr.mxu0 0.0
    %867 = vmatpush1.msra.mxu0 0.0
    %868 = vmatprep.subr.mxu0 0.0
    %869 = vmatpush1.msra.mxu0 0.0
    %870 = vmatprep.subr.mxu0 0.0
    %871 = vmatpush1.msra.mxu0 0.0
    %872 = vmatprep.subr.mxu0 0.0
    %873 = vmatpush1.msra.mxu0 0.0
    %874 = vmatprep.subr.mxu0 0.0
    %875 = vmatpush1.msra.mxu0 0.0
    %876 = vmatprep.subr.mxu0 0.0
    %877 = vmatpush1.msra.mxu0 0.0
    %878 = vmatprep.subr.mxu0 0.0
    %879 = vmatpush1.msra.mxu0 0.0
    %880 = vmatprep.subr.mxu0 0.0
    %881 = vmatpush1.msra.mxu0 0.0
    %882 = vmatprep.subr.mxu0 0.0
    %883 = vmatpush1.msra.mxu0 0.0
    %884 = vmatprep.subr.mxu0 0.0
    %885 = vmatpush1.msra.mxu0 0.0
    %886 = vmatprep.subr.mxu0 0.0
    %887 = vmatpush1.msra.mxu0 0.0
    %888 = vmatprep.subr.mxu0 0.0
    %889 = vmatpush1.msra.mxu0 0.0
    %890 = vmatprep.subr.mxu0 0.0
    %891 = vmatpush1.msra.mxu0 0.0
    %892 = vmatprep.subr.mxu0 0.0
    %893 = vmatpush1.msra.mxu0 0.0
    %894 = vmatprep.subr.mxu0 0.0
    %895 = vmatpush1.msra.mxu0 0.0
    %896 = vmatprep.subr.mxu0 0.0
    %897 = vmatpush1.msra.mxu0 0.0
    %898 = vmatprep.subr.mxu0 0.0
    %899 = vmatpush1.msra.mxu0 0.0
    %900 = vmatprep.mubr.f32.mxu0 0.0
    %901 = vmatmul.mubr.f32.gmra.mrb[0].mxu0 %v834
    %v902 = vpop.f32.mrb[0].mxu0
    %v903 = vadd.f32 %v833, %v902
    %v904 = vpop.f32.mrb[0].mxu0
    %905 = vdwg.mxu0
    %v906 = vsel %vm480, %v903, -inf
    %907 = vmax.xlane.f32.xlu0 %v906
    %v908 = vpop.xlane.xlu0 %907
    %v909 = vsub.f32 %v903, %v908
    %v910 = vmul.f32 %v909, 1.442695
    %v911 = vpow.pop %v910
    %v912 = vsel %vm480, %v911, 0.0
    %913 = vadd.xlane.f32.xlu0 %v912
    %v914 = vpop.xlane.xlu0 %913
    %v915 = vlog2.pop %v914
    %v916 = vmul.f32 %v915, 0.6931472
    %v917 = vsub.f32 %v909, %v916
    %918 = vst [vmem:[#allocation8] sm:$0x1] %v917
    %v919 = vld [vmem:[#allocation2] sm:$0x1]
    %s920 = scalar_lea.vmem [#allocation4], 1
    %v921 = vld [vmem:[%s920] ss:$8 sm:$0x7]
    %v922 = vld [vmem:[%s6] sm:$0xff]
    %v923 = vld [vmem:[%s6 + $0x8] sm:$0xff]
    %v924 = vld [vmem:[%s6 + $0x10] sm:$0xff]
    %v925 = vld [vmem:[%s6 + $0x18] sm:$0xff]
    %v926 = vld [vmem:[%s6 + $0x20] sm:$0xff]
    %v927 = vld [vmem:[%s6 + $0x28] sm:$0xff]
    %v928 = vld [vmem:[%s6 + $0x30] sm:$0xff]
    %v929 = vld [vmem:[%s6 + $0x38] sm:$0xff]
    %v930 = vld [vmem:[%s6 + $0x40] sm:$0xff]
    %v931 = vld [vmem:[%s6 + $0x48] sm:$0xff]
    %v932 = vld [vmem:[%s6 + $0x50] sm:$0xff]
    %v933 = vld [vmem:[%s6 + $0x58] sm:$0xff]
    %v934 = vld [vmem:[%s7] sm:$0x7]
    %v936 = vlaneseq
    %v937 = vshrl.u32 %v936, 7
    %v938 = vsub.s32 0, %v937
    %v939 = vrot.slane %v934, %v938
    %v940 = vlaneseq
    %v941 = vshrl.u32 %v940, 7
    %v942 = vsub.s32 1, %v941
    %v943 = vrot.slane %v934, %v942
    %v944 = vlaneseq
    %v945 = vshrl.u32 %v944, 7
    %v946 = vsub.s32 2, %v945
    %v947 = vrot.slane %v934, %v946
    %v952 = vsel %vm125, %v919, 0
    %954 = vmatprep.subr.mxu0 %v923
    %955 = vmatpush1.msra.mxu0 %v922
    %956 = vmatprep.subr.mxu0 %v926
    %957 = vmatpush1.msra.mxu0 %v925
    %958 = vmatprep.subr.mxu0 %v929
    %959 = vmatpush1.msra.mxu0 %v928
    %960 = vmatprep.subr.mxu0 %v932
    %961 = vmatpush1.msra.mxu0 %v931
    %962 = vmatprep.subr.mxu0 0.0
    %963 = vmatpush1.msra.mxu0 0.0
    %964 = vmatprep.subr.mxu0 0.0
    %965 = vmatpush1.msra.mxu0 0.0
    %966 = vmatprep.subr.mxu0 0.0
    %967 = vmatpush1.msra.mxu0 0.0
    %968 = vmatprep.subr.mxu0 0.0
    %969 = vmatpush1.msra.mxu0 0.0
    %970 = vmatprep.subr.mxu0 0.0
    %971 = vmatpush1.msra.mxu0 0.0
    %972 = vmatprep.subr.mxu0 0.0
    %973 = vmatpush1.msra.mxu0 0.0
    %974 = vmatprep.subr.mxu0 0.0
    %975 = vmatpush1.msra.mxu0 0.0
    %976 = vmatprep.subr.mxu0 0.0
    %977 = vmatpush1.msra.mxu0 0.0
    %978 = vmatprep.subr.mxu0 0.0
    %979 = vmatpush1.msra.mxu0 0.0
    %980 = vmatprep.subr.mxu0 0.0
    %981 = vmatpush1.msra.mxu0 0.0
    %982 = vmatprep.subr.mxu0 0.0
    %983 = vmatpush1.msra.mxu0 0.0
    %984 = vmatprep.subr.mxu0 0.0
    %985 = vmatpush1.msra.mxu0 0.0
    %986 = vmatprep.subr.mxu0 0.0
    %987 = vmatpush1.msra.mxu0 0.0
    %988 = vmatprep.subr.mxu0 0.0
    %989 = vmatpush1.msra.mxu0 0.0
    %990 = vmatprep.subr.mxu0 0.0
    %991 = vmatpush1.msra.mxu0 0.0
    %992 = vmatprep.subr.mxu0 0.0
    %993 = vmatpush1.msra.mxu0 0.0
    %994 = vmatprep.subr.mxu0 0.0
    %995 = vmatpush1.msra.mxu0 0.0
    %996 = vmatprep.subr.mxu0 0.0
    %997 = vmatpush1.msra.mxu0 0.0
    %998 = vmatprep.subr.mxu0 0.0
    %999 = vmatpush1.msra.mxu0 0.0
    %1000 = vmatprep.subr.mxu0 0.0
    %1001 = vmatpush1.msra.mxu0 0.0
    %1002 = vmatprep.subr.mxu0 0.0
    %1003 = vmatpush1.msra.mxu0 0.0
    %1004 = vmatprep.subr.mxu0 0.0
    %1005 = vmatpush1.msra.mxu0 0.0
    %1006 = vmatprep.subr.mxu0 0.0
    %1007 = vmatpush1.msra.mxu0 0.0
    %1008 = vmatprep.subr.mxu0 0.0
    %1009 = vmatpush1.msra.mxu0 0.0
    %1010 = vmatprep.subr.mxu0 0.0
    %1011 = vmatpush1.msra.mxu0 0.0
    %1012 = vmatprep.subr.mxu0 0.0
    %1013 = vmatpush1.msra.mxu0 0.0
    %1014 = vmatprep.subr.mxu0 0.0
    %1015 = vmatpush1.msra.mxu0 0.0
    %1016 = vmatprep.subr.mxu0 0.0
    %1017 = vmatpush1.msra.mxu0 0.0
    %1018 = vmatprep.mubr.f32.mxu0 0.0
    %1019 = vmatmul.mubr.f32.gmra.mrb[0].mxu0 %v952
    %v1020 = vpop.f32.mrb[0].mxu0
    %v1021 = vadd.f32 %v939, %v1020
    %v1022 = vpop.f32.mrb[0].mxu0
    %v1023 = vadd.f32 %v943, %v1022
    %1024 = vdwg.mxu0
    %1025 = vmatprep.subr.mxu0 0.0
    %1026 = vmatpush1.msra.mxu0 %v924
    %1027 = vmatprep.subr.mxu0 0.0
    %1028 = vmatpush1.msra.mxu0 %v927
    %1029 = vmatprep.subr.mxu0 0.0
    %1030 = vmatpush1.msra.mxu0 %v930
    %1031 = vmatprep.subr.mxu0 0.0
    %1032 = vmatpush1.msra.mxu0 %v933
    %1033 = vmatprep.subr.mxu0 0.0
    %1034 = vmatpush1.msra.mxu0 0.0
    %1035 = vmatprep.subr.mxu0 0.0
    %1036 = vmatpush1.msra.mxu0 0.0
    %1037 = vmatprep.subr.mxu0 0.0
    %1038 = vmatpush1.msra.mxu0 0.0
    %1039 = vmatprep.subr.mxu0 0.0
    %1040 = vmatpush1.msra.mxu0 0.0
    %1041 = vmatprep.subr.mxu0 0.0
    %1042 = vmatpush1.msra.mxu0 0.0
    %1043 = vmatprep.subr.mxu0 0.0
    %1044 = vmatpush1.msra.mxu0 0.0
    %1045 = vmatprep.subr.mxu0 0.0
    %1046 = vmatpush1.msra.mxu0 0.0
    %1047 = vmatprep.subr.mxu0 0.0
    %1048 = vmatpush1.msra.mxu0 0.0
    %1049 = vmatprep.subr.mxu0 0.0
    %1050 = vmatpush1.msra.mxu0 0.0
    %1051 = vmatprep.subr.mxu0 0.0
    %1052 = vmatpush1.msra.mxu0 0.0
    %1053 = vmatprep.subr.mxu0 0.0
    %1054 = vmatpush1.msra.mxu0 0.0
    %1055 = vmatprep.subr.mxu0 0.0
    %1056 = vmatpush1.msra.mxu0 0.0
    %1057 = vmatprep.subr.mxu0 0.0
    %1058 = vmatpush1.msra.mxu0 0.0
    %1059 = vmatprep.subr.mxu0 0.0
    %1060 = vmatpush1.msra.mxu0 0.0
    %1061 = vmatprep.subr.mxu0 0.0
    %1062 = vmatpush1.msra.mxu0 0.0
    %1063 = vmatprep.subr.mxu0 0.0
    %1064 = vmatpush1.msra.mxu0 0.0
    %1065 = vmatprep.subr.mxu0 0.0
    %1066 = vmatpush1.msra.mxu0 0.0
    %1067 = vmatprep.subr.mxu0 0.0
    %1068 = vmatpush1.msra.mxu0 0.0
    %1069 = vmatprep.subr.mxu0 0.0
    %1070 = vmatpush1.msra.mxu0 0.0
    %1071 = vmatprep.subr.mxu0 0.0
    %1072 = vmatpush1.msra.mxu0 0.0
    %1073 = vmatprep.subr.mxu0 0.0
    %1074 = vmatpush1.msra.mxu0 0.0
    %1075 = vmatprep.subr.mxu0 0.0
    %1076 = vmatpush1.msra.mxu0 0.0
    %1077 = vmatprep.subr.mxu0 0.0
    %1078 = vmatpush1.msra.mxu0 0.0
    %1079 = vmatprep.subr.mxu0 0.0
    %1080 = vmatpush1.msra.mxu0 0.0
    %1081 = vmatprep.subr.mxu0 0.0
    %1082 = vmatpush1.msra.mxu0 0.0
    %1083 = vmatprep.subr.mxu0 0.0
    %1084 = vmatpush1.msra.mxu0 0.0
    %1085 = vmatprep.subr.mxu0 0.0
    %1086 = vmatpush1.msra.mxu0 0.0
    %1087 = vmatprep.subr.mxu0 0.0
    %1088 = vmatpush1.msra.mxu0 0.0
    %1089 = vmatprep.mubr.f32.mxu0 0.0
    %1090 = vmatmul.mubr.f32.gmra.mrb[0].mxu0 %v952
    %v1091 = vpop.f32.mrb[0].mxu0
    %v1092 = vadd.f32 %v947, %v1091
    %v1093 = vpop.f32.mrb[0].mxu0
    %1094 = vdwg.mxu0
    %v1097 = vcombine.low %v1021, %v1023
    %v1099 = vunpack.c.l.s4 1966171168
    %v1100 = vunpack.c.0.s8 %v1099
    %v1101 = vlaneseq
    %v1102 = vshrl.u32 %v1101, 7
    %v1103 = vsub.s32 %v1100, %v1102
    %v1104 = vrot.slane %v1097, %v1103
    %v1106 = vunpack.c.l.s4 1966171168
    %v1107 = vunpack.c.0.s8 %v1106
    %v1108 = vlaneseq
    %v1109 = vshrl.u32 %v1108, 7
    %v1110 = vsub.s32 %v1107, %v1109
    %v1111 = vrot.slane %v1104, %v1110
    %v1113 = vadd.f32 %v921, %v1111
    %v1115 = vlaneseq
    %v1116 = vshrl.u32 %v1115, 7
    %v1117 = vsub.s32 0, %v1116
    %v1118 = vrot.slane %v1113, %v1117
    %v1119 = vlaneseq
    %v1120 = vshrl.u32 %v1119, 7
    %v1121 = vsub.s32 1, %v1120
    %v1122 = vrot.slane %v1113, %v1121
    %v1125 = vsel %vm480, %v1118, -inf
    %v1126 = vsel %vm480, %v1122, -inf
    %v1127 = vmax.f32 %v1125, %v1126
    %1128 = vmax.xlane.f32.xlu0 %v1127
    %v1129 = vpop.xlane.xlu0 %1128
    %v1131 = vlaneseq
    %v1132 = vshrl.u32 %v1131, 7
    %v1133 = vsub.s32 0, %v1132
    %v1134 = vrot.slane %v1129, %v1133
    %v1136 = vsub.f32 %v1113, %v1134
    %v1137 = vmul.f32 %v1136, 1.442695
    %v1138 = vpow.pop %v1137
    %v1140 = vlaneseq
    %v1141 = vshrl.u32 %v1140, 7
    %v1142 = vsub.s32 0, %v1141
    %v1143 = vrot.slane %v1138, %v1142
    %v1144 = vlaneseq
    %v1145 = vshrl.u32 %v1144, 7
    %v1146 = vsub.s32 1, %v1145
    %v1147 = vrot.slane %v1138, %v1146
    %v1150 = vsel %vm480, %v1143, 0.0
    %v1151 = vsel %vm480, %v1147, 0.0
    %v1152 = vadd.f32 %v1150, %v1151
    %1153 = vadd.xlane.f32.xlu0 %v1152
    %v1154 = vpop.xlane.xlu0 %1153
    %v1155 = vld [vmem:[%s3] sm:$0xff]
    %v1156 = vld [vmem:[%s3 + $0x8] sm:$0xff]
    %v1157 = vld [vmem:[%s3 + $0x10] sm:$0xff]
    %v1158 = vld [vmem:[%s3 + $0x18] sm:$0xff]
    %v1159 = vld [vmem:[%s3 + $0x20] sm:$0xff]
    %v1160 = vld [vmem:[%s3 + $0x28] sm:$0xff]
    %v1161 = vld [vmem:[%s3 + $0x30] sm:$0xff]
    %v1162 = vld [vmem:[%s3 + $0x38] sm:$0xff]
    %v1163 = vld [vmem:[%s3 + $0x40] sm:$0xff]
    %v1164 = vld [vmem:[%s3 + $0x48] sm:$0xff]
    %v1165 = vld [vmem:[%s3 + $0x50] sm:$0xff]
    %v1166 = vld [vmem:[%s3 + $0x58] sm:$0xff]
    %v1167 = vld [vmem:[%s3 + $0x60] sm:$0xff]
    %v1168 = vld [vmem:[%s3 + $0x68] sm:$0xff]
    %v1169 = vld [vmem:[%s3 + $0x70] sm:$0xff]
    %v1170 = vld [vmem:[%s3 + $0x78] sm:$0xff]
    %v1171 = vld [vmem:[%s3 + $0x80] sm:$0xff]
    %v1172 = vld [vmem:[%s3 + $0x88] sm:$0xff]
    %v1173 = vld [vmem:[%s3 + $0x90] sm:$0xff]
    %v1174 = vld [vmem:[%s3 + $0x98] sm:$0xff]
    %v1175 = vld [vmem:[%s3 + $0xa0] sm:$0xff]
    %v1176 = vld [vmem:[%s3 + $0xa8] sm:$0xff]
    %v1177 = vld [vmem:[%s3 + $0xb0] sm:$0xff]
    %v1178 = vld [vmem:[%s3 + $0xb8] sm:$0xff]
    %v1179 = vld [vmem:[%s3 + $0xc0] sm:$0xff]
    %v1180 = vld [vmem:[%s3 + $0xc8] sm:$0xff]
    %v1181 = vld [vmem:[%s3 + $0xd0] sm:$0xff]
    %v1182 = vld [vmem:[%s3 + $0xd8] sm:$0xff]
    %v1183 = vld [vmem:[%s3 + $0xe0] sm:$0xff]
    %v1184 = vld [vmem:[%s3 + $0xe8] sm:$0xff]
    %v1185 = vld [vmem:[%s3 + $0xf0] sm:$0xff]
    %v1186 = vld [vmem:[%s3 + $0xf8] sm:$0xff]
    %1187 = vmatprep.subr.mxu0 0.0
    %1188 = vmatpush1.msra.mxu0 %v1155
    %1189 = vmatprep.subr.mxu0 0.0
    %1190 = vmatpush1.msra.mxu0 %v1156
    %1191 = vmatprep.subr.mxu0 0.0
    %1192 = vmatpush1.msra.mxu0 %v1157
    %1193 = vmatprep.subr.mxu0 0.0
    %1194 = vmatpush1.msra.mxu0 %v1158
    %1195 = vmatprep.subr.mxu0 0.0
    %1196 = vmatpush1.msra.mxu0 %v1159
    %1197 = vmatprep.subr.mxu0 0.0
    %1198 = vmatpush1.msra.mxu0 %v1160
    %1199 = vmatprep.subr.mxu0 0.0
    %1200 = vmatpush1.msra.mxu0 %v1161
    %1201 = vmatprep.subr.mxu0 0.0
    %1202 = vmatpush1.msra.mxu0 %v1162
    %1203 = vmatprep.subr.mxu0 0.0
    %1204 = vmatpush1.msra.mxu0 %v1163
    %1205 = vmatprep.subr.mxu0 0.0
    %1206 = vmatpush1.msra.mxu0 %v1164
    %1207 = vmatprep.subr.mxu0 0.0
    %1208 = vmatpush1.msra.mxu0 %v1165
    %1209 = vmatprep.subr.mxu0 0.0
    %1210 = vmatpush1.msra.mxu0 %v1166
    %1211 = vmatprep.subr.mxu0 0.0
    %1212 = vmatpush1.msra.mxu0 %v1167
    %1213 = vmatprep.subr.mxu0 0.0
    %1214 = vmatpush1.msra.mxu0 %v1168
    %1215 = vmatprep.subr.mxu0 0.0
    %1216 = vmatpush1.msra.mxu0 %v1169
    %1217 = vmatprep.subr.mxu0 0.0
    %1218 = vmatpush1.msra.mxu0 %v1170
    %1219 = vmatprep.subr.mxu0 0.0
    %1220 = vmatpush1.msra.mxu0 %v1171
    %1221 = vmatprep.subr.mxu0 0.0
    %1222 = vmatpush1.msra.mxu0 %v1172
    %1223 = vmatprep.subr.mxu0 0.0
    %1224 = vmatpush1.msra.mxu0 %v1173
    %1225 = vmatprep.subr.mxu0 0.0
    %1226 = vmatpush1.msra.mxu0 %v1174
    %1227 = vmatprep.subr.mxu0 0.0
    %1228 = vmatpush1.msra.mxu0 %v1175
    %1229 = vmatprep.subr.mxu0 0.0
    %1230 = vmatpush1.msra.mxu0 %v1176
    %1231 = vmatprep.subr.mxu0 0.0
    %1232 = vmatpush1.msra.mxu0 %v1177
    %1233 = vmatprep.subr.mxu0 0.0
    %1234 = vmatpush1.msra.mxu0 %v1178
    %1235 = vmatprep.subr.mxu0 0.0
    %1236 = vmatpush1.msra.mxu0 %v1179
    %1237 = vmatprep.subr.mxu0 0.0
    %1238 = vmatpush1.msra.mxu0 %v1180
    %1239 = vmatprep.subr.mxu0 0.0
    %1240 = vmatpush1.msra.mxu0 %v1181
    %1241 = vmatprep.subr.mxu0 0.0
    %1242 = vmatpush1.msra.mxu0 %v1182
    %1243 = vmatprep.subr.mxu0 0.0
    %1244 = vmatpush1.msra.mxu0 %v1183
    %1245 = vmatprep.subr.mxu0 0.0
    %1246 = vmatpush1.msra.mxu0 %v1184
    %1247 = vmatprep.subr.mxu0 0.0
    %1248 = vmatpush1.msra.mxu0 %v1185
    %1249 = vmatprep.subr.mxu0 0.0
    %1250 = vmatpush1.msra.mxu0 %v1186
    %1251 = vmatprep.mubr.f32.mxu0 %v1147
    %1252 = vmatmul.mubr.f32.gmra.mrb[0].mxu0 %v1143
    %v1253 = vpop.f32.mrb[0].mxu0
    %v1254 = vadd.f32 0.0, %v1253
    %v1255 = vpop.f32.mrb[0].mxu0
    %1256 = vdwg.mxu0
    %v1257 = vrcp.pop %v1154
    %v1258 = vmul.f32 %v1154, %v1257
    %v1259 = vsub.f32 2.0, %v1258
    %v1260 = vmul.f32 %v1257, %v1259
    %v1261 = vmul.f32 %v1254, %v1260
    %v1262 = vld [vmem:[%s8] sm:$0xff]
    %v1263 = vld [vmem:[%s8 + $0x8] sm:$0xff]
    %v1264 = vld [vmem:[%s8 + $0x10] sm:$0xff]
    %v1265 = vld [vmem:[%s8 + $0x18] sm:$0xff]
    %v1267 = vsel %vm125, %v1261, 0
    %1269 = vmatprep.subr.mxu0 0.0
    %1270 = vmatpush1.msra.mxu0 %v1262
    %1271 = vmatprep.subr.mxu0 0.0
    %1272 = vmatpush1.msra.mxu0 %v1263
    %1273 = vmatprep.subr.mxu0 0.0
    %1274 = vmatpush1.msra.mxu0 %v1264
    %1275 = vmatprep.subr.mxu0 0.0
    %1276 = vmatpush1.msra.mxu0 %v1265
    %1277 = vmatprep.subr.mxu0 0.0
    %1278 = vmatpush1.msra.mxu0 0.0
    %1279 = vmatprep.subr.mxu0 0.0
    %1280 = vmatpush1.msra.mxu0 0.0
    %1281 = vmatprep.subr.mxu0 0.0
    %1282 = vmatpush1.msra.mxu0 0.0
    %1283 = vmatprep.subr.mxu0 0.0
    %1284 = vmatpush1.msra.mxu0 0.0
    %1285 = vmatprep.subr.mxu0 0.0
    %1286 = vmatpush1.msra.mxu0 0.0
    %1287 = vmatprep.subr.mxu0 0.0
    %1288 = vmatpush1.msra.mxu0 0.0
    %1289 = vmatprep.subr.mxu0 0.0
    %1290 = vmatpush1.msra.mxu0 0.0
    %1291 = vmatprep.subr.mxu0 0.0
    %1292 = vmatpush1.msra.mxu0 0.0
    %1293 = vmatprep.subr.mxu0 0.0
    %1294 = vmatpush1.msra.mxu0 0.0
    %1295 = vmatprep.subr.mxu0 0.0
    %1296 = vmatpush1.msra.mxu0 0.0
    %1297 = vmatprep.subr.mxu0 0.0
    %1298 = vmatpush1.msra.mxu0 0.0
    %1299 = vmatprep.subr.mxu0 0.0
    %1300 = vmatpush1.msra.mxu0 0.0
    %1301 = vmatprep.subr.mxu0 0.0
    %1302 = vmatpush1.msra.mxu0 0.0
    %1303 = vmatprep.subr.mxu0 0.0
    %1304 = vmatpush1.msra.mxu0 0.0
    %1305 = vmatprep.subr.mxu0 0.0
    %1306 = vmatpush1.msra.mxu0 0.0
    %1307 = vmatprep.subr.mxu0 0.0
    %1308 = vmatpush1.msra.mxu0 0.0
    %1309 = vmatprep.subr.mxu0 0.0
    %1310 = vmatpush1.msra.mxu0 0.0
    %1311 = vmatprep.subr.mxu0 0.0
    %1312 = vmatpush1.msra.mxu0 0.0
    %1313 = vmatprep.subr.mxu0 0.0
    %1314 = vmatpush1.msra.mxu0 0.0
    %1315 = vmatprep.subr.mxu0 0.0
    %1316 = vmatpush1.msra.mxu0 0.0
    %1317 = vmatprep.subr.mxu0 0.0
    %1318 = vmatpush1.msra.mxu0 0.0
    %1319 = vmatprep.subr.mxu0 0.0
    %1320 = vmatpush1.msra.mxu0 0.0
    %1321 = vmatprep.subr.mxu0 0.0
    %1322 = vmatpush1.msra.mxu0 0.0
    %1323 = vmatprep.subr.mxu0 0.0
    %1324 = vmatpush1.msra.mxu0 0.0
    %1325 = vmatprep.subr.mxu0 0.0
    %1326 = vmatpush1.msra.mxu0 0.0
    %1327 = vmatprep.subr.mxu0 0.0
    %1328 = vmatpush1.msra.mxu0 0.0
    %1329 = vmatprep.subr.mxu0 0.0
    %1330 = vmatpush1.msra.mxu0 0.0
    %1331 = vmatprep.subr.mxu0 0.0
    %1332 = vmatpush1.msra.mxu0 0.0
    %1333 = vmatprep.mubr.f32.mxu0 0.0
    %1334 = vmatmul.mubr.f32.gmra.mrb[0].mxu0 %v1267
    %v1335 = vpop.f32.mrb[0].mxu0
    %v1336 = vadd.f32 0.0, %v1335
    %v1337 = vpop.f32.mrb[0].mxu0
    %1338 = vdwg.mxu0
    %v1340 = vrot.slane %v921, 2
    %v1342 = vadd.f32 %v1340, %v1336
    %v1343 = vmax.f32 %v1342, 0.0
    %v1344 = vld [vmem:[%s9] sm:$0xff]
    %v1345 = vld [vmem:[%s9 + $0x8] sm:$0xff]
    %v1346 = vld [vmem:[%s9 + $0x10] sm:$0xff]
    %v1347 = vld [vmem:[%s9 + $0x18] sm:$0xff]
    %v1348 = vld [vmem:[%s10] sm:$0x1]
    %v1350 = vsel %vm125, %v1343, 0
    %1352 = vmatprep.subr.mxu0 0.0
    %1353 = vmatpush1.msra.mxu0 %v1344
    %1354 = vmatprep.subr.mxu0 0.0
    %1355 = vmatpush1.msra.mxu0 %v1345
    %1356 = vmatprep.subr.mxu0 0.0
    %1357 = vmatpush1.msra.mxu0 %v1346
    %1358 = vmatprep.subr.mxu0 0.0
    %1359 = vmatpush1.msra.mxu0 %v1347
    %1360 = vmatprep.subr.mxu0 0.0
    %1361 = vmatpush1.msra.mxu0 0.0
    %1362 = vmatprep.subr.mxu0 0.0
    %1363 = vmatpush1.msra.mxu0 0.0
    %1364 = vmatprep.subr.mxu0 0.0
    %1365 = vmatpush1.msra.mxu0 0.0
    %1366 = vmatprep.subr.mxu0 0.0
    %1367 = vmatpush1.msra.mxu0 0.0
    %1368 = vmatprep.subr.mxu0 0.0
    %1369 = vmatpush1.msra.mxu0 0.0
    %1370 = vmatprep.subr.mxu0 0.0
    %1371 = vmatpush1.msra.mxu0 0.0
    %1372 = vmatprep.subr.mxu0 0.0
    %1373 = vmatpush1.msra.mxu0 0.0
    %1374 = vmatprep.subr.mxu0 0.0
    %1375 = vmatpush1.msra.mxu0 0.0
    %1376 = vmatprep.subr.mxu0 0.0
    %1377 = vmatpush1.msra.mxu0 0.0
    %1378 = vmatprep.subr.mxu0 0.0
    %1379 = vmatpush1.msra.mxu0 0.0
    %1380 = vmatprep.subr.mxu0 0.0
    %1381 = vmatpush1.msra.mxu0 0.0
    %1382 = vmatprep.subr.mxu0 0.0
    %1383 = vmatpush1.msra.mxu0 0.0
    %1384 = vmatprep.subr.mxu0 0.0
    %1385 = vmatpush1.msra.mxu0 0.0
    %1386 = vmatprep.subr.mxu0 0.0
    %1387 = vmatpush1.msra.mxu0 0.0
    %1388 = vmatprep.subr.mxu0 0.0
    %1389 = vmatpush1.msra.mxu0 0.0
    %1390 = vmatprep.subr.mxu0 0.0
    %1391 = vmatpush1.msra.mxu0 0.0
    %1392 = vmatprep.subr.mxu0 0.0
    %1393 = vmatpush1.msra.mxu0 0.0
    %1394 = vmatprep.subr.mxu0 0.0
    %1395 = vmatpush1.msra.mxu0 0.0
    %1396 = vmatprep.subr.mxu0 0.0
    %1397 = vmatpush1.msra.mxu0 0.0
    %1398 = vmatprep.subr.mxu0 0.0
    %1399 = vmatpush1.msra.mxu0 0.0
    %1400 = vmatprep.subr.mxu0 0.0
    %1401 = vmatpush1.msra.mxu0 0.0
    %1402 = vmatprep.subr.mxu0 0.0
    %1403 = vmatpush1.msra.mxu0 0.0
    %1404 = vmatprep.subr.mxu0 0.0
    %1405 = vmatpush1.msra.mxu0 0.0
    %1406 = vmatprep.subr.mxu0 0.0
    %1407 = vmatpush1.msra.mxu0 0.0
    %1408 = vmatprep.subr.mxu0 0.0
    %1409 = vmatpush1.msra.mxu0 0.0
    %1410 = vmatprep.subr.mxu0 0.0
    %1411 = vmatpush1.msra.mxu0 0.0
    %1412 = vmatprep.subr.mxu0 0.0
    %1413 = vmatpush1.msra.mxu0 0.0
    %1414 = vmatprep.subr.mxu0 0.0
    %1415 = vmatpush1.msra.mxu0 0.0
    %1416 = vmatprep.mubr.f32.mxu0 0.0
    %1417 = vmatmul.mubr.f32.gmra.mrb[0].mxu0 %v1350
    %v1418 = vpop.f32.mrb[0].mxu0
    %v1419 = vadd.f32 %v1348, %v1418
    %v1420 = vpop.f32.mrb[0].mxu0
    %1421 = vdwg.mxu0
    %v1422 = vadd.f32 %v1419, %v1092
    %v1423 = vxor.u32 %v1422, 2147483648
    %v1424 = vmul.f32 %v1423, 1.442695
    %v1425 = vpow.pop %v1424
    %v1426 = vadd.f32 %v1425, 1.0
    %v1427 = vrcp.pop %v1426
    %v1428 = vmul.f32 1.0, %v1427
    %1430 = vrot.lane.b32.xlu0 %v1092, 64
    %v1431 = vpop.permute.xlu0 %1430
    %v1433 = vmul.f32 %v1428, %v1431
    %1435 = vrot.lane.b32.xlu0 %v1433, 64
    %v1436 = vpop.permute.xlu0 %1435
    %v1438 = vadd.f32 %v1419, %v1436
    %v1439 = vtanh.pop %v1438
    %v1440 = vsub.f32 1.0, %v1428
    %1442 = vrot.lane.b32.xlu0 %v1439, 96
    %v1443 = vpop.permute.xlu0 %1442
    %v1445 = vmul.f32 %v1440, %v1443
    %v1446 = vlaneseq
    %v1447 = vshrl.u32 %v1446, 7
    %v1448 = vsub.s32 0, %v1447
    %v1449 = vrot.slane %v919, %v1448
    %1450 = vrot.lane.b32.xlu0 %v1449, 32
    %v1451 = vpop.permute.xlu0 %1450
    %v1453 = vmul.f32 %v1428, %v1451
    %v1454 = vadd.f32 %v1445, %v1453
    %1456 = vrot.lane.b32.xlu0 %v1454, 96
    %v1457 = vpop.permute.xlu0 %1456
    %1459 = vst.msk [vmem:[#allocation2] sm:$0x1] %vm65, %v1457
    %v1461 = vlaneseq
    %v1462 = vshrl.u32 %v1461, 7
    %v1463 = vsub.s32 0, %v1462
    %v1464 = vrot.slane %v1260, %v1463
    %v1466 = vmul.f32 %v1138, %v1464
    %s1467 = scalar_lea.vmem [#allocation11], 1
    %1468 = vst.msk [vmem:[%s1467] ss:$8 sm:$0x3] %vm826, %v1466
    %1469 = vst.msk [vmem:[%s1467] ss:$8 sm:$0x0] %vm826, %v1466
    %v1470 = vld [vmem:[%s11] sm:$0xff]
    %v1471 = vld [vmem:[%s11 + $0x8] sm:$0xff]
    %v1472 = vld [vmem:[%s11 + $0x10] sm:$0xff]
    %v1473 = vld [vmem:[%s11 + $0x18] sm:$0xff]
    %v1474 = vld [vmem:[%s12] sm:$0x1]
    %v1475 = vsel %vm125, %v1457, 0
    %1477 = vmatprep.subr.mxu0 0.0
    %1478 = vmatpush1.msra.mxu0 %v1470
    %1479 = vmatprep.subr.mxu0 0.0
    %1480 = vmatpush1.msra.mxu0 %v1471
    %1481 = vmatprep.subr.mxu0 0.0
    %1482 = vmatpush1.msra.mxu0 %v1472
    %1483 = vmatprep.subr.mxu0 0.0
    %1484 = vmatpush1.msra.mxu0 %v1473
    %1485 = vmatprep.subr.mxu0 0.0
    %1486 = vmatpush1.msra.mxu0 0.0
    %1487 = vmatprep.subr.mxu0 0.0
    %1488 = vmatpush1.msra.mxu0 0.0
    %1489 = vmatprep.subr.mxu0 0.0
    %1490 = vmatpush1.msra.mxu0 0.0
    %1491 = vmatprep.subr.mxu0 0.0
    %1492 = vmatpush1.msra.mxu0 0.0
    %1493 = vmatprep.subr.mxu0 0.0
    %1494 = vmatpush1.msra.mxu0 0.0
    %1495 = vmatprep.subr.mxu0 0.0
    %1496 = vmatpush1.msra.mxu0 0.0
    %1497 = vmatprep.subr.mxu0 0.0
    %1498 = vmatpush1.msra.mxu0 0.0
    %1499 = vmatprep.subr.mxu0 0.0
    %1500 = vmatpush1.msra.mxu0 0.0
    %1501 = vmatprep.subr.mxu0 0.0
    %1502 = vmatpush1.msra.mxu0 0.0
    %1503 = vmatprep.subr.mxu0 0.0
    %1504 = vmatpush1.msra.mxu0 0.0
    %1505 = vmatprep.subr.mxu0 0.0
    %1506 = vmatpush1.msra.mxu0 0.0
    %1507 = vmatprep.subr.mxu0 0.0
    %1508 = vmatpush1.msra.mxu0 0.0
    %1509 = vmatprep.subr.mxu0 0.0
    %1510 = vmatpush1.msra.mxu0 0.0
    %1511 = vmatprep.subr.mxu0 0.0
    %1512 = vmatpush1.msra.mxu0 0.0
    %1513 = vmatprep.subr.mxu0 0.0
    %1514 = vmatpush1.msra.mxu0 0.0
    %1515 = vmatprep.subr.mxu0 0.0
    %1516 = vmatpush1.msra.mxu0 0.0
    %1517 = vmatprep.subr.mxu0 0.0
    %1518 = vmatpush1.msra.mxu0 0.0
    %1519 = vmatprep.subr.mxu0 0.0
    %1520 = vmatpush1.msra.mxu0 0.0
    %1521 = vmatprep.subr.mxu0 0.0
    %1522 = vmatpush1.msra.mxu0 0.0
    %1523 = vmatprep.subr.mxu0 0.0
    %1524 = vmatpush1.msra.mxu0 0.0
    %1525 = vmatprep.subr.mxu0 0.0
    %1526 = vmatpush1.msra.mxu0 0.0
    %1527 = vmatprep.subr.mxu0 0.0
    %1528 = vmatpush1.msra.mxu0 0.0
    %1529 = vmatprep.subr.mxu0 0.0
    %1530 = vmatpush1.msra.mxu0 0.0
    %1531 = vmatprep.subr.mxu0 0.0
    %1532 = vmatpush1.msra.mxu0 0.0
    %1533 = vmatprep.subr.mxu0 0.0
    %1534 = vmatpush1.msra.mxu0 0.0
    %1535 = vmatprep.subr.mxu0 0.0
    %1536 = vmatpush1.msra.mxu0 0.0
    %1537 = vmatprep.subr.mxu0 0.0
    %1538 = vmatpush1.msra.mxu0 0.0
    %1539 = vmatprep.subr.mxu0 0.0
    %1540 = vmatpush1.msra.mxu0 0.0
    %1541 = vmatprep.mubr.f32.mxu0 0.0
    %1542 = vmatmul.mubr.f32.gmra.mrb[0].mxu0 %v1475
    %v1543 = vpop.f32.mrb[0].mxu0
    %v1544 = vadd.f32 %v1474, %v1543
    %v1545 = vpop.f32.mrb[0].mxu0
    %1546 = vdwg.mxu0
    %v1547 = vsel %vm480, %v1544, -inf
    %1548 = vmax.xlane.f32.xlu0 %v1547
    %v1549 = vpop.xlane.xlu0 %1548
    %v1550 = vsub.f32 %v1544, %v1549
    %v1551 = vmul.f32 %v1550, 1.442695
    %v1552 = vpow.pop %v1551
    %v1553 = vsel %vm480, %v1552, 0.0
    %1554 = vadd.xlane.f32.xlu0 %v1553
    %v1555 = vpop.xlane.xlu0 %1554
    %v1556 = vlog2.pop %v1555
    %v1557 = vmul.f32 %v1556, 0.6931472
    %v1558 = vsub.f32 %v1550, %v1557
    %1559 = vst [vmem:[#allocation8 + $0x1] sm:$0x1] %v1558
    %v1560 = vld [vmem:[#allocation2] sm:$0x1]
    %s1561 = scalar_lea.vmem [#allocation4], 2
    %v1562 = vld [vmem:[%s1561] ss:$8 sm:$0x7]
    %v1563 = vld [vmem:[%s6] sm:$0xff]
    %v1564 = vld [vmem:[%s6 + $0x8] sm:$0xff]
    %v1565 = vld [vmem:[%s6 + $0x10] sm:$0xff]
    %v1566 = vld [vmem:[%s6 + $0x18] sm:$0xff]
    %v1567 = vld [vmem:[%s6 + $0x20] sm:$0xff]
    %v1568 = vld [vmem:[%s6 + $0x28] sm:$0xff]
    %v1569 = vld [vmem:[%s6 + $0x30] sm:$0xff]
    %v1570 = vld [vmem:[%s6 + $0x38] sm:$0xff]
    %v1571 = vld [vmem:[%s6 + $0x40] sm:$0xff]
    %v1572 = vld [vmem:[%s6 + $0x48] sm:$0xff]
    %v1573 = vld [vmem:[%s6 + $0x50] sm:$0xff]
    %v1574 = vld [vmem:[%s6 + $0x58] sm:$0xff]
    %v1575 = vld [vmem:[%s7] sm:$0x7]
    %v1577 = vlaneseq
    %v1578 = vshrl.u32 %v1577, 7
    %v1579 = vsub.s32 0, %v1578
    %v1580 = vrot.slane %v1575, %v1579
    %v1581 = vlaneseq
    %v1582 = vshrl.u32 %v1581, 7
    %v1583 = vsub.s32 1, %v1582
    %v1584 = vrot.slane %v1575, %v1583
    %v1585 = vlaneseq
    %v1586 = vshrl.u32 %v1585, 7
    %v1587 = vsub.s32 2, %v1586
    %v1588 = vrot.slane %v1575, %v1587
    %v1593 = vsel %vm125, %v1560, 0
    %1595 = vmatprep.subr.mxu0 %v1564
    %1596 = vmatpush1.msra.mxu0 %v1563
    %1597 = vmatprep.subr.mxu0 %v1567
    %1598 = vmatpush1.msra.mxu0 %v1566
    %1599 = vmatprep.subr.mxu0 %v1570
    %1600 = vmatpush1.msra.mxu0 %v1569
    %1601 = vmatprep.subr.mxu0 %v1573
    %1602 = vmatpush1.msra.mxu0 %v1572
    %1603 = vmatprep.subr.mxu0 0.0
    %1604 = vmatpush1.msra.mxu0 0.0
    %1605 = vmatprep.subr.mxu0 0.0
    %1606 = vmatpush1.msra.mxu0 0.0
    %1607 = vmatprep.subr.mxu0 0.0
    %1608 = vmatpush1.msra.mxu0 0.0
    %1609 = vmatprep.subr.mxu0 0.0
    %1610 = vmatpush1.msra.mxu0 0.0
    %1611 = vmatprep.subr.mxu0 0.0
    %1612 = vmatpush1.msra.mxu0 0.0
    %1613 = vmatprep.subr.mxu0 0.0
    %1614 = vmatpush1.msra.mxu0 0.0
    %1615 = vmatprep.subr.mxu0 0.0
    %1616 = vmatpush1.msra.mxu0 0.0
    %1617 = vmatprep.subr.mxu0 0.0
    %1618 = vmatpush1.msra.mxu0 0.0
    %1619 = vmatprep.subr.mxu0 0.0
    %1620 = vmatpush1.msra.mxu0 0.0
    %1621 = vmatprep.subr.mxu0 0.0
    %1622 = vmatpush1.msra.mxu0 0.0
    %1623 = vmatprep.subr.mxu0 0.0
    %1624 = vmatpush1.msra.mxu0 0.0
    %1625 = vmatprep.subr.mxu0 0.0
    %1626 = vmatpush1.msra.mxu0 0.0
    %1627 = vmatprep.subr.mxu0 0.0
    %1628 = vmatpush1.msra.mxu0 0.0
    %1629 = vmatprep.subr.mxu0 0.0
    %1630 = vmatpush1.msra.mxu0 0.0
    %1631 = vmatprep.subr.mxu0 0.0
    %1632 = vmatpush1.msra.mxu0 0.0
    %1633 = vmatprep.subr.mxu0 0.0
    %1634 = vmatpush1.msra.mxu0 0.0
    %1635 = vmatprep.subr.mxu0 0.0
    %1636 = vmatpush1.msra.mxu0 0.0
    %1637 = vmatprep.subr.mxu0 0.0
    %1638 = vmatpush1.msra.mxu0 0.0
    %1639 = vmatprep.subr.mxu0 0.0
    %1640 = vmatpush1.msra.mxu0 0.0
    %1641 = vmatprep.subr.mxu0 0.0
    %1642 = vmatpush1.msra.mxu0 0.0
    %1643 = vmatprep.subr.mxu0 0.0
    %1644 = vmatpush1.msra.mxu0 0.0
    %1645 = vmatprep.subr.mxu0 0.0
    %1646 = vmatpush1.msra.mxu0 0.0
    %1647 = vmatprep.subr.mxu0 0.0
    %1648 = vmatpush1.msra.mxu0 0.0
    %1649 = vmatprep.subr.mxu0 0.0
    %1650 = vmatpush1.msra.mxu0 0.0
    %1651 = vmatprep.subr.mxu0 0.0
    %1652 = vmatpush1.msra.mxu0 0.0
    %1653 = vmatprep.subr.mxu0 0.0
    %1654 = vmatpush1.msra.mxu0 0.0
    %1655 = vmatprep.subr.mxu0 0.0
    %1656 = vmatpush1.msra.mxu0 0.0
    %1657 = vmatprep.subr.mxu0 0.0
    %1658 = vmatpush1.msra.mxu0 0.0
    %1659 = vmatprep.mubr.f32.mxu0 0.0
    %1660 = vmatmul.mubr.f32.gmra.mrb[0].mxu0 %v1593
    %v1661 = vpop.f32.mrb[0].mxu0
    %v1662 = vadd.f32 %v1580, %v1661
    %v1663 = vpop.f32.mrb[0].mxu0
    %v1664 = vadd.f32 %v1584, %v1663
    %1665 = vdwg.mxu0
    %1666 = vmatprep.subr.mxu0 0.0
    %1667 = vmatpush1.msra.mxu0 %v1565
    %1668 = vmatprep.subr.mxu0 0.0
    %1669 = vmatpush1.msra.mxu0 %v1568
    %1670 = vmatprep.subr.mxu0 0.0
    %1671 = vmatpush1.msra.mxu0 %v1571
    %1672 = vmatprep.subr.mxu0 0.0
    %1673 = vmatpush1.msra.mxu0 %v1574
    %1674 = vmatprep.subr.mxu0 0.0
    %1675 = vmatpush1.msra.mxu0 0.0
    %1676 = vmatprep.subr.mxu0 0.0
    %1677 = vmatpush1.msra.mxu0 0.0
    %1678 = vmatprep.subr.mxu0 0.0
    %1679 = vmatpush1.msra.mxu0 0.0
    %1680 = vmatprep.subr.mxu0 0.0
    %1681 = vmatpush1.msra.mxu0 0.0
    %1682 = vmatprep.subr.mxu0 0.0
    %1683 = vmatpush1.msra.mxu0 0.0
    %1684 = vmatprep.subr.mxu0 0.0
    %1685 = vmatpush1.msra.mxu0 0.0
    %1686 = vmatprep.subr.mxu0 0.0
    %1687 = vmatpush1.msra.mxu0 0.0
    %1688 = vmatprep.subr.mxu0 0.0
    %1689 = vmatpush1.msra.mxu0 0.0
    %1690 = vmatprep.subr.mxu0 0.0
    %1691 = vmatpush1.msra.mxu0 0.0
    %1692 = vmatprep.subr.mxu0 0.0
    %1693 = vmatpush1.msra.mxu0 0.0
    %1694 = vmatprep.subr.mxu0 0.0
    %1695 = vmatpush1.msra.mxu0 0.0
    %1696 = vmatprep.subr.mxu0 0.0
    %1697 = vmatpush1.msra.mxu0 0.0
    %1698 = vmatprep.subr.mxu0 0.0
    %1699 = vmatpush1.msra.mxu0 0.0
    %1700 = vmatprep.subr.mxu0 0.0
    %1701 = vmatpush1.msra.mxu0 0.0
    %1702 = vmatprep.subr.mxu0 0.0
    %1703 = vmatpush1.msra.mxu0 0.0
    %1704 = vmatprep.subr.mxu0 0.0
    %1705 = vmatpush1.msra.mxu0 0.0
    %1706 = vmatprep.subr.mxu0 0.0
    %1707 = vmatpush1.msra.mxu0 0.0
    %1708 = vmatprep.subr.mxu0 0.0
    %1709 = vmatpush1.msra.mxu0 0.0
    %1710 = vmatprep.subr.mxu0 0.0
    %1711 = vmatpush1.msra.mxu0 0.0
    %1712 = vmatprep.subr.mxu0 0.0
    %1713 = vmatpush1.msra.mxu0 0.0
    %1714 = vmatprep.subr.mxu0 0.0
    %1715 = vmatpush1.msra.mxu0 0.0
    %1716 = vmatprep.subr.mxu0 0.0
    %1717 = vmatpush1.msra.mxu0 0.0
    %1718 = vmatprep.subr.mxu0 0.0
    %1719 = vmatpush1.msra.mxu0 0.0
    %1720 = vmatprep.subr.mxu0 0.0
    %1721 = vmatpush1.msra.mxu0 0.0
    %1722 = vmatprep.subr.mxu0 0.0
    %1723 = vmatpush1.msra.mxu0 0.0
    %1724 = vmatprep.subr.mxu0 0.0
    %1725 = vmatpush1.msra.mxu0 0.0
    %1726 = vmatprep.subr.mxu0 0.0
    %1727 = vmatpush1.msra.mxu0 0.0
    %1728 = vmatprep.subr.mxu0 0.0
    %1729 = vmatpush1.msra.mxu0 0.0
    %1730 = vmatprep.mubr.f32.mxu0 0.0
    %1731 = vmatmul.mubr.f32.gmra.mrb[0].mxu0 %v1593
    %v1732 = vpop.f32.mrb[0].mxu0
    %v1733 = vadd.f32 %v1588, %v1732
    %v1734 = vpop.f32.mrb[0].mxu0
    %1735 = vdwg.mxu0
    %v1738 = vcombine.low %v1662, %v1664
    %v1740 = vunpack.c.l.s4 1966171168
    %v1741 = vunpack.c.0.s8 %v1740
    %v1742 = vlaneseq
    %v1743 = vshrl.u32 %v1742, 7
    %v1744 = vsub.s32 %v1741, %v1743
    %v1745 = vrot.slane %v1738, %v1744
    %v1747 = vunpack.c.l.s4 1966171168
    %v1748 = vunpack.c.0.s8 %v1747
    %v1749 = vlaneseq
    %v1750 = vshrl.u32 %v1749, 7
    %v1751 = vsub.s32 %v1748, %v1750
    %v1752 = vrot.slane %v1745, %v1751
    %v1754 = vadd.f32 %v1562, %v1752
    %v1756 = vlaneseq
    %v1757 = vshrl.u32 %v1756, 7
    %v1758 = vsub.s32 0, %v1757
    %v1759 = vrot.slane %v1754, %v1758
    %v1760 = vlaneseq
    %v1761 = vshrl.u32 %v1760, 7
    %v1762 = vsub.s32 1, %v1761
    %v1763 = vrot.slane %v1754, %v1762
    %v1766 = vsel %vm480, %v1759, -inf
    %v1767 = vsel %vm480, %v1763, -inf
    %v1768 = vmax.f32 %v1766, %v1767
    %1769 = vmax.xlane.f32.xlu0 %v1768
    %v1770 = vpop.xlane.xlu0 %1769
    %v1772 = vlaneseq
    %v1773 = vshrl.u32 %v1772, 7
    %v1774 = vsub.s32 0, %v1773
    %v1775 = vrot.slane %v1770, %v1774
    %v1777 = vsub.f32 %v1754, %v1775
    %v1778 = vmul.f32 %v1777, 1.442695
    %v1779 = vpow.pop %v1778
    %v1781 = vlaneseq
    %v1782 = vshrl.u32 %v1781, 7
    %v1783 = vsub.s32 0, %v1782
    %v1784 = vrot.slane %v1779, %v1783
    %v1785 = vlaneseq
    %v1786 = vshrl.u32 %v1785, 7
    %v1787 = vsub.s32 1, %v1786
    %v1788 = vrot.slane %v1779, %v1787
    %v1791 = vsel %vm480, %v1784, 0.0
    %v1792 = vsel %vm480, %v1788, 0.0
    %v1793 = vadd.f32 %v1791, %v1792
    %1794 = vadd.xlane.f32.xlu0 %v1793
    %v1795 = vpop.xlane.xlu0 %1794
    %v1796 = vld [vmem:[%s3] sm:$0xff]
    %v1797 = vld [vmem:[%s3 + $0x8] sm:$0xff]
    %v1798 = vld [vmem:[%s3 + $0x10] sm:$0xff]
    %v1799 = vld [vmem:[%s3 + $0x18] sm:$0xff]
    %v1800 = vld [vmem:[%s3 + $0x20] sm:$0xff]
    %v1801 = vld [vmem:[%s3 + $0x28] sm:$0xff]
    %v1802 = vld [vmem:[%s3 + $0x30] sm:$0xff]
    %v1803 = vld [vmem:[%s3 + $0x38] sm:$0xff]
    %v1804 = vld [vmem:[%s3 + $0x40] sm:$0xff]
    %v1805 = vld [vmem:[%s3 + $0x48] sm:$0xff]
    %v1806 = vld [vmem:[%s3 + $0x50] sm:$0xff]
    %v1807 = vld [vmem:[%s3 + $0x58] sm:$0xff]
    %v1808 = vld [vmem:[%s3 + $0x60] sm:$0xff]
    %v1809 = vld [vmem:[%s3 + $0x68] sm:$0xff]
    %v1810 = vld [vmem:[%s3 + $0x70] sm:$0xff]
    %v1811 = vld [vmem:[%s3 + $0x78] sm:$0xff]
    %v1812 = vld [vmem:[%s3 + $0x80] sm:$0xff]
    %v1813 = vld [vmem:[%s3 + $0x88] sm:$0xff]
    %v1814 = vld [vmem:[%s3 + $0x90] sm:$0xff]
    %v1815 = vld [vmem:[%s3 + $0x98] sm:$0xff]
    %v1816 = vld [vmem:[%s3 + $0xa0] sm:$0xff]
    %v1817 = vld [vmem:[%s3 + $0xa8] sm:$0xff]
    %v1818 = vld [vmem:[%s3 + $0xb0] sm:$0xff]
    %v1819 = vld [vmem:[%s3 + $0xb8] sm:$0xff]
    %v1820 = vld [vmem:[%s3 + $0xc0] sm:$0xff]
    %v1821 = vld [vmem:[%s3 + $0xc8] sm:$0xff]
    %v1822 = vld [vmem:[%s3 + $0xd0] sm:$0xff]
    %v1823 = vld [vmem:[%s3 + $0xd8] sm:$0xff]
    %v1824 = vld [vmem:[%s3 + $0xe0] sm:$0xff]
    %v1825 = vld [vmem:[%s3 + $0xe8] sm:$0xff]
    %v1826 = vld [vmem:[%s3 + $0xf0] sm:$0xff]
    %v1827 = vld [vmem:[%s3 + $0xf8] sm:$0xff]
    %1828 = vmatprep.subr.mxu0 0.0
    %1829 = vmatpush1.msra.mxu0 %v1796
    %1830 = vmatprep.subr.mxu0 0.0
    %1831 = vmatpush1.msra.mxu0 %v1797
    %1832 = vmatprep.subr.mxu0 0.0
    %1833 = vmatpush1.msra.mxu0 %v1798
    %1834 = vmatprep.subr.mxu0 0.0
    %1835 = vmatpush1.msra.mxu0 %v1799
    %1836 = vmatprep.subr.mxu0 0.0
    %1837 = vmatpush1.msra.mxu0 %v1800
    %1838 = vmatprep.subr.mxu0 0.0
    %1839 = vmatpush1.msra.mxu0 %v1801
    %1840 = vmatprep.subr.mxu0 0.0
    %1841 = vmatpush1.msra.mxu0 %v1802
    %1842 = vmatprep.subr.mxu0 0.0
    %1843 = vmatpush1.msra.mxu0 %v1803
    %1844 = vmatprep.subr.mxu0 0.0
    %1845 = vmatpush1.msra.mxu0 %v1804
    %1846 = vmatprep.subr.mxu0 0.0
    %1847 = vmatpush1.msra.mxu0 %v1805
    %1848 = vmatprep.subr.mxu0 0.0
    %1849 = vmatpush1.msra.mxu0 %v1806
    %1850 = vmatprep.subr.mxu0 0.0
    %1851 = vmatpush1.msra.mxu0 %v1807
    %1852 = vmatprep.subr.mxu0 0.0
    %1853 = vmatpush1.msra.mxu0 %v1808
    %1854 = vmatprep.subr.mxu0 0.0
    %1855 = vmatpush1.msra.mxu0 %v1809
    %1856 = vmatprep.subr.mxu0 0.0
    %1857 = vmatpush1.msra.mxu0 %v1810
    %1858 = vmatprep.subr.mxu0 0.0
    %1859 = vmatpush1.msra.mxu0 %v1811
    %1860 = vmatprep.subr.mxu0 0.0
    %1861 = vmatpush1.msra.mxu0 %v1812
    %1862 = vmatprep.subr.mxu0 0.0
    %1863 = vmatpush1.msra.mxu0 %v1813
    %1864 = vmatprep.subr.mxu0 0.0
    %1865 = vmatpush1.msra.mxu0 %v1814
    %1866 = vmatprep.subr.mxu0 0.0
    %1867 = vmatpush1.msra.mxu0 %v1815
    %1868 = vmatprep.subr.mxu0 0.0
    %1869 = vmatpush1.msra.mxu0 %v1816
    %1870 = vmatprep.subr.mxu0 0.0
    %1871 = vmatpush1.msra.mxu0 %v1817
    %1872 = vmatprep.subr.mxu0 0.0
    %1873 = vmatpush1.msra.mxu0 %v1818
    %1874 = vmatprep.subr.mxu0 0.0
    %1875 = vmatpush1.msra.mxu0 %v1819
    %1876 = vmatprep.subr.mxu0 0.0
    %1877 = vmatpush1.msra.mxu0 %v1820
    %1878 = vmatprep.subr.mxu0 0.0
    %1879 = vmatpush1.msra.mxu0 %v1821
    %1880 = vmatprep.subr.mxu0 0.0
    %1881 = vmatpush1.msra.mxu0 %v1822
    %1882 = vmatprep.subr.mxu0 0.0
    %1883 = vmatpush1.msra.mxu0 %v1823
    %1884 = vmatprep.subr.mxu0 0.0
    %1885 = vmatpush1.msra.mxu0 %v1824
    %1886 = vmatprep.subr.mxu0 0.0
    %1887 = vmatpush1.msra.mxu0 %v1825
    %1888 = vmatprep.subr.mxu0 0.0
    %1889 = vmatpush1.msra.mxu0 %v1826
    %1890 = vmatprep.subr.mxu0 0.0
    %1891 = vmatpush1.msra.mxu0 %v1827
    %1892 = vmatprep.mubr.f32.mxu0 %v1788
    %1893 = vmatmul.mubr.f32.gmra.mrb[0].mxu0 %v1784
    %v1894 = vpop.f32.mrb[0].mxu0
    %v1895 = vadd.f32 0.0, %v1894
    %v1896 = vpop.f32.mrb[0].mxu0
    %1897 = vdwg.mxu0
    %v1898 = vrcp.pop %v1795
    %v1899 = vmul.f32 %v1795, %v1898
    %v1900 = vsub.f32 2.0, %v1899
    %v1901 = vmul.f32 %v1898, %v1900
    %v1902 = vmul.f32 %v1895, %v1901
    %v1903 = vld [vmem:[%s8] sm:$0xff]
    %v1904 = vld [vmem:[%s8 + $0x8] sm:$0xff]
    %v1905 = vld [vmem:[%s8 + $0x10] sm:$0xff]
    %v1906 = vld [vmem:[%s8 + $0x18] sm:$0xff]
    %v1908 = vsel %vm125, %v1902, 0
    %1910 = vmatprep.subr.mxu0 0.0
    %1911 = vmatpush1.msra.mxu0 %v1903
    %1912 = vmatprep.subr.mxu0 0.0
    %1913 = vmatpush1.msra.mxu0 %v1904
    %1914 = vmatprep.subr.mxu0 0.0
    %1915 = vmatpush1.msra.mxu0 %v1905
    %1916 = vmatprep.subr.mxu0 0.0
    %1917 = vmatpush1.msra.mxu0 %v1906
    %1918 = vmatprep.subr.mxu0 0.0
    %1919 = vmatpush1.msra.mxu0 0.0
    %1920 = vmatprep.subr.mxu0 0.0
    %1921 = vmatpush1.msra.mxu0 0.0
    %1922 = vmatprep.subr.mxu0 0.0
    %1923 = vmatpush1.msra.mxu0 0.0
    %1924 = vmatprep.subr.mxu0 0.0
    %1925 = vmatpush1.msra.mxu0 0.0
    %1926 = vmatprep.subr.mxu0 0.0
    %1927 = vmatpush1.msra.mxu0 0.0
    %1928 = vmatprep.subr.mxu0 0.0
    %1929 = vmatpush1.msra.mxu0 0.0
    %1930 = vmatprep.subr.mxu0 0.0
    %1931 = vmatpush1.msra.mxu0 0.0
    %1932 = vmatprep.subr.mxu0 0.0
    %1933 = vmatpush1.msra.mxu0 0.0
    %1934 = vmatprep.subr.mxu0 0.0
    %1935 = vmatpush1.msra.mxu0 0.0
    %1936 = vmatprep.subr.mxu0 0.0
    %1937 = vmatpush1.msra.mxu0 0.0
    %1938 = vmatprep.subr.mxu0 0.0
    %1939 = vmatpush1.msra.mxu0 0.0
    %1940 = vmatprep.subr.mxu0 0.0
    %1941 = vmatpush1.msra.mxu0 0.0
    %1942 = vmatprep.subr.mxu0 0.0
    %1943 = vmatpush1.msra.mxu0 0.0
    %1944 = vmatprep.subr.mxu0 0.0
    %1945 = vmatpush1.msra.mxu0 0.0
    %1946 = vmatprep.subr.mxu0 0.0
    %1947 = vmatpush1.msra.mxu0 0.0
    %1948 = vmatprep.subr.mxu0 0.0
    %1949 = vmatpush1.msra.mxu0 0.0
    %1950 = vmatprep.subr.mxu0 0.0
    %1951 = vmatpush1.msra.mxu0 0.0
    %1952 = vmatprep.subr.mxu0 0.0
    %1953 = vmatpush1.msra.mxu0 0.0
    %1954 = vmatprep.subr.mxu0 0.0
    %1955 = vmatpush1.msra.mxu0 0.0
    %1956 = vmatprep.subr.mxu0 0.0
    %1957 = vmatpush1.msra.mxu0 0.0
    %1958 = vmatprep.subr.mxu0 0.0
    %1959 = vmatpush1.msra.mxu0 0.0
    %1960 = vmatprep.subr.mxu0 0.0
    %1961 = vmatpush1.msra.mxu0 0.0
    %1962 = vmatprep.subr.mxu0 0.0
    %1963 = vmatpush1.msra.mxu0 0.0
    %1964 = vmatprep.subr.mxu0 0.0
    %1965 = vmatpush1.msra.mxu0 0.0
    %1966 = vmatprep.subr.mxu0 0.0
    %1967 = vmatpush1.msra.mxu0 0.0
    %1968 = vmatprep.subr.mxu0 0.0
    %1969 = vmatpush1.msra.mxu0 0.0
    %1970 = vmatprep.subr.mxu0 0.0
    %1971 = vmatpush1.msra.mxu0 0.0
    %1972 = vmatprep.subr.mxu0 0.0
    %1973 = vmatpush1.msra.mxu0 0.0
    %1974 = vmatprep.mubr.f32.mxu0 0.0
    %1975 = vmatmul.mubr.f32.gmra.mrb[0].mxu0 %v1908
    %v1976 = vpop.f32.mrb[0].mxu0
    %v1977 = vadd.f32 0.0, %v1976
    %v1978 = vpop.f32.mrb[0].mxu0
    %1979 = vdwg.mxu0
    %v1981 = vrot.slane %v1562, 2
    %v1983 = vadd.f32 %v1981, %v1977
    %v1984 = vmax.f32 %v1983, 0.0
    %v1985 = vld [vmem:[%s9] sm:$0xff]
    %v1986 = vld [vmem:[%s9 + $0x8] sm:$0xff]
    %v1987 = vld [vmem:[%s9 + $0x10] sm:$0xff]
    %v1988 = vld [vmem:[%s9 + $0x18] sm:$0xff]
    %v1989 = vld [vmem:[%s10] sm:$0x1]
    %v1991 = vsel %vm125, %v1984, 0
    %1993 = vmatprep.subr.mxu0 0.0
    %1994 = vmatpush1.msra.mxu0 %v1985
    %1995 = vmatprep.subr.mxu0 0.0
    %1996 = vmatpush1.msra.mxu0 %v1986
    %1997 = vmatprep.subr.mxu0 0.0
    %1998 = vmatpush1.msra.mxu0 %v1987
    %1999 = vmatprep.subr.mxu0 0.0
    %2000 = vmatpush1.msra.mxu0 %v1988
    %2001 = vmatprep.subr.mxu0 0.0
    %2002 = vmatpush1.msra.mxu0 0.0
    %2003 = vmatprep.subr.mxu0 0.0
    %2004 = vmatpush1.msra.mxu0 0.0
    %2005 = vmatprep.subr.mxu0 0.0
    %2006 = vmatpush1.msra.mxu0 0.0
    %2007 = vmatprep.subr.mxu0 0.0
    %2008 = vmatpush1.msra.mxu0 0.0
    %2009 = vmatprep.subr.mxu0 0.0
    %2010 = vmatpush1.msra.mxu0 0.0
    %2011 = vmatprep.subr.mxu0 0.0
    %2012 = vmatpush1.msra.mxu0 0.0
    %2013 = vmatprep.subr.mxu0 0.0
    %2014 = vmatpush1.msra.mxu0 0.0
    %2015 = vmatprep.subr.mxu0 0.0
    %2016 = vmatpush1.msra.mxu0 0.0
    %2017 = vmatprep.subr.mxu0 0.0
    %2018 = vmatpush1.msra.mxu0 0.0
    %2019 = vmatprep.subr.mxu0 0.0
    %2020 = vmatpush1.msra.mxu0 0.0
    %2021 = vmatprep.subr.mxu0 0.0
    %2022 = vmatpush1.msra.mxu0 0.0
    %2023 = vmatprep.subr.mxu0 0.0
    %2024 = vmatpush1.msra.mxu0 0.0
    %2025 = vmatprep.subr.mxu0 0.0
    %2026 = vmatpush1.msra.mxu0 0.0
    %2027 = vmatprep.subr.mxu0 0.0
    %2028 = vmatpush1.msra.mxu0 0.0
    %2029 = vmatprep.subr.mxu0 0.0
    %2030 = vmatpush1.msra.mxu0 0.0
    %2031 = vmatprep.subr.mxu0 0.0
    %2032 = vmatpush1.msra.mxu0 0.0
    %2033 = vmatprep.subr.mxu0 0.0
    %2034 = vmatpush1.msra.mxu0 0.0
    %2035 = vmatprep.subr.mxu0 0.0
    %2036 = vmatpush1.msra.mxu0 0.0
    %2037 = vmatprep.subr.mxu0 0.0
    %2038 = vmatpush1.msra.mxu0 0.0
    %2039 = vmatprep.subr.mxu0 0.0
    %2040 = vmatpush1.msra.mxu0 0.0
    %2041 = vmatprep.subr.mxu0 0.0
    %2042 = vmatpush1.msra.mxu0 0.0
    %2043 = vmatprep.subr.mxu0 0.0
    %2044 = vmatpush1.msra.mxu0 0.0
    %2045 = vmatprep.subr.mxu0 0.0
    %2046 = vmatpush1.msra.mxu0 0.0
    %2047 = vmatprep.subr.mxu0 0.0
    %2048 = vmatpush1.msra.mxu0 0.0
    %2049 = vmatprep.subr.mxu0 0.0
    %2050 = vmatpush1.msra.mxu0 0.0
    %2051 = vmatprep.subr.mxu0 0.0
    %2052 = vmatpush1.msra.mxu0 0.0
    %2053 = vmatprep.subr.mxu0 0.0
    %2054 = vmatpush1.msra.mxu0 0.0
    %2055 = vmatprep.subr.mxu0 0.0
    %2056 = vmatpush1.msra.mxu0 0.0
    %2057 = vmatprep.mubr.f32.mxu0 0.0
    %2058 = vmatmul.mubr.f32.gmra.mrb[0].mxu0 %v1991
    %v2059 = vpop.f32.mrb[0].mxu0
    %v2060 = vadd.f32 %v1989, %v2059
    %v2061 = vpop.f32.mrb[0].mxu0
    %2062 = vdwg.mxu0
    %v2063 = vadd.f32 %v2060, %v1733
    %v2064 = vxor.u32 %v2063, 2147483648
    %v2065 = vmul.f32 %v2064, 1.442695
    %v2066 = vpow.pop %v2065
    %v2067 = vadd.f32 %v2066, 1.0
    %v2068 = vrcp.pop %v2067
    %v2069 = vmul.f32 1.0, %v2068
    %2071 = vrot.lane.b32.xlu0 %v1733, 64
    %v2072 = vpop.permute.xlu0 %2071
    %v2074 = vmul.f32 %v2069, %v2072
    %2076 = vrot.lane.b32.xlu0 %v2074, 64
    %v2077 = vpop.permute.xlu0 %2076
    %v2079 = vadd.f32 %v2060, %v2077
    %v2080 = vtanh.pop %v2079
    %v2081 = vsub.f32 1.0, %v2069
    %2083 = vrot.lane.b32.xlu0 %v2080, 96
    %v2084 = vpop.permute.xlu0 %2083
    %v2086 = vmul.f32 %v2081, %v2084
    %v2087 = vlaneseq
    %v2088 = vshrl.u32 %v2087, 7
    %v2089 = vsub.s32 0, %v2088
    %v2090 = vrot.slane %v1560, %v2089
    %2091 = vrot.lane.b32.xlu0 %v2090, 32
    %v2092 = vpop.permute.xlu0 %2091
    %v2094 = vmul.f32 %v2069, %v2092
    %v2095 = vadd.f32 %v2086, %v2094
    %2097 = vrot.lane.b32.xlu0 %v2095, 96
    %v2098 = vpop.permute.xlu0 %2097
    %2100 = vst.msk [vmem:[#allocation2] sm:$0x1] %vm65, %v2098
    %v2102 = vlaneseq
    %v2103 = vshrl.u32 %v2102, 7
    %v2104 = vsub.s32 0, %v2103
    %v2105 = vrot.slane %v1901, %v2104
    %v2107 = vmul.f32 %v1779, %v2105
    %s2108 = scalar_lea.vmem [#allocation11], 2
    %2109 = vst.msk [vmem:[%s2108] ss:$8 sm:$0x3] %vm826, %v2107
    %2110 = vst.msk [vmem:[%s2108] ss:$8 sm:$0x0] %vm826, %v2107
    %v2111 = vld [vmem:[%s11] sm:$0xff]
    %v2112 = vld [vmem:[%s11 + $0x8] sm:$0xff]
    %v2113 = vld [vmem:[%s11 + $0x10] sm:$0xff]
    %v2114 = vld [vmem:[%s11 + $0x18] sm:$0xff]
    %v2115 = vld [vmem:[%s12] sm:$0x1]
    %v2116 = vsel %vm125, %v2098, 0
    %2118 = vmatprep.subr.mxu0 0.0
    %2119 = vmatpush1.msra.mxu0 %v2111
    %2120 = vmatprep.subr.mxu0 0.0
    %2121 = vmatpush1.msra.mxu0 %v2112
    %2122 = vmatprep.subr.mxu0 0.0
    %2123 = vmatpush1.msra.mxu0 %v2113
    %2124 = vmatprep.subr.mxu0 0.0
    %2125 = vmatpush1.msra.mxu0 %v2114
    %2126 = vmatprep.subr.mxu0 0.0
    %2127 = vmatpush1.msra.mxu0 0.0
    %2128 = vmatprep.subr.mxu0 0.0
    %2129 = vmatpush1.msra.mxu0 0.0
    %2130 = vmatprep.subr.mxu0 0.0
    %2131 = vmatpush1.msra.mxu0 0.0
    %2132 = vmatprep.subr.mxu0 0.0
    %2133 = vmatpush1.msra.mxu0 0.0
    %2134 = vmatprep.subr.mxu0 0.0
    %2135 = vmatpush1.msra.mxu0 0.0
    %2136 = vmatprep.subr.mxu0 0.0
    %2137 = vmatpush1.msra.mxu0 0.0
    %2138 = vmatprep.subr.mxu0 0.0
    %2139 = vmatpush1.msra.mxu0 0.0
    %2140 = vmatprep.subr.mxu0 0.0
    %2141 = vmatpush1.msra.mxu0 0.0
    %2142 = vmatprep.subr.mxu0 0.0
    %2143 = vmatpush1.msra.mxu0 0.0
    %2144 = vmatprep.subr.mxu0 0.0
    %2145 = vmatpush1.msra.mxu0 0.0
    %2146 = vmatprep.subr.mxu0 0.0
    %2147 = vmatpush1.msra.mxu0 0.0
    %2148 = vmatprep.subr.mxu0 0.0
    %2149 = vmatpush1.msra.mxu0 0.0
    %2150 = vmatprep.subr.mxu0 0.0
    %2151 = vmatpush1.msra.mxu0 0.0
    %2152 = vmatprep.subr.mxu0 0.0
    %2153 = vmatpush1.msra.mxu0 0.0
    %2154 = vmatprep.subr.mxu0 0.0
    %2155 = vmatpush1.msra.mxu0 0.0
    %2156 = vmatprep.subr.mxu0 0.0
    %2157 = vmatpush1.msra.mxu0 0.0
    %2158 = vmatprep.subr.mxu0 0.0
    %2159 = vmatpush1.msra.mxu0 0.0
    %2160 = vmatprep.subr.mxu0 0.0
    %2161 = vmatpush1.msra.mxu0 0.0
    %2162 = vmatprep.subr.mxu0 0.0
    %2163 = vmatpush1.msra.mxu0 0.0
    %2164 = vmatprep.subr.mxu0 0.0
    %2165 = vmatpush1.msra.mxu0 0.0
    %2166 = vmatprep.subr.mxu0 0.0
    %2167 = vmatpush1.msra.mxu0 0.0
    %2168 = vmatprep.subr.mxu0 0.0
    %2169 = vmatpush1.msra.mxu0 0.0
    %2170 = vmatprep.subr.mxu0 0.0
    %2171 = vmatpush1.msra.mxu0 0.0
    %2172 = vmatprep.subr.mxu0 0.0
    %2173 = vmatpush1.msra.mxu0 0.0
    %2174 = vmatprep.subr.mxu0 0.0
    %2175 = vmatpush1.msra.mxu0 0.0
    %2176 = vmatprep.subr.mxu0 0.0
    %2177 = vmatpush1.msra.mxu0 0.0
    %2178 = vmatprep.subr.mxu0 0.0
    %2179 = vmatpush1.msra.mxu0 0.0
    %2180 = vmatprep.subr.mxu0 0.0
    %2181 = vmatpush1.msra.mxu0 0.0
    %2182 = vmatprep.mubr.f32.mxu0 0.0
    %2183 = vmatmul.mubr.f32.gmra.mrb[0].mxu0 %v2116
    %v2184 = vpop.f32.mrb[0].mxu0
    %v2185 = vadd.f32 %v2115, %v2184
    %v2186 = vpop.f32.mrb[0].mxu0
    %2187 = vdwg.mxu0
    %v2188 = vsel %vm480, %v2185, -inf
    %2189 = vmax.xlane.f32.xlu0 %v2188
    %v2190 = vpop.xlane.xlu0 %2189
    %v2191 = vsub.f32 %v2185, %v2190
    %v2192 = vmul.f32 %v2191, 1.442695
    %v2193 = vpow.pop %v2192
    %v2194 = vsel %vm480, %v2193, 0.0
    %2195 = vadd.xlane.f32.xlu0 %v2194
    %v2196 = vpop.xlane.xlu0 %2195
    %v2197 = vlog2.pop %v2196
    %v2198 = vmul.f32 %v2197, 0.6931472
    %v2199 = vsub.f32 %v2191, %v2198
    %2200 = vst [vmem:[#allocation8 + $0x2] sm:$0x1] %v2199
    %v2201 = vld [vmem:[#allocation2] sm:$0x1]
    %s2202 = scalar_lea.vmem [#allocation4], 3
    %v2203 = vld [vmem:[%s2202] ss:$8 sm:$0x7]
    %v2204 = vld [vmem:[%s6] sm:$0xff]
    %v2205 = vld [vmem:[%s6 + $0x8] sm:$0xff]
    %v2206 = vld [vmem:[%s6 + $0x10] sm:$0xff]
    %v2207 = vld [vmem:[%s6 + $0x18] sm:$0xff]
    %v2208 = vld [vmem:[%s6 + $0x20] sm:$0xff]
    %v2209 = vld [vmem:[%s6 + $0x28] sm:$0xff]
    %v2210 = vld [vmem:[%s6 + $0x30] sm:$0xff]
    %v2211 = vld [vmem:[%s6 + $0x38] sm:$0xff]
    %v2212 = vld [vmem:[%s6 + $0x40] sm:$0xff]
    %v2213 = vld [vmem:[%s6 + $0x48] sm:$0xff]
    %v2214 = vld [vmem:[%s6 + $0x50] sm:$0xff]
    %v2215 = vld [vmem:[%s6 + $0x58] sm:$0xff]
    %v2216 = vld [vmem:[%s7] sm:$0x7]
    %v2218 = vlaneseq
    %v2219 = vshrl.u32 %v2218, 7
    %v2220 = vsub.s32 0, %v2219
    %v2221 = vrot.slane %v2216, %v2220
    %v2222 = vlaneseq
    %v2223 = vshrl.u32 %v2222, 7
    %v2224 = vsub.s32 1, %v2223
    %v2225 = vrot.slane %v2216, %v2224
    %v2226 = vlaneseq
    %v2227 = vshrl.u32 %v2226, 7
    %v2228 = vsub.s32 2, %v2227
    %v2229 = vrot.slane %v2216, %v2228
    %v2234 = vsel %vm125, %v2201, 0
    %2236 = vmatprep.subr.mxu0 %v2205
    %2237 = vmatpush1.msra.mxu0 %v2204
    %2238 = vmatprep.subr.mxu0 %v2208
    %2239 = vmatpush1.msra.mxu0 %v2207
    %2240 = vmatprep.subr.mxu0 %v2211
    %2241 = vmatpush1.msra.mxu0 %v2210
    %2242 = vmatprep.subr.mxu0 %v2214
    %2243 = vmatpush1.msra.mxu0 %v2213
    %2244 = vmatprep.subr.mxu0 0.0
    %2245 = vmatpush1.msra.mxu0 0.0
    %2246 = vmatprep.subr.mxu0 0.0
    %2247 = vmatpush1.msra.mxu0 0.0
    %2248 = vmatprep.subr.mxu0 0.0
    %2249 = vmatpush1.msra.mxu0 0.0
    %2250 = vmatprep.subr.mxu0 0.0
    %2251 = vmatpush1.msra.mxu0 0.0
    %2252 = vmatprep.subr.mxu0 0.0
    %2253 = vmatpush1.msra.mxu0 0.0
    %2254 = vmatprep.subr.mxu0 0.0
    %2255 = vmatpush1.msra.mxu0 0.0
    %2256 = vmatprep.subr.mxu0 0.0
    %2257 = vmatpush1.msra.mxu0 0.0
    %2258 = vmatprep.subr.mxu0 0.0
    %2259 = vmatpush1.msra.mxu0 0.0
    %2260 = vmatprep.subr.mxu0 0.0
    %2261 = vmatpush1.msra.mxu0 0.0
    %2262 = vmatprep.subr.mxu0 0.0
    %2263 = vmatpush1.msra.mxu0 0.0
    %2264 = vmatprep.subr.mxu0 0.0
    %2265 = vmatpush1.msra.mxu0 0.0
    %2266 = vmatprep.subr.mxu0 0.0
    %2267 = vmatpush1.msra.mxu0 0.0
    %2268 = vmatprep.subr.mxu0 0.0
    %2269 = vmatpush1.msra.mxu0 0.0
    %2270 = vmatprep.subr.mxu0 0.0
    %2271 = vmatpush1.msra.mxu0 0.0
    %2272 = vmatprep.subr.mxu0 0.0
    %2273 = vmatpush1.msra.mxu0 0.0
    %2274 = vmatprep.subr.mxu0 0.0
    %2275 = vmatpush1.msra.mxu0 0.0
    %2276 = vmatprep.subr.mxu0 0.0
    %2277 = vmatpush1.msra.mxu0 0.0
    %2278 = vmatprep.subr.mxu0 0.0
    %2279 = vmatpush1.msra.mxu0 0.0
    %2280 = vmatprep.subr.mxu0 0.0
    %2281 = vmatpush1.msra.mxu0 0.0
    %2282 = vmatprep.subr.mxu0 0.0
    %2283 = vmatpush1.msra.mxu0 0.0
    %2284 = vmatprep.subr.mxu0 0.0
    %2285 = vmatpush1.msra.mxu0 0.0
    %2286 = vmatprep.subr.mxu0 0.0
    %2287 = vmatpush1.msra.mxu0 0.0
    %2288 = vmatprep.subr.mxu0 0.0
    %2289 = vmatpush1.msra.mxu0 0.0
    %2290 = vmatprep.subr.mxu0 0.0
    %2291 = vmatpush1.msra.mxu0 0.0
    %2292 = vmatprep.subr.mxu0 0.0
    %2293 = vmatpush1.msra.mxu0 0.0
    %2294 = vmatprep.subr.mxu0 0.0
    %2295 = vmatpush1.msra.mxu0 0.0
    %2296 = vmatprep.subr.mxu0 0.0
    %2297 = vmatpush1.msra.mxu0 0.0
    %2298 = vmatprep.subr.mxu0 0.0
    %2299 = vmatpush1.msra.mxu0 0.0
    %2300 = vmatprep.mubr.f32.mxu0 0.0
    %2301 = vmatmul.mubr.f32.gmra.mrb[0].mxu0 %v2234
    %v2302 = vpop.f32.mrb[0].mxu0
    %v2303 = vadd.f32 %v2221, %v2302
    %v2304 = vpop.f32.mrb[0].mxu0
    %v2305 = vadd.f32 %v2225, %v2304
    %2306 = vdwg.mxu0
    %2307 = vmatprep.subr.mxu0 0.0
    %2308 = vmatpush1.msra.mxu0 %v2206
    %2309 = vmatprep.subr.mxu0 0.0
    %2310 = vmatpush1.msra.mxu0 %v2209
    %2311 = vmatprep.subr.mxu0 0.0
    %2312 = vmatpush1.msra.mxu0 %v2212
    %2313 = vmatprep.subr.mxu0 0.0
    %2314 = vmatpush1.msra.mxu0 %v2215
    %2315 = vmatprep.subr.mxu0 0.0
    %2316 = vmatpush1.msra.mxu0 0.0
    %2317 = vmatprep.subr.mxu0 0.0
    %2318 = vmatpush1.msra.mxu0 0.0
    %2319 = vmatprep.subr.mxu0 0.0
    %2320 = vmatpush1.msra.mxu0 0.0
    %2321 = vmatprep.subr.mxu0 0.0
    %2322 = vmatpush1.msra.mxu0 0.0
    %2323 = vmatprep.subr.mxu0 0.0
    %2324 = vmatpush1.msra.mxu0 0.0
    %2325 = vmatprep.subr.mxu0 0.0
    %2326 = vmatpush1.msra.mxu0 0.0
    %2327 = vmatprep.subr.mxu0 0.0
    %2328 = vmatpush1.msra.mxu0 0.0
    %2329 = vmatprep.subr.mxu0 0.0
    %2330 = vmatpush1.msra.mxu0 0.0
    %2331 = vmatprep.subr.mxu0 0.0
    %2332 = vmatpush1.msra.mxu0 0.0
    %2333 = vmatprep.subr.mxu0 0.0
    %2334 = vmatpush1.msra.mxu0 0.0
    %2335 = vmatprep.subr.mxu0 0.0
    %2336 = vmatpush1.msra.mxu0 0.0
    %2337 = vmatprep.subr.mxu0 0.0
    %2338 = vmatpush1.msra.mxu0 0.0
    %2339 = vmatprep.subr.mxu0 0.0
    %2340 = vmatpush1.msra.mxu0 0.0
    %2341 = vmatprep.subr.mxu0 0.0
    %2342 = vmatpush1.msra.mxu0 0.0
    %2343 = vmatprep.subr.mxu0 0.0
    %2344 = vmatpush1.msra.mxu0 0.0
    %2345 = vmatprep.subr.mxu0 0.0
    %2346 = vmatpush1.msra.mxu0 0.0
    %2347 = vmatprep.subr.mxu0 0.0
    %2348 = vmatpush1.msra.mxu0 0.0
    %2349 = vmatprep.subr.mxu0 0.0
    %2350 = vmatpush1.msra.mxu0 0.0
    %2351 = vmatprep.subr.mxu0 0.0
    %2352 = vmatpush1.msra.mxu0 0.0
    %2353 = vmatprep.subr.mxu0 0.0
    %2354 = vmatpush1.msra.mxu0 0.0
    %2355 = vmatprep.subr.mxu0 0.0
    %2356 = vmatpush1.msra.mxu0 0.0
    %2357 = vmatprep.subr.mxu0 0.0
    %2358 = vmatpush1.msra.mxu0 0.0
    %2359 = vmatprep.subr.mxu0 0.0
    %2360 = vmatpush1.msra.mxu0 0.0
    %2361 = vmatprep.subr.mxu0 0.0
    %2362 = vmatpush1.msra.mxu0 0.0
    %2363 = vmatprep.subr.mxu0 0.0
    %2364 = vmatpush1.msra.mxu0 0.0
    %2365 = vmatprep.subr.mxu0 0.0
    %2366 = vmatpush1.msra.mxu0 0.0
    %2367 = vmatprep.subr.mxu0 0.0
    %2368 = vmatpush1.msra.mxu0 0.0
    %2369 = vmatprep.subr.mxu0 0.0
    %2370 = vmatpush1.msra.mxu0 0.0
    %2371 = vmatprep.mubr.f32.mxu0 0.0
    %2372 = vmatmul.mubr.f32.gmra.mrb[0].mxu0 %v2234
    %v2373 = vpop.f32.mrb[0].mxu0
    %v2374 = vadd.f32 %v2229, %v2373
    %v2375 = vpop.f32.mrb[0].mxu0
    %2376 = vdwg.mxu0
    %v2379 = vcombine.low %v2303, %v2305
    %v2381 = vunpack.c.l.s4 1966171168
    %v2382 = vunpack.c.0.s8 %v2381
    %v2383 = vlaneseq
    %v2384 = vshrl.u32 %v2383, 7
    %v2385 = vsub.s32 %v2382, %v2384
    %v2386 = vrot.slane %v2379, %v2385
    %v2388 = vunpack.c.l.s4 1966171168
    %v2389 = vunpack.c.0.s8 %v2388
    %v2390 = vlaneseq
    %v2391 = vshrl.u32 %v2390, 7
    %v2392 = vsub.s32 %v2389, %v2391
    %v2393 = vrot.slane %v2386, %v2392
    %v2395 = vadd.f32 %v2203, %v2393
    %v2397 = vlaneseq
    %v2398 = vshrl.u32 %v2397, 7
    %v2399 = vsub.s32 0, %v2398
    %v2400 = vrot.slane %v2395, %v2399
    %v2401 = vlaneseq
    %v2402 = vshrl.u32 %v2401, 7
    %v2403 = vsub.s32 1, %v2402
    %v2404 = vrot.slane %v2395, %v2403
    %v2407 = vsel %vm480, %v2400, -inf
    %v2408 = vsel %vm480, %v2404, -inf
    %v2409 = vmax.f32 %v2407, %v2408
    %2410 = vmax.xlane.f32.xlu0 %v2409
    %v2411 = vpop.xlane.xlu0 %2410
    %v2413 = vlaneseq
    %v2414 = vshrl.u32 %v2413, 7
    %v2415 = vsub.s32 0, %v2414
    %v2416 = vrot.slane %v2411, %v2415
    %v2418 = vsub.f32 %v2395, %v2416
    %v2419 = vmul.f32 %v2418, 1.442695
    %v2420 = vpow.pop %v2419
    %v2422 = vlaneseq
    %v2423 = vshrl.u32 %v2422, 7
    %v2424 = vsub.s32 0, %v2423
    %v2425 = vrot.slane %v2420, %v2424
    %v2426 = vlaneseq
    %v2427 = vshrl.u32 %v2426, 7
    %v2428 = vsub.s32 1, %v2427
    %v2429 = vrot.slane %v2420, %v2428
    %v2432 = vsel %vm480, %v2425, 0.0
    %v2433 = vsel %vm480, %v2429, 0.0
    %v2434 = vadd.f32 %v2432, %v2433
    %2435 = vadd.xlane.f32.xlu0 %v2434
    %v2436 = vpop.xlane.xlu0 %2435
    %v2437 = vld [vmem:[%s3] sm:$0xff]
    %v2438 = vld [vmem:[%s3 + $0x8] sm:$0xff]
    %v2439 = vld [vmem:[%s3 + $0x10] sm:$0xff]
    %v2440 = vld [vmem:[%s3 + $0x18] sm:$0xff]
    %v2441 = vld [vmem:[%s3 + $0x20] sm:$0xff]
    %v2442 = vld [vmem:[%s3 + $0x28] sm:$0xff]
    %v2443 = vld [vmem:[%s3 + $0x30] sm:$0xff]
    %v2444 = vld [vmem:[%s3 + $0x38] sm:$0xff]
    %v2445 = vld [vmem:[%s3 + $0x40] sm:$0xff]
    %v2446 = vld [vmem:[%s3 + $0x48] sm:$0xff]
    %v2447 = vld [vmem:[%s3 + $0x50] sm:$0xff]
    %v2448 = vld [vmem:[%s3 + $0x58] sm:$0xff]
    %v2449 = vld [vmem:[%s3 + $0x60] sm:$0xff]
    %v2450 = vld [vmem:[%s3 + $0x68] sm:$0xff]
    %v2451 = vld [vmem:[%s3 + $0x70] sm:$0xff]
    %v2452 = vld [vmem:[%s3 + $0x78] sm:$0xff]
    %v2453 = vld [vmem:[%s3 + $0x80] sm:$0xff]
    %v2454 = vld [vmem:[%s3 + $0x88] sm:$0xff]
    %v2455 = vld [vmem:[%s3 + $0x90] sm:$0xff]
    %v2456 = vld [vmem:[%s3 + $0x98] sm:$0xff]
    %v2457 = vld [vmem:[%s3 + $0xa0] sm:$0xff]
    %v2458 = vld [vmem:[%s3 + $0xa8] sm:$0xff]
    %v2459 = vld [vmem:[%s3 + $0xb0] sm:$0xff]
    %v2460 = vld [vmem:[%s3 + $0xb8] sm:$0xff]
    %v2461 = vld [vmem:[%s3 + $0xc0] sm:$0xff]
    %v2462 = vld [vmem:[%s3 + $0xc8] sm:$0xff]
    %v2463 = vld [vmem:[%s3 + $0xd0] sm:$0xff]
    %v2464 = vld [vmem:[%s3 + $0xd8] sm:$0xff]
    %v2465 = vld [vmem:[%s3 + $0xe0] sm:$0xff]
    %v2466 = vld [vmem:[%s3 + $0xe8] sm:$0xff]
    %v2467 = vld [vmem:[%s3 + $0xf0] sm:$0xff]
    %v2468 = vld [vmem:[%s3 + $0xf8] sm:$0xff]
    %2469 = vmatprep.subr.mxu0 0.0
    %2470 = vmatpush1.msra.mxu0 %v2437
    %2471 = vmatprep.subr.mxu0 0.0
    %2472 = vmatpush1.msra.mxu0 %v2438
    %2473 = vmatprep.subr.mxu0 0.0
    %2474 = vmatpush1.msra.mxu0 %v2439
    %2475 = vmatprep.subr.mxu0 0.0
    %2476 = vmatpush1.msra.mxu0 %v2440
    %2477 = vmatprep.subr.mxu0 0.0
    %2478 = vmatpush1.msra.mxu0 %v2441
    %2479 = vmatprep.subr.mxu0 0.0
    %2480 = vmatpush1.msra.mxu0 %v2442
    %2481 = vmatprep.subr.mxu0 0.0
    %2482 = vmatpush1.msra.mxu0 %v2443
    %2483 = vmatprep.subr.mxu0 0.0
    %2484 = vmatpush1.msra.mxu0 %v2444
    %2485 = vmatprep.subr.mxu0 0.0
    %2486 = vmatpush1.msra.mxu0 %v2445
    %2487 = vmatprep.subr.mxu0 0.0
    %2488 = vmatpush1.msra.mxu0 %v2446
    %2489 = vmatprep.subr.mxu0 0.0
    %2490 = vmatpush1.msra.mxu0 %v2447
    %2491 = vmatprep.subr.mxu0 0.0
    %2492 = vmatpush1.msra.mxu0 %v2448
    %2493 = vmatprep.subr.mxu0 0.0
    %2494 = vmatpush1.msra.mxu0 %v2449
    %2495 = vmatprep.subr.mxu0 0.0
    %2496 = vmatpush1.msra.mxu0 %v2450
    %2497 = vmatprep.subr.mxu0 0.0
    %2498 = vmatpush1.msra.mxu0 %v2451
    %2499 = vmatprep.subr.mxu0 0.0
    %2500 = vmatpush1.msra.mxu0 %v2452
    %2501 = vmatprep.subr.mxu0 0.0
    %2502 = vmatpush1.msra.mxu0 %v2453
    %2503 = vmatprep.subr.mxu0 0.0
    %2504 = vmatpush1.msra.mxu0 %v2454
    %2505 = vmatprep.subr.mxu0 0.0
    %2506 = vmatpush1.msra.mxu0 %v2455
    %2507 = vmatprep.subr.mxu0 0.0
    %2508 = vmatpush1.msra.mxu0 %v2456
    %2509 = vmatprep.subr.mxu0 0.0
    %2510 = vmatpush1.msra.mxu0 %v2457
    %2511 = vmatprep.subr.mxu0 0.0
    %2512 = vmatpush1.msra.mxu0 %v2458
    %2513 = vmatprep.subr.mxu0 0.0
    %2514 = vmatpush1.msra.mxu0 %v2459
    %2515 = vmatprep.subr.mxu0 0.0
    %2516 = vmatpush1.msra.mxu0 %v2460
    %2517 = vmatprep.subr.mxu0 0.0
    %2518 = vmatpush1.msra.mxu0 %v2461
    %2519 = vmatprep.subr.mxu0 0.0
    %2520 = vmatpush1.msra.mxu0 %v2462
    %2521 = vmatprep.subr.mxu0 0.0
    %2522 = vmatpush1.msra.mxu0 %v2463
    %2523 = vmatprep.subr.mxu0 0.0
    %2524 = vmatpush1.msra.mxu0 %v2464
    %2525 = vmatprep.subr.mxu0 0.0
    %2526 = vmatpush1.msra.mxu0 %v2465
    %2527 = vmatprep.subr.mxu0 0.0
    %2528 = vmatpush1.msra.mxu0 %v2466
    %2529 = vmatprep.subr.mxu0 0.0
    %2530 = vmatpush1.msra.mxu0 %v2467
    %2531 = vmatprep.subr.mxu0 0.0
    %2532 = vmatpush1.msra.mxu0 %v2468
    %2533 = vmatprep.mubr.f32.mxu0 %v2429
    %2534 = vmatmul.mubr.f32.gmra.mrb[0].mxu0 %v2425
    %v2535 = vpop.f32.mrb[0].mxu0
    %v2536 = vadd.f32 0.0, %v2535
    %v2537 = vpop.f32.mrb[0].mxu0
    %2538 = vdwg.mxu0
    %v2539 = vrcp.pop %v2436
    %v2540 = vmul.f32 %v2436, %v2539
    %v2541 = vsub.f32 2.0, %v2540
    %v2542 = vmul.f32 %v2539, %v2541
    %v2543 = vmul.f32 %v2536, %v2542
    %v2544 = vld [vmem:[%s8] sm:$0xff]
    %v2545 = vld [vmem:[%s8 + $0x8] sm:$0xff]
    %v2546 = vld [vmem:[%s8 + $0x10] sm:$0xff]
    %v2547 = vld [vmem:[%s8 + $0x18] sm:$0xff]
    %v2549 = vsel %vm125, %v2543, 0
    %2551 = vmatprep.subr.mxu0 0.0
    %2552 = vmatpush1.msra.mxu0 %v2544
    %2553 = vmatprep.subr.mxu0 0.0
    %2554 = vmatpush1.msra.mxu0 %v2545
    %2555 = vmatprep.subr.mxu0 0.0
    %2556 = vmatpush1.msra.mxu0 %v2546
    %2557 = vmatprep.subr.mxu0 0.0
    %2558 = vmatpush1.msra.mxu0 %v2547
    %2559 = vmatprep.subr.mxu0 0.0
    %2560 = vmatpush1.msra.mxu0 0.0
    %2561 = vmatprep.subr.mxu0 0.0
    %2562 = vmatpush1.msra.mxu0 0.0
    %2563 = vmatprep.subr.mxu0 0.0
    %2564 = vmatpush1.msra.mxu0 0.0
    %2565 = vmatprep.subr.mxu0 0.0
    %2566 = vmatpush1.msra.mxu0 0.0
    %2567 = vmatprep.subr.mxu0 0.0
    %2568 = vmatpush1.msra.mxu0 0.0
    %2569 = vmatprep.subr.mxu0 0.0
    %2570 = vmatpush1.msra.mxu0 0.0
    %2571 = vmatprep.subr.mxu0 0.0
    %2572 = vmatpush1.msra.mxu0 0.0
    %2573 = vmatprep.subr.mxu0 0.0
    %2574 = vmatpush1.msra.mxu0 0.0
    %2575 = vmatprep.subr.mxu0 0.0
    %2576 = vmatpush1.msra.mxu0 0.0
    %2577 = vmatprep.subr.mxu0 0.0
    %2578 = vmatpush1.msra.mxu0 0.0
    %2579 = vmatprep.subr.mxu0 0.0
    %2580 = vmatpush1.msra.mxu0 0.0
    %2581 = vmatprep.subr.mxu0 0.0
    %2582 = vmatpush1.msra.mxu0 0.0
    %2583 = vmatprep.subr.mxu0 0.0
    %2584 = vmatpush1.msra.mxu0 0.0
    %2585 = vmatprep.subr.mxu0 0.0
    %2586 = vmatpush1.msra.mxu0 0.0
    %2587 = vmatprep.subr.mxu0 0.0
    %2588 = vmatpush1.msra.mxu0 0.0
    %2589 = vmatprep.subr.mxu0 0.0
    %2590 = vmatpush1.msra.mxu0 0.0
    %2591 = vmatprep.subr.mxu0 0.0
    %2592 = vmatpush1.msra.mxu0 0.0
    %2593 = vmatprep.subr.mxu0 0.0
    %2594 = vmatpush1.msra.mxu0 0.0
    %2595 = vmatprep.subr.mxu0 0.0
    %2596 = vmatpush1.msra.mxu0 0.0
    %2597 = vmatprep.subr.mxu0 0.0
    %2598 = vmatpush1.msra.mxu0 0.0
    %2599 = vmatprep.subr.mxu0 0.0
    %2600 = vmatpush1.msra.mxu0 0.0
    %2601 = vmatprep.subr.mxu0 0.0
    %2602 = vmatpush1.msra.mxu0 0.0
    %2603 = vmatprep.subr.mxu0 0.0
    %2604 = vmatpush1.msra.mxu0 0.0
    %2605 = vmatprep.subr.mxu0 0.0
    %2606 = vmatpush1.msra.mxu0 0.0
    %2607 = vmatprep.subr.mxu0 0.0
    %2608 = vmatpush1.msra.mxu0 0.0
    %2609 = vmatprep.subr.mxu0 0.0
    %2610 = vmatpush1.msra.mxu0 0.0
    %2611 = vmatprep.subr.mxu0 0.0
    %2612 = vmatpush1.msra.mxu0 0.0
    %2613 = vmatprep.subr.mxu0 0.0
    %2614 = vmatpush1.msra.mxu0 0.0
    %2615 = vmatprep.mubr.f32.mxu0 0.0
    %2616 = vmatmul.mubr.f32.gmra.mrb[0].mxu0 %v2549
    %v2617 = vpop.f32.mrb[0].mxu0
    %v2618 = vadd.f32 0.0, %v2617
    %v2619 = vpop.f32.mrb[0].mxu0
    %2620 = vdwg.mxu0
    %v2622 = vrot.slane %v2203, 2
    %v2624 = vadd.f32 %v2622, %v2618
    %v2625 = vmax.f32 %v2624, 0.0
    %v2626 = vld [vmem:[%s9] sm:$0xff]
    %v2627 = vld [vmem:[%s9 + $0x8] sm:$0xff]
    %v2628 = vld [vmem:[%s9 + $0x10] sm:$0xff]
    %v2629 = vld [vmem:[%s9 + $0x18] sm:$0xff]
    %v2630 = vld [vmem:[%s10] sm:$0x1]
    %v2632 = vsel %vm125, %v2625, 0
    %2634 = vmatprep.subr.mxu0 0.0
    %2635 = vmatpush1.msra.mxu0 %v2626
    %2636 = vmatprep.subr.mxu0 0.0
    %2637 = vmatpush1.msra.mxu0 %v2627
    %2638 = vmatprep.subr.mxu0 0.0
    %2639 = vmatpush1.msra.mxu0 %v2628
    %2640 = vmatprep.subr.mxu0 0.0
    %2641 = vmatpush1.msra.mxu0 %v2629
    %2642 = vmatprep.subr.mxu0 0.0
    %2643 = vmatpush1.msra.mxu0 0.0
    %2644 = vmatprep.subr.mxu0 0.0
    %2645 = vmatpush1.msra.mxu0 0.0
    %2646 = vmatprep.subr.mxu0 0.0
    %2647 = vmatpush1.msra.mxu0 0.0
    %2648 = vmatprep.subr.mxu0 0.0
    %2649 = vmatpush1.msra.mxu0 0.0
    %2650 = vmatprep.subr.mxu0 0.0
    %2651 = vmatpush1.msra.mxu0 0.0
    %2652 = vmatprep.subr.mxu0 0.0
    %2653 = vmatpush1.msra.mxu0 0.0
    %2654 = vmatprep.subr.mxu0 0.0
    %2655 = vmatpush1.msra.mxu0 0.0
    %2656 = vmatprep.subr.mxu0 0.0
    %2657 = vmatpush1.msra.mxu0 0.0
    %2658 = vmatprep.subr.mxu0 0.0
    %2659 = vmatpush1.msra.mxu0 0.0
    %2660 = vmatprep.subr.mxu0 0.0
    %2661 = vmatpush1.msra.mxu0 0.0
    %2662 = vmatprep.subr.mxu0 0.0
    %2663 = vmatpush1.msra.mxu0 0.0
    %2664 = vmatprep.subr.mxu0 0.0
    %2665 = vmatpush1.msra.mxu0 0.0
    %2666 = vmatprep.subr.mxu0 0.0
    %2667 = vmatpush1.msra.mxu0 0.0
    %2668 = vmatprep.subr.mxu0 0.0
    %2669 = vmatpush1.msra.mxu0 0.0
    %2670 = vmatprep.subr.mxu0 0.0
    %2671 = vmatpush1.msra.mxu0 0.0
    %2672 = vmatprep.subr.mxu0 0.0
    %2673 = vmatpush1.msra.mxu0 0.0
    %2674 = vmatprep.subr.mxu0 0.0
    %2675 = vmatpush1.msra.mxu0 0.0
    %2676 = vmatprep.subr.mxu0 0.0
    %2677 = vmatpush1.msra.mxu0 0.0
    %2678 = vmatprep.subr.mxu0 0.0
    %2679 = vmatpush1.msra.mxu0 0.0
    %2680 = vmatprep.subr.mxu0 0.0
    %2681 = vmatpush1.msra.mxu0 0.0
    %2682 = vmatprep.subr.mxu0 0.0
    %2683 = vmatpush1.msra.mxu0 0.0
    %2684 = vmatprep.subr.mxu0 0.0
    %2685 = vmatpush1.msra.mxu0 0.0
    %2686 = vmatprep.subr.mxu0 0.0
    %2687 = vmatpush1.msra.mxu0 0.0
    %2688 = vmatprep.subr.mxu0 0.0
    %2689 = vmatpush1.msra.mxu0 0.0
    %2690 = vmatprep.subr.mxu0 0.0
    %2691 = vmatpush1.msra.mxu0 0.0
    %2692 = vmatprep.subr.mxu0 0.0
    %2693 = vmatpush1.msra.mxu0 0.0
    %2694 = vmatprep.subr.mxu0 0.0
    %2695 = vmatpush1.msra.mxu0 0.0
    %2696 = vmatprep.subr.mxu0 0.0
    %2697 = vmatpush1.msra.mxu0 0.0
    %2698 = vmatprep.mubr.f32.mxu0 0.0
    %2699 = vmatmul.mubr.f32.gmra.mrb[0].mxu0 %v2632
    %v2700 = vpop.f32.mrb[0].mxu0
    %v2701 = vadd.f32 %v2630, %v2700
    %v2702 = vpop.f32.mrb[0].mxu0
    %2703 = vdwg.mxu0
    %v2704 = vadd.f32 %v2701, %v2374
    %v2705 = vxor.u32 %v2704, 2147483648
    %v2706 = vmul.f32 %v2705, 1.442695
    %v2707 = vpow.pop %v2706
    %v2708 = vadd.f32 %v2707, 1.0
    %v2709 = vrcp.pop %v2708
    %v2710 = vmul.f32 1.0, %v2709
    %2712 = vrot.lane.b32.xlu0 %v2374, 64
    %v2713 = vpop.permute.xlu0 %2712
    %v2715 = vmul.f32 %v2710, %v2713
    %2717 = vrot.lane.b32.xlu0 %v2715, 64
    %v2718 = vpop.permute.xlu0 %2717
    %v2720 = vadd.f32 %v2701, %v2718
    %v2721 = vtanh.pop %v2720
    %v2722 = vsub.f32 1.0, %v2710
    %2724 = vrot.lane.b32.xlu0 %v2721, 96
    %v2725 = vpop.permute.xlu0 %2724
    %v2727 = vmul.f32 %v2722, %v2725
    %v2728 = vlaneseq
    %v2729 = vshrl.u32 %v2728, 7
    %v2730 = vsub.s32 0, %v2729
    %v2731 = vrot.slane %v2201, %v2730
    %2732 = vrot.lane.b32.xlu0 %v2731, 32
    %v2733 = vpop.permute.xlu0 %2732
    %v2735 = vmul.f32 %v2710, %v2733
    %v2736 = vadd.f32 %v2727, %v2735
    %2738 = vrot.lane.b32.xlu0 %v2736, 96
    %v2739 = vpop.permute.xlu0 %2738
    %2741 = vst.msk [vmem:[#allocation2] sm:$0x1] %vm65, %v2739
    %v2743 = vlaneseq
    %v2744 = vshrl.u32 %v2743, 7
    %v2745 = vsub.s32 0, %v2744
    %v2746 = vrot.slane %v2542, %v2745
    %v2748 = vmul.f32 %v2420, %v2746
    %s2749 = scalar_lea.vmem [#allocation11], 3
    %2750 = vst.msk [vmem:[%s2749] ss:$8 sm:$0x3] %vm826, %v2748
    %2751 = vst.msk [vmem:[%s2749] ss:$8 sm:$0x0] %vm826, %v2748
    %v2752 = vld [vmem:[%s11] sm:$0xff]
    %v2753 = vld [vmem:[%s11 + $0x8] sm:$0xff]
    %v2754 = vld [vmem:[%s11 + $0x10] sm:$0xff]
    %v2755 = vld [vmem:[%s11 + $0x18] sm:$0xff]
    %v2756 = vld [vmem:[%s12] sm:$0x1]
    %v2757 = vsel %vm125, %v2739, 0
    %2759 = vmatprep.subr.mxu0 0.0
    %2760 = vmatpush1.msra.mxu0 %v2752
    %2761 = vmatprep.subr.mxu0 0.0
    %2762 = vmatpush1.msra.mxu0 %v2753
    %2763 = vmatprep.subr.mxu0 0.0
    %2764 = vmatpush1.msra.mxu0 %v2754
    %2765 = vmatprep.subr.mxu0 0.0
    %2766 = vmatpush1.msra.mxu0 %v2755
    %2767 = vmatprep.subr.mxu0 0.0
    %2768 = vmatpush1.msra.mxu0 0.0
    %2769 = vmatprep.subr.mxu0 0.0
    %2770 = vmatpush1.msra.mxu0 0.0
    %2771 = vmatprep.subr.mxu0 0.0
    %2772 = vmatpush1.msra.mxu0 0.0
    %2773 = vmatprep.subr.mxu0 0.0
    %2774 = vmatpush1.msra.mxu0 0.0
    %2775 = vmatprep.subr.mxu0 0.0
    %2776 = vmatpush1.msra.mxu0 0.0
    %2777 = vmatprep.subr.mxu0 0.0
    %2778 = vmatpush1.msra.mxu0 0.0
    %2779 = vmatprep.subr.mxu0 0.0
    %2780 = vmatpush1.msra.mxu0 0.0
    %2781 = vmatprep.subr.mxu0 0.0
    %2782 = vmatpush1.msra.mxu0 0.0
    %2783 = vmatprep.subr.mxu0 0.0
    %2784 = vmatpush1.msra.mxu0 0.0
    %2785 = vmatprep.subr.mxu0 0.0
    %2786 = vmatpush1.msra.mxu0 0.0
    %2787 = vmatprep.subr.mxu0 0.0
    %2788 = vmatpush1.msra.mxu0 0.0
    %2789 = vmatprep.subr.mxu0 0.0
    %2790 = vmatpush1.msra.mxu0 0.0
    %2791 = vmatprep.subr.mxu0 0.0
    %2792 = vmatpush1.msra.mxu0 0.0
    %2793 = vmatprep.subr.mxu0 0.0
    %2794 = vmatpush1.msra.mxu0 0.0
    %2795 = vmatprep.subr.mxu0 0.0
    %2796 = vmatpush1.msra.mxu0 0.0
    %2797 = vmatprep.subr.mxu0 0.0
    %2798 = vmatpush1.msra.mxu0 0.0
    %2799 = vmatprep.subr.mxu0 0.0
    %2800 = vmatpush1.msra.mxu0 0.0
    %2801 = vmatprep.subr.mxu0 0.0
    %2802 = vmatpush1.msra.mxu0 0.0
    %2803 = vmatprep.subr.mxu0 0.0
    %2804 = vmatpush1.msra.mxu0 0.0
    %2805 = vmatprep.subr.mxu0 0.0
    %2806 = vmatpush1.msra.mxu0 0.0
    %2807 = vmatprep.subr.mxu0 0.0
    %2808 = vmatpush1.msra.mxu0 0.0
    %2809 = vmatprep.subr.mxu0 0.0
    %2810 = vmatpush1.msra.mxu0 0.0
    %2811 = vmatprep.subr.mxu0 0.0
    %2812 = vmatpush1.msra.mxu0 0.0
    %2813 = vmatprep.subr.mxu0 0.0
    %2814 = vmatpush1.msra.mxu0 0.0
    %2815 = vmatprep.subr.mxu0 0.0
    %2816 = vmatpush1.msra.mxu0 0.0
    %2817 = vmatprep.subr.mxu0 0.0
    %2818 = vmatpush1.msra.mxu0 0.0
    %2819 = vmatprep.subr.mxu0 0.0
    %2820 = vmatpush1.msra.mxu0 0.0
    %2821 = vmatprep.subr.mxu0 0.0
    %2822 = vmatpush1.msra.mxu0 0.0
    %2823 = vmatprep.mubr.f32.mxu0 0.0
    %2824 = vmatmul.mubr.f32.gmra.mrb[0].mxu0 %v2757
    %v2825 = vpop.f32.mrb[0].mxu0
    %v2826 = vadd.f32 %v2756, %v2825
    %v2827 = vpop.f32.mrb[0].mxu0
    %2828 = vdwg.mxu0
    %v2829 = vsel %vm480, %v2826, -inf
    %2830 = vmax.xlane.f32.xlu0 %v2829
    %v2831 = vpop.xlane.xlu0 %2830
    %v2832 = vsub.f32 %v2826, %v2831
    %v2833 = vmul.f32 %v2832, 1.442695
    %v2834 = vpow.pop %v2833
    %v2835 = vsel %vm480, %v2834, 0.0
    %2836 = vadd.xlane.f32.xlu0 %v2835
    %v2837 = vpop.xlane.xlu0 %2836
    %v2838 = vlog2.pop %v2837
    %v2839 = vmul.f32 %v2838, 0.6931472
    %v2840 = vsub.f32 %v2832, %v2839
    %2841 = vst [vmem:[#allocation8 + $0x3] sm:$0x1] %v2840
    %v2842 = vld [vmem:[#allocation2] sm:$0x1]
    %s2843 = scalar_lea.vmem [#allocation4], 4
    %v2844 = vld [vmem:[%s2843] ss:$8 sm:$0x7]
    %v2845 = vld [vmem:[%s6] sm:$0xff]
    %v2846 = vld [vmem:[%s6 + $0x8] sm:$0xff]
    %v2847 = vld [vmem:[%s6 + $0x10] sm:$0xff]
    %v2848 = vld [vmem:[%s6 + $0x18] sm:$0xff]
    %v2849 = vld [vmem:[%s6 + $0x20] sm:$0xff]
    %v2850 = vld [vmem:[%s6 + $0x28] sm:$0xff]
    %v2851 = vld [vmem:[%s6 + $0x30] sm:$0xff]
    %v2852 = vld [vmem:[%s6 + $0x38] sm:$0xff]
    %v2853 = vld [vmem:[%s6 + $0x40] sm:$0xff]
    %v2854 = vld [vmem:[%s6 + $0x48] sm:$0xff]
    %v2855 = vld [vmem:[%s6 + $0x50] sm:$0xff]
    %v2856 = vld [vmem:[%s6 + $0x58] sm:$0xff]
    %v2857 = vld [vmem:[%s7] sm:$0x7]
    %v2859 = vlaneseq
    %v2860 = vshrl.u32 %v2859, 7
    %v2861 = vsub.s32 0, %v2860
    %v2862 = vrot.slane %v2857, %v2861
    %v2863 = vlaneseq
    %v2864 = vshrl.u32 %v2863, 7
    %v2865 = vsub.s32 1, %v2864
    %v2866 = vrot.slane %v2857, %v2865
    %v2867 = vlaneseq
    %v2868 = vshrl.u32 %v2867, 7
    %v2869 = vsub.s32 2, %v2868
    %v2870 = vrot.slane %v2857, %v2869
    %v2875 = vsel %vm125, %v2842, 0
    %2877 = vmatprep.subr.mxu0 %v2846
    %2878 = vmatpush1.msra.mxu0 %v2845
    %2879 = vmatprep.subr.mxu0 %v2849
    %2880 = vmatpush1.msra.mxu0 %v2848
    %2881 = vmatprep.subr.mxu0 %v2852
    %2882 = vmatpush1.msra.mxu0 %v2851
    %2883 = vmatprep.subr.mxu0 %v2855
    %2884 = vmatpush1.msra.mxu0 %v2854
    %2885 = vmatprep.subr.mxu0 0.0
    %2886 = vmatpush1.msra.mxu0 0.0
    %2887 = vmatprep.subr.mxu0 0.0
    %2888 = vmatpush1.msra.mxu0 0.0
    %2889 = vmatprep.subr.mxu0 0.0
    %2890 = vmatpush1.msra.mxu0 0.0
    %2891 = vmatprep.subr.mxu0 0.0
    %2892 = vmatpush1.msra.mxu0 0.0
    %2893 = vmatprep.subr.mxu0 0.0
    %2894 = vmatpush1.msra.mxu0 0.0
    %2895 = vmatprep.subr.mxu0 0.0
    %2896 = vmatpush1.msra.mxu0 0.0
    %2897 = vmatprep.subr.mxu0 0.0
    %2898 = vmatpush1.msra.mxu0 0.0
    %2899 = vmatprep.subr.mxu0 0.0
    %2900 = vmatpush1.msra.mxu0 0.0
    %2901 = vmatprep.subr.mxu0 0.0
    %2902 = vmatpush1.msra.mxu0 0.0
    %2903 = vmatprep.subr.mxu0 0.0
    %2904 = vmatpush1.msra.mxu0 0.0
    %2905 = vmatprep.subr.mxu0 0.0
    %2906 = vmatpush1.msra.mxu0 0.0
    %2907 = vmatprep.subr.mxu0 0.0
    %2908 = vmatpush1.msra.mxu0 0.0
    %2909 = vmatprep.subr.mxu0 0.0
    %2910 = vmatpush1.msra.mxu0 0.0
    %2911 = vmatprep.subr.mxu0 0.0
    %2912 = vmatpush1.msra.mxu0 0.0
    %2913 = vmatprep.subr.mxu0 0.0
    %2914 = vmatpush1.msra.mxu0 0.0
    %2915 = vmatprep.subr.mxu0 0.0
    %2916 = vmatpush1.msra.mxu0 0.0
    %2917 = vmatprep.subr.mxu0 0.0
    %2918 = vmatpush1.msra.mxu0 0.0
    %2919 = vmatprep.subr.mxu0 0.0
    %2920 = vmatpush1.msra.mxu0 0.0
    %2921 = vmatprep.subr.mxu0 0.0
    %2922 = vmatpush1.msra.mxu0 0.0
    %2923 = vmatprep.subr.mxu0 0.0
    %2924 = vmatpush1.msra.mxu0 0.0
    %2925 = vmatprep.subr.mxu0 0.0
    %2926 = vmatpush1.msra.mxu0 0.0
    %2927 = vmatprep.subr.mxu0 0.0
    %2928 = vmatpush1.msra.mxu0 0.0
    %2929 = vmatprep.subr.mxu0 0.0
    %2930 = vmatpush1.msra.mxu0 0.0
    %2931 = vmatprep.subr.mxu0 0.0
    %2932 = vmatpush1.msra.mxu0 0.0
    %2933 = vmatprep.subr.mxu0 0.0
    %2934 = vmatpush1.msra.mxu0 0.0
    %2935 = vmatprep.subr.mxu0 0.0
    %2936 = vmatpush1.msra.mxu0 0.0
    %2937 = vmatprep.subr.mxu0 0.0
    %2938 = vmatpush1.msra.mxu0 0.0
    %2939 = vmatprep.subr.mxu0 0.0
    %2940 = vmatpush1.msra.mxu0 0.0
    %2941 = vmatprep.mubr.f32.mxu0 0.0
    %2942 = vmatmul.mubr.f32.gmra.mrb[0].mxu0 %v2875
    %v2943 = vpop.f32.mrb[0].mxu0
    %v2944 = vadd.f32 %v2862, %v2943
    %v2945 = vpop.f32.mrb[0].mxu0
    %v2946 = vadd.f32 %v2866, %v2945
    %2947 = vdwg.mxu0
    %2948 = vmatprep.subr.mxu0 0.0
    %2949 = vmatpush1.msra.mxu0 %v2847
    %2950 = vmatprep.subr.mxu0 0.0
    %2951 = vmatpush1.msra.mxu0 %v2850
    %2952 = vmatprep.subr.mxu0 0.0
    %2953 = vmatpush1.msra.mxu0 %v2853
    %2954 = vmatprep.subr.mxu0 0.0
    %2955 = vmatpush1.msra.mxu0 %v2856
    %2956 = vmatprep.subr.mxu0 0.0
    %2957 = vmatpush1.msra.mxu0 0.0
    %2958 = vmatprep.subr.mxu0 0.0
    %2959 = vmatpush1.msra.mxu0 0.0
    %2960 = vmatprep.subr.mxu0 0.0
    %2961 = vmatpush1.msra.mxu0 0.0
    %2962 = vmatprep.subr.mxu0 0.0
    %2963 = vmatpush1.msra.mxu0 0.0
    %2964 = vmatprep.subr.mxu0 0.0
    %2965 = vmatpush1.msra.mxu0 0.0
    %2966 = vmatprep.subr.mxu0 0.0
    %2967 = vmatpush1.msra.mxu0 0.0
    %2968 = vmatprep.subr.mxu0 0.0
    %2969 = vmatpush1.msra.mxu0 0.0
    %2970 = vmatprep.subr.mxu0 0.0
    %2971 = vmatpush1.msra.mxu0 0.0
    %2972 = vmatprep.subr.mxu0 0.0
    %2973 = vmatpush1.msra.mxu0 0.0
    %2974 = vmatprep.subr.mxu0 0.0
    %2975 = vmatpush1.msra.mxu0 0.0
    %2976 = vmatprep.subr.mxu0 0.0
    %2977 = vmatpush1.msra.mxu0 0.0
    %2978 = vmatprep.subr.mxu0 0.0
    %2979 = vmatpush1.msra.mxu0 0.0
    %2980 = vmatprep.subr.mxu0 0.0
    %2981 = vmatpush1.msra.mxu0 0.0
    %2982 = vmatprep.subr.mxu0 0.0
    %2983 = vmatpush1.msra.mxu0 0.0
    %2984 = vmatprep.subr.mxu0 0.0
    %2985 = vmatpush1.msra.mxu0 0.0
    %2986 = vmatprep.subr.mxu0 0.0
    %2987 = vmatpush1.msra.mxu0 0.0
    %2988 = vmatprep.subr.mxu0 0.0
    %2989 = vmatpush1.msra.mxu0 0.0
    %2990 = vmatprep.subr.mxu0 0.0
    %2991 = vmatpush1.msra.mxu0 0.0
    %2992 = vmatprep.subr.mxu0 0.0
    %2993 = vmatpush1.msra.mxu0 0.0
    %2994 = vmatprep.subr.mxu0 0.0
    %2995 = vmatpush1.msra.mxu0 0.0
    %2996 = vmatprep.subr.mxu0 0.0
    %2997 = vmatpush1.msra.mxu0 0.0
    %2998 = vmatprep.subr.mxu0 0.0
    %2999 = vmatpush1.msra.mxu0 0.0
    %3000 = vmatprep.subr.mxu0 0.0
    %3001 = vmatpush1.msra.mxu0 0.0
    %3002 = vmatprep.subr.mxu0 0.0
    %3003 = vmatpush1.msra.mxu0 0.0
    %3004 = vmatprep.subr.mxu0 0.0
    %3005 = vmatpush1.msra.mxu0 0.0
    %3006 = vmatprep.subr.mxu0 0.0
    %3007 = vmatpush1.msra.mxu0 0.0
    %3008 = vmatprep.subr.mxu0 0.0
    %3009 = vmatpush1.msra.mxu0 0.0
    %3010 = vmatprep.subr.mxu0 0.0
    %3011 = vmatpush1.msra.mxu0 0.0
    %3012 = vmatprep.mubr.f32.mxu0 0.0
    %3013 = vmatmul.mubr.f32.gmra.mrb[0].mxu0 %v2875
    %v3014 = vpop.f32.mrb[0].mxu0
    %v3015 = vadd.f32 %v2870, %v3014
    %v3016 = vpop.f32.mrb[0].mxu0
    %3017 = vdwg.mxu0
    %v3020 = vcombine.low %v2944, %v2946
    %v3022 = vunpack.c.l.s4 1966171168
    %v3023 = vunpack.c.0.s8 %v3022
    %v3024 = vlaneseq
    %v3025 = vshrl.u32 %v3024, 7
    %v3026 = vsub.s32 %v3023, %v3025
    %v3027 = vrot.slane %v3020, %v3026
    %v3029 = vunpack.c.l.s4 1966171168
    %v3030 = vunpack.c.0.s8 %v3029
    %v3031 = vlaneseq
    %v3032 = vshrl.u32 %v3031, 7
    %v3033 = vsub.s32 %v3030, %v3032
    %v3034 = vrot.slane %v3027, %v3033
    %v3036 = vadd.f32 %v2844, %v3034
    %v3038 = vlaneseq
    %v3039 = vshrl.u32 %v3038, 7
    %v3040 = vsub.s32 0, %v3039
    %v3041 = vrot.slane %v3036, %v3040
    %v3042 = vlaneseq
    %v3043 = vshrl.u32 %v3042, 7
    %v3044 = vsub.s32 1, %v3043
    %v3045 = vrot.slane %v3036, %v3044
    %v3048 = vsel %vm480, %v3041, -inf
    %v3049 = vsel %vm480, %v3045, -inf
    %v3050 = vmax.f32 %v3048, %v3049
    %3051 = vmax.xlane.f32.xlu0 %v3050
    %v3052 = vpop.xlane.xlu0 %3051
    %v3054 = vlaneseq
    %v3055 = vshrl.u32 %v3054, 7
    %v3056 = vsub.s32 0, %v3055
    %v3057 = vrot.slane %v3052, %v3056
    %v3059 = vsub.f32 %v3036, %v3057
    %v3060 = vmul.f32 %v3059, 1.442695
    %v3061 = vpow.pop %v3060
    %v3063 = vlaneseq
    %v3064 = vshrl.u32 %v3063, 7
    %v3065 = vsub.s32 0, %v3064
    %v3066 = vrot.slane %v3061, %v3065
    %v3067 = vlaneseq
    %v3068 = vshrl.u32 %v3067, 7
    %v3069 = vsub.s32 1, %v3068
    %v3070 = vrot.slane %v3061, %v3069
    %v3073 = vsel %vm480, %v3066, 0.0
    %v3074 = vsel %vm480, %v3070, 0.0
    %v3075 = vadd.f32 %v3073, %v3074
    %3076 = vadd.xlane.f32.xlu0 %v3075
    %v3077 = vpop.xlane.xlu0 %3076
    %v3078 = vld [vmem:[%s3] sm:$0xff]
    %v3079 = vld [vmem:[%s3 + $0x8] sm:$0xff]
    %v3080 = vld [vmem:[%s3 + $0x10] sm:$0xff]
    %v3081 = vld [vmem:[%s3 + $0x18] sm:$0xff]
    %v3082 = vld [vmem:[%s3 + $0x20] sm:$0xff]
    %v3083 = vld [vmem:[%s3 + $0x28] sm:$0xff]
    %v3084 = vld [vmem:[%s3 + $0x30] sm:$0xff]
    %v3085 = vld [vmem:[%s3 + $0x38] sm:$0xff]
    %v3086 = vld [vmem:[%s3 + $0x40] sm:$0xff]
    %v3087 = vld [vmem:[%s3 + $0x48] sm:$0xff]
    %v3088 = vld [vmem:[%s3 + $0x50] sm:$0xff]
    %v3089 = vld [vmem:[%s3 + $0x58] sm:$0xff]
    %v3090 = vld [vmem:[%s3 + $0x60] sm:$0xff]
    %v3091 = vld [vmem:[%s3 + $0x68] sm:$0xff]
    %v3092 = vld [vmem:[%s3 + $0x70] sm:$0xff]
    %v3093 = vld [vmem:[%s3 + $0x78] sm:$0xff]
    %v3094 = vld [vmem:[%s3 + $0x80] sm:$0xff]
    %v3095 = vld [vmem:[%s3 + $0x88] sm:$0xff]
    %v3096 = vld [vmem:[%s3 + $0x90] sm:$0xff]
    %v3097 = vld [vmem:[%s3 + $0x98] sm:$0xff]
    %v3098 = vld [vmem:[%s3 + $0xa0] sm:$0xff]
    %v3099 = vld [vmem:[%s3 + $0xa8] sm:$0xff]
    %v3100 = vld [vmem:[%s3 + $0xb0] sm:$0xff]
    %v3101 = vld [vmem:[%s3 + $0xb8] sm:$0xff]
    %v3102 = vld [vmem:[%s3 + $0xc0] sm:$0xff]
    %v3103 = vld [vmem:[%s3 + $0xc8] sm:$0xff]
    %v3104 = vld [vmem:[%s3 + $0xd0] sm:$0xff]
    %v3105 = vld [vmem:[%s3 + $0xd8] sm:$0xff]
    %v3106 = vld [vmem:[%s3 + $0xe0] sm:$0xff]
    %v3107 = vld [vmem:[%s3 + $0xe8] sm:$0xff]
    %v3108 = vld [vmem:[%s3 + $0xf0] sm:$0xff]
    %v3109 = vld [vmem:[%s3 + $0xf8] sm:$0xff]
    %3110 = vmatprep.subr.mxu0 0.0
    %3111 = vmatpush1.msra.mxu0 %v3078
    %3112 = vmatprep.subr.mxu0 0.0
    %3113 = vmatpush1.msra.mxu0 %v3079
    %3114 = vmatprep.subr.mxu0 0.0
    %3115 = vmatpush1.msra.mxu0 %v3080
    %3116 = vmatprep.subr.mxu0 0.0
    %3117 = vmatpush1.msra.mxu0 %v3081
    %3118 = vmatprep.subr.mxu0 0.0
    %3119 = vmatpush1.msra.mxu0 %v3082
    %3120 = vmatprep.subr.mxu0 0.0
    %3121 = vmatpush1.msra.mxu0 %v3083
    %3122 = vmatprep.subr.mxu0 0.0
    %3123 = vmatpush1.msra.mxu0 %v3084
    %3124 = vmatprep.subr.mxu0 0.0
    %3125 = vmatpush1.msra.mxu0 %v3085
    %3126 = vmatprep.subr.mxu0 0.0
    %3127 = vmatpush1.msra.mxu0 %v3086
    %3128 = vmatprep.subr.mxu0 0.0
    %3129 = vmatpush1.msra.mxu0 %v3087
    %3130 = vmatprep.subr.mxu0 0.0
    %3131 = vmatpush1.msra.mxu0 %v3088
    %3132 = vmatprep.subr.mxu0 0.0
    %3133 = vmatpush1.msra.mxu0 %v3089
    %3134 = vmatprep.subr.mxu0 0.0
    %3135 = vmatpush1.msra.mxu0 %v3090
    %3136 = vmatprep.subr.mxu0 0.0
    %3137 = vmatpush1.msra.mxu0 %v3091
    %3138 = vmatprep.subr.mxu0 0.0
    %3139 = vmatpush1.msra.mxu0 %v3092
    %3140 = vmatprep.subr.mxu0 0.0
    %3141 = vmatpush1.msra.mxu0 %v3093
    %3142 = vmatprep.subr.mxu0 0.0
    %3143 = vmatpush1.msra.mxu0 %v3094
    %3144 = vmatprep.subr.mxu0 0.0
    %3145 = vmatpush1.msra.mxu0 %v3095
    %3146 = vmatprep.subr.mxu0 0.0
    %3147 = vmatpush1.msra.mxu0 %v3096
    %3148 = vmatprep.subr.mxu0 0.0
    %3149 = vmatpush1.msra.mxu0 %v3097
    %3150 = vmatprep.subr.mxu0 0.0
    %3151 = vmatpush1.msra.mxu0 %v3098
    %3152 = vmatprep.subr.mxu0 0.0
    %3153 = vmatpush1.msra.mxu0 %v3099
    %3154 = vmatprep.subr.mxu0 0.0
    %3155 = vmatpush1.msra.mxu0 %v3100
    %3156 = vmatprep.subr.mxu0 0.0
    %3157 = vmatpush1.msra.mxu0 %v3101
    %3158 = vmatprep.subr.mxu0 0.0
    %3159 = vmatpush1.msra.mxu0 %v3102
    %3160 = vmatprep.subr.mxu0 0.0
    %3161 = vmatpush1.msra.mxu0 %v3103
    %3162 = vmatprep.subr.mxu0 0.0
    %3163 = vmatpush1.msra.mxu0 %v3104
    %3164 = vmatprep.subr.mxu0 0.0
    %3165 = vmatpush1.msra.mxu0 %v3105
    %3166 = vmatprep.subr.mxu0 0.0
    %3167 = vmatpush1.msra.mxu0 %v3106
    %3168 = vmatprep.subr.mxu0 0.0
    %3169 = vmatpush1.msra.mxu0 %v3107
    %3170 = vmatprep.subr.mxu0 0.0
    %3171 = vmatpush1.msra.mxu0 %v3108
    %3172 = vmatprep.subr.mxu0 0.0
    %3173 = vmatpush1.msra.mxu0 %v3109
    %3174 = vmatprep.mubr.f32.mxu0 %v3070
    %3175 = vmatmul.mubr.f32.gmra.mrb[0].mxu0 %v3066
    %v3176 = vpop.f32.mrb[0].mxu0
    %v3177 = vadd.f32 0.0, %v3176
    %v3178 = vpop.f32.mrb[0].mxu0
    %3179 = vdwg.mxu0
    %v3180 = vrcp.pop %v3077
    %v3181 = vmul.f32 %v3077, %v3180
    %v3182 = vsub.f32 2.0, %v3181
    %v3183 = vmul.f32 %v3180, %v3182
    %v3184 = vmul.f32 %v3177, %v3183
    %v3185 = vld [vmem:[%s8] sm:$0xff]
    %v3186 = vld [vmem:[%s8 + $0x8] sm:$0xff]
    %v3187 = vld [vmem:[%s8 + $0x10] sm:$0xff]
    %v3188 = vld [vmem:[%s8 + $0x18] sm:$0xff]
    %v3190 = vsel %vm125, %v3184, 0
    %3192 = vmatprep.subr.mxu0 0.0
    %3193 = vmatpush1.msra.mxu0 %v3185
    %3194 = vmatprep.subr.mxu0 0.0
    %3195 = vmatpush1.msra.mxu0 %v3186
    %3196 = vmatprep.subr.mxu0 0.0
    %3197 = vmatpush1.msra.mxu0 %v3187
    %3198 = vmatprep.subr.mxu0 0.0
    %3199 = vmatpush1.msra.mxu0 %v3188
    %3200 = vmatprep.subr.mxu0 0.0
    %3201 = vmatpush1.msra.mxu0 0.0
    %3202 = vmatprep.subr.mxu0 0.0
    %3203 = vmatpush1.msra.mxu0 0.0
    %3204 = vmatprep.subr.mxu0 0.0
    %3205 = vmatpush1.msra.mxu0 0.0
    %3206 = vmatprep.subr.mxu0 0.0
    %3207 = vmatpush1.msra.mxu0 0.0
    %3208 = vmatprep.subr.mxu0 0.0
    %3209 = vmatpush1.msra.mxu0 0.0
    %3210 = vmatprep.subr.mxu0 0.0
    %3211 = vmatpush1.msra.mxu0 0.0
    %3212 = vmatprep.subr.mxu0 0.0
    %3213 = vmatpush1.msra.mxu0 0.0
    %3214 = vmatprep.subr.mxu0 0.0
    %3215 = vmatpush1.msra.mxu0 0.0
    %3216 = vmatprep.subr.mxu0 0.0
    %3217 = vmatpush1.msra.mxu0 0.0
    %3218 = vmatprep.subr.mxu0 0.0
    %3219 = vmatpush1.msra.mxu0 0.0
    %3220 = vmatprep.subr.mxu0 0.0
    %3221 = vmatpush1.msra.mxu0 0.0
    %3222 = vmatprep.subr.mxu0 0.0
    %3223 = vmatpush1.msra.mxu0 0.0
    %3224 = vmatprep.subr.mxu0 0.0
    %3225 = vmatpush1.msra.mxu0 0.0
    %3226 = vmatprep.subr.mxu0 0.0
    %3227 = vmatpush1.msra.mxu0 0.0
    %3228 = vmatprep.subr.mxu0 0.0
    %3229 = vmatpush1.msra.mxu0 0.0
    %3230 = vmatprep.subr.mxu0 0.0
    %3231 = vmatpush1.msra.mxu0 0.0
    %3232 = vmatprep.subr.mxu0 0.0
    %3233 = vmatpush1.msra.mxu0 0.0
    %3234 = vmatprep.subr.mxu0 0.0
    %3235 = vmatpush1.msra.mxu0 0.0
    %3236 = vmatprep.subr.mxu0 0.0
    %3237 = vmatpush1.msra.mxu0 0.0
    %3238 = vmatprep.subr.mxu0 0.0
    %3239 = vmatpush1.msra.mxu0 0.0
    %3240 = vmatprep.subr.mxu0 0.0
    %3241 = vmatpush1.msra.mxu0 0.0
    %3242 = vmatprep.subr.mxu0 0.0
    %3243 = vmatpush1.msra.mxu0 0.0
    %3244 = vmatprep.subr.mxu0 0.0
    %3245 = vmatpush1.msra.mxu0 0.0
    %3246 = vmatprep.subr.mxu0 0.0
    %3247 = vmatpush1.msra.mxu0 0.0
    %3248 = vmatprep.subr.mxu0 0.0
    %3249 = vmatpush1.msra.mxu0 0.0
    %3250 = vmatprep.subr.mxu0 0.0
    %3251 = vmatpush1.msra.mxu0 0.0
    %3252 = vmatprep.subr.mxu0 0.0
    %3253 = vmatpush1.msra.mxu0 0.0
    %3254 = vmatprep.subr.mxu0 0.0
    %3255 = vmatpush1.msra.mxu0 0.0
    %3256 = vmatprep.mubr.f32.mxu0 0.0
    %3257 = vmatmul.mubr.f32.gmra.mrb[0].mxu0 %v3190
    %v3258 = vpop.f32.mrb[0].mxu0
    %v3259 = vadd.f32 0.0, %v3258
    %v3260 = vpop.f32.mrb[0].mxu0
    %3261 = vdwg.mxu0
    %v3263 = vrot.slane %v2844, 2
    %v3265 = vadd.f32 %v3263, %v3259
    %v3266 = vmax.f32 %v3265, 0.0
    %v3267 = vld [vmem:[%s9] sm:$0xff]
    %v3268 = vld [vmem:[%s9 + $0x8] sm:$0xff]
    %v3269 = vld [vmem:[%s9 + $0x10] sm:$0xff]
    %v3270 = vld [vmem:[%s9 + $0x18] sm:$0xff]
    %v3271 = vld [vmem:[%s10] sm:$0x1]
    %v3273 = vsel %vm125, %v3266, 0
    %3275 = vmatprep.subr.mxu0 0.0
    %3276 = vmatpush1.msra.mxu0 %v3267
    %3277 = vmatprep.subr.mxu0 0.0
    %3278 = vmatpush1.msra.mxu0 %v3268
    %3279 = vmatprep.subr.mxu0 0.0
    %3280 = vmatpush1.msra.mxu0 %v3269
    %3281 = vmatprep.subr.mxu0 0.0
    %3282 = vmatpush1.msra.mxu0 %v3270
    %3283 = vmatprep.subr.mxu0 0.0
    %3284 = vmatpush1.msra.mxu0 0.0
    %3285 = vmatprep.subr.mxu0 0.0
    %3286 = vmatpush1.msra.mxu0 0.0
    %3287 = vmatprep.subr.mxu0 0.0
    %3288 = vmatpush1.msra.mxu0 0.0
    %3289 = vmatprep.subr.mxu0 0.0
    %3290 = vmatpush1.msra.mxu0 0.0
    %3291 = vmatprep.subr.mxu0 0.0
    %3292 = vmatpush1.msra.mxu0 0.0
    %3293 = vmatprep.subr.mxu0 0.0
    %3294 = vmatpush1.msra.mxu0 0.0
    %3295 = vmatprep.subr.mxu0 0.0
    %3296 = vmatpush1.msra.mxu0 0.0
    %3297 = vmatprep.subr.mxu0 0.0
    %3298 = vmatpush1.msra.mxu0 0.0
    %3299 = vmatprep.subr.mxu0 0.0
    %3300 = vmatpush1.msra.mxu0 0.0
    %3301 = vmatprep.subr.mxu0 0.0
    %3302 = vmatpush1.msra.mxu0 0.0
    %3303 = vmatprep.subr.mxu0 0.0
    %3304 = vmatpush1.msra.mxu0 0.0
    %3305 = vmatprep.subr.mxu0 0.0
    %3306 = vmatpush1.msra.mxu0 0.0
    %3307 = vmatprep.subr.mxu0 0.0
    %3308 = vmatpush1.msra.mxu0 0.0
    %3309 = vmatprep.subr.mxu0 0.0
    %3310 = vmatpush1.msra.mxu0 0.0
    %3311 = vmatprep.subr.mxu0 0.0
    %3312 = vmatpush1.msra.mxu0 0.0
    %3313 = vmatprep.subr.mxu0 0.0
    %3314 = vmatpush1.msra.mxu0 0.0
    %3315 = vmatprep.subr.mxu0 0.0
    %3316 = vmatpush1.msra.mxu0 0.0
    %3317 = vmatprep.subr.mxu0 0.0
    %3318 = vmatpush1.msra.mxu0 0.0
    %3319 = vmatprep.subr.mxu0 0.0
    %3320 = vmatpush1.msra.mxu0 0.0
    %3321 = vmatprep.subr.mxu0 0.0
    %3322 = vmatpush1.msra.mxu0 0.0
    %3323 = vmatprep.subr.mxu0 0.0
    %3324 = vmatpush1.msra.mxu0 0.0
    %3325 = vmatprep.subr.mxu0 0.0
    %3326 = vmatpush1.msra.mxu0 0.0
    %3327 = vmatprep.subr.mxu0 0.0
    %3328 = vmatpush1.msra.mxu0 0.0
    %3329 = vmatprep.subr.mxu0 0.0
    %3330 = vmatpush1.msra.mxu0 0.0
    %3331 = vmatprep.subr.mxu0 0.0
    %3332 = vmatpush1.msra.mxu0 0.0
    %3333 = vmatprep.subr.mxu0 0.0
    %3334 = vmatpush1.msra.mxu0 0.0
    %3335 = vmatprep.subr.mxu0 0.0
    %3336 = vmatpush1.msra.mxu0 0.0
    %3337 = vmatprep.subr.mxu0 0.0
    %3338 = vmatpush1.msra.mxu0 0.0
    %3339 = vmatprep.mubr.f32.mxu0 0.0
    %3340 = vmatmul.mubr.f32.gmra.mrb[0].mxu0 %v3273
    %v3341 = vpop.f32.mrb[0].mxu0
    %v3342 = vadd.f32 %v3271, %v3341
    %v3343 = vpop.f32.mrb[0].mxu0
    %3344 = vdwg.mxu0
    %v3345 = vadd.f32 %v3342, %v3015
    %v3346 = vxor.u32 %v3345, 2147483648
    %v3347 = vmul.f32 %v3346, 1.442695
    %v3348 = vpow.pop %v3347
    %v3349 = vadd.f32 %v3348, 1.0
    %v3350 = vrcp.pop %v3349
    %v3351 = vmul.f32 1.0, %v3350
    %3353 = vrot.lane.b32.xlu0 %v3015, 64
    %v3354 = vpop.permute.xlu0 %3353
    %v3356 = vmul.f32 %v3351, %v3354
    %3358 = vrot.lane.b32.xlu0 %v3356, 64
    %v3359 = vpop.permute.xlu0 %3358
    %v3361 = vadd.f32 %v3342, %v3359
    %v3362 = vtanh.pop %v3361
    %v3363 = vsub.f32 1.0, %v3351
    %3365 = vrot.lane.b32.xlu0 %v3362, 96
    %v3366 = vpop.permute.xlu0 %3365
    %v3368 = vmul.f32 %v3363, %v3366
    %v3369 = vlaneseq
    %v3370 = vshrl.u32 %v3369, 7
    %v3371 = vsub.s32 0, %v3370
    %v3372 = vrot.slane %v2842, %v3371
    %3373 = vrot.lane.b32.xlu0 %v3372, 32
    %v3374 = vpop.permute.xlu0 %3373
    %v3376 = vmul.f32 %v3351, %v3374
    %v3377 = vadd.f32 %v3368, %v3376
    %3379 = vrot.lane.b32.xlu0 %v3377, 96
    %v3380 = vpop.permute.xlu0 %3379
    %3382 = vst.msk [vmem:[#allocation2] sm:$0x1] %vm65, %v3380
    %v3384 = vlaneseq
    %v3385 = vshrl.u32 %v3384, 7
    %v3386 = vsub.s32 0, %v3385
    %v3387 = vrot.slane %v3183, %v3386
    %v3389 = vmul.f32 %v3061, %v3387
    %s3390 = scalar_lea.vmem [#allocation11], 4
    %3391 = vst.msk [vmem:[%s3390] ss:$8 sm:$0x3] %vm826, %v3389
    %3392 = vst.msk [vmem:[%s3390] ss:$8 sm:$0x0] %vm826, %v3389
    %v3393 = vld [vmem:[%s11] sm:$0xff]
    %v3394 = vld [vmem:[%s11 + $0x8] sm:$0xff]
    %v3395 = vld [vmem:[%s11 + $0x10] sm:$0xff]
    %v3396 = vld [vmem:[%s11 + $0x18] sm:$0xff]
    %v3397 = vld [vmem:[%s12] sm:$0x1]
    %v3398 = vsel %vm125, %v3380, 0
    %3400 = vmatprep.subr.mxu0 0.0
    %3401 = vmatpush1.msra.mxu0 %v3393
    %3402 = vmatprep.subr.mxu0 0.0
    %3403 = vmatpush1.msra.mxu0 %v3394
    %3404 = vmatprep.subr.mxu0 0.0
    %3405 = vmatpush1.msra.mxu0 %v3395
    %3406 = vmatprep.subr.mxu0 0.0
    %3407 = vmatpush1.msra.mxu0 %v3396
    %3408 = vmatprep.subr.mxu0 0.0
    %3409 = vmatpush1.msra.mxu0 0.0
    %3410 = vmatprep.subr.mxu0 0.0
    %3411 = vmatpush1.msra.mxu0 0.0
    %3412 = vmatprep.subr.mxu0 0.0
    %3413 = vmatpush1.msra.mxu0 0.0
    %3414 = vmatprep.subr.mxu0 0.0
    %3415 = vmatpush1.msra.mxu0 0.0
    %3416 = vmatprep.subr.mxu0 0.0
    %3417 = vmatpush1.msra.mxu0 0.0
    %3418 = vmatprep.subr.mxu0 0.0
    %3419 = vmatpush1.msra.mxu0 0.0
    %3420 = vmatprep.subr.mxu0 0.0
    %3421 = vmatpush1.msra.mxu0 0.0
    %3422 = vmatprep.subr.mxu0 0.0
    %3423 = vmatpush1.msra.mxu0 0.0
    %3424 = vmatprep.subr.mxu0 0.0
    %3425 = vmatpush1.msra.mxu0 0.0
    %3426 = vmatprep.subr.mxu0 0.0
    %3427 = vmatpush1.msra.mxu0 0.0
    %3428 = vmatprep.subr.mxu0 0.0
    %3429 = vmatpush1.msra.mxu0 0.0
    %3430 = vmatprep.subr.mxu0 0.0
    %3431 = vmatpush1.msra.mxu0 0.0
    %3432 = vmatprep.subr.mxu0 0.0
    %3433 = vmatpush1.msra.mxu0 0.0
    %3434 = vmatprep.subr.mxu0 0.0
    %3435 = vmatpush1.msra.mxu0 0.0
    %3436 = vmatprep.subr.mxu0 0.0
    %3437 = vmatpush1.msra.mxu0 0.0
    %3438 = vmatprep.subr.mxu0 0.0
    %3439 = vmatpush1.msra.mxu0 0.0
    %3440 = vmatprep.subr.mxu0 0.0
    %3441 = vmatpush1.msra.mxu0 0.0
    %3442 = vmatprep.subr.mxu0 0.0
    %3443 = vmatpush1.msra.mxu0 0.0
    %3444 = vmatprep.subr.mxu0 0.0
    %3445 = vmatpush1.msra.mxu0 0.0
    %3446 = vmatprep.subr.mxu0 0.0
    %3447 = vmatpush1.msra.mxu0 0.0
    %3448 = vmatprep.subr.mxu0 0.0
    %3449 = vmatpush1.msra.mxu0 0.0
    %3450 = vmatprep.subr.mxu0 0.0
    %3451 = vmatpush1.msra.mxu0 0.0
    %3452 = vmatprep.subr.mxu0 0.0
    %3453 = vmatpush1.msra.mxu0 0.0
    %3454 = vmatprep.subr.mxu0 0.0
    %3455 = vmatpush1.msra.mxu0 0.0
    %3456 = vmatprep.subr.mxu0 0.0
    %3457 = vmatpush1.msra.mxu0 0.0
    %3458 = vmatprep.subr.mxu0 0.0
    %3459 = vmatpush1.msra.mxu0 0.0
    %3460 = vmatprep.subr.mxu0 0.0
    %3461 = vmatpush1.msra.mxu0 0.0
    %3462 = vmatprep.subr.mxu0 0.0
    %3463 = vmatpush1.msra.mxu0 0.0
    %3464 = vmatprep.mubr.f32.mxu0 0.0
    %3465 = vmatmul.mubr.f32.gmra.mrb[0].mxu0 %v3398
    %v3466 = vpop.f32.mrb[0].mxu0
    %v3467 = vadd.f32 %v3397, %v3466
    %v3468 = vpop.f32.mrb[0].mxu0
    %3469 = vdwg.mxu0
    %v3470 = vsel %vm480, %v3467, -inf
    %3471 = vmax.xlane.f32.xlu0 %v3470
    %v3472 = vpop.xlane.xlu0 %3471
    %v3473 = vsub.f32 %v3467, %v3472
    %v3474 = vmul.f32 %v3473, 1.442695
    %v3475 = vpow.pop %v3474
    %v3476 = vsel %vm480, %v3475, 0.0
    %3477 = vadd.xlane.f32.xlu0 %v3476
    %v3478 = vpop.xlane.xlu0 %3477
    %v3479 = vlog2.pop %v3478
    %v3480 = vmul.f32 %v3479, 0.6931472
    %v3481 = vsub.f32 %v3473, %v3480
    %3482 = vst [vmem:[#allocation8 + $0x4] sm:$0x1] %v3481
    %v3483 = vld [vmem:[#allocation2] sm:$0x1]
    %s3484 = scalar_lea.vmem [#allocation4], 5
    %v3485 = vld [vmem:[%s3484] ss:$8 sm:$0x7]
    %v3486 = vld [vmem:[%s6] sm:$0xff]
    %v3487 = vld [vmem:[%s6 + $0x8] sm:$0xff]
    %v3488 = vld [vmem:[%s6 + $0x10] sm:$0xff]
    %v3489 = vld [vmem:[%s6 + $0x18] sm:$0xff]
    %v3490 = vld [vmem:[%s6 + $0x20] sm:$0xff]
    %v3491 = vld [vmem:[%s6 + $0x28] sm:$0xff]
    %v3492 = vld [vmem:[%s6 + $0x30] sm:$0xff]
    %v3493 = vld [vmem:[%s6 + $0x38] sm:$0xff]
    %v3494 = vld [vmem:[%s6 + $0x40] sm:$0xff]
    %v3495 = vld [vmem:[%s6 + $0x48] sm:$0xff]
    %v3496 = vld [vmem:[%s6 + $0x50] sm:$0xff]
    %v3497 = vld [vmem:[%s6 + $0x58] sm:$0xff]
    %v3498 = vld [vmem:[%s7] sm:$0x7]
    %v3500 = vlaneseq
    %v3501 = vshrl.u32 %v3500, 7
    %v3502 = vsub.s32 0, %v3501
    %v3503 = vrot.slane %v3498, %v3502
    %v3504 = vlaneseq
    %v3505 = vshrl.u32 %v3504, 7
    %v3506 = vsub.s32 1, %v3505
    %v3507 = vrot.slane %v3498, %v3506
    %v3508 = vlaneseq
    %v3509 = vshrl.u32 %v3508, 7
    %v3510 = vsub.s32 2, %v3509
    %v3511 = vrot.slane %v3498, %v3510
    %v3516 = vsel %vm125, %v3483, 0
    %3518 = vmatprep.subr.mxu0 %v3487
    %3519 = vmatpush1.msra.mxu0 %v3486
    %3520 = vmatprep.subr.mxu0 %v3490
    %3521 = vmatpush1.msra.mxu0 %v3489
    %3522 = vmatprep.subr.mxu0 %v3493
    %3523 = vmatpush1.msra.mxu0 %v3492
    %3524 = vmatprep.subr.mxu0 %v3496
    %3525 = vmatpush1.msra.mxu0 %v3495
    %3526 = vmatprep.subr.mxu0 0.0
    %3527 = vmatpush1.msra.mxu0 0.0
    %3528 = vmatprep.subr.mxu0 0.0
    %3529 = vmatpush1.msra.mxu0 0.0
    %3530 = vmatprep.subr.mxu0 0.0
    %3531 = vmatpush1.msra.mxu0 0.0
    %3532 = vmatprep.subr.mxu0 0.0
    %3533 = vmatpush1.msra.mxu0 0.0
    %3534 = vmatprep.subr.mxu0 0.0
    %3535 = vmatpush1.msra.mxu0 0.0
    %3536 = vmatprep.subr.mxu0 0.0
    %3537 = vmatpush1.msra.mxu0 0.0
    %3538 = vmatprep.subr.mxu0 0.0
    %3539 = vmatpush1.msra.mxu0 0.0
    %3540 = vmatprep.subr.mxu0 0.0
    %3541 = vmatpush1.msra.mxu0 0.0
    %3542 = vmatprep.subr.mxu0 0.0
    %3543 = vmatpush1.msra.mxu0 0.0
    %3544 = vmatprep.subr.mxu0 0.0
    %3545 = vmatpush1.msra.mxu0 0.0
    %3546 = vmatprep.subr.mxu0 0.0
    %3547 = vmatpush1.msra.mxu0 0.0
    %3548 = vmatprep.subr.mxu0 0.0
    %3549 = vmatpush1.msra.mxu0 0.0
    %3550 = vmatprep.subr.mxu0 0.0
    %3551 = vmatpush1.msra.mxu0 0.0
    %3552 = vmatprep.subr.mxu0 0.0
    %3553 = vmatpush1.msra.mxu0 0.0
    %3554 = vmatprep.subr.mxu0 0.0
    %3555 = vmatpush1.msra.mxu0 0.0
    %3556 = vmatprep.subr.mxu0 0.0
    %3557 = vmatpush1.msra.mxu0 0.0
    %3558 = vmatprep.subr.mxu0 0.0
    %3559 = vmatpush1.msra.mxu0 0.0
    %3560 = vmatprep.subr.mxu0 0.0
    %3561 = vmatpush1.msra.mxu0 0.0
    %3562 = vmatprep.subr.mxu0 0.0
    %3563 = vmatpush1.msra.mxu0 0.0
    %3564 = vmatprep.subr.mxu0 0.0
    %3565 = vmatpush1.msra.mxu0 0.0
    %3566 = vmatprep.subr.mxu0 0.0
    %3567 = vmatpush1.msra.mxu0 0.0
    %3568 = vmatprep.subr.mxu0 0.0
    %3569 = vmatpush1.msra.mxu0 0.0
    %3570 = vmatprep.subr.mxu0 0.0
    %3571 = vmatpush1.msra.mxu0 0.0
    %3572 = vmatprep.subr.mxu0 0.0
    %3573 = vmatpush1.msra.mxu0 0.0
    %3574 = vmatprep.subr.mxu0 0.0
    %3575 = vmatpush1.msra.mxu0 0.0
    %3576 = vmatprep.subr.mxu0 0.0
    %3577 = vmatpush1.msra.mxu0 0.0
    %3578 = vmatprep.subr.mxu0 0.0
    %3579 = vmatpush1.msra.mxu0 0.0
    %3580 = vmatprep.subr.mxu0 0.0
    %3581 = vmatpush1.msra.mxu0 0.0
    %3582 = vmatprep.mubr.f32.mxu0 0.0
    %3583 = vmatmul.mubr.f32.gmra.mrb[0].mxu0 %v3516
    %v3584 = vpop.f32.mrb[0].mxu0
    %v3585 = vadd.f32 %v3503, %v3584
    %v3586 = vpop.f32.mrb[0].mxu0
    %v3587 = vadd.f32 %v3507, %v3586
    %3588 = vdwg.mxu0
    %3589 = vmatprep.subr.mxu0 0.0
    %3590 = vmatpush1.msra.mxu0 %v3488
    %3591 = vmatprep.subr.mxu0 0.0
    %3592 = vmatpush1.msra.mxu0 %v3491
    %3593 = vmatprep.subr.mxu0 0.0
    %3594 = vmatpush1.msra.mxu0 %v3494
    %3595 = vmatprep.subr.mxu0 0.0
    %3596 = vmatpush1.msra.mxu0 %v3497
    %3597 = vmatprep.subr.mxu0 0.0
    %3598 = vmatpush1.msra.mxu0 0.0
    %3599 = vmatprep.subr.mxu0 0.0
    %3600 = vmatpush1.msra.mxu0 0.0
    %3601 = vmatprep.subr.mxu0 0.0
    %3602 = vmatpush1.msra.mxu0 0.0
    %3603 = vmatprep.subr.mxu0 0.0
    %3604 = vmatpush1.msra.mxu0 0.0
    %3605 = vmatprep.subr.mxu0 0.0
    %3606 = vmatpush1.msra.mxu0 0.0
    %3607 = vmatprep.subr.mxu0 0.0
    %3608 = vmatpush1.msra.mxu0 0.0
    %3609 = vmatprep.subr.mxu0 0.0
    %3610 = vmatpush1.msra.mxu0 0.0
    %3611 = vmatprep.subr.mxu0 0.0
    %3612 = vmatpush1.msra.mxu0 0.0
    %3613 = vmatprep.subr.mxu0 0.0
    %3614 = vmatpush1.msra.mxu0 0.0
    %3615 = vmatprep.subr.mxu0 0.0
    %3616 = vmatpush1.msra.mxu0 0.0
    %3617 = vmatprep.subr.mxu0 0.0
    %3618 = vmatpush1.msra.mxu0 0.0
    %3619 = vmatprep.subr.mxu0 0.0
    %3620 = vmatpush1.msra.mxu0 0.0
    %3621 = vmatprep.subr.mxu0 0.0
    %3622 = vmatpush1.msra.mxu0 0.0
    %3623 = vmatprep.subr.mxu0 0.0
    %3624 = vmatpush1.msra.mxu0 0.0
    %3625 = vmatprep.subr.mxu0 0.0
    %3626 = vmatpush1.msra.mxu0 0.0
    %3627 = vmatprep.subr.mxu0 0.0
    %3628 = vmatpush1.msra.mxu0 0.0
    %3629 = vmatprep.subr.mxu0 0.0
    %3630 = vmatpush1.msra.mxu0 0.0
    %3631 = vmatprep.subr.mxu0 0.0
    %3632 = vmatpush1.msra.mxu0 0.0
    %3633 = vmatprep.subr.mxu0 0.0
    %3634 = vmatpush1.msra.mxu0 0.0
    %3635 = vmatprep.subr.mxu0 0.0
    %3636 = vmatpush1.msra.mxu0 0.0
    %3637 = vmatprep.subr.mxu0 0.0
    %3638 = vmatpush1.msra.mxu0 0.0
    %3639 = vmatprep.subr.mxu0 0.0
    %3640 = vmatpush1.msra.mxu0 0.0
    %3641 = vmatprep.subr.mxu0 0.0
    %3642 = vmatpush1.msra.mxu0 0.0
    %3643 = vmatprep.subr.mxu0 0.0
    %3644 = vmatpush1.msra.mxu0 0.0
    %3645 = vmatprep.subr.mxu0 0.0
    %3646 = vmatpush1.msra.mxu0 0.0
    %3647 = vmatprep.subr.mxu0 0.0
    %3648 = vmatpush1.msra.mxu0 0.0
    %3649 = vmatprep.subr.mxu0 0.0
    %3650 = vmatpush1.msra.mxu0 0.0
    %3651 = vmatprep.subr.mxu0 0.0
    %3652 = vmatpush1.msra.mxu0 0.0
    %3653 = vmatprep.mubr.f32.mxu0 0.0
    %3654 = vmatmul.mubr.f32.gmra.mrb[0].mxu0 %v3516
    %v3655 = vpop.f32.mrb[0].mxu0
    %v3656 = vadd.f32 %v3511, %v3655
    %v3657 = vpop.f32.mrb[0].mxu0
    %3658 = vdwg.mxu0
    %v3661 = vcombine.low %v3585, %v3587
    %v3663 = vunpack.c.l.s4 1966171168
    %v3664 = vunpack.c.0.s8 %v3663
    %v3665 = vlaneseq
    %v3666 = vshrl.u32 %v3665, 7
    %v3667 = vsub.s32 %v3664, %v3666
    %v3668 = vrot.slane %v3661, %v3667
    %v3670 = vunpack.c.l.s4 1966171168
    %v3671 = vunpack.c.0.s8 %v3670
    %v3672 = vlaneseq
    %v3673 = vshrl.u32 %v3672, 7
    %v3674 = vsub.s32 %v3671, %v3673
    %v3675 = vrot.slane %v3668, %v3674
    %v3677 = vadd.f32 %v3485, %v3675
    %v3679 = vlaneseq
    %v3680 = vshrl.u32 %v3679, 7
    %v3681 = vsub.s32 0, %v3680
    %v3682 = vrot.slane %v3677, %v3681
    %v3683 = vlaneseq
    %v3684 = vshrl.u32 %v3683, 7
    %v3685 = vsub.s32 1, %v3684
    %v3686 = vrot.slane %v3677, %v3685
    %v3689 = vsel %vm480, %v3682, -inf
    %v3690 = vsel %vm480, %v3686, -inf
    %v3691 = vmax.f32 %v3689, %v3690
    %3692 = vmax.xlane.f32.xlu0 %v3691
    %v3693 = vpop.xlane.xlu0 %3692
    %v3695 = vlaneseq
    %v3696 = vshrl.u32 %v3695, 7
    %v3697 = vsub.s32 0, %v3696
    %v3698 = vrot.slane %v3693, %v3697
    %v3700 = vsub.f32 %v3677, %v3698
    %v3701 = vmul.f32 %v3700, 1.442695
    %v3702 = vpow.pop %v3701
    %v3704 = vlaneseq
    %v3705 = vshrl.u32 %v3704, 7
    %v3706 = vsub.s32 0, %v3705
    %v3707 = vrot.slane %v3702, %v3706
    %v3708 = vlaneseq
    %v3709 = vshrl.u32 %v3708, 7
    %v3710 = vsub.s32 1, %v3709
    %v3711 = vrot.slane %v3702, %v3710
    %v3714 = vsel %vm480, %v3707, 0.0
    %v3715 = vsel %vm480, %v3711, 0.0
    %v3716 = vadd.f32 %v3714, %v3715
    %3717 = vadd.xlane.f32.xlu0 %v3716
    %v3718 = vpop.xlane.xlu0 %3717
    %v3719 = vld [vmem:[%s3] sm:$0xff]
    %v3720 = vld [vmem:[%s3 + $0x8] sm:$0xff]
    %v3721 = vld [vmem:[%s3 + $0x10] sm:$0xff]
    %v3722 = vld [vmem:[%s3 + $0x18] sm:$0xff]
    %v3723 = vld [vmem:[%s3 + $0x20] sm:$0xff]
    %v3724 = vld [vmem:[%s3 + $0x28] sm:$0xff]
    %v3725 = vld [vmem:[%s3 + $0x30] sm:$0xff]
    %v3726 = vld [vmem:[%s3 + $0x38] sm:$0xff]
    %v3727 = vld [vmem:[%s3 + $0x40] sm:$0xff]
    %v3728 = vld [vmem:[%s3 + $0x48] sm:$0xff]
    %v3729 = vld [vmem:[%s3 + $0x50] sm:$0xff]
    %v3730 = vld [vmem:[%s3 + $0x58] sm:$0xff]
    %v3731 = vld [vmem:[%s3 + $0x60] sm:$0xff]
    %v3732 = vld [vmem:[%s3 + $0x68] sm:$0xff]
    %v3733 = vld [vmem:[%s3 + $0x70] sm:$0xff]
    %v3734 = vld [vmem:[%s3 + $0x78] sm:$0xff]
    %v3735 = vld [vmem:[%s3 + $0x80] sm:$0xff]
    %v3736 = vld [vmem:[%s3 + $0x88] sm:$0xff]
    %v3737 = vld [vmem:[%s3 + $0x90] sm:$0xff]
    %v3738 = vld [vmem:[%s3 + $0x98] sm:$0xff]
    %v3739 = vld [vmem:[%s3 + $0xa0] sm:$0xff]
    %v3740 = vld [vmem:[%s3 + $0xa8] sm:$0xff]
    %v3741 = vld [vmem:[%s3 + $0xb0] sm:$0xff]
    %v3742 = vld [vmem:[%s3 + $0xb8] sm:$0xff]
    %v3743 = vld [vmem:[%s3 + $0xc0] sm:$0xff]
    %v3744 = vld [vmem:[%s3 + $0xc8] sm:$0xff]
    %v3745 = vld [vmem:[%s3 + $0xd0] sm:$0xff]
    %v3746 = vld [vmem:[%s3 + $0xd8] sm:$0xff]
    %v3747 = vld [vmem:[%s3 + $0xe0] sm:$0xff]
    %v3748 = vld [vmem:[%s3 + $0xe8] sm:$0xff]
    %v3749 = vld [vmem:[%s3 + $0xf0] sm:$0xff]
    %v3750 = vld [vmem:[%s3 + $0xf8] sm:$0xff]
    %3751 = vmatprep.subr.mxu0 0.0
    %3752 = vmatpush1.msra.mxu0 %v3719
    %3753 = vmatprep.subr.mxu0 0.0
    %3754 = vmatpush1.msra.mxu0 %v3720
    %3755 = vmatprep.subr.mxu0 0.0
    %3756 = vmatpush1.msra.mxu0 %v3721
    %3757 = vmatprep.subr.mxu0 0.0
    %3758 = vmatpush1.msra.mxu0 %v3722
    %3759 = vmatprep.subr.mxu0 0.0
    %3760 = vmatpush1.msra.mxu0 %v3723
    %3761 = vmatprep.subr.mxu0 0.0
    %3762 = vmatpush1.msra.mxu0 %v3724
    %3763 = vmatprep.subr.mxu0 0.0
    %3764 = vmatpush1.msra.mxu0 %v3725
    %3765 = vmatprep.subr.mxu0 0.0
    %3766 = vmatpush1.msra.mxu0 %v3726
    %3767 = vmatprep.subr.mxu0 0.0
    %3768 = vmatpush1.msra.mxu0 %v3727
    %3769 = vmatprep.subr.mxu0 0.0
    %3770 = vmatpush1.msra.mxu0 %v3728
    %3771 = vmatprep.subr.mxu0 0.0
    %3772 = vmatpush1.msra.mxu0 %v3729
    %3773 = vmatprep.subr.mxu0 0.0
    %3774 = vmatpush1.msra.mxu0 %v3730
    %3775 = vmatprep.subr.mxu0 0.0
    %3776 = vmatpush1.msra.mxu0 %v3731
    %3777 = vmatprep.subr.mxu0 0.0
    %3778 = vmatpush1.msra.mxu0 %v3732
    %3779 = vmatprep.subr.mxu0 0.0
    %3780 = vmatpush1.msra.mxu0 %v3733
    %3781 = vmatprep.subr.mxu0 0.0
    %3782 = vmatpush1.msra.mxu0 %v3734
    %3783 = vmatprep.subr.mxu0 0.0
    %3784 = vmatpush1.msra.mxu0 %v3735
    %3785 = vmatprep.subr.mxu0 0.0
    %3786 = vmatpush1.msra.mxu0 %v3736
    %3787 = vmatprep.subr.mxu0 0.0
    %3788 = vmatpush1.msra.mxu0 %v3737
    %3789 = vmatprep.subr.mxu0 0.0
    %3790 = vmatpush1.msra.mxu0 %v3738
    %3791 = vmatprep.subr.mxu0 0.0
    %3792 = vmatpush1.msra.mxu0 %v3739
    %3793 = vmatprep.subr.mxu0 0.0
    %3794 = vmatpush1.msra.mxu0 %v3740
    %3795 = vmatprep.subr.mxu0 0.0
    %3796 = vmatpush1.msra.mxu0 %v3741
    %3797 = vmatprep.subr.mxu0 0.0
    %3798 = vmatpush1.msra.mxu0 %v3742
    %3799 = vmatprep.subr.mxu0 0.0
    %3800 = vmatpush1.msra.mxu0 %v3743
    %3801 = vmatprep.subr.mxu0 0.0
    %3802 = vmatpush1.msra.mxu0 %v3744
    %3803 = vmatprep.subr.mxu0 0.0
    %3804 = vmatpush1.msra.mxu0 %v3745
    %3805 = vmatprep.subr.mxu0 0.0
    %3806 = vmatpush1.msra.mxu0 %v3746
    %3807 = vmatprep.subr.mxu0 0.0
    %3808 = vmatpush1.msra.mxu0 %v3747
    %3809 = vmatprep.subr.mxu0 0.0
    %3810 = vmatpush1.msra.mxu0 %v3748
    %3811 = vmatprep.subr.mxu0 0.0
    %3812 = vmatpush1.msra.mxu0 %v3749
    %3813 = vmatprep.subr.mxu0 0.0
    %3814 = vmatpush1.msra.mxu0 %v3750
    %3815 = vmatprep.mubr.f32.mxu0 %v3711
    %3816 = vmatmul.mubr.f32.gmra.mrb[0].mxu0 %v3707
    %v3817 = vpop.f32.mrb[0].mxu0
    %v3818 = vadd.f32 0.0, %v3817
    %v3819 = vpop.f32.mrb[0].mxu0
    %3820 = vdwg.mxu0
    %v3821 = vrcp.pop %v3718
    %v3822 = vmul.f32 %v3718, %v3821
    %v3823 = vsub.f32 2.0, %v3822
    %v3824 = vmul.f32 %v3821, %v3823
    %v3825 = vmul.f32 %v3818, %v3824
    %v3826 = vld [vmem:[%s8] sm:$0xff]
    %v3827 = vld [vmem:[%s8 + $0x8] sm:$0xff]
    %v3828 = vld [vmem:[%s8 + $0x10] sm:$0xff]
    %v3829 = vld [vmem:[%s8 + $0x18] sm:$0xff]
    %v3831 = vsel %vm125, %v3825, 0
    %3833 = vmatprep.subr.mxu0 0.0
    %3834 = vmatpush1.msra.mxu0 %v3826
    %3835 = vmatprep.subr.mxu0 0.0
    %3836 = vmatpush1.msra.mxu0 %v3827
    %3837 = vmatprep.subr.mxu0 0.0
    %3838 = vmatpush1.msra.mxu0 %v3828
    %3839 = vmatprep.subr.mxu0 0.0
    %3840 = vmatpush1.msra.mxu0 %v3829
    %3841 = vmatprep.subr.mxu0 0.0
    %3842 = vmatpush1.msra.mxu0 0.0
    %3843 = vmatprep.subr.mxu0 0.0
    %3844 = vmatpush1.msra.mxu0 0.0
    %3845 = vmatprep.subr.mxu0 0.0
    %3846 = vmatpush1.msra.mxu0 0.0
    %3847 = vmatprep.subr.mxu0 0.0
    %3848 = vmatpush1.msra.mxu0 0.0
    %3849 = vmatprep.subr.mxu0 0.0
    %3850 = vmatpush1.msra.mxu0 0.0
    %3851 = vmatprep.subr.mxu0 0.0
    %3852 = vmatpush1.msra.mxu0 0.0
    %3853 = vmatprep.subr.mxu0 0.0
    %3854 = vmatpush1.msra.mxu0 0.0
    %3855 = vmatprep.subr.mxu0 0.0
    %3856 = vmatpush1.msra.mxu0 0.0
    %3857 = vmatprep.subr.mxu0 0.0
    %3858 = vmatpush1.msra.mxu0 0.0
    %3859 = vmatprep.subr.mxu0 0.0
    %3860 = vmatpush1.msra.mxu0 0.0
    %3861 = vmatprep.subr.mxu0 0.0
    %3862 = vmatpush1.msra.mxu0 0.0
    %3863 = vmatprep.subr.mxu0 0.0
    %3864 = vmatpush1.msra.mxu0 0.0
    %3865 = vmatprep.subr.mxu0 0.0
    %3866 = vmatpush1.msra.mxu0 0.0
    %3867 = vmatprep.subr.mxu0 0.0
    %3868 = vmatpush1.msra.mxu0 0.0
    %3869 = vmatprep.subr.mxu0 0.0
    %3870 = vmatpush1.msra.mxu0 0.0
    %3871 = vmatprep.subr.mxu0 0.0
    %3872 = vmatpush1.msra.mxu0 0.0
    %3873 = vmatprep.subr.mxu0 0.0
    %3874 = vmatpush1.msra.mxu0 0.0
    %3875 = vmatprep.subr.mxu0 0.0
    %3876 = vmatpush1.msra.mxu0 0.0
    %3877 = vmatprep.subr.mxu0 0.0
    %3878 = vmatpush1.msra.mxu0 0.0
    %3879 = vmatprep.subr.mxu0 0.0
    %3880 = vmatpush1.msra.mxu0 0.0
    %3881 = vmatprep.subr.mxu0 0.0
    %3882 = vmatpush1.msra.mxu0 0.0
    %3883 = vmatprep.subr.mxu0 0.0
    %3884 = vmatpush1.msra.mxu0 0.0
    %3885 = vmatprep.subr.mxu0 0.0
    %3886 = vmatpush1.msra.mxu0 0.0
    %3887 = vmatprep.subr.mxu0 0.0
    %3888 = vmatpush1.msra.mxu0 0.0
    %3889 = vmatprep.subr.mxu0 0.0
    %3890 = vmatpush1.msra.mxu0 0.0
    %3891 = vmatprep.subr.mxu0 0.0
    %3892 = vmatpush1.msra.mxu0 0.0
    %3893 = vmatprep.subr.mxu0 0.0
    %3894 = vmatpush1.msra.mxu0 0.0
    %3895 = vmatprep.subr.mxu0 0.0
    %3896 = vmatpush1.msra.mxu0 0.0
    %3897 = vmatprep.mubr.f32.mxu0 0.0
    %3898 = vmatmul.mubr.f32.gmra.mrb[0].mxu0 %v3831
    %v3899 = vpop.f32.mrb[0].mxu0
    %v3900 = vadd.f32 0.0, %v3899
    %v3901 = vpop.f32.mrb[0].mxu0
    %3902 = vdwg.mxu0
    %v3904 = vrot.slane %v3485, 2
    %v3906 = vadd.f32 %v3904, %v3900
    %v3907 = vmax.f32 %v3906, 0.0
    %v3908 = vld [vmem:[%s9] sm:$0xff]
    %v3909 = vld [vmem:[%s9 + $0x8] sm:$0xff]
    %v3910 = vld [vmem:[%s9 + $0x10] sm:$0xff]
    %v3911 = vld [vmem:[%s9 + $0x18] sm:$0xff]
    %v3912 = vld [vmem:[%s10] sm:$0x1]
    %v3914 = vsel %vm125, %v3907, 0
    %3916 = vmatprep.subr.mxu0 0.0
    %3917 = vmatpush1.msra.mxu0 %v3908
    %3918 = vmatprep.subr.mxu0 0.0
    %3919 = vmatpush1.msra.mxu0 %v3909
    %3920 = vmatprep.subr.mxu0 0.0
    %3921 = vmatpush1.msra.mxu0 %v3910
    %3922 = vmatprep.subr.mxu0 0.0
    %3923 = vmatpush1.msra.mxu0 %v3911
    %3924 = vmatprep.subr.mxu0 0.0
    %3925 = vmatpush1.msra.mxu0 0.0
    %3926 = vmatprep.subr.mxu0 0.0
    %3927 = vmatpush1.msra.mxu0 0.0
    %3928 = vmatprep.subr.mxu0 0.0
    %3929 = vmatpush1.msra.mxu0 0.0
    %3930 = vmatprep.subr.mxu0 0.0
    %3931 = vmatpush1.msra.mxu0 0.0
    %3932 = vmatprep.subr.mxu0 0.0
    %3933 = vmatpush1.msra.mxu0 0.0
    %3934 = vmatprep.subr.mxu0 0.0
    %3935 = vmatpush1.msra.mxu0 0.0
    %3936 = vmatprep.subr.mxu0 0.0
    %3937 = vmatpush1.msra.mxu0 0.0
    %3938 = vmatprep.subr.mxu0 0.0
    %3939 = vmatpush1.msra.mxu0 0.0
    %3940 = vmatprep.subr.mxu0 0.0
    %3941 = vmatpush1.msra.mxu0 0.0
    %3942 = vmatprep.subr.mxu0 0.0
    %3943 = vmatpush1.msra.mxu0 0.0
    %3944 = vmatprep.subr.mxu0 0.0
    %3945 = vmatpush1.msra.mxu0 0.0
    %3946 = vmatprep.subr.mxu0 0.0
    %3947 = vmatpush1.msra.mxu0 0.0
    %3948 = vmatprep.subr.mxu0 0.0
    %3949 = vmatpush1.msra.mxu0 0.0
    %3950 = vmatprep.subr.mxu0 0.0
    %3951 = vmatpush1.msra.mxu0 0.0
    %3952 = vmatprep.subr.mxu0 0.0
    %3953 = vmatpush1.msra.mxu0 0.0
    %3954 = vmatprep.subr.mxu0 0.0
    %3955 = vmatpush1.msra.mxu0 0.0
    %3956 = vmatprep.subr.mxu0 0.0
    %3957 = vmatpush1.msra.mxu0 0.0
    %3958 = vmatprep.subr.mxu0 0.0
    %3959 = vmatpush1.msra.mxu0 0.0
    %3960 = vmatprep.subr.mxu0 0.0
    %3961 = vmatpush1.msra.mxu0 0.0
    %3962 = vmatprep.subr.mxu0 0.0
    %3963 = vmatpush1.msra.mxu0 0.0
    %3964 = vmatprep.subr.mxu0 0.0
    %3965 = vmatpush1.msra.mxu0 0.0
    %3966 = vmatprep.subr.mxu0 0.0
    %3967 = vmatpush1.msra.mxu0 0.0
    %3968 = vmatprep.subr.mxu0 0.0
    %3969 = vmatpush1.msra.mxu0 0.0
    %3970 = vmatprep.subr.mxu0 0.0
    %3971 = vmatpush1.msra.mxu0 0.0
    %3972 = vmatprep.subr.mxu0 0.0
    %3973 = vmatpush1.msra.mxu0 0.0
    %3974 = vmatprep.subr.mxu0 0.0
    %3975 = vmatpush1.msra.mxu0 0.0
    %3976 = vmatprep.subr.mxu0 0.0
    %3977 = vmatpush1.msra.mxu0 0.0
    %3978 = vmatprep.subr.mxu0 0.0
    %3979 = vmatpush1.msra.mxu0 0.0
    %3980 = vmatprep.mubr.f32.mxu0 0.0
    %3981 = vmatmul.mubr.f32.gmra.mrb[0].mxu0 %v3914
    %v3982 = vpop.f32.mrb[0].mxu0
    %v3983 = vadd.f32 %v3912, %v3982
    %v3984 = vpop.f32.mrb[0].mxu0
    %3985 = vdwg.mxu0
    %v3986 = vadd.f32 %v3983, %v3656
    %v3987 = vxor.u32 %v3986, 2147483648
    %v3988 = vmul.f32 %v3987, 1.442695
    %v3989 = vpow.pop %v3988
    %v3990 = vadd.f32 %v3989, 1.0
    %v3991 = vrcp.pop %v3990
    %v3992 = vmul.f32 1.0, %v3991
    %3994 = vrot.lane.b32.xlu0 %v3656, 64
    %v3995 = vpop.permute.xlu0 %3994
    %v3997 = vmul.f32 %v3992, %v3995
    %3999 = vrot.lane.b32.xlu0 %v3997, 64
    %v4000 = vpop.permute.xlu0 %3999
    %v4002 = vadd.f32 %v3983, %v4000
    %v4003 = vtanh.pop %v4002
    %v4004 = vsub.f32 1.0, %v3992
    %4006 = vrot.lane.b32.xlu0 %v4003, 96
    %v4007 = vpop.permute.xlu0 %4006
    %v4009 = vmul.f32 %v4004, %v4007
    %v4010 = vlaneseq
    %v4011 = vshrl.u32 %v4010, 7
    %v4012 = vsub.s32 0, %v4011
    %v4013 = vrot.slane %v3483, %v4012
    %4014 = vrot.lane.b32.xlu0 %v4013, 32
    %v4015 = vpop.permute.xlu0 %4014
    %v4017 = vmul.f32 %v3992, %v4015
    %v4018 = vadd.f32 %v4009, %v4017
    %4020 = vrot.lane.b32.xlu0 %v4018, 96
    %v4021 = vpop.permute.xlu0 %4020
    %4023 = vst.msk [vmem:[#allocation2] sm:$0x1] %vm65, %v4021
    %v4025 = vlaneseq
    %v4026 = vshrl.u32 %v4025, 7
    %v4027 = vsub.s32 0, %v4026
    %v4028 = vrot.slane %v3824, %v4027
    %v4030 = vmul.f32 %v3702, %v4028
    %s4031 = scalar_lea.vmem [#allocation11], 5
    %4032 = vst.msk [vmem:[%s4031] ss:$8 sm:$0x3] %vm826, %v4030
    %4033 = vst.msk [vmem:[%s4031] ss:$8 sm:$0x0] %vm826, %v4030
    %v4034 = vld [vmem:[%s11] sm:$0xff]
    %v4035 = vld [vmem:[%s11 + $0x8] sm:$0xff]
    %v4036 = vld [vmem:[%s11 + $0x10] sm:$0xff]
    %v4037 = vld [vmem:[%s11 + $0x18] sm:$0xff]
    %v4038 = vld [vmem:[%s12] sm:$0x1]
    %v4039 = vsel %vm125, %v4021, 0
    %4041 = vmatprep.subr.mxu0 0.0
    %4042 = vmatpush1.msra.mxu0 %v4034
    %4043 = vmatprep.subr.mxu0 0.0
    %4044 = vmatpush1.msra.mxu0 %v4035
    %4045 = vmatprep.subr.mxu0 0.0
    %4046 = vmatpush1.msra.mxu0 %v4036
    %4047 = vmatprep.subr.mxu0 0.0
    %4048 = vmatpush1.msra.mxu0 %v4037
    %4049 = vmatprep.subr.mxu0 0.0
    %4050 = vmatpush1.msra.mxu0 0.0
    %4051 = vmatprep.subr.mxu0 0.0
    %4052 = vmatpush1.msra.mxu0 0.0
    %4053 = vmatprep.subr.mxu0 0.0
    %4054 = vmatpush1.msra.mxu0 0.0
    %4055 = vmatprep.subr.mxu0 0.0
    %4056 = vmatpush1.msra.mxu0 0.0
    %4057 = vmatprep.subr.mxu0 0.0
    %4058 = vmatpush1.msra.mxu0 0.0
    %4059 = vmatprep.subr.mxu0 0.0
    %4060 = vmatpush1.msra.mxu0 0.0
    %4061 = vmatprep.subr.mxu0 0.0
    %4062 = vmatpush1.msra.mxu0 0.0
    %4063 = vmatprep.subr.mxu0 0.0
    %4064 = vmatpush1.msra.mxu0 0.0
    %4065 = vmatprep.subr.mxu0 0.0
    %4066 = vmatpush1.msra.mxu0 0.0
    %4067 = vmatprep.subr.mxu0 0.0
    %4068 = vmatpush1.msra.mxu0 0.0
    %4069 = vmatprep.subr.mxu0 0.0
    %4070 = vmatpush1.msra.mxu0 0.0
    %4071 = vmatprep.subr.mxu0 0.0
    %4072 = vmatpush1.msra.mxu0 0.0
    %4073 = vmatprep.subr.mxu0 0.0
    %4074 = vmatpush1.msra.mxu0 0.0
    %4075 = vmatprep.subr.mxu0 0.0
    %4076 = vmatpush1.msra.mxu0 0.0
    %4077 = vmatprep.subr.mxu0 0.0
    %4078 = vmatpush1.msra.mxu0 0.0
    %4079 = vmatprep.subr.mxu0 0.0
    %4080 = vmatpush1.msra.mxu0 0.0
    %4081 = vmatprep.subr.mxu0 0.0
    %4082 = vmatpush1.msra.mxu0 0.0
    %4083 = vmatprep.subr.mxu0 0.0
    %4084 = vmatpush1.msra.mxu0 0.0
    %4085 = vmatprep.subr.mxu0 0.0
    %4086 = vmatpush1.msra.mxu0 0.0
    %4087 = vmatprep.subr.mxu0 0.0
    %4088 = vmatpush1.msra.mxu0 0.0
    %4089 = vmatprep.subr.mxu0 0.0
    %4090 = vmatpush1.msra.mxu0 0.0
    %4091 = vmatprep.subr.mxu0 0.0
    %4092 = vmatpush1.msra.mxu0 0.0
    %4093 = vmatprep.subr.mxu0 0.0
    %4094 = vmatpush1.msra.mxu0 0.0
    %4095 = vmatprep.subr.mxu0 0.0
    %4096 = vmatpush1.msra.mxu0 0.0
    %4097 = vmatprep.subr.mxu0 0.0
    %4098 = vmatpush1.msra.mxu0 0.0
    %4099 = vmatprep.subr.mxu0 0.0
    %4100 = vmatpush1.msra.mxu0 0.0
    %4101 = vmatprep.subr.mxu0 0.0
    %4102 = vmatpush1.msra.mxu0 0.0
    %4103 = vmatprep.subr.mxu0 0.0
    %4104 = vmatpush1.msra.mxu0 0.0
    %4105 = vmatprep.mubr.f32.mxu0 0.0
    %4106 = vmatmul.mubr.f32.gmra.mrb[0].mxu0 %v4039
    %v4107 = vpop.f32.mrb[0].mxu0
    %v4108 = vadd.f32 %v4038, %v4107
    %v4109 = vpop.f32.mrb[0].mxu0
    %4110 = vdwg.mxu0
    %v4111 = vsel %vm480, %v4108, -inf
    %4112 = vmax.xlane.f32.xlu0 %v4111
    %v4113 = vpop.xlane.xlu0 %4112
    %v4114 = vsub.f32 %v4108, %v4113
    %v4115 = vmul.f32 %v4114, 1.442695
    %v4116 = vpow.pop %v4115
    %v4117 = vsel %vm480, %v4116, 0.0
    %4118 = vadd.xlane.f32.xlu0 %v4117
    %v4119 = vpop.xlane.xlu0 %4118
    %v4120 = vlog2.pop %v4119
    %v4121 = vmul.f32 %v4120, 0.6931472
    %v4122 = vsub.f32 %v4114, %v4121
    %4123 = vst [vmem:[#allocation8 + $0x5] sm:$0x1] %v4122
    %v4124 = vld [vmem:[#allocation2] sm:$0x1]
    %s4125 = scalar_lea.vmem [#allocation4], 6
    %v4126 = vld [vmem:[%s4125] ss:$8 sm:$0x7]
    %v4127 = vld [vmem:[%s6] sm:$0xff]
    %v4128 = vld [vmem:[%s6 + $0x8] sm:$0xff]
    %v4129 = vld [vmem:[%s6 + $0x10] sm:$0xff]
    %v4130 = vld [vmem:[%s6 + $0x18] sm:$0xff]
    %v4131 = vld [vmem:[%s6 + $0x20] sm:$0xff]
    %v4132 = vld [vmem:[%s6 + $0x28] sm:$0xff]
    %v4133 = vld [vmem:[%s6 + $0x30] sm:$0xff]
    %v4134 = vld [vmem:[%s6 + $0x38] sm:$0xff]
    %v4135 = vld [vmem:[%s6 + $0x40] sm:$0xff]
    %v4136 = vld [vmem:[%s6 + $0x48] sm:$0xff]
    %v4137 = vld [vmem:[%s6 + $0x50] sm:$0xff]
    %v4138 = vld [vmem:[%s6 + $0x58] sm:$0xff]
    %v4139 = vld [vmem:[%s7] sm:$0x7]
    %v4141 = vlaneseq
    %v4142 = vshrl.u32 %v4141, 7
    %v4143 = vsub.s32 0, %v4142
    %v4144 = vrot.slane %v4139, %v4143
    %v4145 = vlaneseq
    %v4146 = vshrl.u32 %v4145, 7
    %v4147 = vsub.s32 1, %v4146
    %v4148 = vrot.slane %v4139, %v4147
    %v4149 = vlaneseq
    %v4150 = vshrl.u32 %v4149, 7
    %v4151 = vsub.s32 2, %v4150
    %v4152 = vrot.slane %v4139, %v4151
    %v4157 = vsel %vm125, %v4124, 0
    %4159 = vmatprep.subr.mxu0 %v4128
    %4160 = vmatpush1.msra.mxu0 %v4127
    %4161 = vmatprep.subr.mxu0 %v4131
    %4162 = vmatpush1.msra.mxu0 %v4130
    %4163 = vmatprep.subr.mxu0 %v4134
    %4164 = vmatpush1.msra.mxu0 %v4133
    %4165 = vmatprep.subr.mxu0 %v4137
    %4166 = vmatpush1.msra.mxu0 %v4136
    %4167 = vmatprep.subr.mxu0 0.0
    %4168 = vmatpush1.msra.mxu0 0.0
    %4169 = vmatprep.subr.mxu0 0.0
    %4170 = vmatpush1.msra.mxu0 0.0
    %4171 = vmatprep.subr.mxu0 0.0
    %4172 = vmatpush1.msra.mxu0 0.0
    %4173 = vmatprep.subr.mxu0 0.0
    %4174 = vmatpush1.msra.mxu0 0.0
    %4175 = vmatprep.subr.mxu0 0.0
    %4176 = vmatpush1.msra.mxu0 0.0
    %4177 = vmatprep.subr.mxu0 0.0
    %4178 = vmatpush1.msra.mxu0 0.0
    %4179 = vmatprep.subr.mxu0 0.0
    %4180 = vmatpush1.msra.mxu0 0.0
    %4181 = vmatprep.subr.mxu0 0.0
    %4182 = vmatpush1.msra.mxu0 0.0
    %4183 = vmatprep.subr.mxu0 0.0
    %4184 = vmatpush1.msra.mxu0 0.0
    %4185 = vmatprep.subr.mxu0 0.0
    %4186 = vmatpush1.msra.mxu0 0.0
    %4187 = vmatprep.subr.mxu0 0.0
    %4188 = vmatpush1.msra.mxu0 0.0
    %4189 = vmatprep.subr.mxu0 0.0
    %4190 = vmatpush1.msra.mxu0 0.0
    %4191 = vmatprep.subr.mxu0 0.0
    %4192 = vmatpush1.msra.mxu0 0.0
    %4193 = vmatprep.subr.mxu0 0.0
    %4194 = vmatpush1.msra.mxu0 0.0
    %4195 = vmatprep.subr.mxu0 0.0
    %4196 = vmatpush1.msra.mxu0 0.0
    %4197 = vmatprep.subr.mxu0 0.0
    %4198 = vmatpush1.msra.mxu0 0.0
    %4199 = vmatprep.subr.mxu0 0.0
    %4200 = vmatpush1.msra.mxu0 0.0
    %4201 = vmatprep.subr.mxu0 0.0
    %4202 = vmatpush1.msra.mxu0 0.0
    %4203 = vmatprep.subr.mxu0 0.0
    %4204 = vmatpush1.msra.mxu0 0.0
    %4205 = vmatprep.subr.mxu0 0.0
    %4206 = vmatpush1.msra.mxu0 0.0
    %4207 = vmatprep.subr.mxu0 0.0
    %4208 = vmatpush1.msra.mxu0 0.0
    %4209 = vmatprep.subr.mxu0 0.0
    %4210 = vmatpush1.msra.mxu0 0.0
    %4211 = vmatprep.subr.mxu0 0.0
    %4212 = vmatpush1.msra.mxu0 0.0
    %4213 = vmatprep.subr.mxu0 0.0
    %4214 = vmatpush1.msra.mxu0 0.0
    %4215 = vmatprep.subr.mxu0 0.0
    %4216 = vmatpush1.msra.mxu0 0.0
    %4217 = vmatprep.subr.mxu0 0.0
    %4218 = vmatpush1.msra.mxu0 0.0
    %4219 = vmatprep.subr.mxu0 0.0
    %4220 = vmatpush1.msra.mxu0 0.0
    %4221 = vmatprep.subr.mxu0 0.0
    %4222 = vmatpush1.msra.mxu0 0.0
    %4223 = vmatprep.mubr.f32.mxu0 0.0
    %4224 = vmatmul.mubr.f32.gmra.mrb[0].mxu0 %v4157
    %v4225 = vpop.f32.mrb[0].mxu0
    %v4226 = vadd.f32 %v4144, %v4225
    %v4227 = vpop.f32.mrb[0].mxu0
    %v4228 = vadd.f32 %v4148, %v4227
    %4229 = vdwg.mxu0
    %4230 = vmatprep.subr.mxu0 0.0
    %4231 = vmatpush1.msra.mxu0 %v4129
    %4232 = vmatprep.subr.mxu0 0.0
    %4233 = vmatpush1.msra.mxu0 %v4132
    %4234 = vmatprep.subr.mxu0 0.0
    %4235 = vmatpush1.msra.mxu0 %v4135
    %4236 = vmatprep.subr.mxu0 0.0
    %4237 = vmatpush1.msra.mxu0 %v4138
    %4238 = vmatprep.subr.mxu0 0.0
    %4239 = vmatpush1.msra.mxu0 0.0
    %4240 = vmatprep.subr.mxu0 0.0
    %4241 = vmatpush1.msra.mxu0 0.0
    %4242 = vmatprep.subr.mxu0 0.0
    %4243 = vmatpush1.msra.mxu0 0.0
    %4244 = vmatprep.subr.mxu0 0.0
    %4245 = vmatpush1.msra.mxu0 0.0
    %4246 = vmatprep.subr.mxu0 0.0
    %4247 = vmatpush1.msra.mxu0 0.0
    %4248 = vmatprep.subr.mxu0 0.0
    %4249 = vmatpush1.msra.mxu0 0.0
    %4250 = vmatprep.subr.mxu0 0.0
    %4251 = vmatpush1.msra.mxu0 0.0
    %4252 = vmatprep.subr.mxu0 0.0
    %4253 = vmatpush1.msra.mxu0 0.0
    %4254 = vmatprep.subr.mxu0 0.0
    %4255 = vmatpush1.msra.mxu0 0.0
    %4256 = vmatprep.subr.mxu0 0.0
    %4257 = vmatpush1.msra.mxu0 0.0
    %4258 = vmatprep.subr.mxu0 0.0
    %4259 = vmatpush1.msra.mxu0 0.0
    %4260 = vmatprep.subr.mxu0 0.0
    %4261 = vmatpush1.msra.mxu0 0.0
    %4262 = vmatprep.subr.mxu0 0.0
    %4263 = vmatpush1.msra.mxu0 0.0
    %4264 = vmatprep.subr.mxu0 0.0
    %4265 = vmatpush1.msra.mxu0 0.0
    %4266 = vmatprep.subr.mxu0 0.0
    %4267 = vmatpush1.msra.mxu0 0.0
    %4268 = vmatprep.subr.mxu0 0.0
    %4269 = vmatpush1.msra.mxu0 0.0
    %4270 = vmatprep.subr.mxu0 0.0
    %4271 = vmatpush1.msra.mxu0 0.0
    %4272 = vmatprep.subr.mxu0 0.0
    %4273 = vmatpush1.msra.mxu0 0.0
    %4274 = vmatprep.subr.mxu0 0.0
    %4275 = vmatpush1.msra.mxu0 0.0
    %4276 = vmatprep.subr.mxu0 0.0
    %4277 = vmatpush1.msra.mxu0 0.0
    %4278 = vmatprep.subr.mxu0 0.0
    %4279 = vmatpush1.msra.mxu0 0.0
    %4280 = vmatprep.subr.mxu0 0.0
    %4281 = vmatpush1.msra.mxu0 0.0
    %4282 = vmatprep.subr.mxu0 0.0
    %4283 = vmatpush1.msra.mxu0 0.0
    %4284 = vmatprep.subr.mxu0 0.0
    %4285 = vmatpush1.msra.mxu0 0.0
    %4286 = vmatprep.subr.mxu0 0.0
    %4287 = vmatpush1.msra.mxu0 0.0
    %4288 = vmatprep.subr.mxu0 0.0
    %4289 = vmatpush1.msra.mxu0 0.0
    %4290 = vmatprep.subr.mxu0 0.0
    %4291 = vmatpush1.msra.mxu0 0.0
    %4292 = vmatprep.subr.mxu0 0.0
    %4293 = vmatpush1.msra.mxu0 0.0
    %4294 = vmatprep.mubr.f32.mxu0 0.0
    %4295 = vmatmul.mubr.f32.gmra.mrb[0].mxu0 %v4157
    %v4296 = vpop.f32.mrb[0].mxu0
    %v4297 = vadd.f32 %v4152, %v4296
    %v4298 = vpop.f32.mrb[0].mxu0
    %4299 = vdwg.mxu0
    %v4302 = vcombine.low %v4226, %v4228
    %v4304 = vunpack.c.l.s4 1966171168
    %v4305 = vunpack.c.0.s8 %v4304
    %v4306 = vlaneseq
    %v4307 = vshrl.u32 %v4306, 7
    %v4308 = vsub.s32 %v4305, %v4307
    %v4309 = vrot.slane %v4302, %v4308
    %v4311 = vunpack.c.l.s4 1966171168
    %v4312 = vunpack.c.0.s8 %v4311
    %v4313 = vlaneseq
    %v4314 = vshrl.u32 %v4313, 7
    %v4315 = vsub.s32 %v4312, %v4314
    %v4316 = vrot.slane %v4309, %v4315
    %v4318 = vadd.f32 %v4126, %v4316
    %v4320 = vlaneseq
    %v4321 = vshrl.u32 %v4320, 7
    %v4322 = vsub.s32 0, %v4321
    %v4323 = vrot.slane %v4318, %v4322
    %v4324 = vlaneseq
    %v4325 = vshrl.u32 %v4324, 7
    %v4326 = vsub.s32 1, %v4325
    %v4327 = vrot.slane %v4318, %v4326
    %v4330 = vsel %vm480, %v4323, -inf
    %v4331 = vsel %vm480, %v4327, -inf
    %v4332 = vmax.f32 %v4330, %v4331
    %4333 = vmax.xlane.f32.xlu0 %v4332
    %v4334 = vpop.xlane.xlu0 %4333
    %v4336 = vlaneseq
    %v4337 = vshrl.u32 %v4336, 7
    %v4338 = vsub.s32 0, %v4337
    %v4339 = vrot.slane %v4334, %v4338
    %v4341 = vsub.f32 %v4318, %v4339
    %v4342 = vmul.f32 %v4341, 1.442695
    %v4343 = vpow.pop %v4342
    %v4345 = vlaneseq
    %v4346 = vshrl.u32 %v4345, 7
    %v4347 = vsub.s32 0, %v4346
    %v4348 = vrot.slane %v4343, %v4347
    %v4349 = vlaneseq
    %v4350 = vshrl.u32 %v4349, 7
    %v4351 = vsub.s32 1, %v4350
    %v4352 = vrot.slane %v4343, %v4351
    %v4355 = vsel %vm480, %v4348, 0.0
    %v4356 = vsel %vm480, %v4352, 0.0
    %v4357 = vadd.f32 %v4355, %v4356
    %4358 = vadd.xlane.f32.xlu0 %v4357
    %v4359 = vpop.xlane.xlu0 %4358
    %v4360 = vld [vmem:[%s3] sm:$0xff]
    %v4361 = vld [vmem:[%s3 + $0x8] sm:$0xff]
    %v4362 = vld [vmem:[%s3 + $0x10] sm:$0xff]
    %v4363 = vld [vmem:[%s3 + $0x18] sm:$0xff]
    %v4364 = vld [vmem:[%s3 + $0x20] sm:$0xff]
    %v4365 = vld [vmem:[%s3 + $0x28] sm:$0xff]
    %v4366 = vld [vmem:[%s3 + $0x30] sm:$0xff]
    %v4367 = vld [vmem:[%s3 + $0x38] sm:$0xff]
    %v4368 = vld [vmem:[%s3 + $0x40] sm:$0xff]
    %v4369 = vld [vmem:[%s3 + $0x48] sm:$0xff]
    %v4370 = vld [vmem:[%s3 + $0x50] sm:$0xff]
    %v4371 = vld [vmem:[%s3 + $0x58] sm:$0xff]
    %v4372 = vld [vmem:[%s3 + $0x60] sm:$0xff]
    %v4373 = vld [vmem:[%s3 + $0x68] sm:$0xff]
    %v4374 = vld [vmem:[%s3 + $0x70] sm:$0xff]
    %v4375 = vld [vmem:[%s3 + $0x78] sm:$0xff]
    %v4376 = vld [vmem:[%s3 + $0x80] sm:$0xff]
    %v4377 = vld [vmem:[%s3 + $0x88] sm:$0xff]
    %v4378 = vld [vmem:[%s3 + $0x90] sm:$0xff]
    %v4379 = vld [vmem:[%s3 + $0x98] sm:$0xff]
    %v4380 = vld [vmem:[%s3 + $0xa0] sm:$0xff]
    %v4381 = vld [vmem:[%s3 + $0xa8] sm:$0xff]
    %v4382 = vld [vmem:[%s3 + $0xb0] sm:$0xff]
    %v4383 = vld [vmem:[%s3 + $0xb8] sm:$0xff]
    %v4384 = vld [vmem:[%s3 + $0xc0] sm:$0xff]
    %v4385 = vld [vmem:[%s3 + $0xc8] sm:$0xff]
    %v4386 = vld [vmem:[%s3 + $0xd0] sm:$0xff]
    %v4387 = vld [vmem:[%s3 + $0xd8] sm:$0xff]
    %v4388 = vld [vmem:[%s3 + $0xe0] sm:$0xff]
    %v4389 = vld [vmem:[%s3 + $0xe8] sm:$0xff]
    %v4390 = vld [vmem:[%s3 + $0xf0] sm:$0xff]
    %v4391 = vld [vmem:[%s3 + $0xf8] sm:$0xff]
    %4392 = vmatprep.subr.mxu0 0.0
    %4393 = vmatpush1.msra.mxu0 %v4360
    %4394 = vmatprep.subr.mxu0 0.0
    %4395 = vmatpush1.msra.mxu0 %v4361
    %4396 = vmatprep.subr.mxu0 0.0
    %4397 = vmatpush1.msra.mxu0 %v4362
    %4398 = vmatprep.subr.mxu0 0.0
    %4399 = vmatpush1.msra.mxu0 %v4363
    %4400 = vmatprep.subr.mxu0 0.0
    %4401 = vmatpush1.msra.mxu0 %v4364
    %4402 = vmatprep.subr.mxu0 0.0
    %4403 = vmatpush1.msra.mxu0 %v4365
    %4404 = vmatprep.subr.mxu0 0.0
    %4405 = vmatpush1.msra.mxu0 %v4366
    %4406 = vmatprep.subr.mxu0 0.0
    %4407 = vmatpush1.msra.mxu0 %v4367
    %4408 = vmatprep.subr.mxu0 0.0
    %4409 = vmatpush1.msra.mxu0 %v4368
    %4410 = vmatprep.subr.mxu0 0.0
    %4411 = vmatpush1.msra.mxu0 %v4369
    %4412 = vmatprep.subr.mxu0 0.0
    %4413 = vmatpush1.msra.mxu0 %v4370
    %4414 = vmatprep.subr.mxu0 0.0
    %4415 = vmatpush1.msra.mxu0 %v4371
    %4416 = vmatprep.subr.mxu0 0.0
    %4417 = vmatpush1.msra.mxu0 %v4372
    %4418 = vmatprep.subr.mxu0 0.0
    %4419 = vmatpush1.msra.mxu0 %v4373
    %4420 = vmatprep.subr.mxu0 0.0
    %4421 = vmatpush1.msra.mxu0 %v4374
    %4422 = vmatprep.subr.mxu0 0.0
    %4423 = vmatpush1.msra.mxu0 %v4375
    %4424 = vmatprep.subr.mxu0 0.0
    %4425 = vmatpush1.msra.mxu0 %v4376
    %4426 = vmatprep.subr.mxu0 0.0
    %4427 = vmatpush1.msra.mxu0 %v4377
    %4428 = vmatprep.subr.mxu0 0.0
    %4429 = vmatpush1.msra.mxu0 %v4378
    %4430 = vmatprep.subr.mxu0 0.0
    %4431 = vmatpush1.msra.mxu0 %v4379
    %4432 = vmatprep.subr.mxu0 0.0
    %4433 = vmatpush1.msra.mxu0 %v4380
    %4434 = vmatprep.subr.mxu0 0.0
    %4435 = vmatpush1.msra.mxu0 %v4381
    %4436 = vmatprep.subr.mxu0 0.0
    %4437 = vmatpush1.msra.mxu0 %v4382
    %4438 = vmatprep.subr.mxu0 0.0
    %4439 = vmatpush1.msra.mxu0 %v4383
    %4440 = vmatprep.subr.mxu0 0.0
    %4441 = vmatpush1.msra.mxu0 %v4384
    %4442 = vmatprep.subr.mxu0 0.0
    %4443 = vmatpush1.msra.mxu0 %v4385
    %4444 = vmatprep.subr.mxu0 0.0
    %4445 = vmatpush1.msra.mxu0 %v4386
    %4446 = vmatprep.subr.mxu0 0.0
    %4447 = vmatpush1.msra.mxu0 %v4387
    %4448 = vmatprep.subr.mxu0 0.0
    %4449 = vmatpush1.msra.mxu0 %v4388
    %4450 = vmatprep.subr.mxu0 0.0
    %4451 = vmatpush1.msra.mxu0 %v4389
    %4452 = vmatprep.subr.mxu0 0.0
    %4453 = vmatpush1.msra.mxu0 %v4390
    %4454 = vmatprep.subr.mxu0 0.0
    %4455 = vmatpush1.msra.mxu0 %v4391
    %4456 = vmatprep.mubr.f32.mxu0 %v4352
    %4457 = vmatmul.mubr.f32.gmra.mrb[0].mxu0 %v4348
    %v4458 = vpop.f32.mrb[0].mxu0
    %v4459 = vadd.f32 0.0, %v4458
    %v4460 = vpop.f32.mrb[0].mxu0
    %4461 = vdwg.mxu0
    %v4462 = vrcp.pop %v4359
    %v4463 = vmul.f32 %v4359, %v4462
    %v4464 = vsub.f32 2.0, %v4463
    %v4465 = vmul.f32 %v4462, %v4464
    %v4466 = vmul.f32 %v4459, %v4465
    %v4467 = vld [vmem:[%s8] sm:$0xff]
    %v4468 = vld [vmem:[%s8 + $0x8] sm:$0xff]
    %v4469 = vld [vmem:[%s8 + $0x10] sm:$0xff]
    %v4470 = vld [vmem:[%s8 + $0x18] sm:$0xff]
    %v4472 = vsel %vm125, %v4466, 0
    %4474 = vmatprep.subr.mxu0 0.0
    %4475 = vmatpush1.msra.mxu0 %v4467
    %4476 = vmatprep.subr.mxu0 0.0
    %4477 = vmatpush1.msra.mxu0 %v4468
    %4478 = vmatprep.subr.mxu0 0.0
    %4479 = vmatpush1.msra.mxu0 %v4469
    %4480 = vmatprep.subr.mxu0 0.0
    %4481 = vmatpush1.msra.mxu0 %v4470
    %4482 = vmatprep.subr.mxu0 0.0
    %4483 = vmatpush1.msra.mxu0 0.0
    %4484 = vmatprep.subr.mxu0 0.0
    %4485 = vmatpush1.msra.mxu0 0.0
    %4486 = vmatprep.subr.mxu0 0.0
    %4487 = vmatpush1.msra.mxu0 0.0
    %4488 = vmatprep.subr.mxu0 0.0
    %4489 = vmatpush1.msra.mxu0 0.0
    %4490 = vmatprep.subr.mxu0 0.0
    %4491 = vmatpush1.msra.mxu0 0.0
    %4492 = vmatprep.subr.mxu0 0.0
    %4493 = vmatpush1.msra.mxu0 0.0
    %4494 = vmatprep.subr.mxu0 0.0
    %4495 = vmatpush1.msra.mxu0 0.0
    %4496 = vmatprep.subr.mxu0 0.0
    %4497 = vmatpush1.msra.mxu0 0.0
    %4498 = vmatprep.subr.mxu0 0.0
    %4499 = vmatpush1.msra.mxu0 0.0
    %4500 = vmatprep.subr.mxu0 0.0
    %4501 = vmatpush1.msra.mxu0 0.0
    %4502 = vmatprep.subr.mxu0 0.0
    %4503 = vmatpush1.msra.mxu0 0.0
    %4504 = vmatprep.subr.mxu0 0.0
    %4505 = vmatpush1.msra.mxu0 0.0
    %4506 = vmatprep.subr.mxu0 0.0
    %4507 = vmatpush1.msra.mxu0 0.0
    %4508 = vmatprep.subr.mxu0 0.0
    %4509 = vmatpush1.msra.mxu0 0.0
    %4510 = vmatprep.subr.mxu0 0.0
    %4511 = vmatpush1.msra.mxu0 0.0
    %4512 = vmatprep.subr.mxu0 0.0
    %4513 = vmatpush1.msra.mxu0 0.0
    %4514 = vmatprep.subr.mxu0 0.0
    %4515 = vmatpush1.msra.mxu0 0.0
    %4516 = vmatprep.subr.mxu0 0.0
    %4517 = vmatpush1.msra.mxu0 0.0
    %4518 = vmatprep.subr.mxu0 0.0
    %4519 = vmatpush1.msra.mxu0 0.0
    %4520 = vmatprep.subr.mxu0 0.0
    %4521 = vmatpush1.msra.mxu0 0.0
    %4522 = vmatprep.subr.mxu0 0.0
    %4523 = vmatpush1.msra.mxu0 0.0
    %4524 = vmatprep.subr.mxu0 0.0
    %4525 = vmatpush1.msra.mxu0 0.0
    %4526 = vmatprep.subr.mxu0 0.0
    %4527 = vmatpush1.msra.mxu0 0.0
    %4528 = vmatprep.subr.mxu0 0.0
    %4529 = vmatpush1.msra.mxu0 0.0
    %4530 = vmatprep.subr.mxu0 0.0
    %4531 = vmatpush1.msra.mxu0 0.0
    %4532 = vmatprep.subr.mxu0 0.0
    %4533 = vmatpush1.msra.mxu0 0.0
    %4534 = vmatprep.subr.mxu0 0.0
    %4535 = vmatpush1.msra.mxu0 0.0
    %4536 = vmatprep.subr.mxu0 0.0
    %4537 = vmatpush1.msra.mxu0 0.0
    %4538 = vmatprep.mubr.f32.mxu0 0.0
    %4539 = vmatmul.mubr.f32.gmra.mrb[0].mxu0 %v4472
    %v4540 = vpop.f32.mrb[0].mxu0
    %v4541 = vadd.f32 0.0, %v4540
    %v4542 = vpop.f32.mrb[0].mxu0
    %4543 = vdwg.mxu0
    %v4545 = vrot.slane %v4126, 2
    %v4547 = vadd.f32 %v4545, %v4541
    %v4548 = vmax.f32 %v4547, 0.0
    %v4549 = vld [vmem:[%s9] sm:$0xff]
    %v4550 = vld [vmem:[%s9 + $0x8] sm:$0xff]
    %v4551 = vld [vmem:[%s9 + $0x10] sm:$0xff]
    %v4552 = vld [vmem:[%s9 + $0x18] sm:$0xff]
    %v4553 = vld [vmem:[%s10] sm:$0x1]
    %v4555 = vsel %vm125, %v4548, 0
    %4557 = vmatprep.subr.mxu0 0.0
    %4558 = vmatpush1.msra.mxu0 %v4549
    %4559 = vmatprep.subr.mxu0 0.0
    %4560 = vmatpush1.msra.mxu0 %v4550
    %4561 = vmatprep.subr.mxu0 0.0
    %4562 = vmatpush1.msra.mxu0 %v4551
    %4563 = vmatprep.subr.mxu0 0.0
    %4564 = vmatpush1.msra.mxu0 %v4552
    %4565 = vmatprep.subr.mxu0 0.0
    %4566 = vmatpush1.msra.mxu0 0.0
    %4567 = vmatprep.subr.mxu0 0.0
    %4568 = vmatpush1.msra.mxu0 0.0
    %4569 = vmatprep.subr.mxu0 0.0
    %4570 = vmatpush1.msra.mxu0 0.0
    %4571 = vmatprep.subr.mxu0 0.0
    %4572 = vmatpush1.msra.mxu0 0.0
    %4573 = vmatprep.subr.mxu0 0.0
    %4574 = vmatpush1.msra.mxu0 0.0
    %4575 = vmatprep.subr.mxu0 0.0
    %4576 = vmatpush1.msra.mxu0 0.0
    %4577 = vmatprep.subr.mxu0 0.0
    %4578 = vmatpush1.msra.mxu0 0.0
    %4579 = vmatprep.subr.mxu0 0.0
    %4580 = vmatpush1.msra.mxu0 0.0
    %4581 = vmatprep.subr.mxu0 0.0
    %4582 = vmatpush1.msra.mxu0 0.0
    %4583 = vmatprep.subr.mxu0 0.0
    %4584 = vmatpush1.msra.mxu0 0.0
    %4585 = vmatprep.subr.mxu0 0.0
    %4586 = vmatpush1.msra.mxu0 0.0
    %4587 = vmatprep.subr.mxu0 0.0
    %4588 = vmatpush1.msra.mxu0 0.0
    %4589 = vmatprep.subr.mxu0 0.0
    %4590 = vmatpush1.msra.mxu0 0.0
    %4591 = vmatprep.subr.mxu0 0.0
    %4592 = vmatpush1.msra.mxu0 0.0
    %4593 = vmatprep.subr.mxu0 0.0
    %4594 = vmatpush1.msra.mxu0 0.0
    %4595 = vmatprep.subr.mxu0 0.0
    %4596 = vmatpush1.msra.mxu0 0.0
    %4597 = vmatprep.subr.mxu0 0.0
    %4598 = vmatpush1.msra.mxu0 0.0
    %4599 = vmatprep.subr.mxu0 0.0
    %4600 = vmatpush1.msra.mxu0 0.0
    %4601 = vmatprep.subr.mxu0 0.0
    %4602 = vmatpush1.msra.mxu0 0.0
    %4603 = vmatprep.subr.mxu0 0.0
    %4604 = vmatpush1.msra.mxu0 0.0
    %4605 = vmatprep.subr.mxu0 0.0
    %4606 = vmatpush1.msra.mxu0 0.0
    %4607 = vmatprep.subr.mxu0 0.0
    %4608 = vmatpush1.msra.mxu0 0.0
    %4609 = vmatprep.subr.mxu0 0.0
    %4610 = vmatpush1.msra.mxu0 0.0
    %4611 = vmatprep.subr.mxu0 0.0
    %4612 = vmatpush1.msra.mxu0 0.0
    %4613 = vmatprep.subr.mxu0 0.0
    %4614 = vmatpush1.msra.mxu0 0.0
    %4615 = vmatprep.subr.mxu0 0.0
    %4616 = vmatpush1.msra.mxu0 0.0
    %4617 = vmatprep.subr.mxu0 0.0
    %4618 = vmatpush1.msra.mxu0 0.0
    %4619 = vmatprep.subr.mxu0 0.0
    %4620 = vmatpush1.msra.mxu0 0.0
    %4621 = vmatprep.mubr.f32.mxu0 0.0
    %4622 = vmatmul.mubr.f32.gmra.mrb[0].mxu0 %v4555
    %v4623 = vpop.f32.mrb[0].mxu0
    %v4624 = vadd.f32 %v4553, %v4623
    %v4625 = vpop.f32.mrb[0].mxu0
    %4626 = vdwg.mxu0
    %v4627 = vadd.f32 %v4624, %v4297
    %v4628 = vxor.u32 %v4627, 2147483648
    %v4629 = vmul.f32 %v4628, 1.442695
    %v4630 = vpow.pop %v4629
    %v4631 = vadd.f32 %v4630, 1.0
    %v4632 = vrcp.pop %v4631
    %v4633 = vmul.f32 1.0, %v4632
    %4635 = vrot.lane.b32.xlu0 %v4297, 64
    %v4636 = vpop.permute.xlu0 %4635
    %v4638 = vmul.f32 %v4633, %v4636
    %4640 = vrot.lane.b32.xlu0 %v4638, 64
    %v4641 = vpop.permute.xlu0 %4640
    %v4643 = vadd.f32 %v4624, %v4641
    %v4644 = vtanh.pop %v4643
    %v4645 = vsub.f32 1.0, %v4633
    %4647 = vrot.lane.b32.xlu0 %v4644, 96
    %v4648 = vpop.permute.xlu0 %4647
    %v4650 = vmul.f32 %v4645, %v4648
    %v4651 = vlaneseq
    %v4652 = vshrl.u32 %v4651, 7
    %v4653 = vsub.s32 0, %v4652
    %v4654 = vrot.slane %v4124, %v4653
    %4655 = vrot.lane.b32.xlu0 %v4654, 32
    %v4656 = vpop.permute.xlu0 %4655
    %v4658 = vmul.f32 %v4633, %v4656
    %v4659 = vadd.f32 %v4650, %v4658
    %4661 = vrot.lane.b32.xlu0 %v4659, 96
    %v4662 = vpop.permute.xlu0 %4661
    %4664 = vst.msk [vmem:[#allocation2] sm:$0x1] %vm65, %v4662
    %v4666 = vlaneseq
    %v4667 = vshrl.u32 %v4666, 7
    %v4668 = vsub.s32 0, %v4667
    %v4669 = vrot.slane %v4465, %v4668
    %v4671 = vmul.f32 %v4343, %v4669
    %s4672 = scalar_lea.vmem [#allocation11], 6
    %4673 = vst.msk [vmem:[%s4672] ss:$8 sm:$0x3] %vm826, %v4671
    %4674 = vst.msk [vmem:[%s4672] ss:$8 sm:$0x0] %vm826, %v4671
    %v4675 = vld [vmem:[%s11] sm:$0xff]
    %v4676 = vld [vmem:[%s11 + $0x8] sm:$0xff]
    %v4677 = vld [vmem:[%s11 + $0x10] sm:$0xff]
    %v4678 = vld [vmem:[%s11 + $0x18] sm:$0xff]
    %v4679 = vld [vmem:[%s12] sm:$0x1]
    %v4680 = vsel %vm125, %v4662, 0
    %4682 = vmatprep.subr.mxu0 0.0
    %4683 = vmatpush1.msra.mxu0 %v4675
    %4684 = vmatprep.subr.mxu0 0.0
    %4685 = vmatpush1.msra.mxu0 %v4676
    %4686 = vmatprep.subr.mxu0 0.0
    %4687 = vmatpush1.msra.mxu0 %v4677
    %4688 = vmatprep.subr.mxu0 0.0
    %4689 = vmatpush1.msra.mxu0 %v4678
    %4690 = vmatprep.subr.mxu0 0.0
    %4691 = vmatpush1.msra.mxu0 0.0
    %4692 = vmatprep.subr.mxu0 0.0
    %4693 = vmatpush1.msra.mxu0 0.0
    %4694 = vmatprep.subr.mxu0 0.0
    %4695 = vmatpush1.msra.mxu0 0.0
    %4696 = vmatprep.subr.mxu0 0.0
    %4697 = vmatpush1.msra.mxu0 0.0
    %4698 = vmatprep.subr.mxu0 0.0
    %4699 = vmatpush1.msra.mxu0 0.0
    %4700 = vmatprep.subr.mxu0 0.0
    %4701 = vmatpush1.msra.mxu0 0.0
    %4702 = vmatprep.subr.mxu0 0.0
    %4703 = vmatpush1.msra.mxu0 0.0
    %4704 = vmatprep.subr.mxu0 0.0
    %4705 = vmatpush1.msra.mxu0 0.0
    %4706 = vmatprep.subr.mxu0 0.0
    %4707 = vmatpush1.msra.mxu0 0.0
    %4708 = vmatprep.subr.mxu0 0.0
    %4709 = vmatpush1.msra.mxu0 0.0
    %4710 = vmatprep.subr.mxu0 0.0
    %4711 = vmatpush1.msra.mxu0 0.0
    %4712 = vmatprep.subr.mxu0 0.0
    %4713 = vmatpush1.msra.mxu0 0.0
    %4714 = vmatprep.subr.mxu0 0.0
    %4715 = vmatpush1.msra.mxu0 0.0
    %4716 = vmatprep.subr.mxu0 0.0
    %4717 = vmatpush1.msra.mxu0 0.0
    %4718 = vmatprep.subr.mxu0 0.0
    %4719 = vmatpush1.msra.mxu0 0.0
    %4720 = vmatprep.subr.mxu0 0.0
    %4721 = vmatpush1.msra.mxu0 0.0
    %4722 = vmatprep.subr.mxu0 0.0
    %4723 = vmatpush1.msra.mxu0 0.0
    %4724 = vmatprep.subr.mxu0 0.0
    %4725 = vmatpush1.msra.mxu0 0.0
    %4726 = vmatprep.subr.mxu0 0.0
    %4727 = vmatpush1.msra.mxu0 0.0
    %4728 = vmatprep.subr.mxu0 0.0
    %4729 = vmatpush1.msra.mxu0 0.0
    %4730 = vmatprep.subr.mxu0 0.0
    %4731 = vmatpush1.msra.mxu0 0.0
    %4732 = vmatprep.subr.mxu0 0.0
    %4733 = vmatpush1.msra.mxu0 0.0
    %4734 = vmatprep.subr.mxu0 0.0
    %4735 = vmatpush1.msra.mxu0 0.0
    %4736 = vmatprep.subr.mxu0 0.0
    %4737 = vmatpush1.msra.mxu0 0.0
    %4738 = vmatprep.subr.mxu0 0.0
    %4739 = vmatpush1.msra.mxu0 0.0
    %4740 = vmatprep.subr.mxu0 0.0
    %4741 = vmatpush1.msra.mxu0 0.0
    %4742 = vmatprep.subr.mxu0 0.0
    %4743 = vmatpush1.msra.mxu0 0.0
    %4744 = vmatprep.subr.mxu0 0.0
    %4745 = vmatpush1.msra.mxu0 0.0
    %4746 = vmatprep.mubr.f32.mxu0 0.0
    %4747 = vmatmul.mubr.f32.gmra.mrb[0].mxu0 %v4680
    %v4748 = vpop.f32.mrb[0].mxu0
    %v4749 = vadd.f32 %v4679, %v4748
    %v4750 = vpop.f32.mrb[0].mxu0
    %4751 = vdwg.mxu0
    %v4752 = vsel %vm480, %v4749, -inf
    %4753 = vmax.xlane.f32.xlu0 %v4752
    %v4754 = vpop.xlane.xlu0 %4753
    %v4755 = vsub.f32 %v4749, %v4754
    %v4756 = vmul.f32 %v4755, 1.442695
    %v4757 = vpow.pop %v4756
    %v4758 = vsel %vm480, %v4757, 0.0
    %4759 = vadd.xlane.f32.xlu0 %v4758
    %v4760 = vpop.xlane.xlu0 %4759
    %v4761 = vlog2.pop %v4760
    %v4762 = vmul.f32 %v4761, 0.6931472
    %v4763 = vsub.f32 %v4755, %v4762
    %4764 = vst [vmem:[#allocation8 + $0x6] sm:$0x1] %v4763
    %v4765 = vld [vmem:[#allocation2] sm:$0x1]
    %s4766 = scalar_lea.vmem [#allocation4], 7
    %v4767 = vld [vmem:[%s4766] ss:$8 sm:$0x7]
    %v4768 = vld [vmem:[%s6] sm:$0xff]
    %v4769 = vld [vmem:[%s6 + $0x8] sm:$0xff]
    %v4770 = vld [vmem:[%s6 + $0x10] sm:$0xff]
    %v4771 = vld [vmem:[%s6 + $0x18] sm:$0xff]
    %v4772 = vld [vmem:[%s6 + $0x20] sm:$0xff]
    %v4773 = vld [vmem:[%s6 + $0x28] sm:$0xff]
    %v4774 = vld [vmem:[%s6 + $0x30] sm:$0xff]
    %v4775 = vld [vmem:[%s6 + $0x38] sm:$0xff]
    %v4776 = vld [vmem:[%s6 + $0x40] sm:$0xff]
    %v4777 = vld [vmem:[%s6 + $0x48] sm:$0xff]
    %v4778 = vld [vmem:[%s6 + $0x50] sm:$0xff]
    %v4779 = vld [vmem:[%s6 + $0x58] sm:$0xff]
    %v4780 = vld [vmem:[%s7] sm:$0x7]
    %v4782 = vlaneseq
    %v4783 = vshrl.u32 %v4782, 7
    %v4784 = vsub.s32 0, %v4783
    %v4785 = vrot.slane %v4780, %v4784
    %v4786 = vlaneseq
    %v4787 = vshrl.u32 %v4786, 7
    %v4788 = vsub.s32 1, %v4787
    %v4789 = vrot.slane %v4780, %v4788
    %v4790 = vlaneseq
    %v4791 = vshrl.u32 %v4790, 7
    %v4792 = vsub.s32 2, %v4791
    %v4793 = vrot.slane %v4780, %v4792
    %v4798 = vsel %vm125, %v4765, 0
    %4800 = vmatprep.subr.mxu0 %v4769
    %4801 = vmatpush1.msra.mxu0 %v4768
    %4802 = vmatprep.subr.mxu0 %v4772
    %4803 = vmatpush1.msra.mxu0 %v4771
    %4804 = vmatprep.subr.mxu0 %v4775
    %4805 = vmatpush1.msra.mxu0 %v4774
    %4806 = vmatprep.subr.mxu0 %v4778
    %4807 = vmatpush1.msra.mxu0 %v4777
    %4808 = vmatprep.subr.mxu0 0.0
    %4809 = vmatpush1.msra.mxu0 0.0
    %4810 = vmatprep.subr.mxu0 0.0
    %4811 = vmatpush1.msra.mxu0 0.0
    %4812 = vmatprep.subr.mxu0 0.0
    %4813 = vmatpush1.msra.mxu0 0.0
    %4814 = vmatprep.subr.mxu0 0.0
    %4815 = vmatpush1.msra.mxu0 0.0
    %4816 = vmatprep.subr.mxu0 0.0
    %4817 = vmatpush1.msra.mxu0 0.0
    %4818 = vmatprep.subr.mxu0 0.0
    %4819 = vmatpush1.msra.mxu0 0.0
    %4820 = vmatprep.subr.mxu0 0.0
    %4821 = vmatpush1.msra.mxu0 0.0
    %4822 = vmatprep.subr.mxu0 0.0
    %4823 = vmatpush1.msra.mxu0 0.0
    %4824 = vmatprep.subr.mxu0 0.0
    %4825 = vmatpush1.msra.mxu0 0.0
    %4826 = vmatprep.subr.mxu0 0.0
    %4827 = vmatpush1.msra.mxu0 0.0
    %4828 = vmatprep.subr.mxu0 0.0
    %4829 = vmatpush1.msra.mxu0 0.0
    %4830 = vmatprep.subr.mxu0 0.0
    %4831 = vmatpush1.msra.mxu0 0.0
    %4832 = vmatprep.subr.mxu0 0.0
    %4833 = vmatpush1.msra.mxu0 0.0
    %4834 = vmatprep.subr.mxu0 0.0
    %4835 = vmatpush1.msra.mxu0 0.0
    %4836 = vmatprep.subr.mxu0 0.0
    %4837 = vmatpush1.msra.mxu0 0.0
    %4838 = vmatprep.subr.mxu0 0.0
    %4839 = vmatpush1.msra.mxu0 0.0
    %4840 = vmatprep.subr.mxu0 0.0
    %4841 = vmatpush1.msra.mxu0 0.0
    %4842 = vmatprep.subr.mxu0 0.0
    %4843 = vmatpush1.msra.mxu0 0.0
    %4844 = vmatprep.subr.mxu0 0.0
    %4845 = vmatpush1.msra.mxu0 0.0
    %4846 = vmatprep.subr.mxu0 0.0
    %4847 = vmatpush1.msra.mxu0 0.0
    %4848 = vmatprep.subr.mxu0 0.0
    %4849 = vmatpush1.msra.mxu0 0.0
    %4850 = vmatprep.subr.mxu0 0.0
    %4851 = vmatpush1.msra.mxu0 0.0
    %4852 = vmatprep.subr.mxu0 0.0
    %4853 = vmatpush1.msra.mxu0 0.0
    %4854 = vmatprep.subr.mxu0 0.0
    %4855 = vmatpush1.msra.mxu0 0.0
    %4856 = vmatprep.subr.mxu0 0.0
    %4857 = vmatpush1.msra.mxu0 0.0
    %4858 = vmatprep.subr.mxu0 0.0
    %4859 = vmatpush1.msra.mxu0 0.0
    %4860 = vmatprep.subr.mxu0 0.0
    %4861 = vmatpush1.msra.mxu0 0.0
    %4862 = vmatprep.subr.mxu0 0.0
    %4863 = vmatpush1.msra.mxu0 0.0
    %4864 = vmatprep.mubr.f32.mxu0 0.0
    %4865 = vmatmul.mubr.f32.gmra.mrb[0].mxu0 %v4798
    %v4866 = vpop.f32.mrb[0].mxu0
    %v4867 = vadd.f32 %v4785, %v4866
    %v4868 = vpop.f32.mrb[0].mxu0
    %v4869 = vadd.f32 %v4789, %v4868
    %4870 = vdwg.mxu0
    %4871 = vmatprep.subr.mxu0 0.0
    %4872 = vmatpush1.msra.mxu0 %v4770
    %4873 = vmatprep.subr.mxu0 0.0
    %4874 = vmatpush1.msra.mxu0 %v4773
    %4875 = vmatprep.subr.mxu0 0.0
    %4876 = vmatpush1.msra.mxu0 %v4776
    %4877 = vmatprep.subr.mxu0 0.0
    %4878 = vmatpush1.msra.mxu0 %v4779
    %4879 = vmatprep.subr.mxu0 0.0
    %4880 = vmatpush1.msra.mxu0 0.0
    %4881 = vmatprep.subr.mxu0 0.0
    %4882 = vmatpush1.msra.mxu0 0.0
    %4883 = vmatprep.subr.mxu0 0.0
    %4884 = vmatpush1.msra.mxu0 0.0
    %4885 = vmatprep.subr.mxu0 0.0
    %4886 = vmatpush1.msra.mxu0 0.0
    %4887 = vmatprep.subr.mxu0 0.0
    %4888 = vmatpush1.msra.mxu0 0.0
    %4889 = vmatprep.subr.mxu0 0.0
    %4890 = vmatpush1.msra.mxu0 0.0
    %4891 = vmatprep.subr.mxu0 0.0
    %4892 = vmatpush1.msra.mxu0 0.0
    %4893 = vmatprep.subr.mxu0 0.0
    %4894 = vmatpush1.msra.mxu0 0.0
    %4895 = vmatprep.subr.mxu0 0.0
    %4896 = vmatpush1.msra.mxu0 0.0
    %4897 = vmatprep.subr.mxu0 0.0
    %4898 = vmatpush1.msra.mxu0 0.0
    %4899 = vmatprep.subr.mxu0 0.0
    %4900 = vmatpush1.msra.mxu0 0.0
    %4901 = vmatprep.subr.mxu0 0.0
    %4902 = vmatpush1.msra.mxu0 0.0
    %4903 = vmatprep.subr.mxu0 0.0
    %4904 = vmatpush1.msra.mxu0 0.0
    %4905 = vmatprep.subr.mxu0 0.0
    %4906 = vmatpush1.msra.mxu0 0.0
    %4907 = vmatprep.subr.mxu0 0.0
    %4908 = vmatpush1.msra.mxu0 0.0
    %4909 = vmatprep.subr.mxu0 0.0
    %4910 = vmatpush1.msra.mxu0 0.0
    %4911 = vmatprep.subr.mxu0 0.0
    %4912 = vmatpush1.msra.mxu0 0.0
    %4913 = vmatprep.subr.mxu0 0.0
    %4914 = vmatpush1.msra.mxu0 0.0
    %4915 = vmatprep.subr.mxu0 0.0
    %4916 = vmatpush1.msra.mxu0 0.0
    %4917 = vmatprep.subr.mxu0 0.0
    %4918 = vmatpush1.msra.mxu0 0.0
    %4919 = vmatprep.subr.mxu0 0.0
    %4920 = vmatpush1.msra.mxu0 0.0
    %4921 = vmatprep.subr.mxu0 0.0
    %4922 = vmatpush1.msra.mxu0 0.0
    %4923 = vmatprep.subr.mxu0 0.0
    %4924 = vmatpush1.msra.mxu0 0.0
    %4925 = vmatprep.subr.mxu0 0.0
    %4926 = vmatpush1.msra.mxu0 0.0
    %4927 = vmatprep.subr.mxu0 0.0
    %4928 = vmatpush1.msra.mxu0 0.0
    %4929 = vmatprep.subr.mxu0 0.0
    %4930 = vmatpush1.msra.mxu0 0.0
    %4931 = vmatprep.subr.mxu0 0.0
    %4932 = vmatpush1.msra.mxu0 0.0
    %4933 = vmatprep.subr.mxu0 0.0
    %4934 = vmatpush1.msra.mxu0 0.0
    %4935 = vmatprep.mubr.f32.mxu0 0.0
    %4936 = vmatmul.mubr.f32.gmra.mrb[0].mxu0 %v4798
    %v4937 = vpop.f32.mrb[0].mxu0
    %v4938 = vadd.f32 %v4793, %v4937
    %v4939 = vpop.f32.mrb[0].mxu0
    %4940 = vdwg.mxu0
    %v4943 = vcombine.low %v4867, %v4869
    %v4945 = vunpack.c.l.s4 1966171168
    %v4946 = vunpack.c.0.s8 %v4945
    %v4947 = vlaneseq
    %v4948 = vshrl.u32 %v4947, 7
    %v4949 = vsub.s32 %v4946, %v4948
    %v4950 = vrot.slane %v4943, %v4949
    %v4952 = vunpack.c.l.s4 1966171168
    %v4953 = vunpack.c.0.s8 %v4952
    %v4954 = vlaneseq
    %v4955 = vshrl.u32 %v4954, 7
    %v4956 = vsub.s32 %v4953, %v4955
    %v4957 = vrot.slane %v4950, %v4956
    %v4959 = vadd.f32 %v4767, %v4957
    %v4961 = vlaneseq
    %v4962 = vshrl.u32 %v4961, 7
    %v4963 = vsub.s32 0, %v4962
    %v4964 = vrot.slane %v4959, %v4963
    %v4965 = vlaneseq
    %v4966 = vshrl.u32 %v4965, 7
    %v4967 = vsub.s32 1, %v4966
    %v4968 = vrot.slane %v4959, %v4967
    %v4971 = vsel %vm480, %v4964, -inf
    %v4972 = vsel %vm480, %v4968, -inf
    %v4973 = vmax.f32 %v4971, %v4972
    %4974 = vmax.xlane.f32.xlu0 %v4973
    %v4975 = vpop.xlane.xlu0 %4974
    %v4977 = vlaneseq
    %v4978 = vshrl.u32 %v4977, 7
    %v4979 = vsub.s32 0, %v4978
    %v4980 = vrot.slane %v4975, %v4979
    %v4982 = vsub.f32 %v4959, %v4980
    %v4983 = vmul.f32 %v4982, 1.442695
    %v4984 = vpow.pop %v4983
    %v4986 = vlaneseq
    %v4987 = vshrl.u32 %v4986, 7
    %v4988 = vsub.s32 0, %v4987
    %v4989 = vrot.slane %v4984, %v4988
    %v4990 = vlaneseq
    %v4991 = vshrl.u32 %v4990, 7
    %v4992 = vsub.s32 1, %v4991
    %v4993 = vrot.slane %v4984, %v4992
    %v4996 = vsel %vm480, %v4989, 0.0
    %v4997 = vsel %vm480, %v4993, 0.0
    %v4998 = vadd.f32 %v4996, %v4997
    %4999 = vadd.xlane.f32.xlu0 %v4998
    %v5000 = vpop.xlane.xlu0 %4999
    %v5001 = vld [vmem:[%s3] sm:$0xff]
    %v5002 = vld [vmem:[%s3 + $0x8] sm:$0xff]
    %v5003 = vld [vmem:[%s3 + $0x10] sm:$0xff]
    %v5004 = vld [vmem:[%s3 + $0x18] sm:$0xff]
    %v5005 = vld [vmem:[%s3 + $0x20] sm:$0xff]
    %v5006 = vld [vmem:[%s3 + $0x28] sm:$0xff]
    %v5007 = vld [vmem:[%s3 + $0x30] sm:$0xff]
    %v5008 = vld [vmem:[%s3 + $0x38] sm:$0xff]
    %v5009 = vld [vmem:[%s3 + $0x40] sm:$0xff]
    %v5010 = vld [vmem:[%s3 + $0x48] sm:$0xff]
    %v5011 = vld [vmem:[%s3 + $0x50] sm:$0xff]
    %v5012 = vld [vmem:[%s3 + $0x58] sm:$0xff]
    %v5013 = vld [vmem:[%s3 + $0x60] sm:$0xff]
    %v5014 = vld [vmem:[%s3 + $0x68] sm:$0xff]
    %v5015 = vld [vmem:[%s3 + $0x70] sm:$0xff]
    %v5016 = vld [vmem:[%s3 + $0x78] sm:$0xff]
    %v5017 = vld [vmem:[%s3 + $0x80] sm:$0xff]
    %v5018 = vld [vmem:[%s3 + $0x88] sm:$0xff]
    %v5019 = vld [vmem:[%s3 + $0x90] sm:$0xff]
    %v5020 = vld [vmem:[%s3 + $0x98] sm:$0xff]
    %v5021 = vld [vmem:[%s3 + $0xa0] sm:$0xff]
    %v5022 = vld [vmem:[%s3 + $0xa8] sm:$0xff]
    %v5023 = vld [vmem:[%s3 + $0xb0] sm:$0xff]
    %v5024 = vld [vmem:[%s3 + $0xb8] sm:$0xff]
    %v5025 = vld [vmem:[%s3 + $0xc0] sm:$0xff]
    %v5026 = vld [vmem:[%s3 + $0xc8] sm:$0xff]
    %v5027 = vld [vmem:[%s3 + $0xd0] sm:$0xff]
    %v5028 = vld [vmem:[%s3 + $0xd8] sm:$0xff]
    %v5029 = vld [vmem:[%s3 + $0xe0] sm:$0xff]
    %v5030 = vld [vmem:[%s3 + $0xe8] sm:$0xff]
    %v5031 = vld [vmem:[%s3 + $0xf0] sm:$0xff]
    %v5032 = vld [vmem:[%s3 + $0xf8] sm:$0xff]
    %5033 = vmatprep.subr.mxu0 0.0
    %5034 = vmatpush1.msra.mxu0 %v5001
    %5035 = vmatprep.subr.mxu0 0.0
    %5036 = vmatpush1.msra.mxu0 %v5002
    %5037 = vmatprep.subr.mxu0 0.0
    %5038 = vmatpush1.msra.mxu0 %v5003
    %5039 = vmatprep.subr.mxu0 0.0
    %5040 = vmatpush1.msra.mxu0 %v5004
    %5041 = vmatprep.subr.mxu0 0.0
    %5042 = vmatpush1.msra.mxu0 %v5005
    %5043 = vmatprep.subr.mxu0 0.0
    %5044 = vmatpush1.msra.mxu0 %v5006
    %5045 = vmatprep.subr.mxu0 0.0
    %5046 = vmatpush1.msra.mxu0 %v5007
    %5047 = vmatprep.subr.mxu0 0.0
    %5048 = vmatpush1.msra.mxu0 %v5008
    %5049 = vmatprep.subr.mxu0 0.0
    %5050 = vmatpush1.msra.mxu0 %v5009
    %5051 = vmatprep.subr.mxu0 0.0
    %5052 = vmatpush1.msra.mxu0 %v5010
    %5053 = vmatprep.subr.mxu0 0.0
    %5054 = vmatpush1.msra.mxu0 %v5011
    %5055 = vmatprep.subr.mxu0 0.0
    %5056 = vmatpush1.msra.mxu0 %v5012
    %5057 = vmatprep.subr.mxu0 0.0
    %5058 = vmatpush1.msra.mxu0 %v5013
    %5059 = vmatprep.subr.mxu0 0.0
    %5060 = vmatpush1.msra.mxu0 %v5014
    %5061 = vmatprep.subr.mxu0 0.0
    %5062 = vmatpush1.msra.mxu0 %v5015
    %5063 = vmatprep.subr.mxu0 0.0
    %5064 = vmatpush1.msra.mxu0 %v5016
    %5065 = vmatprep.subr.mxu0 0.0
    %5066 = vmatpush1.msra.mxu0 %v5017
    %5067 = vmatprep.subr.mxu0 0.0
    %5068 = vmatpush1.msra.mxu0 %v5018
    %5069 = vmatprep.subr.mxu0 0.0
    %5070 = vmatpush1.msra.mxu0 %v5019
    %5071 = vmatprep.subr.mxu0 0.0
    %5072 = vmatpush1.msra.mxu0 %v5020
    %5073 = vmatprep.subr.mxu0 0.0
    %5074 = vmatpush1.msra.mxu0 %v5021
    %5075 = vmatprep.subr.mxu0 0.0
    %5076 = vmatpush1.msra.mxu0 %v5022
    %5077 = vmatprep.subr.mxu0 0.0
    %5078 = vmatpush1.msra.mxu0 %v5023
    %5079 = vmatprep.subr.mxu0 0.0
    %5080 = vmatpush1.msra.mxu0 %v5024
    %5081 = vmatprep.subr.mxu0 0.0
    %5082 = vmatpush1.msra.mxu0 %v5025
    %5083 = vmatprep.subr.mxu0 0.0
    %5084 = vmatpush1.msra.mxu0 %v5026
    %5085 = vmatprep.subr.mxu0 0.0
    %5086 = vmatpush1.msra.mxu0 %v5027
    %5087 = vmatprep.subr.mxu0 0.0
    %5088 = vmatpush1.msra.mxu0 %v5028
    %5089 = vmatprep.subr.mxu0 0.0
    %5090 = vmatpush1.msra.mxu0 %v5029
    %5091 = vmatprep.subr.mxu0 0.0
    %5092 = vmatpush1.msra.mxu0 %v5030
    %5093 = vmatprep.subr.mxu0 0.0
    %5094 = vmatpush1.msra.mxu0 %v5031
    %5095 = vmatprep.subr.mxu0 0.0
    %5096 = vmatpush1.msra.mxu0 %v5032
    %5097 = vmatprep.mubr.f32.mxu0 %v4993
    %5098 = vmatmul.mubr.f32.gmra.mrb[0].mxu0 %v4989
    %v5099 = vpop.f32.mrb[0].mxu0
    %v5100 = vadd.f32 0.0, %v5099
    %v5101 = vpop.f32.mrb[0].mxu0
    %5102 = vdwg.mxu0
    %v5103 = vrcp.pop %v5000
    %v5104 = vmul.f32 %v5000, %v5103
    %v5105 = vsub.f32 2.0, %v5104
    %v5106 = vmul.f32 %v5103, %v5105
    %v5107 = vmul.f32 %v5100, %v5106
    %v5108 = vld [vmem:[%s8] sm:$0xff]
    %v5109 = vld [vmem:[%s8 + $0x8] sm:$0xff]
    %v5110 = vld [vmem:[%s8 + $0x10] sm:$0xff]
    %v5111 = vld [vmem:[%s8 + $0x18] sm:$0xff]
    %v5113 = vsel %vm125, %v5107, 0
    %5115 = vmatprep.subr.mxu0 0.0
    %5116 = vmatpush1.msra.mxu0 %v5108
    %5117 = vmatprep.subr.mxu0 0.0
    %5118 = vmatpush1.msra.mxu0 %v5109
    %5119 = vmatprep.subr.mxu0 0.0
    %5120 = vmatpush1.msra.mxu0 %v5110
    %5121 = vmatprep.subr.mxu0 0.0
    %5122 = vmatpush1.msra.mxu0 %v5111
    %5123 = vmatprep.subr.mxu0 0.0
    %5124 = vmatpush1.msra.mxu0 0.0
    %5125 = vmatprep.subr.mxu0 0.0
    %5126 = vmatpush1.msra.mxu0 0.0
    %5127 = vmatprep.subr.mxu0 0.0
    %5128 = vmatpush1.msra.mxu0 0.0
    %5129 = vmatprep.subr.mxu0 0.0
    %5130 = vmatpush1.msra.mxu0 0.0
    %5131 = vmatprep.subr.mxu0 0.0
    %5132 = vmatpush1.msra.mxu0 0.0
    %5133 = vmatprep.subr.mxu0 0.0
    %5134 = vmatpush1.msra.mxu0 0.0
    %5135 = vmatprep.subr.mxu0 0.0
    %5136 = vmatpush1.msra.mxu0 0.0
    %5137 = vmatprep.subr.mxu0 0.0
    %5138 = vmatpush1.msra.mxu0 0.0
    %5139 = vmatprep.subr.mxu0 0.0
    %5140 = vmatpush1.msra.mxu0 0.0
    %5141 = vmatprep.subr.mxu0 0.0
    %5142 = vmatpush1.msra.mxu0 0.0
    %5143 = vmatprep.subr.mxu0 0.0
    %5144 = vmatpush1.msra.mxu0 0.0
    %5145 = vmatprep.subr.mxu0 0.0
    %5146 = vmatpush1.msra.mxu0 0.0
    %5147 = vmatprep.subr.mxu0 0.0
    %5148 = vmatpush1.msra.mxu0 0.0
    %5149 = vmatprep.subr.mxu0 0.0
    %5150 = vmatpush1.msra.mxu0 0.0
    %5151 = vmatprep.subr.mxu0 0.0
    %5152 = vmatpush1.msra.mxu0 0.0
    %5153 = vmatprep.subr.mxu0 0.0
    %5154 = vmatpush1.msra.mxu0 0.0
    %5155 = vmatprep.subr.mxu0 0.0
    %5156 = vmatpush1.msra.mxu0 0.0
    %5157 = vmatprep.subr.mxu0 0.0
    %5158 = vmatpush1.msra.mxu0 0.0
    %5159 = vmatprep.subr.mxu0 0.0
    %5160 = vmatpush1.msra.mxu0 0.0
    %5161 = vmatprep.subr.mxu0 0.0
    %5162 = vmatpush1.msra.mxu0 0.0
    %5163 = vmatprep.subr.mxu0 0.0
    %5164 = vmatpush1.msra.mxu0 0.0
    %5165 = vmatprep.subr.mxu0 0.0
    %5166 = vmatpush1.msra.mxu0 0.0
    %5167 = vmatprep.subr.mxu0 0.0
    %5168 = vmatpush1.msra.mxu0 0.0
    %5169 = vmatprep.subr.mxu0 0.0
    %5170 = vmatpush1.msra.mxu0 0.0
    %5171 = vmatprep.subr.mxu0 0.0
    %5172 = vmatpush1.msra.mxu0 0.0
    %5173 = vmatprep.subr.mxu0 0.0
    %5174 = vmatpush1.msra.mxu0 0.0
    %5175 = vmatprep.subr.mxu0 0.0
    %5176 = vmatpush1.msra.mxu0 0.0
    %5177 = vmatprep.subr.mxu0 0.0
    %5178 = vmatpush1.msra.mxu0 0.0
    %5179 = vmatprep.mubr.f32.mxu0 0.0
    %5180 = vmatmul.mubr.f32.gmra.mrb[0].mxu0 %v5113
    %v5181 = vpop.f32.mrb[0].mxu0
    %v5182 = vadd.f32 0.0, %v5181
    %v5183 = vpop.f32.mrb[0].mxu0
    %5184 = vdwg.mxu0
    %v5186 = vrot.slane %v4767, 2
    %v5188 = vadd.f32 %v5186, %v5182
    %v5189 = vmax.f32 %v5188, 0.0
    %v5190 = vld [vmem:[%s9] sm:$0xff]
    %v5191 = vld [vmem:[%s9 + $0x8] sm:$0xff]
    %v5192 = vld [vmem:[%s9 + $0x10] sm:$0xff]
    %v5193 = vld [vmem:[%s9 + $0x18] sm:$0xff]
    %v5194 = vld [vmem:[%s10] sm:$0x1]
    %v5196 = vsel %vm125, %v5189, 0
    %5198 = vmatprep.subr.mxu0 0.0
    %5199 = vmatpush1.msra.mxu0 %v5190
    %5200 = vmatprep.subr.mxu0 0.0
    %5201 = vmatpush1.msra.mxu0 %v5191
    %5202 = vmatprep.subr.mxu0 0.0
    %5203 = vmatpush1.msra.mxu0 %v5192
    %5204 = vmatprep.subr.mxu0 0.0
    %5205 = vmatpush1.msra.mxu0 %v5193
    %5206 = vmatprep.subr.mxu0 0.0
    %5207 = vmatpush1.msra.mxu0 0.0
    %5208 = vmatprep.subr.mxu0 0.0
    %5209 = vmatpush1.msra.mxu0 0.0
    %5210 = vmatprep.subr.mxu0 0.0
    %5211 = vmatpush1.msra.mxu0 0.0
    %5212 = vmatprep.subr.mxu0 0.0
    %5213 = vmatpush1.msra.mxu0 0.0
    %5214 = vmatprep.subr.mxu0 0.0
    %5215 = vmatpush1.msra.mxu0 0.0
    %5216 = vmatprep.subr.mxu0 0.0
    %5217 = vmatpush1.msra.mxu0 0.0
    %5218 = vmatprep.subr.mxu0 0.0
    %5219 = vmatpush1.msra.mxu0 0.0
    %5220 = vmatprep.subr.mxu0 0.0
    %5221 = vmatpush1.msra.mxu0 0.0
    %5222 = vmatprep.subr.mxu0 0.0
    %5223 = vmatpush1.msra.mxu0 0.0
    %5224 = vmatprep.subr.mxu0 0.0
    %5225 = vmatpush1.msra.mxu0 0.0
    %5226 = vmatprep.subr.mxu0 0.0
    %5227 = vmatpush1.msra.mxu0 0.0
    %5228 = vmatprep.subr.mxu0 0.0
    %5229 = vmatpush1.msra.mxu0 0.0
    %5230 = vmatprep.subr.mxu0 0.0
    %5231 = vmatpush1.msra.mxu0 0.0
    %5232 = vmatprep.subr.mxu0 0.0
    %5233 = vmatpush1.msra.mxu0 0.0
    %5234 = vmatprep.subr.mxu0 0.0
    %5235 = vmatpush1.msra.mxu0 0.0
    %5236 = vmatprep.subr.mxu0 0.0
    %5237 = vmatpush1.msra.mxu0 0.0
    %5238 = vmatprep.subr.mxu0 0.0
    %5239 = vmatpush1.msra.mxu0 0.0
    %5240 = vmatprep.subr.mxu0 0.0
    %5241 = vmatpush1.msra.mxu0 0.0
    %5242 = vmatprep.subr.mxu0 0.0
    %5243 = vmatpush1.msra.mxu0 0.0
    %5244 = vmatprep.subr.mxu0 0.0
    %5245 = vmatpush1.msra.mxu0 0.0
    %5246 = vmatprep.subr.mxu0 0.0
    %5247 = vmatpush1.msra.mxu0 0.0
    %5248 = vmatprep.subr.mxu0 0.0
    %5249 = vmatpush1.msra.mxu0 0.0
    %5250 = vmatprep.subr.mxu0 0.0
    %5251 = vmatpush1.msra.mxu0 0.0
    %5252 = vmatprep.subr.mxu0 0.0
    %5253 = vmatpush1.msra.mxu0 0.0
    %5254 = vmatprep.subr.mxu0 0.0
    %5255 = vmatpush1.msra.mxu0 0.0
    %5256 = vmatprep.subr.mxu0 0.0
    %5257 = vmatpush1.msra.mxu0 0.0
    %5258 = vmatprep.subr.mxu0 0.0
    %5259 = vmatpush1.msra.mxu0 0.0
    %5260 = vmatprep.subr.mxu0 0.0
    %5261 = vmatpush1.msra.mxu0 0.0
    %5262 = vmatprep.mubr.f32.mxu0 0.0
    %5263 = vmatmul.mubr.f32.gmra.mrb[0].mxu0 %v5196
    %v5264 = vpop.f32.mrb[0].mxu0
    %v5265 = vadd.f32 %v5194, %v5264
    %v5266 = vpop.f32.mrb[0].mxu0
    %5267 = vdwg.mxu0
    %v5268 = vadd.f32 %v5265, %v4938
    %v5269 = vxor.u32 %v5268, 2147483648
    %v5270 = vmul.f32 %v5269, 1.442695
    %v5271 = vpow.pop %v5270
    %v5272 = vadd.f32 %v5271, 1.0
    %v5273 = vrcp.pop %v5272
    %v5274 = vmul.f32 1.0, %v5273
    %5276 = vrot.lane.b32.xlu0 %v4938, 64
    %v5277 = vpop.permute.xlu0 %5276
    %v5279 = vmul.f32 %v5274, %v5277
    %5281 = vrot.lane.b32.xlu0 %v5279, 64
    %v5282 = vpop.permute.xlu0 %5281
    %v5284 = vadd.f32 %v5265, %v5282
    %v5285 = vtanh.pop %v5284
    %v5286 = vsub.f32 1.0, %v5274
    %5288 = vrot.lane.b32.xlu0 %v5285, 96
    %v5289 = vpop.permute.xlu0 %5288
    %v5291 = vmul.f32 %v5286, %v5289
    %v5292 = vlaneseq
    %v5293 = vshrl.u32 %v5292, 7
    %v5294 = vsub.s32 0, %v5293
    %v5295 = vrot.slane %v4765, %v5294
    %5296 = vrot.lane.b32.xlu0 %v5295, 32
    %v5297 = vpop.permute.xlu0 %5296
    %v5299 = vmul.f32 %v5274, %v5297
    %v5300 = vadd.f32 %v5291, %v5299
    %5302 = vrot.lane.b32.xlu0 %v5300, 96
    %v5303 = vpop.permute.xlu0 %5302
    %5305 = vst.msk [vmem:[#allocation2] sm:$0x1] %vm65, %v5303
    %v5307 = vlaneseq
    %v5308 = vshrl.u32 %v5307, 7
    %v5309 = vsub.s32 0, %v5308
    %v5310 = vrot.slane %v5106, %v5309
    %v5312 = vmul.f32 %v4984, %v5310
    %s5313 = scalar_lea.vmem [#allocation11], 7
    %5314 = vst.msk [vmem:[%s5313] ss:$8 sm:$0x3] %vm826, %v5312
    %5315 = vst.msk [vmem:[%s5313] ss:$8 sm:$0x0] %vm826, %v5312
    %v5316 = vld [vmem:[%s11] sm:$0xff]
    %v5317 = vld [vmem:[%s11 + $0x8] sm:$0xff]
    %v5318 = vld [vmem:[%s11 + $0x10] sm:$0xff]
    %v5319 = vld [vmem:[%s11 + $0x18] sm:$0xff]
    %v5320 = vld [vmem:[%s12] sm:$0x1]
    %v5321 = vsel %vm125, %v5303, 0
    %5323 = vmatprep.subr.mxu0 0.0
    %5324 = vmatpush1.msra.mxu0 %v5316
    %5325 = vmatprep.subr.mxu0 0.0
    %5326 = vmatpush1.msra.mxu0 %v5317
    %5327 = vmatprep.subr.mxu0 0.0
    %5328 = vmatpush1.msra.mxu0 %v5318
    %5329 = vmatprep.subr.mxu0 0.0
    %5330 = vmatpush1.msra.mxu0 %v5319
    %5331 = vmatprep.subr.mxu0 0.0
    %5332 = vmatpush1.msra.mxu0 0.0
    %5333 = vmatprep.subr.mxu0 0.0
    %5334 = vmatpush1.msra.mxu0 0.0
    %5335 = vmatprep.subr.mxu0 0.0
    %5336 = vmatpush1.msra.mxu0 0.0
    %5337 = vmatprep.subr.mxu0 0.0
    %5338 = vmatpush1.msra.mxu0 0.0
    %5339 = vmatprep.subr.mxu0 0.0
    %5340 = vmatpush1.msra.mxu0 0.0
    %5341 = vmatprep.subr.mxu0 0.0
    %5342 = vmatpush1.msra.mxu0 0.0
    %5343 = vmatprep.subr.mxu0 0.0
    %5344 = vmatpush1.msra.mxu0 0.0
    %5345 = vmatprep.subr.mxu0 0.0
    %5346 = vmatpush1.msra.mxu0 0.0
    %5347 = vmatprep.subr.mxu0 0.0
    %5348 = vmatpush1.msra.mxu0 0.0
    %5349 = vmatprep.subr.mxu0 0.0
    %5350 = vmatpush1.msra.mxu0 0.0
    %5351 = vmatprep.subr.mxu0 0.0
    %5352 = vmatpush1.msra.mxu0 0.0
    %5353 = vmatprep.subr.mxu0 0.0
    %5354 = vmatpush1.msra.mxu0 0.0
    %5355 = vmatprep.subr.mxu0 0.0
    %5356 = vmatpush1.msra.mxu0 0.0
    %5357 = vmatprep.subr.mxu0 0.0
    %5358 = vmatpush1.msra.mxu0 0.0
    %5359 = vmatprep.subr.mxu0 0.0
    %5360 = vmatpush1.msra.mxu0 0.0
    %5361 = vmatprep.subr.mxu0 0.0
    %5362 = vmatpush1.msra.mxu0 0.0
    %5363 = vmatprep.subr.mxu0 0.0
    %5364 = vmatpush1.msra.mxu0 0.0
    %5365 = vmatprep.subr.mxu0 0.0
    %5366 = vmatpush1.msra.mxu0 0.0
    %5367 = vmatprep.subr.mxu0 0.0
    %5368 = vmatpush1.msra.mxu0 0.0
    %5369 = vmatprep.subr.mxu0 0.0
    %5370 = vmatpush1.msra.mxu0 0.0
    %5371 = vmatprep.subr.mxu0 0.0
    %5372 = vmatpush1.msra.mxu0 0.0
    %5373 = vmatprep.subr.mxu0 0.0
    %5374 = vmatpush1.msra.mxu0 0.0
    %5375 = vmatprep.subr.mxu0 0.0
    %5376 = vmatpush1.msra.mxu0 0.0
    %5377 = vmatprep.subr.mxu0 0.0
    %5378 = vmatpush1.msra.mxu0 0.0
    %5379 = vmatprep.subr.mxu0 0.0
    %5380 = vmatpush1.msra.mxu0 0.0
    %5381 = vmatprep.subr.mxu0 0.0
    %5382 = vmatpush1.msra.mxu0 0.0
    %5383 = vmatprep.subr.mxu0 0.0
    %5384 = vmatpush1.msra.mxu0 0.0
    %5385 = vmatprep.subr.mxu0 0.0
    %5386 = vmatpush1.msra.mxu0 0.0
    %5387 = vmatprep.mubr.f32.mxu0 0.0
    %5388 = vmatmul.mubr.f32.gmra.mrb[0].mxu0 %v5321
    %v5389 = vpop.f32.mrb[0].mxu0
    %v5390 = vadd.f32 %v5320, %v5389
    %v5391 = vpop.f32.mrb[0].mxu0
    %5392 = vdwg.mxu0
    %v5393 = vsel %vm480, %v5390, -inf
    %5394 = vmax.xlane.f32.xlu0 %v5393
    %v5395 = vpop.xlane.xlu0 %5394
    %v5396 = vsub.f32 %v5390, %v5395
    %v5397 = vmul.f32 %v5396, 1.442695
    %v5398 = vpow.pop %v5397
    %v5399 = vsel %vm480, %v5398, 0.0
    %5400 = vadd.xlane.f32.xlu0 %v5399
    %v5401 = vpop.xlane.xlu0 %5400
    %v5402 = vlog2.pop %v5401
    %v5403 = vmul.f32 %v5402, 0.6931472
    %v5404 = vsub.f32 %v5396, %v5403
    %5405 = vst [vmem:[#allocation8 + $0x7] sm:$0x1] %v5404
    %v5406 = vld [vmem:[#allocation2] sm:$0x1]
    %5407 = vst.msk [vmem:[#allocation9] sm:$0x1] %vm65, %v5406
    // Predicated region
    $region58: #{tpu_custom_call.1} parent=1 // pred_check
      _
    $region59: #{tpu_custom_call.1} parent=1 // pred_check_branch
      %5409 = sbr.rel (0) target = $region61
    $region60: #{tpu_custom_call.1} parent=1 // pred_region
      %s5411 = ssub.s32 128, 128
      %5412 = vsyncadd [#allocation6], %s5411
      %s5414 = sshll.u32 [#allocation8], 4
      %s5415 = int_to_ptr.vmem [resolvable:$true] %s5414
      %5417 = dma.vmem_to_hbm [thread:$0]  %s5415, 128, %s13, [#allocation6]
    $region61: #{tpu_custom_call.1} parent=1 // pred_fallthru
      _
    // Predicated region
    $region62: #{tpu_custom_call.1} parent=1 // pred_check
      _
    $region63: #{tpu_custom_call.1} parent=1 // pred_check_branch
      %5419 = sbr.rel (0) target = $region65
    $region64: #{tpu_custom_call.1} parent=1 // pred_region
      %s5421 = ssub.s32 16, 16
      %5422 = vsyncadd [#allocation10], %s5421
      %s5424 = sshll.u32 [#allocation9], 4
      %s5425 = int_to_ptr.vmem [resolvable:$true] %s5424
      %5427 = dma.vmem_to_hbm [thread:$0]  %s5425, 16, %s14, [#allocation10]
    $region65: #{tpu_custom_call.1} parent=1 // pred_fallthru
      _
    // Predicated region
    $region66: #{tpu_custom_call.1} parent=1 // pred_check
      _
    $region67: #{tpu_custom_call.1} parent=1 // pred_check_branch
      %5429 = sbr.rel (0) target = $region69
    $region68: #{tpu_custom_call.1} parent=1 // pred_region
      %s5431 = ssub.s32 256, 256
      %5432 = vsyncadd [#allocation10], %s5431
      %s5434 = sshll.u32 [#allocation11], 4
      %s5435 = int_to_ptr.vmem [resolvable:$true] %s5434
      %5437 = dma.vmem_to_hbm [thread:$0]  %s5435, 256, %s15, [#allocation10]
    $region69: #{tpu_custom_call.1} parent=1 // pred_fallthru
      _
    // Predicated region
    $region70: #{tpu_custom_call.1} parent=1 // pred_check
      _
    $region71: #{tpu_custom_call.1} parent=1 // pred_check_branch
      %5439 = sbr.rel (0) target = $region73
    $region72: #{tpu_custom_call.1} parent=1 // pred_region
      %5440 = dma.done [#allocation6], 128
    $region73: #{tpu_custom_call.1} parent=1 // pred_fallthru
      _
    // Predicated region
    $region74: #{tpu_custom_call.1} parent=1 // pred_check
      _
    $region75: #{tpu_custom_call.1} parent=1 // pred_check_branch
      %5442 = sbr.rel (0) target = $region77
    $region76: #{tpu_custom_call.1} parent=1 // pred_region
      %5443 = dma.done [#allocation10], 16
    $region77: #{tpu_custom_call.1} parent=1 // pred_fallthru
      _
    // Predicated region
    $region78: #{tpu_custom_call.1} parent=1 // pred_check
      _
    $region79: #{tpu_custom_call.1} parent=1 // pred_check_branch
      %5445 = sbr.rel (0) target = $region81
    $region80: #{tpu_custom_call.1} parent=1 // pred_region
      %5446 = dma.done [#allocation10], 256
    $region81: #{tpu_custom_call.1} parent=1 // pred_fallthru
      _
    %5447 = vsyncpa [#allocation6], 1
    %5448 = vsyncpa [#allocation10], 1
    %5449 = vsyncpa [#allocation7], 1

</llo_original>
